<compile_context>
chip_gen: v7x
topology: tpu7x:2x2x1
jax: 0.10.0
libtpu: 0.0.40
codegen_flags: <defaults>
</compile_context>

<pallas_src>
import functools
import math

import jax
import jax.numpy as jnp
from jax.experimental import pallas as pl
from jax.experimental.pallas import tpu as pltpu

NEG_SLOPE = 0.3
BN_EPS = 1e-5
H, W = 24, 16
HW = H * W
NCH = 2                    # image channels entering/leaving the CRBlocks
TOTAL = NCH * HW           # 768 = decoder_fc output features

WROWS = 16                 # sublane rows of the packed weight buffer
SEG_LANES = 128            # lane stride between packed weight segments
N_SEG = 13                 # head + 2 * (fused-head, 1x9, 9x1, 5x1, c11a, c11b)
SCRATCH_ROWS = 64          # >= max stacked K (9 taps * 7 ch = 63)


def _tap_list(kh, kw):
    ph, pw = (kh - 1) // 2, (kw - 1) // 2
    return [(ih - ph, iw - pw) for ih in range(kh) for iw in range(kw)]


TAPS_5x5 = _tap_list(5, 5)
TAPS_3x3 = _tap_list(3, 3)
TAPS_1x9 = _tap_list(1, 9)
TAPS_9x1 = _tap_list(9, 1)
TAPS_5x1 = _tap_list(5, 1)
# p1.conv3x3 and p2.conv1x5 read the same 2-channel input: fuse them into one
# matmul over the union of their taps (o1 -> rows 0..6, o2 -> rows 8..14).
FUSED_TAPS = TAPS_3x3 + [(0, -2), (0, 2)]


def _all_shift_taps():
    taps, seen = [], set()
    for tl in (TAPS_5x5, FUSED_TAPS, TAPS_1x9, TAPS_9x1, TAPS_5x1):
        for t in tl:
            if t != (0, 0) and t not in seen:
                seen.add(t)
                taps.append(t)
    return taps


SHIFT_TAPS = _all_shift_taps()                 # 32 distinct non-zero shifts
MASK_IDX = {t: i for i, t in enumerate(SHIFT_TAPS)}


def _leaky(v):
    return jnp.where(v >= 0.0, v, NEG_SLOPE * v)


# ----------------------------------------------------------------------------
# Fused decoder kernel
# ----------------------------------------------------------------------------
def _decoder_kernel(x_ref, fcw_ref, fcb_ref, mask_ref, w_ref, b_ref,
                    o_ref, st_ref):
    """Whole Decoder forward.

    Activation layout: (C, L) with L = B_local*H*W; lane p encodes
    (b, h, w) = (p // HW, (p % HW) // W, p % W).
    """
    L = o_ref.shape[1]
    F = x_ref.shape[2]

    # ---- decoder_fc: writes directly in the (C, L) conv layout --------------
    xv = x_ref[0]                                            # (B_local, F)
    Bl = xv.shape[0]
    chan_rows = []
    for c in range(NCH):
        z = jnp.dot(xv, fcw_ref[c * F:(c + 1) * F, :],
                    preferred_element_type=jnp.float32)      # (B_local, HW)
        chan_rows.append(
            jnp.concatenate([z[b:b + 1, :] for b in range(Bl)], axis=1))
    act = jnp.concatenate(chan_rows, axis=0) + fcb_ref[...]  # (2, L)

    # ---- tap-stacked ConvBN helpers ------------------------------------------
    def shifted_tap(x, dh, dw):
        # shifted[c, p] = x[c, p + dh*W + dw] if the source pixel lies inside
        # the same (b, H, W) image, else 0 ('same' zero padding).
        s = dh * W + dw
        v = x if s == 0 else pltpu.roll(x, (-s) % L, axis=1)  # XLU lane rotate
        if (dh, dw) != (0, 0):
            m = MASK_IDX[(dh, dw)]
            v = v * mask_ref[m:m + 1, :]                      # host-built mask
        return v

    def stack_taps(x, taps):
        # Dense packing: tap t's cin channels land at scratch rows
        # [t*cin, (t+1)*cin), so every row the matmul reads is freshly written.
        cin = x.shape[0]
        for t, (dh, dw) in enumerate(taps):
            st_ref[t * cin:(t + 1) * cin, :] = shifted_tap(x, dh, dw)
        return len(taps) * cin

    def seg_dot(seg, cout, k):
        # One MXU matmul per ConvBN layer (BN folded into weight/bias).
        w = w_ref[0:cout, seg * SEG_LANES:seg * SEG_LANES + k]
        out = jnp.dot(w, st_ref[0:k, :], preferred_element_type=jnp.float32)
        return out + b_ref[0:cout, seg:seg + 1]

    # ---- decoder_feature: conv5x5_bn + LeakyReLU -----------------------------
    act = _leaky(seg_dot(0, NCH, stack_taps(act, TAPS_5x5)))

    # ---- CRBlock x 2 ----------------------------------------------------------
    for blk in range(2):
        base = 1 + 6 * blk
        identity = act

        # Fused path heads: rows 0-6 = conv3x3 (path1), rows 8-14 = conv1x5
        # (path2); rows 7/15 are zero so both slices stay tile-aligned.
        k = stack_taps(act, FUSED_TAPS)
        heads = seg_dot(base, 16, k)
        o1 = _leaky(heads[0:7, :])                           # relu1
        o2 = _leaky(heads[8:15, :])                          # relu (path2)

        o1 = _leaky(seg_dot(base + 1, 7, stack_taps(o1, TAPS_1x9)))   # + relu2
        o1 = seg_dot(base + 2, 7, stack_taps(o1, TAPS_9x1))           # conv9x1
        o2 = seg_dot(base + 3, 7, stack_taps(o2, TAPS_5x1))           # conv5x1

        # relu(cat(o1, o2)) then 1x1 conv: the channel concat is replaced by
        # two split-weight dots sharing one f32 accumulator.
        o1 = _leaky(o1)
        o2 = _leaky(o2)
        w1 = w_ref[0:NCH, (base + 4) * SEG_LANES:(base + 4) * SEG_LANES + 7]
        w2 = w_ref[0:NCH, (base + 5) * SEG_LANES:(base + 5) * SEG_LANES + 7]
        out = (jnp.dot(w1, o1, preferred_element_type=jnp.float32)
               + jnp.dot(w2, o2, preferred_element_type=jnp.float32)
               + b_ref[0:NCH, base + 4:base + 5])
        act = _leaky(out + identity)

    # ---- final sigmoid; full-width lane-dense store ---------------------------
    o_ref[...] = jax.nn.sigmoid(act)


# ----------------------------------------------------------------------------
# Wrapper
# ----------------------------------------------------------------------------
def decoder_forward(x, packed, per_batch_grid=False):
    B, F = x.shape
    L = HW if per_batch_grid else B * HW
    inputs = (packed["fcw"], packed["fcb"], packed["masks"],
              packed["W_all"], packed["B_all"])
    scratch = [pltpu.VMEM((SCRATCH_ROWS, L), jnp.float32)]
    out_shape = jax.ShapeDtypeStruct((NCH, B * HW), jnp.float32)

    if per_batch_grid:
        # v7x: one batch image per TensorCore (L = HW = 384, still lane-dense).
        x3 = x.reshape(B, 1, F)
        in_specs = [pl.BlockSpec((1, 1, F), lambda b: (b, 0, 0))]
        in_specs += [pl.BlockSpec(a.shape, lambda b, n=a.ndim: (0,) * n)
                     for a in inputs]
        act = pl.pallas_call(
            _decoder_kernel,
            out_shape=out_shape,
            grid=(B,),
            in_specs=in_specs,
            out_specs=pl.BlockSpec((NCH, HW), lambda b: (0, b)),
            scratch_shapes=scratch,
            compiler_params=pltpu.CompilerParams(
                dimension_semantics=("parallel",)),
        )(x3, *inputs)
    else:
        # v5e/v6e: gridless, batch folded into the lane axis (L = B*HW = 768).
        x3 = x.reshape(1, B, F)
        vmem = lambda: pl.BlockSpec(memory_space=pltpu.MemorySpace.VMEM)
        act = pl.pallas_call(
            _decoder_kernel,
            out_shape=out_shape,
            in_specs=[vmem() for _ in range(6)],
            out_specs=vmem(),
            scratch_shapes=scratch,
        )(x3, *inputs)

    # (C, B*HW) -> (B, H, W, C); matches torch's out.permute(0, 2, 3, 1).
    return act.reshape(NCH, B, H, W).transpose(1, 2, 3, 0)


def use_per_batch_grid():
    # Split the batch across TensorCores only on multi-TC chips (v7x); on
    # single-TC v5e/v6e a grid is pure per-step overhead for this kernel.
    try:
        kind = jax.devices()[0].device_kind.lower()
    except Exception:
        return False
    return ("v7" in kind) or ("7x" in kind)


# ----------------------------------------------------------------------------
# Host-side packing of canonical parameters into the kernel's flat buffers
# ----------------------------------------------------------------------------
def _pad_seg(seg):
    r, c = seg.shape
    return jnp.pad(seg, ((0, WROWS - r), (0, SEG_LANES - c)))


def _plain_seg(w):
    # (cout, cin, kh, kw) -> (cout, kh*kw*cin), tap-major / channel-minor.
    cout = w.shape[0]
    return jnp.transpose(w, (0, 2, 3, 1)).reshape(cout, -1)


def _fused_seg(w3, w5):
    # Fused conv3x3 (rows 0-6) + conv1x5 (rows 8-14) over FUSED_TAPS.
    cols = []
    z7 = jnp.zeros((7, 2), jnp.float32)
    z1 = jnp.zeros((1, 2), jnp.float32)
    for dh, dw in FUSED_TAPS:
        top = w3[:, :, dh + 1, dw + 1] if (abs(dh) <= 1 and abs(dw) <= 1) else z7
        bot = w5[:, :, 0, dw + 2] if (dh == 0 and abs(dw) <= 2) else z7
        cols.append(jnp.concatenate([top, z1, bot, z1], axis=0))  # (16, 2)
    return jnp.concatenate(cols, axis=1)                          # (16, 22)


def _bias_col(b):
    return jnp.zeros((WROWS,), jnp.float32).at[0:b.shape[0]].set(b)


def _fused_bias(b3, b5):
    col = jnp.zeros((WROWS,), jnp.float32)
    return col.at[0:7].set(b3).at[8:15].set(b5)


def _build_masks(L):
    pos = jnp.arange(L, dtype=jnp.int32)
    hh = (pos % HW) // W
    ww = pos % W
    rows = []
    for dh, dw in SHIFT_TAPS:
        ok = ((hh + dh >= 0) & (hh + dh < H) & (ww + dw >= 0) & (ww + dw < W))
        rows.append(ok.astype(jnp.float32))
    return jnp.stack(rows, axis=0)                               # (32, L)


def pack_decoder_params(params, batch, per_batch_grid=False):
    segs, bias_cols = [], []

    w, b = params["head"]
    segs.append(_pad_seg(_plain_seg(w)))
    bias_cols.append(_bias_col(b))

    for blk in ("cr1", "cr2"):
        p = params[blk]
        w3, b3 = p["p1c1"]
        w5, b5 = p["p2c1"]
        segs.append(_pad_seg(_fused_seg(w3, w5)))
        bias_cols.append(_fused_bias(b3, b5))
        for name in ("p1c2", "p1c3", "p2c2"):
            w, b = p[name]
            segs.append(_pad_seg(_plain_seg(w)))
            bias_cols.append(_bias_col(b))
        w11, b11 = p["c11"]
        w11 = w11.reshape(NCH, 14)
        segs.append(_pad_seg(w11[:, 0:7]))                 # c11, path1 half
        bias_cols.append(_bias_col(b11))
        segs.append(_pad_seg(w11[:, 7:14]))                # c11, path2 half
        bias_cols.append(jnp.zeros((WROWS,), jnp.float32))

    W_all = jnp.concatenate(segs, axis=1)                  # (16, 13*128)
    B_all = jnp.stack(bias_cols, axis=1)                   # (16, 13)

    # decoder_fc: fold the NCHW .view(-1,2,24,16) into the weight layout.
    fw, fb = params["fc"]                                  # (F, 768), (768,)
    F = fw.shape[0]
    fcw = jnp.transpose(fw.reshape(F, NCH, HW), (1, 0, 2)).reshape(NCH * F, HW)
    reps = 1 if per_batch_grid else batch
    L = reps * HW
    fcb = jnp.tile(fb.reshape(NCH, 1, HW), (1, reps, 1)).reshape(NCH, L)
    masks = _build_masks(L)

    return dict(W_all=W_all, B_all=B_all, fcw=fcw, fcb=fcb, masks=masks)


# ----------------------------------------------------------------------------
# Deterministic canonical parameters (eval-mode BN folded into conv weights)
# ----------------------------------------------------------------------------
def _make_convbn(key, cin, cout, kh, kw):
    kconv, kg, kb, km, kv = jax.random.split(key, 5)
    fan_in = cin * kh * kw
    w = jax.random.normal(kconv, (cout, cin, kh, kw), jnp.float32) / math.sqrt(fan_in)
    gamma = 1.0 + 0.1 * jax.random.normal(kg, (cout,), jnp.float32)
    beta = 0.1 * jax.random.normal(kb, (cout,), jnp.float32)
    mean = 0.1 * jax.random.normal(km, (cout,), jnp.float32)
    var = jax.random.uniform(kv, (cout,), jnp.float32, minval=0.5, maxval=1.5)
    scale = gamma / jnp.sqrt(var + BN_EPS)
    return (w * scale[:, None, None, None], beta - mean * scale)


def _make_crblock(key):
    ks = jax.random.split(key, 6)
    return {
        "p1c1": _make_convbn(ks[0], 2, 7, 3, 3),
        "p1c2": _make_convbn(ks[1], 7, 7, 1, 9),
        "p1c3": _make_convbn(ks[2], 7, 7, 9, 1),
        "p2c1": _make_convbn(ks[3], 2, 7, 1, 5),
        "p2c2": _make_convbn(ks[4], 7, 7, 5, 1),
        "c11":  _make_convbn(ks[5], 14, 2, 1, 1),
    }


def init_decoder_params(key, feedback_bits):
    kfc, khead, k1, k2 = jax.random.split(key, 4)
    kfw, kfb = jax.random.split(kfc)
    fcw = jax.random.normal(kfw, (feedback_bits, TOTAL), jnp.float32) / math.sqrt(feedback_bits)
    fcb = 0.1 * jax.random.normal(kfb, (TOTAL,), jnp.float32)
    return {
        "fc": (fcw, fcb),
        "head": _make_convbn(khead, 2, 2, 5, 5),
        "cr1": _make_crblock(k1),
        "cr2": _make_crblock(k2),
    }


# ----------------------------------------------------------------------------
# Pure-JAX/XLA reference (mirrors Decoder.forward) for validation
# ----------------------------------------------------------------------------
def reference_forward(x, params):
    B = x.shape[0]
    fw, fb = params["fc"]
    h = jnp.dot(x, fw, precision=jax.lax.Precision.HIGHEST) + fb
    h = h.reshape(B, NCH, H, W)                                    # NCHW

    def conv_ref(v, p):
        w, b = p
        cout, cin, kh, kw = w.shape
        out = jax.lax.conv_general_dilated(
            v, w, window_strides=(1, 1),
            padding=[((kh - 1) // 2, (kh - 1) // 2),
                     ((kw - 1) // 2, (kw - 1) // 2)],
            dimension_numbers=("NCHW", "OIHW", "NCHW"),
            precision=jax.lax.Precision.HIGHEST)
        return out + b.reshape(1, cout, 1, 1)

    h = _leaky(conv_ref(h, params["head"]))
    for blk in ("cr1", "cr2"):
        p = params[blk]
        idt = h
        o1 = _leaky(conv_ref(h, p["p1c1"]))
        o1 = _leaky(conv_ref(o1, p["p1c2"]))
        o1 = conv_ref(o1, p["p1c3"])
        o2 = _leaky(conv_ref(h, p["p2c1"]))
        o2 = conv_ref(o2, p["p2c2"])
        cat = _leaky(jnp.concatenate([o1, o2], axis=1))            # (B, 14, H, W)
        out = conv_ref(cat, p["c11"])
        h = _leaky(out + idt)
    out = jax.nn.sigmoid(h)
    return jnp.transpose(out, (0, 2, 3, 1))                        # NHWC


# ----------------------------------------------------------------------------
if __name__ == "__main__":
    feedback_bits = 128
    batch = 2

    key = jax.random.PRNGKey(0)
    k_params, k_x = jax.random.split(key)
    params = init_decoder_params(k_params, feedback_bits)
    x = jax.random.uniform(k_x, (batch, feedback_bits), dtype=jnp.float32)

    per_batch_grid = use_per_batch_grid()
    packed = pack_decoder_params(params, batch, per_batch_grid)

    fwd = jax.jit(functools.partial(decoder_forward,
                                    per_batch_grid=per_batch_grid))
    out = jax.block_until_ready(fwd(x, packed))

    assert out.shape == (batch, H, W, NCH), out.shape
    assert out.dtype == jnp.float32
    assert bool(jnp.all(jnp.isfinite(out)))
    assert bool(jnp.all((out >= 0.0) & (out <= 1.0)))              # sigmoid range

    # Validate against the pure-JAX reference of the same Decoder.
    ref = jax.block_until_ready(jax.jit(reference_forward)(x, params))
    max_err = float(jnp.max(jnp.abs(out - ref)))
    assert max_err < 5e-3, f"mismatch vs reference: {max_err}"

    print("KERNEL_OK")
</pallas_src>

<mosaic_0001>
module attributes {stable_mosaic.version = 11 : i64} {
  func.func @_decoder_kernel(%arg0: memref<1x2x128xf32, #tpu.memory_space<vmem>>, %arg1: memref<256x384xf32, #tpu.memory_space<vmem>>, %arg2: memref<2x768xf32, #tpu.memory_space<vmem>>, %arg3: memref<32x768xf32, #tpu.memory_space<vmem>>, %arg4: memref<16x1664xf32, #tpu.memory_space<vmem>>, %arg5: memref<16x13xf32, #tpu.memory_space<vmem>>, %arg6: memref<2x768xf32, #tpu.memory_space<vmem>>, %arg7: memref<64x768xf32, #tpu.memory_space<vmem>>) attributes {dimension_semantics = [], scalar_prefetch = 0 : i64, scratch_operands = 1 : i64, tpu.core_type = #tpu.core_type<tc>} {
    %c0 = arith.constant 0 : index
    %c0_0 = arith.constant 0 : index
    %c0_1 = arith.constant 0 : index
    %0 = vector.load %arg0[%c0, %c0_0, %c0_1] : memref<1x2x128xf32, #tpu.memory_space<vmem>>, vector<1x2x128xf32>
    %1 = vector.shape_cast %0 : vector<1x2x128xf32> to vector<2x128xf32>
    %c0_2 = arith.constant 0 : index
    %c0_3 = arith.constant 0 : index
    %2 = vector.load %arg1[%c0_2, %c0_3] : memref<256x384xf32, #tpu.memory_space<vmem>>, vector<128x384xf32>
    %cst = arith.constant dense<0.000000e+00> : vector<2x384xf32>
    %3 = tpu.matmul %1, %2, %cst {dimension_numbers = #tpu.dot_dimension_numbers<[1], [0], [0], [1], [0, 0, 1, 1], [], []>} : vector<2x128xf32>, vector<128x384xf32>, vector<2x384xf32> -> vector<2x384xf32>
    %4 = vector.extract_strided_slice %3 {offsets = [0, 0], sizes = [1, 384], strides = [1, 1]} : vector<2x384xf32> to vector<1x384xf32>
    %5 = vector.extract_strided_slice %3 {offsets = [1, 0], sizes = [1, 384], strides = [1, 1]} : vector<2x384xf32> to vector<1x384xf32>
    %6 = tpu.concatenate %4, %5 in 1 : vector<1x384xf32>, vector<1x384xf32> -> vector<1x768xf32>
    %c128 = arith.constant 128 : index
    %c0_4 = arith.constant 0 : index
    %7 = vector.load %arg1[%c128, %c0_4] : memref<256x384xf32, #tpu.memory_space<vmem>>, vector<128x384xf32>
    %cst_5 = arith.constant dense<0.000000e+00> : vector<2x384xf32>
    %8 = tpu.matmul %1, %7, %cst_5 {dimension_numbers = #tpu.dot_dimension_numbers<[1], [0], [0], [1], [0, 0, 1, 1], [], []>} : vector<2x128xf32>, vector<128x384xf32>, vector<2x384xf32> -> vector<2x384xf32>
    %9 = vector.extract_strided_slice %8 {offsets = [0, 0], sizes = [1, 384], strides = [1, 1]} : vector<2x384xf32> to vector<1x384xf32>
    %10 = vector.extract_strided_slice %8 {offsets = [1, 0], sizes = [1, 384], strides = [1, 1]} : vector<2x384xf32> to vector<1x384xf32>
    %11 = tpu.concatenate %9, %10 in 1 : vector<1x384xf32>, vector<1x384xf32> -> vector<1x768xf32>
    %12 = tpu.concatenate %6, %11 in 0 : vector<1x768xf32>, vector<1x768xf32> -> vector<2x768xf32>
    %c0_6 = arith.constant 0 : index
    %c0_7 = arith.constant 0 : index
    %13 = vector.load %arg2[%c0_6, %c0_7] : memref<2x768xf32, #tpu.memory_space<vmem>>, vector<2x768xf32>
    %14 = arith.addf %12, %13 : vector<2x768xf32>
    %c34_i32 = arith.constant 34 : i32
    %15 = tpu.dynamic_rotate %14 by %c34_i32 dim 1 : vector<2x768xf32>, i32 -> vector<2x768xf32>
    %c0_8 = arith.constant 0 : index
    %c0_9 = arith.constant 0 : index
    %16 = vector.load %arg3[%c0_8, %c0_9] : memref<32x768xf32, #tpu.memory_space<vmem>>, vector<1x768xf32>
    %17 = vector.broadcast %16 : vector<1x768xf32> to vector<2x768xf32>
    %18 = arith.mulf %15, %17 : vector<2x768xf32>
    %c0_10 = arith.constant 0 : index
    %c0_11 = arith.constant 0 : index
    %19 = vector.load %arg7[%c0_10, %c0_11] : memref<64x768xf32, #tpu.memory_space<vmem>>, vector<2x768xf32>
    tpu.vector_store %arg7[%c0_10, %c0_11], %18 {strides = array<i32>} : memref<64x768xf32, #tpu.memory_space<vmem>>, vector<2x768xf32>,
    %c33_i32 = arith.constant 33 : i32
    %20 = tpu.dynamic_rotate %14 by %c33_i32 dim 1 : vector<2x768xf32>, i32 -> vector<2x768xf32>
    %c1 = arith.constant 1 : index
    %c0_12 = arith.constant 0 : index
    %21 = vector.load %arg3[%c1, %c0_12] : memref<32x768xf32, #tpu.memory_space<vmem>>, vector<1x768xf32>
    %22 = vector.broadcast %21 : vector<1x768xf32> to vector<2x768xf32>
    %23 = arith.mulf %20, %22 : vector<2x768xf32>
    %c2 = arith.constant 2 : index
    %c0_13 = arith.constant 0 : index
    %24 = vector.load %arg7[%c2, %c0_13] : memref<64x768xf32, #tpu.memory_space<vmem>>, vector<2x768xf32>
    tpu.vector_store %arg7[%c2, %c0_13], %23 {strides = array<i32>} : memref<64x768xf32, #tpu.memory_space<vmem>>, vector<2x768xf32>,
    %c32_i32 = arith.constant 32 : i32
    %25 = tpu.dynamic_rotate %14 by %c32_i32 dim 1 : vector<2x768xf32>, i32 -> vector<2x768xf32>
    %c2_14 = arith.constant 2 : index
    %c0_15 = arith.constant 0 : index
    %26 = vector.load %arg3[%c2_14, %c0_15] : memref<32x768xf32, #tpu.memory_space<vmem>>, vector<1x768xf32>
    %27 = vector.broadcast %26 : vector<1x768xf32> to vector<2x768xf32>
    %28 = arith.mulf %25, %27 : vector<2x768xf32>
    %c4 = arith.constant 4 : index
    %c0_16 = arith.constant 0 : index
    %29 = vector.load %arg7[%c4, %c0_16] : memref<64x768xf32, #tpu.memory_space<vmem>>, vector<2x768xf32>
    tpu.vector_store %arg7[%c4, %c0_16], %28 {strides = array<i32>} : memref<64x768xf32, #tpu.memory_space<vmem>>, vector<2x768xf32>,
    %c31_i32 = arith.constant 31 : i32
    %30 = tpu.dynamic_rotate %14 by %c31_i32 dim 1 : vector<2x768xf32>, i32 -> vector<2x768xf32>
    %c3 = arith.constant 3 : index
    %c0_17 = arith.constant 0 : index
    %31 = vector.load %arg3[%c3, %c0_17] : memref<32x768xf32, #tpu.memory_space<vmem>>, vector<1x768xf32>
    %32 = vector.broadcast %31 : vector<1x768xf32> to vector<2x768xf32>
    %33 = arith.mulf %30, %32 : vector<2x768xf32>
    %c6 = arith.constant 6 : index
    %c0_18 = arith.constant 0 : index
    %34 = vector.load %arg7[%c6, %c0_18] : memref<64x768xf32, #tpu.memory_space<vmem>>, vector<2x768xf32>
    tpu.vector_store %arg7[%c6, %c0_18], %33 {strides = array<i32>} : memref<64x768xf32, #tpu.memory_space<vmem>>, vector<2x768xf32>,
    %c30_i32 = arith.constant 30 : i32
    %35 = tpu.dynamic_rotate %14 by %c30_i32 dim 1 : vector<2x768xf32>, i32 -> vector<2x768xf32>
    %c4_19 = arith.constant 4 : index
    %c0_20 = arith.constant 0 : index
    %36 = vector.load %arg3[%c4_19, %c0_20] : memref<32x768xf32, #tpu.memory_space<vmem>>, vector<1x768xf32>
    %37 = vector.broadcast %36 : vector<1x768xf32> to vector<2x768xf32>
    %38 = arith.mulf %35, %37 : vector<2x768xf32>
    %c8 = arith.constant 8 : index
    %c0_21 = arith.constant 0 : index
    %39 = vector.load %arg7[%c8, %c0_21] : memref<64x768xf32, #tpu.memory_space<vmem>>, vector<2x768xf32>
    tpu.vector_store %arg7[%c8, %c0_21], %38 {strides = array<i32>} : memref<64x768xf32, #tpu.memory_space<vmem>>, vector<2x768xf32>,
    %c18_i32 = arith.constant 18 : i32
    %40 = tpu.dynamic_rotate %14 by %c18_i32 dim 1 : vector<2x768xf32>, i32 -> vector<2x768xf32>
    %c5 = arith.constant 5 : index
    %c0_22 = arith.constant 0 : index
    %41 = vector.load %arg3[%c5, %c0_22] : memref<32x768xf32, #tpu.memory_space<vmem>>, vector<1x768xf32>
    %42 = vector.broadcast %41 : vector<1x768xf32> to vector<2x768xf32>
    %43 = arith.mulf %40, %42 : vector<2x768xf32>
    %c10 = arith.constant 10 : index
    %c0_23 = arith.constant 0 : index
    %44 = vector.load %arg7[%c10, %c0_23] : memref<64x768xf32, #tpu.memory_space<vmem>>, vector<2x768xf32>
    tpu.vector_store %arg7[%c10, %c0_23], %43 {strides = array<i32>} : memref<64x768xf32, #tpu.memory_space<vmem>>, vector<2x768xf32>,
    %c17_i32 = arith.constant 17 : i32
    %45 = tpu.dynamic_rotate %14 by %c17_i32 dim 1 : vector<2x768xf32>, i32 -> vector<2x768xf32>
    %c6_24 = arith.constant 6 : index
    %c0_25 = arith.constant 0 : index
    %46 = vector.load %arg3[%c6_24, %c0_25] : memref<32x768xf32, #tpu.memory_space<vmem>>, vector<1x768xf32>
    %47 = vector.broadcast %46 : vector<1x768xf32> to vector<2x768xf32>
    %48 = arith.mulf %45, %47 : vector<2x768xf32>
    %c12 = arith.constant 12 : index
    %c0_26 = arith.constant 0 : index
    %49 = vector.load %arg7[%c12, %c0_26] : memref<64x768xf32, #tpu.memory_space<vmem>>, vector<2x768xf32>
    tpu.vector_store %arg7[%c12, %c0_26], %48 {strides = array<i32>} : memref<64x768xf32, #tpu.memory_space<vmem>>, vector<2x768xf32>,
    %c16_i32 = arith.constant 16 : i32
    %50 = tpu.dynamic_rotate %14 by %c16_i32 dim 1 : vector<2x768xf32>, i32 -> vector<2x768xf32>
    %c7 = arith.constant 7 : index
    %c0_27 = arith.constant 0 : index
    %51 = vector.load %arg3[%c7, %c0_27] : memref<32x768xf32, #tpu.memory_space<vmem>>, vector<1x768xf32>
    %52 = vector.broadcast %51 : vector<1x768xf32> to vector<2x768xf32>
    %53 = arith.mulf %50, %52 : vector<2x768xf32>
    %c14 = arith.constant 14 : index
    %c0_28 = arith.constant 0 : index
    %54 = vector.load %arg7[%c14, %c0_28] : memref<64x768xf32, #tpu.memory_space<vmem>>, vector<2x768xf32>
    tpu.vector_store %arg7[%c14, %c0_28], %53 {strides = array<i32>} : memref<64x768xf32, #tpu.memory_space<vmem>>, vector<2x768xf32>,
    %c15_i32 = arith.constant 15 : i32
    %55 = tpu.dynamic_rotate %14 by %c15_i32 dim 1 : vector<2x768xf32>, i32 -> vector<2x768xf32>
    %c8_29 = arith.constant 8 : index
    %c0_30 = arith.constant 0 : index
    %56 = vector.load %arg3[%c8_29, %c0_30] : memref<32x768xf32, #tpu.memory_space<vmem>>, vector<1x768xf32>
    %57 = vector.broadcast %56 : vector<1x768xf32> to vector<2x768xf32>
    %58 = arith.mulf %55, %57 : vector<2x768xf32>
    %c16 = arith.constant 16 : index
    %c0_31 = arith.constant 0 : index
    %59 = vector.load %arg7[%c16, %c0_31] : memref<64x768xf32, #tpu.memory_space<vmem>>, vector<2x768xf32>
    tpu.vector_store %arg7[%c16, %c0_31], %58 {strides = array<i32>} : memref<64x768xf32, #tpu.memory_space<vmem>>, vector<2x768xf32>,
    %c14_i32 = arith.constant 14 : i32
    %60 = tpu.dynamic_rotate %14 by %c14_i32 dim 1 : vector<2x768xf32>, i32 -> vector<2x768xf32>
    %c9 = arith.constant 9 : index
    %c0_32 = arith.constant 0 : index
    %61 = vector.load %arg3[%c9, %c0_32] : memref<32x768xf32, #tpu.memory_space<vmem>>, vector<1x768xf32>
    %62 = vector.broadcast %61 : vector<1x768xf32> to vector<2x768xf32>
    %63 = arith.mulf %60, %62 : vector<2x768xf32>
    %c18 = arith.constant 18 : index
    %c0_33 = arith.constant 0 : index
    %64 = vector.load %arg7[%c18, %c0_33] : memref<64x768xf32, #tpu.memory_space<vmem>>, vector<2x768xf32>
    tpu.vector_store %arg7[%c18, %c0_33], %63 {strides = array<i32>} : memref<64x768xf32, #tpu.memory_space<vmem>>, vector<2x768xf32>,
    %c2_i32 = arith.constant 2 : i32
    %65 = tpu.dynamic_rotate %14 by %c2_i32 dim 1 : vector<2x768xf32>, i32 -> vector<2x768xf32>
    %c10_34 = arith.constant 10 : index
    %c0_35 = arith.constant 0 : index
    %66 = vector.load %arg3[%c10_34, %c0_35] : memref<32x768xf32, #tpu.memory_space<vmem>>, vector<1x768xf32>
    %67 = vector.broadcast %66 : vector<1x768xf32> to vector<2x768xf32>
    %68 = arith.mulf %65, %67 : vector<2x768xf32>
    %c20 = arith.constant 20 : index
    %c0_36 = arith.constant 0 : index
    %69 = vector.load %arg7[%c20, %c0_36] : memref<64x768xf32, #tpu.memory_space<vmem>>, vector<2x768xf32>
    tpu.vector_store %arg7[%c20, %c0_36], %68 {strides = array<i32>} : memref<64x768xf32, #tpu.memory_space<vmem>>, vector<2x768xf32>,
    %c1_i32 = arith.constant 1 : i32
    %70 = tpu.dynamic_rotate %14 by %c1_i32 dim 1 : vector<2x768xf32>, i32 -> vector<2x768xf32>
    %c11 = arith.constant 11 : index
    %c0_37 = arith.constant 0 : index
    %71 = vector.load %arg3[%c11, %c0_37] : memref<32x768xf32, #tpu.memory_space<vmem>>, vector<1x768xf32>
    %72 = vector.broadcast %71 : vector<1x768xf32> to vector<2x768xf32>
    %73 = arith.mulf %70, %72 : vector<2x768xf32>
    %c22 = arith.constant 22 : index
    %c0_38 = arith.constant 0 : index
    %74 = vector.load %arg7[%c22, %c0_38] : memref<64x768xf32, #tpu.memory_space<vmem>>, vector<2x768xf32>
    tpu.vector_store %arg7[%c22, %c0_38], %73 {strides = array<i32>} : memref<64x768xf32, #tpu.memory_space<vmem>>, vector<2x768xf32>,
    %c24 = arith.constant 24 : index
    %c0_39 = arith.constant 0 : index
    %75 = vector.load %arg7[%c24, %c0_39] : memref<64x768xf32, #tpu.memory_space<vmem>>, vector<2x768xf32>
    tpu.vector_store %arg7[%c24, %c0_39], %14 {strides = array<i32>} : memref<64x768xf32, #tpu.memory_space<vmem>>, vector<2x768xf32>,
    %c767_i32 = arith.constant 767 : i32
    %76 = tpu.dynamic_rotate %14 by %c767_i32 dim 1 : vector<2x768xf32>, i32 -> vector<2x768xf32>
    %c12_40 = arith.constant 12 : index
    %c0_41 = arith.constant 0 : index
    %77 = vector.load %arg3[%c12_40, %c0_41] : memref<32x768xf32, #tpu.memory_space<vmem>>, vector<1x768xf32>
    %78 = vector.broadcast %77 : vector<1x768xf32> to vector<2x768xf32>
    %79 = arith.mulf %76, %78 : vector<2x768xf32>
    %c26 = arith.constant 26 : index
    %c0_42 = arith.constant 0 : index
    %80 = vector.load %arg7[%c26, %c0_42] : memref<64x768xf32, #tpu.memory_space<vmem>>, vector<2x768xf32>
    tpu.vector_store %arg7[%c26, %c0_42], %79 {strides = array<i32>} : memref<64x768xf32, #tpu.memory_space<vmem>>, vector<2x768xf32>,
    %c766_i32 = arith.constant 766 : i32
    %81 = tpu.dynamic_rotate %14 by %c766_i32 dim 1 : vector<2x768xf32>, i32 -> vector<2x768xf32>
    %c13 = arith.constant 13 : index
    %c0_43 = arith.constant 0 : index
    %82 = vector.load %arg3[%c13, %c0_43] : memref<32x768xf32, #tpu.memory_space<vmem>>, vector<1x768xf32>
    %83 = vector.broadcast %82 : vector<1x768xf32> to vector<2x768xf32>
    %84 = arith.mulf %81, %83 : vector<2x768xf32>
    %c28 = arith.constant 28 : index
    %c0_44 = arith.constant 0 : index
    %85 = vector.load %arg7[%c28, %c0_44] : memref<64x768xf32, #tpu.memory_space<vmem>>, vector<2x768xf32>
    tpu.vector_store %arg7[%c28, %c0_44], %84 {strides = array<i32>} : memref<64x768xf32, #tpu.memory_space<vmem>>, vector<2x768xf32>,
    %c754_i32 = arith.constant 754 : i32
    %86 = tpu.dynamic_rotate %14 by %c754_i32 dim 1 : vector<2x768xf32>, i32 -> vector<2x768xf32>
    %c14_45 = arith.constant 14 : index
    %c0_46 = arith.constant 0 : index
    %87 = vector.load %arg3[%c14_45, %c0_46] : memref<32x768xf32, #tpu.memory_space<vmem>>, vector<1x768xf32>
    %88 = vector.broadcast %87 : vector<1x768xf32> to vector<2x768xf32>
    %89 = arith.mulf %86, %88 : vector<2x768xf32>
    %c30 = arith.constant 30 : index
    %c0_47 = arith.constant 0 : index
    %90 = vector.load %arg7[%c30, %c0_47] : memref<64x768xf32, #tpu.memory_space<vmem>>, vector<2x768xf32>
    tpu.vector_store %arg7[%c30, %c0_47], %89 {strides = array<i32>} : memref<64x768xf32, #tpu.memory_space<vmem>>, vector<2x768xf32>,
    %c753_i32 = arith.constant 753 : i32
    %91 = tpu.dynamic_rotate %14 by %c753_i32 dim 1 : vector<2x768xf32>, i32 -> vector<2x768xf32>
    %c15 = arith.constant 15 : index
    %c0_48 = arith.constant 0 : index
    %92 = vector.load %arg3[%c15, %c0_48] : memref<32x768xf32, #tpu.memory_space<vmem>>, vector<1x768xf32>
    %93 = vector.broadcast %92 : vector<1x768xf32> to vector<2x768xf32>
    %94 = arith.mulf %91, %93 : vector<2x768xf32>
    %c32 = arith.constant 32 : index
    %c0_49 = arith.constant 0 : index
    %95 = vector.load %arg7[%c32, %c0_49] : memref<64x768xf32, #tpu.memory_space<vmem>>, vector<2x768xf32>
    tpu.vector_store %arg7[%c32, %c0_49], %94 {strides = array<i32>} : memref<64x768xf32, #tpu.memory_space<vmem>>, vector<2x768xf32>,
    %c752_i32 = arith.constant 752 : i32
    %96 = tpu.dynamic_rotate %14 by %c752_i32 dim 1 : vector<2x768xf32>, i32 -> vector<2x768xf32>
    %c16_50 = arith.constant 16 : index
    %c0_51 = arith.constant 0 : index
    %97 = vector.load %arg3[%c16_50, %c0_51] : memref<32x768xf32, #tpu.memory_space<vmem>>, vector<1x768xf32>
    %98 = vector.broadcast %97 : vector<1x768xf32> to vector<2x768xf32>
    %99 = arith.mulf %96, %98 : vector<2x768xf32>
    %c34 = arith.constant 34 : index
    %c0_52 = arith.constant 0 : index
    %100 = vector.load %arg7[%c34, %c0_52] : memref<64x768xf32, #tpu.memory_space<vmem>>, vector<2x768xf32>
    tpu.vector_store %arg7[%c34, %c0_52], %99 {strides = array<i32>} : memref<64x768xf32, #tpu.memory_space<vmem>>, vector<2x768xf32>,
    %c751_i32 = arith.constant 751 : i32
    %101 = tpu.dynamic_rotate %14 by %c751_i32 dim 1 : vector<2x768xf32>, i32 -> vector<2x768xf32>
    %c17 = arith.constant 17 : index
    %c0_53 = arith.constant 0 : index
    %102 = vector.load %arg3[%c17, %c0_53] : memref<32x768xf32, #tpu.memory_space<vmem>>, vector<1x768xf32>
    %103 = vector.broadcast %102 : vector<1x768xf32> to vector<2x768xf32>
    %104 = arith.mulf %101, %103 : vector<2x768xf32>
    %c36 = arith.constant 36 : index
    %c0_54 = arith.constant 0 : index
    %105 = vector.load %arg7[%c36, %c0_54] : memref<64x768xf32, #tpu.memory_space<vmem>>, vector<2x768xf32>
    tpu.vector_store %arg7[%c36, %c0_54], %104 {strides = array<i32>} : memref<64x768xf32, #tpu.memory_space<vmem>>, vector<2x768xf32>,
    %c750_i32 = arith.constant 750 : i32
    %106 = tpu.dynamic_rotate %14 by %c750_i32 dim 1 : vector<2x768xf32>, i32 -> vector<2x768xf32>
    %c18_55 = arith.constant 18 : index
    %c0_56 = arith.constant 0 : index
    %107 = vector.load %arg3[%c18_55, %c0_56] : memref<32x768xf32, #tpu.memory_space<vmem>>, vector<1x768xf32>
    %108 = vector.broadcast %107 : vector<1x768xf32> to vector<2x768xf32>
    %109 = arith.mulf %106, %108 : vector<2x768xf32>
    %c38 = arith.constant 38 : index
    %c0_57 = arith.constant 0 : index
    %110 = vector.load %arg7[%c38, %c0_57] : memref<64x768xf32, #tpu.memory_space<vmem>>, vector<2x768xf32>
    tpu.vector_store %arg7[%c38, %c0_57], %109 {strides = array<i32>} : memref<64x768xf32, #tpu.memory_space<vmem>>, vector<2x768xf32>,
    %c738_i32 = arith.constant 738 : i32
    %111 = tpu.dynamic_rotate %14 by %c738_i32 dim 1 : vector<2x768xf32>, i32 -> vector<2x768xf32>
    %c19 = arith.constant 19 : index
    %c0_58 = arith.constant 0 : index
    %112 = vector.load %arg3[%c19, %c0_58] : memref<32x768xf32, #tpu.memory_space<vmem>>, vector<1x768xf32>
    %113 = vector.broadcast %112 : vector<1x768xf32> to vector<2x768xf32>
    %114 = arith.mulf %111, %113 : vector<2x768xf32>
    %c40 = arith.constant 40 : index
    %c0_59 = arith.constant 0 : index
    %115 = vector.load %arg7[%c40, %c0_59] : memref<64x768xf32, #tpu.memory_space<vmem>>, vector<2x768xf32>
    tpu.vector_store %arg7[%c40, %c0_59], %114 {strides = array<i32>} : memref<64x768xf32, #tpu.memory_space<vmem>>, vector<2x768xf32>,
    %c737_i32 = arith.constant 737 : i32
    %116 = tpu.dynamic_rotate %14 by %c737_i32 dim 1 : vector<2x768xf32>, i32 -> vector<2x768xf32>
    %c20_60 = arith.constant 20 : index
    %c0_61 = arith.constant 0 : index
    %117 = vector.load %arg3[%c20_60, %c0_61] : memref<32x768xf32, #tpu.memory_space<vmem>>, vector<1x768xf32>
    %118 = vector.broadcast %117 : vector<1x768xf32> to vector<2x768xf32>
    %119 = arith.mulf %116, %118 : vector<2x768xf32>
    %c42 = arith.constant 42 : index
    %c0_62 = arith.constant 0 : index
    %120 = vector.load %arg7[%c42, %c0_62] : memref<64x768xf32, #tpu.memory_space<vmem>>, vector<2x768xf32>
    tpu.vector_store %arg7[%c42, %c0_62], %119 {strides = array<i32>} : memref<64x768xf32, #tpu.memory_space<vmem>>, vector<2x768xf32>,
    %c736_i32 = arith.constant 736 : i32
    %121 = tpu.dynamic_rotate %14 by %c736_i32 dim 1 : vector<2x768xf32>, i32 -> vector<2x768xf32>
    %c21 = arith.constant 21 : index
    %c0_63 = arith.constant 0 : index
    %122 = vector.load %arg3[%c21, %c0_63] : memref<32x768xf32, #tpu.memory_space<vmem>>, vector<1x768xf32>
    %123 = vector.broadcast %122 : vector<1x768xf32> to vector<2x768xf32>
    %124 = arith.mulf %121, %123 : vector<2x768xf32>
    %c44 = arith.constant 44 : index
    %c0_64 = arith.constant 0 : index
    %125 = vector.load %arg7[%c44, %c0_64] : memref<64x768xf32, #tpu.memory_space<vmem>>, vector<2x768xf32>
    tpu.vector_store %arg7[%c44, %c0_64], %124 {strides = array<i32>} : memref<64x768xf32, #tpu.memory_space<vmem>>, vector<2x768xf32>,
    %c735_i32 = arith.constant 735 : i32
    %126 = tpu.dynamic_rotate %14 by %c735_i32 dim 1 : vector<2x768xf32>, i32 -> vector<2x768xf32>
    %c22_65 = arith.constant 22 : index
    %c0_66 = arith.constant 0 : index
    %127 = vector.load %arg3[%c22_65, %c0_66] : memref<32x768xf32, #tpu.memory_space<vmem>>, vector<1x768xf32>
    %128 = vector.broadcast %127 : vector<1x768xf32> to vector<2x768xf32>
    %129 = arith.mulf %126, %128 : vector<2x768xf32>
    %c46 = arith.constant 46 : index
    %c0_67 = arith.constant 0 : index
    %130 = vector.load %arg7[%c46, %c0_67] : memref<64x768xf32, #tpu.memory_space<vmem>>, vector<2x768xf32>
    tpu.vector_store %arg7[%c46, %c0_67], %129 {strides = array<i32>} : memref<64x768xf32, #tpu.memory_space<vmem>>, vector<2x768xf32>,
    %c734_i32 = arith.constant 734 : i32
    %131 = tpu.dynamic_rotate %14 by %c734_i32 dim 1 : vector<2x768xf32>, i32 -> vector<2x768xf32>
    %c23 = arith.constant 23 : index
    %c0_68 = arith.constant 0 : index
    %132 = vector.load %arg3[%c23, %c0_68] : memref<32x768xf32, #tpu.memory_space<vmem>>, vector<1x768xf32>
    %133 = vector.broadcast %132 : vector<1x768xf32> to vector<2x768xf32>
    %134 = arith.mulf %131, %133 : vector<2x768xf32>
    %c48 = arith.constant 48 : index
    %c0_69 = arith.constant 0 : index
    %135 = vector.load %arg7[%c48, %c0_69] : memref<64x768xf32, #tpu.memory_space<vmem>>, vector<2x768xf32>
    tpu.vector_store %arg7[%c48, %c0_69], %134 {strides = array<i32>} : memref<64x768xf32, #tpu.memory_space<vmem>>, vector<2x768xf32>,
    %c0_70 = arith.constant 0 : index
    %c0_71 = arith.constant 0 : index
    %136 = vector.load %arg4[%c0_70, %c0_71] : memref<16x1664xf32, #tpu.memory_space<vmem>>, vector<2x50xf32>
    %c0_72 = arith.constant 0 : index
    %c0_73 = arith.constant 0 : index
    %137 = vector.load %arg7[%c0_72, %c0_73] : memref<64x768xf32, #tpu.memory_space<vmem>>, vector<50x768xf32>
    %cst_74 = arith.constant dense<0.000000e+00> : vector<2x768xf32>
    %138 = tpu.matmul %136, %137, %cst_74 {dimension_numbers = #tpu.dot_dimension_numbers<[1], [0], [0], [1], [0, 0, 1, 1], [], []>} : vector<2x50xf32>, vector<50x768xf32>, vector<2x768xf32> -> vector<2x768xf32>
    %c0_75 = arith.constant 0 : index
    %c0_76 = arith.constant 0 : index
    %139 = vector.load %arg5[%c0_75, %c0_76] : memref<16x13xf32, #tpu.memory_space<vmem>>, vector<2x1xf32>
    %140 = vector.broadcast %139 : vector<2x1xf32> to vector<2x768xf32>
    %141 = arith.addf %138, %140 : vector<2x768xf32>
    %cst_77 = arith.constant 0.000000e+00 : f32
    %142 = vector.broadcast %cst_77 : f32 to vector<2x768xf32>
    %143 = arith.cmpf oge, %141, %142 : vector<2x768xf32>
    %cst_78 = arith.constant 3.000000e-01 : f32
    %144 = vector.broadcast %cst_78 : f32 to vector<2x768xf32>
    %145 = arith.mulf %144, %141 : vector<2x768xf32>
    %146 = arith.select %143, %141, %145 : vector<2x768xi1>, vector<2x768xf32>
    %c17_i32_79 = arith.constant 17 : i32
    %147 = tpu.dynamic_rotate %146 by %c17_i32_79 dim 1 : vector<2x768xf32>, i32 -> vector<2x768xf32>
    %c6_80 = arith.constant 6 : index
    %c0_81 = arith.constant 0 : index
    %148 = vector.load %arg3[%c6_80, %c0_81] : memref<32x768xf32, #tpu.memory_space<vmem>>, vector<1x768xf32>
    %149 = vector.broadcast %148 : vector<1x768xf32> to vector<2x768xf32>
    %150 = arith.mulf %147, %149 : vector<2x768xf32>
    %c0_82 = arith.constant 0 : index
    %c0_83 = arith.constant 0 : index
    %151 = vector.load %arg7[%c0_82, %c0_83] : memref<64x768xf32, #tpu.memory_space<vmem>>, vector<2x768xf32>
    tpu.vector_store %arg7[%c0_82, %c0_83], %150 {strides = array<i32>} : memref<64x768xf32, #tpu.memory_space<vmem>>, vector<2x768xf32>,
    %c16_i32_84 = arith.constant 16 : i32
    %152 = tpu.dynamic_rotate %146 by %c16_i32_84 dim 1 : vector<2x768xf32>, i32 -> vector<2x768xf32>
    %c7_85 = arith.constant 7 : index
    %c0_86 = arith.constant 0 : index
    %153 = vector.load %arg3[%c7_85, %c0_86] : memref<32x768xf32, #tpu.memory_space<vmem>>, vector<1x768xf32>
    %154 = vector.broadcast %153 : vector<1x768xf32> to vector<2x768xf32>
    %155 = arith.mulf %152, %154 : vector<2x768xf32>
    %c2_87 = arith.constant 2 : index
    %c0_88 = arith.constant 0 : index
    %156 = vector.load %arg7[%c2_87, %c0_88] : memref<64x768xf32, #tpu.memory_space<vmem>>, vector<2x768xf32>
    tpu.vector_store %arg7[%c2_87, %c0_88], %155 {strides = array<i32>} : memref<64x768xf32, #tpu.memory_space<vmem>>, vector<2x768xf32>,
    %c15_i32_89 = arith.constant 15 : i32
    %157 = tpu.dynamic_rotate %146 by %c15_i32_89 dim 1 : vector<2x768xf32>, i32 -> vector<2x768xf32>
    %c8_90 = arith.constant 8 : index
    %c0_91 = arith.constant 0 : index
    %158 = vector.load %arg3[%c8_90, %c0_91] : memref<32x768xf32, #tpu.memory_space<vmem>>, vector<1x768xf32>
    %159 = vector.broadcast %158 : vector<1x768xf32> to vector<2x768xf32>
    %160 = arith.mulf %157, %159 : vector<2x768xf32>
    %c4_92 = arith.constant 4 : index
    %c0_93 = arith.constant 0 : index
    %161 = vector.load %arg7[%c4_92, %c0_93] : memref<64x768xf32, #tpu.memory_space<vmem>>, vector<2x768xf32>
    tpu.vector_store %arg7[%c4_92, %c0_93], %160 {strides = array<i32>} : memref<64x768xf32, #tpu.memory_space<vmem>>, vector<2x768xf32>,
    %c1_i32_94 = arith.constant 1 : i32
    %162 = tpu.dynamic_rotate %146 by %c1_i32_94 dim 1 : vector<2x768xf32>, i32 -> vector<2x768xf32>
    %c11_95 = arith.constant 11 : index
    %c0_96 = arith.constant 0 : index
    %163 = vector.load %arg3[%c11_95, %c0_96] : memref<32x768xf32, #tpu.memory_space<vmem>>, vector<1x768xf32>
    %164 = vector.broadcast %163 : vector<1x768xf32> to vector<2x768xf32>
    %165 = arith.mulf %162, %164 : vector<2x768xf32>
    %c6_97 = arith.constant 6 : index
    %c0_98 = arith.constant 0 : index
    %166 = vector.load %arg7[%c6_97, %c0_98] : memref<64x768xf32, #tpu.memory_space<vmem>>, vector<2x768xf32>
    tpu.vector_store %arg7[%c6_97, %c0_98], %165 {strides = array<i32>} : memref<64x768xf32, #tpu.memory_space<vmem>>, vector<2x768xf32>,
    %c8_99 = arith.constant 8 : index
    %c0_100 = arith.constant 0 : index
    %167 = vector.load %arg7[%c8_99, %c0_100] : memref<64x768xf32, #tpu.memory_space<vmem>>, vector<2x768xf32>
    tpu.vector_store %arg7[%c8_99, %c0_100], %146 {strides = array<i32>} : memref<64x768xf32, #tpu.memory_space<vmem>>, vector<2x768xf32>,
    %c767_i32_101 = arith.constant 767 : i32
    %168 = tpu.dynamic_rotate %146 by %c767_i32_101 dim 1 : vector<2x768xf32>, i32 -> vector<2x768xf32>
    %c12_102 = arith.constant 12 : index
    %c0_103 = arith.constant 0 : index
    %169 = vector.load %arg3[%c12_102, %c0_103] : memref<32x768xf32, #tpu.memory_space<vmem>>, vector<1x768xf32>
    %170 = vector.broadcast %169 : vector<1x768xf32> to vector<2x768xf32>
    %171 = arith.mulf %168, %170 : vector<2x768xf32>
    %c10_104 = arith.constant 10 : index
    %c0_105 = arith.constant 0 : index
    %172 = vector.load %arg7[%c10_104, %c0_105] : memref<64x768xf32, #tpu.memory_space<vmem>>, vector<2x768xf32>
    tpu.vector_store %arg7[%c10_104, %c0_105], %171 {strides = array<i32>} : memref<64x768xf32, #tpu.memory_space<vmem>>, vector<2x768xf32>,
    %c753_i32_106 = arith.constant 753 : i32
    %173 = tpu.dynamic_rotate %146 by %c753_i32_106 dim 1 : vector<2x768xf32>, i32 -> vector<2x768xf32>
    %c15_107 = arith.constant 15 : index
    %c0_108 = arith.constant 0 : index
    %174 = vector.load %arg3[%c15_107, %c0_108] : memref<32x768xf32, #tpu.memory_space<vmem>>, vector<1x768xf32>
    %175 = vector.broadcast %174 : vector<1x768xf32> to vector<2x768xf32>
    %176 = arith.mulf %173, %175 : vector<2x768xf32>
    %c12_109 = arith.constant 12 : index
    %c0_110 = arith.constant 0 : index
    %177 = vector.load %arg7[%c12_109, %c0_110] : memref<64x768xf32, #tpu.memory_space<vmem>>, vector<2x768xf32>
    tpu.vector_store %arg7[%c12_109, %c0_110], %176 {strides = array<i32>} : memref<64x768xf32, #tpu.memory_space<vmem>>, vector<2x768xf32>,
    %c752_i32_111 = arith.constant 752 : i32
    %178 = tpu.dynamic_rotate %146 by %c752_i32_111 dim 1 : vector<2x768xf32>, i32 -> vector<2x768xf32>
    %c16_112 = arith.constant 16 : index
    %c0_113 = arith.constant 0 : index
    %179 = vector.load %arg3[%c16_112, %c0_113] : memref<32x768xf32, #tpu.memory_space<vmem>>, vector<1x768xf32>
    %180 = vector.broadcast %179 : vector<1x768xf32> to vector<2x768xf32>
    %181 = arith.mulf %178, %180 : vector<2x768xf32>
    %c14_114 = arith.constant 14 : index
    %c0_115 = arith.constant 0 : index
    %182 = vector.load %arg7[%c14_114, %c0_115] : memref<64x768xf32, #tpu.memory_space<vmem>>, vector<2x768xf32>
    tpu.vector_store %arg7[%c14_114, %c0_115], %181 {strides = array<i32>} : memref<64x768xf32, #tpu.memory_space<vmem>>, vector<2x768xf32>,
    %c751_i32_116 = arith.constant 751 : i32
    %183 = tpu.dynamic_rotate %146 by %c751_i32_116 dim 1 : vector<2x768xf32>, i32 -> vector<2x768xf32>
    %c17_117 = arith.constant 17 : index
    %c0_118 = arith.constant 0 : index
    %184 = vector.load %arg3[%c17_117, %c0_118] : memref<32x768xf32, #tpu.memory_space<vmem>>, vector<1x768xf32>
    %185 = vector.broadcast %184 : vector<1x768xf32> to vector<2x768xf32>
    %186 = arith.mulf %183, %185 : vector<2x768xf32>
    %c16_119 = arith.constant 16 : index
    %c0_120 = arith.constant 0 : index
    %187 = vector.load %arg7[%c16_119, %c0_120] : memref<64x768xf32, #tpu.memory_space<vmem>>, vector<2x768xf32>
    tpu.vector_store %arg7[%c16_119, %c0_120], %186 {strides = array<i32>} : memref<64x768xf32, #tpu.memory_space<vmem>>, vector<2x768xf32>,
    %c2_i32_121 = arith.constant 2 : i32
    %188 = tpu.dynamic_rotate %146 by %c2_i32_121 dim 1 : vector<2x768xf32>, i32 -> vector<2x768xf32>
    %c10_122 = arith.constant 10 : index
    %c0_123 = arith.constant 0 : index
    %189 = vector.load %arg3[%c10_122, %c0_123] : memref<32x768xf32, #tpu.memory_space<vmem>>, vector<1x768xf32>
    %190 = vector.broadcast %189 : vector<1x768xf32> to vector<2x768xf32>
    %191 = arith.mulf %188, %190 : vector<2x768xf32>
    %c18_124 = arith.constant 18 : index
    %c0_125 = arith.constant 0 : index
    %192 = vector.load %arg7[%c18_124, %c0_125] : memref<64x768xf32, #tpu.memory_space<vmem>>, vector<2x768xf32>
    tpu.vector_store %arg7[%c18_124, %c0_125], %191 {strides = array<i32>} : memref<64x768xf32, #tpu.memory_space<vmem>>, vector<2x768xf32>,
    %c766_i32_126 = arith.constant 766 : i32
    %193 = tpu.dynamic_rotate %146 by %c766_i32_126 dim 1 : vector<2x768xf32>, i32 -> vector<2x768xf32>
    %c13_127 = arith.constant 13 : index
    %c0_128 = arith.constant 0 : index
    %194 = vector.load %arg3[%c13_127, %c0_128] : memref<32x768xf32, #tpu.memory_space<vmem>>, vector<1x768xf32>
    %195 = vector.broadcast %194 : vector<1x768xf32> to vector<2x768xf32>
    %196 = arith.mulf %193, %195 : vector<2x768xf32>
    %c20_129 = arith.constant 20 : index
    %c0_130 = arith.constant 0 : index
    %197 = vector.load %arg7[%c20_129, %c0_130] : memref<64x768xf32, #tpu.memory_space<vmem>>, vector<2x768xf32>
    tpu.vector_store %arg7[%c20_129, %c0_130], %196 {strides = array<i32>} : memref<64x768xf32, #tpu.memory_space<vmem>>, vector<2x768xf32>,
    %c0_131 = arith.constant 0 : index
    %c128_132 = arith.constant 128 : index
    %198 = vector.load %arg4[%c0_131, %c128_132] : memref<16x1664xf32, #tpu.memory_space<vmem>>, vector<16x22xf32>
    %c0_133 = arith.constant 0 : index
    %c0_134 = arith.constant 0 : index
    %199 = vector.load %arg7[%c0_133, %c0_134] : memref<64x768xf32, #tpu.memory_space<vmem>>, vector<22x768xf32>
    %cst_135 = arith.constant dense<0.000000e+00> : vector<16x768xf32>
    %200 = tpu.matmul %198, %199, %cst_135 {dimension_numbers = #tpu.dot_dimension_numbers<[1], [0], [0], [1], [0, 0, 1, 1], [], []>} : vector<16x22xf32>, vector<22x768xf32>, vector<16x768xf32> -> vector<16x768xf32>
    %c0_136 = arith.constant 0 : index
    %c1_137 = arith.constant 1 : index
    %201 = vector.load %arg5[%c0_136, %c1_137] : memref<16x13xf32, #tpu.memory_space<vmem>>, vector<16x1xf32>
    %202 = vector.broadcast %201 : vector<16x1xf32> to vector<16x768xf32>
    %203 = arith.addf %200, %202 : vector<16x768xf32>
    %204 = vector.extract_strided_slice %203 {offsets = [0, 0], sizes = [7, 768], strides = [1, 1]} : vector<16x768xf32> to vector<7x768xf32>
    %cst_138 = arith.constant 0.000000e+00 : f32
    %205 = vector.broadcast %cst_138 : f32 to vector<7x768xf32>
    %206 = arith.cmpf oge, %204, %205 : vector<7x768xf32>
    %cst_139 = arith.constant 3.000000e-01 : f32
    %207 = vector.broadcast %cst_139 : f32 to vector<7x768xf32>
    %208 = arith.mulf %207, %204 : vector<7x768xf32>
    %209 = arith.select %206, %204, %208 : vector<7x768xi1>, vector<7x768xf32>
    %210 = vector.extract_strided_slice %203 {offsets = [8, 0], sizes = [7, 768], strides = [1, 1]} : vector<16x768xf32> to vector<7x768xf32>
    %cst_140 = arith.constant 0.000000e+00 : f32
    %211 = vector.broadcast %cst_140 : f32 to vector<7x768xf32>
    %212 = arith.cmpf oge, %210, %211 : vector<7x768xf32>
    %cst_141 = arith.constant 3.000000e-01 : f32
    %213 = vector.broadcast %cst_141 : f32 to vector<7x768xf32>
    %214 = arith.mulf %213, %210 : vector<7x768xf32>
    %215 = arith.select %212, %210, %214 : vector<7x768xi1>, vector<7x768xf32>
    %c4_i32 = arith.constant 4 : i32
    %216 = tpu.dynamic_rotate %209 by %c4_i32 dim 1 : vector<7x768xf32>, i32 -> vector<7x768xf32>
    %c24_142 = arith.constant 24 : index
    %c0_143 = arith.constant 0 : index
    %217 = vector.load %arg3[%c24_142, %c0_143] : memref<32x768xf32, #tpu.memory_space<vmem>>, vector<1x768xf32>
    %218 = vector.broadcast %217 : vector<1x768xf32> to vector<7x768xf32>
    %219 = arith.mulf %216, %218 : vector<7x768xf32>
    %c0_144 = arith.constant 0 : index
    %c0_145 = arith.constant 0 : index
    %220 = vector.load %arg7[%c0_144, %c0_145] : memref<64x768xf32, #tpu.memory_space<vmem>>, vector<7x768xf32>
    tpu.vector_store %arg7[%c0_144, %c0_145], %219 {strides = array<i32>} : memref<64x768xf32, #tpu.memory_space<vmem>>, vector<7x768xf32>,
    %c3_i32 = arith.constant 3 : i32
    %221 = tpu.dynamic_rotate %209 by %c3_i32 dim 1 : vector<7x768xf32>, i32 -> vector<7x768xf32>
    %c25 = arith.constant 25 : index
    %c0_146 = arith.constant 0 : index
    %222 = vector.load %arg3[%c25, %c0_146] : memref<32x768xf32, #tpu.memory_space<vmem>>, vector<1x768xf32>
    %223 = vector.broadcast %222 : vector<1x768xf32> to vector<7x768xf32>
    %224 = arith.mulf %221, %223 : vector<7x768xf32>
    %c7_147 = arith.constant 7 : index
    %c0_148 = arith.constant 0 : index
    %225 = vector.load %arg7[%c7_147, %c0_148] : memref<64x768xf32, #tpu.memory_space<vmem>>, vector<7x768xf32>
    tpu.vector_store %arg7[%c7_147, %c0_148], %224 {strides = array<i32>} : memref<64x768xf32, #tpu.memory_space<vmem>>, vector<7x768xf32>,
    %c2_i32_149 = arith.constant 2 : i32
    %226 = tpu.dynamic_rotate %209 by %c2_i32_149 dim 1 : vector<7x768xf32>, i32 -> vector<7x768xf32>
    %c10_150 = arith.constant 10 : index
    %c0_151 = arith.constant 0 : index
    %227 = vector.load %arg3[%c10_150, %c0_151] : memref<32x768xf32, #tpu.memory_space<vmem>>, vector<1x768xf32>
    %228 = vector.broadcast %227 : vector<1x768xf32> to vector<7x768xf32>
    %229 = arith.mulf %226, %228 : vector<7x768xf32>
    %c14_152 = arith.constant 14 : index
    %c0_153 = arith.constant 0 : index
    %230 = vector.load %arg7[%c14_152, %c0_153] : memref<64x768xf32, #tpu.memory_space<vmem>>, vector<7x768xf32>
    tpu.vector_store %arg7[%c14_152, %c0_153], %229 {strides = array<i32>} : memref<64x768xf32, #tpu.memory_space<vmem>>, vector<7x768xf32>,
    %c1_i32_154 = arith.constant 1 : i32
    %231 = tpu.dynamic_rotate %209 by %c1_i32_154 dim 1 : vector<7x768xf32>, i32 -> vector<7x768xf32>
    %c11_155 = arith.constant 11 : index
    %c0_156 = arith.constant 0 : index
    %232 = vector.load %arg3[%c11_155, %c0_156] : memref<32x768xf32, #tpu.memory_space<vmem>>, vector<1x768xf32>
    %233 = vector.broadcast %232 : vector<1x768xf32> to vector<7x768xf32>
    %234 = arith.mulf %231, %233 : vector<7x768xf32>
    %c21_157 = arith.constant 21 : index
    %c0_158 = arith.constant 0 : index
    %235 = vector.load %arg7[%c21_157, %c0_158] : memref<64x768xf32, #tpu.memory_space<vmem>>, vector<7x768xf32>
    tpu.vector_store %arg7[%c21_157, %c0_158], %234 {strides = array<i32>} : memref<64x768xf32, #tpu.memory_space<vmem>>, vector<7x768xf32>,
    %c28_159 = arith.constant 28 : index
    %c0_160 = arith.constant 0 : index
    %236 = vector.load %arg7[%c28_159, %c0_160] : memref<64x768xf32, #tpu.memory_space<vmem>>, vector<7x768xf32>
    tpu.vector_store %arg7[%c28_159, %c0_160], %209 {strides = array<i32>} : memref<64x768xf32, #tpu.memory_space<vmem>>, vector<7x768xf32>,
    %c767_i32_161 = arith.constant 767 : i32
    %237 = tpu.dynamic_rotate %209 by %c767_i32_161 dim 1 : vector<7x768xf32>, i32 -> vector<7x768xf32>
    %c12_162 = arith.constant 12 : index
    %c0_163 = arith.constant 0 : index
    %238 = vector.load %arg3[%c12_162, %c0_163] : memref<32x768xf32, #tpu.memory_space<vmem>>, vector<1x768xf32>
    %239 = vector.broadcast %238 : vector<1x768xf32> to vector<7x768xf32>
    %240 = arith.mulf %237, %239 : vector<7x768xf32>
    %c35 = arith.constant 35 : index
    %c0_164 = arith.constant 0 : index
    %241 = vector.load %arg7[%c35, %c0_164] : memref<64x768xf32, #tpu.memory_space<vmem>>, vector<7x768xf32>
    tpu.vector_store %arg7[%c35, %c0_164], %240 {strides = array<i32>} : memref<64x768xf32, #tpu.memory_space<vmem>>, vector<7x768xf32>,
    %c766_i32_165 = arith.constant 766 : i32
    %242 = tpu.dynamic_rotate %209 by %c766_i32_165 dim 1 : vector<7x768xf32>, i32 -> vector<7x768xf32>
    %c13_166 = arith.constant 13 : index
    %c0_167 = arith.constant 0 : index
    %243 = vector.load %arg3[%c13_166, %c0_167] : memref<32x768xf32, #tpu.memory_space<vmem>>, vector<1x768xf32>
    %244 = vector.broadcast %243 : vector<1x768xf32> to vector<7x768xf32>
    %245 = arith.mulf %242, %244 : vector<7x768xf32>
    %c42_168 = arith.constant 42 : index
    %c0_169 = arith.constant 0 : index
    %246 = vector.load %arg7[%c42_168, %c0_169] : memref<64x768xf32, #tpu.memory_space<vmem>>, vector<7x768xf32>
    tpu.vector_store %arg7[%c42_168, %c0_169], %245 {strides = array<i32>} : memref<64x768xf32, #tpu.memory_space<vmem>>, vector<7x768xf32>,
    %c765_i32 = arith.constant 765 : i32
    %247 = tpu.dynamic_rotate %209 by %c765_i32 dim 1 : vector<7x768xf32>, i32 -> vector<7x768xf32>
    %c26_170 = arith.constant 26 : index
    %c0_171 = arith.constant 0 : index
    %248 = vector.load %arg3[%c26_170, %c0_171] : memref<32x768xf32, #tpu.memory_space<vmem>>, vector<1x768xf32>
    %249 = vector.broadcast %248 : vector<1x768xf32> to vector<7x768xf32>
    %250 = arith.mulf %247, %249 : vector<7x768xf32>
    %c49 = arith.constant 49 : index
    %c0_172 = arith.constant 0 : index
    %251 = vector.load %arg7[%c49, %c0_172] : memref<64x768xf32, #tpu.memory_space<vmem>>, vector<7x768xf32>
    tpu.vector_store %arg7[%c49, %c0_172], %250 {strides = array<i32>} : memref<64x768xf32, #tpu.memory_space<vmem>>, vector<7x768xf32>,
    %c764_i32 = arith.constant 764 : i32
    %252 = tpu.dynamic_rotate %209 by %c764_i32 dim 1 : vector<7x768xf32>, i32 -> vector<7x768xf32>
    %c27 = arith.constant 27 : index
    %c0_173 = arith.constant 0 : index
    %253 = vector.load %arg3[%c27, %c0_173] : memref<32x768xf32, #tpu.memory_space<vmem>>, vector<1x768xf32>
    %254 = vector.broadcast %253 : vector<1x768xf32> to vector<7x768xf32>
    %255 = arith.mulf %252, %254 : vector<7x768xf32>
    %c56 = arith.constant 56 : index
    %c0_174 = arith.constant 0 : index
    %256 = vector.load %arg7[%c56, %c0_174] : memref<64x768xf32, #tpu.memory_space<vmem>>, vector<7x768xf32>
    tpu.vector_store %arg7[%c56, %c0_174], %255 {strides = array<i32>} : memref<64x768xf32, #tpu.memory_space<vmem>>, vector<7x768xf32>,
    %c0_175 = arith.constant 0 : index
    %c256 = arith.constant 256 : index
    %257 = vector.load %arg4[%c0_175, %c256] : memref<16x1664xf32, #tpu.memory_space<vmem>>, vector<7x63xf32>
    %c0_176 = arith.constant 0 : index
    %c0_177 = arith.constant 0 : index
    %258 = vector.load %arg7[%c0_176, %c0_177] : memref<64x768xf32, #tpu.memory_space<vmem>>, vector<63x768xf32>
    %cst_178 = arith.constant dense<0.000000e+00> : vector<7x768xf32>
    %259 = tpu.matmul %257, %258, %cst_178 {dimension_numbers = #tpu.dot_dimension_numbers<[1], [0], [0], [1], [0, 0, 1, 1], [], []>} : vector<7x63xf32>, vector<63x768xf32>, vector<7x768xf32> -> vector<7x768xf32>
    %c0_179 = arith.constant 0 : index
    %c2_180 = arith.constant 2 : index
    %260 = vector.load %arg5[%c0_179, %c2_180] : memref<16x13xf32, #tpu.memory_space<vmem>>, vector<7x1xf32>
    %261 = vector.broadcast %260 : vector<7x1xf32> to vector<7x768xf32>
    %262 = arith.addf %259, %261 : vector<7x768xf32>
    %cst_181 = arith.constant 0.000000e+00 : f32
    %263 = vector.broadcast %cst_181 : f32 to vector<7x768xf32>
    %264 = arith.cmpf oge, %262, %263 : vector<7x768xf32>
    %cst_182 = arith.constant 3.000000e-01 : f32
    %265 = vector.broadcast %cst_182 : f32 to vector<7x768xf32>
    %266 = arith.mulf %265, %262 : vector<7x768xf32>
    %267 = arith.select %264, %262, %266 : vector<7x768xi1>, vector<7x768xf32>
    %c64_i32 = arith.constant 64 : i32
    %268 = tpu.dynamic_rotate %267 by %c64_i32 dim 1 : vector<7x768xf32>, i32 -> vector<7x768xf32>
    %c28_183 = arith.constant 28 : index
    %c0_184 = arith.constant 0 : index
    %269 = vector.load %arg3[%c28_183, %c0_184] : memref<32x768xf32, #tpu.memory_space<vmem>>, vector<1x768xf32>
    %270 = vector.broadcast %269 : vector<1x768xf32> to vector<7x768xf32>
    %271 = arith.mulf %268, %270 : vector<7x768xf32>
    %c0_185 = arith.constant 0 : index
    %c0_186 = arith.constant 0 : index
    %272 = vector.load %arg7[%c0_185, %c0_186] : memref<64x768xf32, #tpu.memory_space<vmem>>, vector<7x768xf32>
    tpu.vector_store %arg7[%c0_185, %c0_186], %271 {strides = array<i32>} : memref<64x768xf32, #tpu.memory_space<vmem>>, vector<7x768xf32>,
    %c48_i32 = arith.constant 48 : i32
    %273 = tpu.dynamic_rotate %267 by %c48_i32 dim 1 : vector<7x768xf32>, i32 -> vector<7x768xf32>
    %c29 = arith.constant 29 : index
    %c0_187 = arith.constant 0 : index
    %274 = vector.load %arg3[%c29, %c0_187] : memref<32x768xf32, #tpu.memory_space<vmem>>, vector<1x768xf32>
    %275 = vector.broadcast %274 : vector<1x768xf32> to vector<7x768xf32>
    %276 = arith.mulf %273, %275 : vector<7x768xf32>
    %c7_188 = arith.constant 7 : index
    %c0_189 = arith.constant 0 : index
    %277 = vector.load %arg7[%c7_188, %c0_189] : memref<64x768xf32, #tpu.memory_space<vmem>>, vector<7x768xf32>
    tpu.vector_store %arg7[%c7_188, %c0_189], %276 {strides = array<i32>} : memref<64x768xf32, #tpu.memory_space<vmem>>, vector<7x768xf32>,
    %c32_i32_190 = arith.constant 32 : i32
    %278 = tpu.dynamic_rotate %267 by %c32_i32_190 dim 1 : vector<7x768xf32>, i32 -> vector<7x768xf32>
    %c2_191 = arith.constant 2 : index
    %c0_192 = arith.constant 0 : index
    %279 = vector.load %arg3[%c2_191, %c0_192] : memref<32x768xf32, #tpu.memory_space<vmem>>, vector<1x768xf32>
    %280 = vector.broadcast %279 : vector<1x768xf32> to vector<7x768xf32>
    %281 = arith.mulf %278, %280 : vector<7x768xf32>
    %c14_193 = arith.constant 14 : index
    %c0_194 = arith.constant 0 : index
    %282 = vector.load %arg7[%c14_193, %c0_194] : memref<64x768xf32, #tpu.memory_space<vmem>>, vector<7x768xf32>
    tpu.vector_store %arg7[%c14_193, %c0_194], %281 {strides = array<i32>} : memref<64x768xf32, #tpu.memory_space<vmem>>, vector<7x768xf32>,
    %c16_i32_195 = arith.constant 16 : i32
    %283 = tpu.dynamic_rotate %267 by %c16_i32_195 dim 1 : vector<7x768xf32>, i32 -> vector<7x768xf32>
    %c7_196 = arith.constant 7 : index
    %c0_197 = arith.constant 0 : index
    %284 = vector.load %arg3[%c7_196, %c0_197] : memref<32x768xf32, #tpu.memory_space<vmem>>, vector<1x768xf32>
    %285 = vector.broadcast %284 : vector<1x768xf32> to vector<7x768xf32>
    %286 = arith.mulf %283, %285 : vector<7x768xf32>
    %c21_198 = arith.constant 21 : index
    %c0_199 = arith.constant 0 : index
    %287 = vector.load %arg7[%c21_198, %c0_199] : memref<64x768xf32, #tpu.memory_space<vmem>>, vector<7x768xf32>
    tpu.vector_store %arg7[%c21_198, %c0_199], %286 {strides = array<i32>} : memref<64x768xf32, #tpu.memory_space<vmem>>, vector<7x768xf32>,
    %c28_200 = arith.constant 28 : index
    %c0_201 = arith.constant 0 : index
    %288 = vector.load %arg7[%c28_200, %c0_201] : memref<64x768xf32, #tpu.memory_space<vmem>>, vector<7x768xf32>
    tpu.vector_store %arg7[%c28_200, %c0_201], %267 {strides = array<i32>} : memref<64x768xf32, #tpu.memory_space<vmem>>, vector<7x768xf32>,
    %c752_i32_202 = arith.constant 752 : i32
    %289 = tpu.dynamic_rotate %267 by %c752_i32_202 dim 1 : vector<7x768xf32>, i32 -> vector<7x768xf32>
    %c16_203 = arith.constant 16 : index
    %c0_204 = arith.constant 0 : index
    %290 = vector.load %arg3[%c16_203, %c0_204] : memref<32x768xf32, #tpu.memory_space<vmem>>, vector<1x768xf32>
    %291 = vector.broadcast %290 : vector<1x768xf32> to vector<7x768xf32>
    %292 = arith.mulf %289, %291 : vector<7x768xf32>
    %c35_205 = arith.constant 35 : index
    %c0_206 = arith.constant 0 : index
    %293 = vector.load %arg7[%c35_205, %c0_206] : memref<64x768xf32, #tpu.memory_space<vmem>>, vector<7x768xf32>
    tpu.vector_store %arg7[%c35_205, %c0_206], %292 {strides = array<i32>} : memref<64x768xf32, #tpu.memory_space<vmem>>, vector<7x768xf32>,
    %c736_i32_207 = arith.constant 736 : i32
    %294 = tpu.dynamic_rotate %267 by %c736_i32_207 dim 1 : vector<7x768xf32>, i32 -> vector<7x768xf32>
    %c21_208 = arith.constant 21 : index
    %c0_209 = arith.constant 0 : index
    %295 = vector.load %arg3[%c21_208, %c0_209] : memref<32x768xf32, #tpu.memory_space<vmem>>, vector<1x768xf32>
    %296 = vector.broadcast %295 : vector<1x768xf32> to vector<7x768xf32>
    %297 = arith.mulf %294, %296 : vector<7x768xf32>
    %c42_210 = arith.constant 42 : index
    %c0_211 = arith.constant 0 : index
    %298 = vector.load %arg7[%c42_210, %c0_211] : memref<64x768xf32, #tpu.memory_space<vmem>>, vector<7x768xf32>
    tpu.vector_store %arg7[%c42_210, %c0_211], %297 {strides = array<i32>} : memref<64x768xf32, #tpu.memory_space<vmem>>, vector<7x768xf32>,
    %c720_i32 = arith.constant 720 : i32
    %299 = tpu.dynamic_rotate %267 by %c720_i32 dim 1 : vector<7x768xf32>, i32 -> vector<7x768xf32>
    %c30_212 = arith.constant 30 : index
    %c0_213 = arith.constant 0 : index
    %300 = vector.load %arg3[%c30_212, %c0_213] : memref<32x768xf32, #tpu.memory_space<vmem>>, vector<1x768xf32>
    %301 = vector.broadcast %300 : vector<1x768xf32> to vector<7x768xf32>
    %302 = arith.mulf %299, %301 : vector<7x768xf32>
    %c49_214 = arith.constant 49 : index
    %c0_215 = arith.constant 0 : index
    %303 = vector.load %arg7[%c49_214, %c0_215] : memref<64x768xf32, #tpu.memory_space<vmem>>, vector<7x768xf32>
    tpu.vector_store %arg7[%c49_214, %c0_215], %302 {strides = array<i32>} : memref<64x768xf32, #tpu.memory_space<vmem>>, vector<7x768xf32>,
    %c704_i32 = arith.constant 704 : i32
    %304 = tpu.dynamic_rotate %267 by %c704_i32 dim 1 : vector<7x768xf32>, i32 -> vector<7x768xf32>
    %c31 = arith.constant 31 : index
    %c0_216 = arith.constant 0 : index
    %305 = vector.load %arg3[%c31, %c0_216] : memref<32x768xf32, #tpu.memory_space<vmem>>, vector<1x768xf32>
    %306 = vector.broadcast %305 : vector<1x768xf32> to vector<7x768xf32>
    %307 = arith.mulf %304, %306 : vector<7x768xf32>
    %c56_217 = arith.constant 56 : index
    %c0_218 = arith.constant 0 : index
    %308 = vector.load %arg7[%c56_217, %c0_218] : memref<64x768xf32, #tpu.memory_space<vmem>>, vector<7x768xf32>
    tpu.vector_store %arg7[%c56_217, %c0_218], %307 {strides = array<i32>} : memref<64x768xf32, #tpu.memory_space<vmem>>, vector<7x768xf32>,
    %c0_219 = arith.constant 0 : index
    %c384 = arith.constant 384 : index
    %309 = vector.load %arg4[%c0_219, %c384] : memref<16x1664xf32, #tpu.memory_space<vmem>>, vector<7x63xf32>
    %c0_220 = arith.constant 0 : index
    %c0_221 = arith.constant 0 : index
    %310 = vector.load %arg7[%c0_220, %c0_221] : memref<64x768xf32, #tpu.memory_space<vmem>>, vector<63x768xf32>
    %cst_222 = arith.constant dense<0.000000e+00> : vector<7x768xf32>
    %311 = tpu.matmul %309, %310, %cst_222 {dimension_numbers = #tpu.dot_dimension_numbers<[1], [0], [0], [1], [0, 0, 1, 1], [], []>} : vector<7x63xf32>, vector<63x768xf32>, vector<7x768xf32> -> vector<7x768xf32>
    %c0_223 = arith.constant 0 : index
    %c3_224 = arith.constant 3 : index
    %312 = vector.load %arg5[%c0_223, %c3_224] : memref<16x13xf32, #tpu.memory_space<vmem>>, vector<7x1xf32>
    %313 = vector.broadcast %312 : vector<7x1xf32> to vector<7x768xf32>
    %314 = arith.addf %311, %313 : vector<7x768xf32>
    %c32_i32_225 = arith.constant 32 : i32
    %315 = tpu.dynamic_rotate %215 by %c32_i32_225 dim 1 : vector<7x768xf32>, i32 -> vector<7x768xf32>
    %c2_226 = arith.constant 2 : index
    %c0_227 = arith.constant 0 : index
    %316 = vector.load %arg3[%c2_226, %c0_227] : memref<32x768xf32, #tpu.memory_space<vmem>>, vector<1x768xf32>
    %317 = vector.broadcast %316 : vector<1x768xf32> to vector<7x768xf32>
    %318 = arith.mulf %315, %317 : vector<7x768xf32>
    %c0_228 = arith.constant 0 : index
    %c0_229 = arith.constant 0 : index
    %319 = vector.load %arg7[%c0_228, %c0_229] : memref<64x768xf32, #tpu.memory_space<vmem>>, vector<7x768xf32>
    tpu.vector_store %arg7[%c0_228, %c0_229], %318 {strides = array<i32>} : memref<64x768xf32, #tpu.memory_space<vmem>>, vector<7x768xf32>,
    %c16_i32_230 = arith.constant 16 : i32
    %320 = tpu.dynamic_rotate %215 by %c16_i32_230 dim 1 : vector<7x768xf32>, i32 -> vector<7x768xf32>
    %c7_231 = arith.constant 7 : index
    %c0_232 = arith.constant 0 : index
    %321 = vector.load %arg3[%c7_231, %c0_232] : memref<32x768xf32, #tpu.memory_space<vmem>>, vector<1x768xf32>
    %322 = vector.broadcast %321 : vector<1x768xf32> to vector<7x768xf32>
    %323 = arith.mulf %320, %322 : vector<7x768xf32>
    %c7_233 = arith.constant 7 : index
    %c0_234 = arith.constant 0 : index
    %324 = vector.load %arg7[%c7_233, %c0_234] : memref<64x768xf32, #tpu.memory_space<vmem>>, vector<7x768xf32>
    tpu.vector_store %arg7[%c7_233, %c0_234], %323 {strides = array<i32>} : memref<64x768xf32, #tpu.memory_space<vmem>>, vector<7x768xf32>,
    %c14_235 = arith.constant 14 : index
    %c0_236 = arith.constant 0 : index
    %325 = vector.load %arg7[%c14_235, %c0_236] : memref<64x768xf32, #tpu.memory_space<vmem>>, vector<7x768xf32>
    tpu.vector_store %arg7[%c14_235, %c0_236], %215 {strides = array<i32>} : memref<64x768xf32, #tpu.memory_space<vmem>>, vector<7x768xf32>,
    %c752_i32_237 = arith.constant 752 : i32
    %326 = tpu.dynamic_rotate %215 by %c752_i32_237 dim 1 : vector<7x768xf32>, i32 -> vector<7x768xf32>
    %c16_238 = arith.constant 16 : index
    %c0_239 = arith.constant 0 : index
    %327 = vector.load %arg3[%c16_238, %c0_239] : memref<32x768xf32, #tpu.memory_space<vmem>>, vector<1x768xf32>
    %328 = vector.broadcast %327 : vector<1x768xf32> to vector<7x768xf32>
    %329 = arith.mulf %326, %328 : vector<7x768xf32>
    %c21_240 = arith.constant 21 : index
    %c0_241 = arith.constant 0 : index
    %330 = vector.load %arg7[%c21_240, %c0_241] : memref<64x768xf32, #tpu.memory_space<vmem>>, vector<7x768xf32>
    tpu.vector_store %arg7[%c21_240, %c0_241], %329 {strides = array<i32>} : memref<64x768xf32, #tpu.memory_space<vmem>>, vector<7x768xf32>,
    %c736_i32_242 = arith.constant 736 : i32
    %331 = tpu.dynamic_rotate %215 by %c736_i32_242 dim 1 : vector<7x768xf32>, i32 -> vector<7x768xf32>
    %c21_243 = arith.constant 21 : index
    %c0_244 = arith.constant 0 : index
    %332 = vector.load %arg3[%c21_243, %c0_244] : memref<32x768xf32, #tpu.memory_space<vmem>>, vector<1x768xf32>
    %333 = vector.broadcast %332 : vector<1x768xf32> to vector<7x768xf32>
    %334 = arith.mulf %331, %333 : vector<7x768xf32>
    %c28_245 = arith.constant 28 : index
    %c0_246 = arith.constant 0 : index
    %335 = vector.load %arg7[%c28_245, %c0_246] : memref<64x768xf32, #tpu.memory_space<vmem>>, vector<7x768xf32>
    tpu.vector_store %arg7[%c28_245, %c0_246], %334 {strides = array<i32>} : memref<64x768xf32, #tpu.memory_space<vmem>>, vector<7x768xf32>,
    %c0_247 = arith.constant 0 : index
    %c512 = arith.constant 512 : index
    %336 = vector.load %arg4[%c0_247, %c512] : memref<16x1664xf32, #tpu.memory_space<vmem>>, vector<7x35xf32>
    %c0_248 = arith.constant 0 : index
    %c0_249 = arith.constant 0 : index
    %337 = vector.load %arg7[%c0_248, %c0_249] : memref<64x768xf32, #tpu.memory_space<vmem>>, vector<35x768xf32>
    %cst_250 = arith.constant dense<0.000000e+00> : vector<7x768xf32>
    %338 = tpu.matmul %336, %337, %cst_250 {dimension_numbers = #tpu.dot_dimension_numbers<[1], [0], [0], [1], [0, 0, 1, 1], [], []>} : vector<7x35xf32>, vector<35x768xf32>, vector<7x768xf32> -> vector<7x768xf32>
    %c0_251 = arith.constant 0 : index
    %c4_252 = arith.constant 4 : index
    %339 = vector.load %arg5[%c0_251, %c4_252] : memref<16x13xf32, #tpu.memory_space<vmem>>, vector<7x1xf32>
    %340 = vector.broadcast %339 : vector<7x1xf32> to vector<7x768xf32>
    %341 = arith.addf %338, %340 : vector<7x768xf32>
    %cst_253 = arith.constant 0.000000e+00 : f32
    %342 = vector.broadcast %cst_253 : f32 to vector<7x768xf32>
    %343 = arith.cmpf oge, %314, %342 : vector<7x768xf32>
    %cst_254 = arith.constant 3.000000e-01 : f32
    %344 = vector.broadcast %cst_254 : f32 to vector<7x768xf32>
    %345 = arith.mulf %344, %314 : vector<7x768xf32>
    %346 = arith.select %343, %314, %345 : vector<7x768xi1>, vector<7x768xf32>
    %cst_255 = arith.constant 0.000000e+00 : f32
    %347 = vector.broadcast %cst_255 : f32 to vector<7x768xf32>
    %348 = arith.cmpf oge, %341, %347 : vector<7x768xf32>
    %cst_256 = arith.constant 3.000000e-01 : f32
    %349 = vector.broadcast %cst_256 : f32 to vector<7x768xf32>
    %350 = arith.mulf %349, %341 : vector<7x768xf32>
    %351 = arith.select %348, %341, %350 : vector<7x768xi1>, vector<7x768xf32>
    %c0_257 = arith.constant 0 : index
    %c640 = arith.constant 640 : index
    %352 = vector.load %arg4[%c0_257, %c640] : memref<16x1664xf32, #tpu.memory_space<vmem>>, vector<2x7xf32>
    %c0_258 = arith.constant 0 : index
    %c768 = arith.constant 768 : index
    %353 = vector.load %arg4[%c0_258, %c768] : memref<16x1664xf32, #tpu.memory_space<vmem>>, vector<2x7xf32>
    %cst_259 = arith.constant dense<0.000000e+00> : vector<2x768xf32>
    %354 = tpu.matmul %352, %346, %cst_259 {dimension_numbers = #tpu.dot_dimension_numbers<[1], [0], [0], [1], [0, 0, 1, 1], [], []>} : vector<2x7xf32>, vector<7x768xf32>, vector<2x768xf32> -> vector<2x768xf32>
    %cst_260 = arith.constant dense<0.000000e+00> : vector<2x768xf32>
    %355 = tpu.matmul %353, %351, %cst_260 {dimension_numbers = #tpu.dot_dimension_numbers<[1], [0], [0], [1], [0, 0, 1, 1], [], []>} : vector<2x7xf32>, vector<7x768xf32>, vector<2x768xf32> -> vector<2x768xf32>
    %356 = arith.addf %354, %355 : vector<2x768xf32>
    %c0_261 = arith.constant 0 : index
    %c5_262 = arith.constant 5 : index
    %357 = vector.load %arg5[%c0_261, %c5_262] : memref<16x13xf32, #tpu.memory_space<vmem>>, vector<2x1xf32>
    %358 = vector.broadcast %357 : vector<2x1xf32> to vector<2x768xf32>
    %359 = arith.addf %356, %358 : vector<2x768xf32>
    %360 = arith.addf %359, %146 : vector<2x768xf32>
    %cst_263 = arith.constant 0.000000e+00 : f32
    %361 = vector.broadcast %cst_263 : f32 to vector<2x768xf32>
    %362 = arith.cmpf oge, %360, %361 : vector<2x768xf32>
    %cst_264 = arith.constant 3.000000e-01 : f32
    %363 = vector.broadcast %cst_264 : f32 to vector<2x768xf32>
    %364 = arith.mulf %363, %360 : vector<2x768xf32>
    %365 = arith.select %362, %360, %364 : vector<2x768xi1>, vector<2x768xf32>
    %c17_i32_265 = arith.constant 17 : i32
    %366 = tpu.dynamic_rotate %365 by %c17_i32_265 dim 1 : vector<2x768xf32>, i32 -> vector<2x768xf32>
    %c6_266 = arith.constant 6 : index
    %c0_267 = arith.constant 0 : index
    %367 = vector.load %arg3[%c6_266, %c0_267] : memref<32x768xf32, #tpu.memory_space<vmem>>, vector<1x768xf32>
    %368 = vector.broadcast %367 : vector<1x768xf32> to vector<2x768xf32>
    %369 = arith.mulf %366, %368 : vector<2x768xf32>
    %c0_268 = arith.constant 0 : index
    %c0_269 = arith.constant 0 : index
    %370 = vector.load %arg7[%c0_268, %c0_269] : memref<64x768xf32, #tpu.memory_space<vmem>>, vector<2x768xf32>
    tpu.vector_store %arg7[%c0_268, %c0_269], %369 {strides = array<i32>} : memref<64x768xf32, #tpu.memory_space<vmem>>, vector<2x768xf32>,
    %c16_i32_270 = arith.constant 16 : i32
    %371 = tpu.dynamic_rotate %365 by %c16_i32_270 dim 1 : vector<2x768xf32>, i32 -> vector<2x768xf32>
    %c7_271 = arith.constant 7 : index
    %c0_272 = arith.constant 0 : index
    %372 = vector.load %arg3[%c7_271, %c0_272] : memref<32x768xf32, #tpu.memory_space<vmem>>, vector<1x768xf32>
    %373 = vector.broadcast %372 : vector<1x768xf32> to vector<2x768xf32>
    %374 = arith.mulf %371, %373 : vector<2x768xf32>
    %c2_273 = arith.constant 2 : index
    %c0_274 = arith.constant 0 : index
    %375 = vector.load %arg7[%c2_273, %c0_274] : memref<64x768xf32, #tpu.memory_space<vmem>>, vector<2x768xf32>
    tpu.vector_store %arg7[%c2_273, %c0_274], %374 {strides = array<i32>} : memref<64x768xf32, #tpu.memory_space<vmem>>, vector<2x768xf32>,
    %c15_i32_275 = arith.constant 15 : i32
    %376 = tpu.dynamic_rotate %365 by %c15_i32_275 dim 1 : vector<2x768xf32>, i32 -> vector<2x768xf32>
    %c8_276 = arith.constant 8 : index
    %c0_277 = arith.constant 0 : index
    %377 = vector.load %arg3[%c8_276, %c0_277] : memref<32x768xf32, #tpu.memory_space<vmem>>, vector<1x768xf32>
    %378 = vector.broadcast %377 : vector<1x768xf32> to vector<2x768xf32>
    %379 = arith.mulf %376, %378 : vector<2x768xf32>
    %c4_278 = arith.constant 4 : index
    %c0_279 = arith.constant 0 : index
    %380 = vector.load %arg7[%c4_278, %c0_279] : memref<64x768xf32, #tpu.memory_space<vmem>>, vector<2x768xf32>
    tpu.vector_store %arg7[%c4_278, %c0_279], %379 {strides = array<i32>} : memref<64x768xf32, #tpu.memory_space<vmem>>, vector<2x768xf32>,
    %c1_i32_280 = arith.constant 1 : i32
    %381 = tpu.dynamic_rotate %365 by %c1_i32_280 dim 1 : vector<2x768xf32>, i32 -> vector<2x768xf32>
    %c11_281 = arith.constant 11 : index
    %c0_282 = arith.constant 0 : index
    %382 = vector.load %arg3[%c11_281, %c0_282] : memref<32x768xf32, #tpu.memory_space<vmem>>, vector<1x768xf32>
    %383 = vector.broadcast %382 : vector<1x768xf32> to vector<2x768xf32>
    %384 = arith.mulf %381, %383 : vector<2x768xf32>
    %c6_283 = arith.constant 6 : index
    %c0_284 = arith.constant 0 : index
    %385 = vector.load %arg7[%c6_283, %c0_284] : memref<64x768xf32, #tpu.memory_space<vmem>>, vector<2x768xf32>
    tpu.vector_store %arg7[%c6_283, %c0_284], %384 {strides = array<i32>} : memref<64x768xf32, #tpu.memory_space<vmem>>, vector<2x768xf32>,
    %c8_285 = arith.constant 8 : index
    %c0_286 = arith.constant 0 : index
    %386 = vector.load %arg7[%c8_285, %c0_286] : memref<64x768xf32, #tpu.memory_space<vmem>>, vector<2x768xf32>
    tpu.vector_store %arg7[%c8_285, %c0_286], %365 {strides = array<i32>} : memref<64x768xf32, #tpu.memory_space<vmem>>, vector<2x768xf32>,
    %c767_i32_287 = arith.constant 767 : i32
    %387 = tpu.dynamic_rotate %365 by %c767_i32_287 dim 1 : vector<2x768xf32>, i32 -> vector<2x768xf32>
    %c12_288 = arith.constant 12 : index
    %c0_289 = arith.constant 0 : index
    %388 = vector.load %arg3[%c12_288, %c0_289] : memref<32x768xf32, #tpu.memory_space<vmem>>, vector<1x768xf32>
    %389 = vector.broadcast %388 : vector<1x768xf32> to vector<2x768xf32>
    %390 = arith.mulf %387, %389 : vector<2x768xf32>
    %c10_290 = arith.constant 10 : index
    %c0_291 = arith.constant 0 : index
    %391 = vector.load %arg7[%c10_290, %c0_291] : memref<64x768xf32, #tpu.memory_space<vmem>>, vector<2x768xf32>
    tpu.vector_store %arg7[%c10_290, %c0_291], %390 {strides = array<i32>} : memref<64x768xf32, #tpu.memory_space<vmem>>, vector<2x768xf32>,
    %c753_i32_292 = arith.constant 753 : i32
    %392 = tpu.dynamic_rotate %365 by %c753_i32_292 dim 1 : vector<2x768xf32>, i32 -> vector<2x768xf32>
    %c15_293 = arith.constant 15 : index
    %c0_294 = arith.constant 0 : index
    %393 = vector.load %arg3[%c15_293, %c0_294] : memref<32x768xf32, #tpu.memory_space<vmem>>, vector<1x768xf32>
    %394 = vector.broadcast %393 : vector<1x768xf32> to vector<2x768xf32>
    %395 = arith.mulf %392, %394 : vector<2x768xf32>
    %c12_295 = arith.constant 12 : index
    %c0_296 = arith.constant 0 : index
    %396 = vector.load %arg7[%c12_295, %c0_296] : memref<64x768xf32, #tpu.memory_space<vmem>>, vector<2x768xf32>
    tpu.vector_store %arg7[%c12_295, %c0_296], %395 {strides = array<i32>} : memref<64x768xf32, #tpu.memory_space<vmem>>, vector<2x768xf32>,
    %c752_i32_297 = arith.constant 752 : i32
    %397 = tpu.dynamic_rotate %365 by %c752_i32_297 dim 1 : vector<2x768xf32>, i32 -> vector<2x768xf32>
    %c16_298 = arith.constant 16 : index
    %c0_299 = arith.constant 0 : index
    %398 = vector.load %arg3[%c16_298, %c0_299] : memref<32x768xf32, #tpu.memory_space<vmem>>, vector<1x768xf32>
    %399 = vector.broadcast %398 : vector<1x768xf32> to vector<2x768xf32>
    %400 = arith.mulf %397, %399 : vector<2x768xf32>
    %c14_300 = arith.constant 14 : index
    %c0_301 = arith.constant 0 : index
    %401 = vector.load %arg7[%c14_300, %c0_301] : memref<64x768xf32, #tpu.memory_space<vmem>>, vector<2x768xf32>
    tpu.vector_store %arg7[%c14_300, %c0_301], %400 {strides = array<i32>} : memref<64x768xf32, #tpu.memory_space<vmem>>, vector<2x768xf32>,
    %c751_i32_302 = arith.constant 751 : i32
    %402 = tpu.dynamic_rotate %365 by %c751_i32_302 dim 1 : vector<2x768xf32>, i32 -> vector<2x768xf32>
    %c17_303 = arith.constant 17 : index
    %c0_304 = arith.constant 0 : index
    %403 = vector.load %arg3[%c17_303, %c0_304] : memref<32x768xf32, #tpu.memory_space<vmem>>, vector<1x768xf32>
    %404 = vector.broadcast %403 : vector<1x768xf32> to vector<2x768xf32>
    %405 = arith.mulf %402, %404 : vector<2x768xf32>
    %c16_305 = arith.constant 16 : index
    %c0_306 = arith.constant 0 : index
    %406 = vector.load %arg7[%c16_305, %c0_306] : memref<64x768xf32, #tpu.memory_space<vmem>>, vector<2x768xf32>
    tpu.vector_store %arg7[%c16_305, %c0_306], %405 {strides = array<i32>} : memref<64x768xf32, #tpu.memory_space<vmem>>, vector<2x768xf32>,
    %c2_i32_307 = arith.constant 2 : i32
    %407 = tpu.dynamic_rotate %365 by %c2_i32_307 dim 1 : vector<2x768xf32>, i32 -> vector<2x768xf32>
    %c10_308 = arith.constant 10 : index
    %c0_309 = arith.constant 0 : index
    %408 = vector.load %arg3[%c10_308, %c0_309] : memref<32x768xf32, #tpu.memory_space<vmem>>, vector<1x768xf32>
    %409 = vector.broadcast %408 : vector<1x768xf32> to vector<2x768xf32>
    %410 = arith.mulf %407, %409 : vector<2x768xf32>
    %c18_310 = arith.constant 18 : index
    %c0_311 = arith.constant 0 : index
    %411 = vector.load %arg7[%c18_310, %c0_311] : memref<64x768xf32, #tpu.memory_space<vmem>>, vector<2x768xf32>
    tpu.vector_store %arg7[%c18_310, %c0_311], %410 {strides = array<i32>} : memref<64x768xf32, #tpu.memory_space<vmem>>, vector<2x768xf32>,
    %c766_i32_312 = arith.constant 766 : i32
    %412 = tpu.dynamic_rotate %365 by %c766_i32_312 dim 1 : vector<2x768xf32>, i32 -> vector<2x768xf32>
    %c13_313 = arith.constant 13 : index
    %c0_314 = arith.constant 0 : index
    %413 = vector.load %arg3[%c13_313, %c0_314] : memref<32x768xf32, #tpu.memory_space<vmem>>, vector<1x768xf32>
    %414 = vector.broadcast %413 : vector<1x768xf32> to vector<2x768xf32>
    %415 = arith.mulf %412, %414 : vector<2x768xf32>
    %c20_315 = arith.constant 20 : index
    %c0_316 = arith.constant 0 : index
    %416 = vector.load %arg7[%c20_315, %c0_316] : memref<64x768xf32, #tpu.memory_space<vmem>>, vector<2x768xf32>
    tpu.vector_store %arg7[%c20_315, %c0_316], %415 {strides = array<i32>} : memref<64x768xf32, #tpu.memory_space<vmem>>, vector<2x768xf32>,
    %c0_317 = arith.constant 0 : index
    %c896 = arith.constant 896 : index
    %417 = vector.load %arg4[%c0_317, %c896] : memref<16x1664xf32, #tpu.memory_space<vmem>>, vector<16x22xf32>
    %c0_318 = arith.constant 0 : index
    %c0_319 = arith.constant 0 : index
    %418 = vector.load %arg7[%c0_318, %c0_319] : memref<64x768xf32, #tpu.memory_space<vmem>>, vector<22x768xf32>
    %cst_320 = arith.constant dense<0.000000e+00> : vector<16x768xf32>
    %419 = tpu.matmul %417, %418, %cst_320 {dimension_numbers = #tpu.dot_dimension_numbers<[1], [0], [0], [1], [0, 0, 1, 1], [], []>} : vector<16x22xf32>, vector<22x768xf32>, vector<16x768xf32> -> vector<16x768xf32>
    %c0_321 = arith.constant 0 : index
    %c7_322 = arith.constant 7 : index
    %420 = vector.load %arg5[%c0_321, %c7_322] : memref<16x13xf32, #tpu.memory_space<vmem>>, vector<16x1xf32>
    %421 = vector.broadcast %420 : vector<16x1xf32> to vector<16x768xf32>
    %422 = arith.addf %419, %421 : vector<16x768xf32>
    %423 = vector.extract_strided_slice %422 {offsets = [0, 0], sizes = [7, 768], strides = [1, 1]} : vector<16x768xf32> to vector<7x768xf32>
    %cst_323 = arith.constant 0.000000e+00 : f32
    %424 = vector.broadcast %cst_323 : f32 to vector<7x768xf32>
    %425 = arith.cmpf oge, %423, %424 : vector<7x768xf32>
    %cst_324 = arith.constant 3.000000e-01 : f32
    %426 = vector.broadcast %cst_324 : f32 to vector<7x768xf32>
    %427 = arith.mulf %426, %423 : vector<7x768xf32>
    %428 = arith.select %425, %423, %427 : vector<7x768xi1>, vector<7x768xf32>
    %429 = vector.extract_strided_slice %422 {offsets = [8, 0], sizes = [7, 768], strides = [1, 1]} : vector<16x768xf32> to vector<7x768xf32>
    %cst_325 = arith.constant 0.000000e+00 : f32
    %430 = vector.broadcast %cst_325 : f32 to vector<7x768xf32>
    %431 = arith.cmpf oge, %429, %430 : vector<7x768xf32>
    %cst_326 = arith.constant 3.000000e-01 : f32
    %432 = vector.broadcast %cst_326 : f32 to vector<7x768xf32>
    %433 = arith.mulf %432, %429 : vector<7x768xf32>
    %434 = arith.select %431, %429, %433 : vector<7x768xi1>, vector<7x768xf32>
    %c4_i32_327 = arith.constant 4 : i32
    %435 = tpu.dynamic_rotate %428 by %c4_i32_327 dim 1 : vector<7x768xf32>, i32 -> vector<7x768xf32>
    %c24_328 = arith.constant 24 : index
    %c0_329 = arith.constant 0 : index
    %436 = vector.load %arg3[%c24_328, %c0_329] : memref<32x768xf32, #tpu.memory_space<vmem>>, vector<1x768xf32>
    %437 = vector.broadcast %436 : vector<1x768xf32> to vector<7x768xf32>
    %438 = arith.mulf %435, %437 : vector<7x768xf32>
    %c0_330 = arith.constant 0 : index
    %c0_331 = arith.constant 0 : index
    %439 = vector.load %arg7[%c0_330, %c0_331] : memref<64x768xf32, #tpu.memory_space<vmem>>, vector<7x768xf32>
    tpu.vector_store %arg7[%c0_330, %c0_331], %438 {strides = array<i32>} : memref<64x768xf32, #tpu.memory_space<vmem>>, vector<7x768xf32>,
    %c3_i32_332 = arith.constant 3 : i32
    %440 = tpu.dynamic_rotate %428 by %c3_i32_332 dim 1 : vector<7x768xf32>, i32 -> vector<7x768xf32>
    %c25_333 = arith.constant 25 : index
    %c0_334 = arith.constant 0 : index
    %441 = vector.load %arg3[%c25_333, %c0_334] : memref<32x768xf32, #tpu.memory_space<vmem>>, vector<1x768xf32>
    %442 = vector.broadcast %441 : vector<1x768xf32> to vector<7x768xf32>
    %443 = arith.mulf %440, %442 : vector<7x768xf32>
    %c7_335 = arith.constant 7 : index
    %c0_336 = arith.constant 0 : index
    %444 = vector.load %arg7[%c7_335, %c0_336] : memref<64x768xf32, #tpu.memory_space<vmem>>, vector<7x768xf32>
    tpu.vector_store %arg7[%c7_335, %c0_336], %443 {strides = array<i32>} : memref<64x768xf32, #tpu.memory_space<vmem>>, vector<7x768xf32>,
    %c2_i32_337 = arith.constant 2 : i32
    %445 = tpu.dynamic_rotate %428 by %c2_i32_337 dim 1 : vector<7x768xf32>, i32 -> vector<7x768xf32>
    %c10_338 = arith.constant 10 : index
    %c0_339 = arith.constant 0 : index
    %446 = vector.load %arg3[%c10_338, %c0_339] : memref<32x768xf32, #tpu.memory_space<vmem>>, vector<1x768xf32>
    %447 = vector.broadcast %446 : vector<1x768xf32> to vector<7x768xf32>
    %448 = arith.mulf %445, %447 : vector<7x768xf32>
    %c14_340 = arith.constant 14 : index
    %c0_341 = arith.constant 0 : index
    %449 = vector.load %arg7[%c14_340, %c0_341] : memref<64x768xf32, #tpu.memory_space<vmem>>, vector<7x768xf32>
    tpu.vector_store %arg7[%c14_340, %c0_341], %448 {strides = array<i32>} : memref<64x768xf32, #tpu.memory_space<vmem>>, vector<7x768xf32>,
    %c1_i32_342 = arith.constant 1 : i32
    %450 = tpu.dynamic_rotate %428 by %c1_i32_342 dim 1 : vector<7x768xf32>, i32 -> vector<7x768xf32>
    %c11_343 = arith.constant 11 : index
    %c0_344 = arith.constant 0 : index
    %451 = vector.load %arg3[%c11_343, %c0_344] : memref<32x768xf32, #tpu.memory_space<vmem>>, vector<1x768xf32>
    %452 = vector.broadcast %451 : vector<1x768xf32> to vector<7x768xf32>
    %453 = arith.mulf %450, %452 : vector<7x768xf32>
    %c21_345 = arith.constant 21 : index
    %c0_346 = arith.constant 0 : index
    %454 = vector.load %arg7[%c21_345, %c0_346] : memref<64x768xf32, #tpu.memory_space<vmem>>, vector<7x768xf32>
    tpu.vector_store %arg7[%c21_345, %c0_346], %453 {strides = array<i32>} : memref<64x768xf32, #tpu.memory_space<vmem>>, vector<7x768xf32>,
    %c28_347 = arith.constant 28 : index
    %c0_348 = arith.constant 0 : index
    %455 = vector.load %arg7[%c28_347, %c0_348] : memref<64x768xf32, #tpu.memory_space<vmem>>, vector<7x768xf32>
    tpu.vector_store %arg7[%c28_347, %c0_348], %428 {strides = array<i32>} : memref<64x768xf32, #tpu.memory_space<vmem>>, vector<7x768xf32>,
    %c767_i32_349 = arith.constant 767 : i32
    %456 = tpu.dynamic_rotate %428 by %c767_i32_349 dim 1 : vector<7x768xf32>, i32 -> vector<7x768xf32>
    %c12_350 = arith.constant 12 : index
    %c0_351 = arith.constant 0 : index
    %457 = vector.load %arg3[%c12_350, %c0_351] : memref<32x768xf32, #tpu.memory_space<vmem>>, vector<1x768xf32>
    %458 = vector.broadcast %457 : vector<1x768xf32> to vector<7x768xf32>
    %459 = arith.mulf %456, %458 : vector<7x768xf32>
    %c35_352 = arith.constant 35 : index
    %c0_353 = arith.constant 0 : index
    %460 = vector.load %arg7[%c35_352, %c0_353] : memref<64x768xf32, #tpu.memory_space<vmem>>, vector<7x768xf32>
    tpu.vector_store %arg7[%c35_352, %c0_353], %459 {strides = array<i32>} : memref<64x768xf32, #tpu.memory_space<vmem>>, vector<7x768xf32>,
    %c766_i32_354 = arith.constant 766 : i32
    %461 = tpu.dynamic_rotate %428 by %c766_i32_354 dim 1 : vector<7x768xf32>, i32 -> vector<7x768xf32>
    %c13_355 = arith.constant 13 : index
    %c0_356 = arith.constant 0 : index
    %462 = vector.load %arg3[%c13_355, %c0_356] : memref<32x768xf32, #tpu.memory_space<vmem>>, vector<1x768xf32>
    %463 = vector.broadcast %462 : vector<1x768xf32> to vector<7x768xf32>
    %464 = arith.mulf %461, %463 : vector<7x768xf32>
    %c42_357 = arith.constant 42 : index
    %c0_358 = arith.constant 0 : index
    %465 = vector.load %arg7[%c42_357, %c0_358] : memref<64x768xf32, #tpu.memory_space<vmem>>, vector<7x768xf32>
    tpu.vector_store %arg7[%c42_357, %c0_358], %464 {strides = array<i32>} : memref<64x768xf32, #tpu.memory_space<vmem>>, vector<7x768xf32>,
    %c765_i32_359 = arith.constant 765 : i32
    %466 = tpu.dynamic_rotate %428 by %c765_i32_359 dim 1 : vector<7x768xf32>, i32 -> vector<7x768xf32>
    %c26_360 = arith.constant 26 : index
    %c0_361 = arith.constant 0 : index
    %467 = vector.load %arg3[%c26_360, %c0_361] : memref<32x768xf32, #tpu.memory_space<vmem>>, vector<1x768xf32>
    %468 = vector.broadcast %467 : vector<1x768xf32> to vector<7x768xf32>
    %469 = arith.mulf %466, %468 : vector<7x768xf32>
    %c49_362 = arith.constant 49 : index
    %c0_363 = arith.constant 0 : index
    %470 = vector.load %arg7[%c49_362, %c0_363] : memref<64x768xf32, #tpu.memory_space<vmem>>, vector<7x768xf32>
    tpu.vector_store %arg7[%c49_362, %c0_363], %469 {strides = array<i32>} : memref<64x768xf32, #tpu.memory_space<vmem>>, vector<7x768xf32>,
    %c764_i32_364 = arith.constant 764 : i32
    %471 = tpu.dynamic_rotate %428 by %c764_i32_364 dim 1 : vector<7x768xf32>, i32 -> vector<7x768xf32>
    %c27_365 = arith.constant 27 : index
    %c0_366 = arith.constant 0 : index
    %472 = vector.load %arg3[%c27_365, %c0_366] : memref<32x768xf32, #tpu.memory_space<vmem>>, vector<1x768xf32>
    %473 = vector.broadcast %472 : vector<1x768xf32> to vector<7x768xf32>
    %474 = arith.mulf %471, %473 : vector<7x768xf32>
    %c56_367 = arith.constant 56 : index
    %c0_368 = arith.constant 0 : index
    %475 = vector.load %arg7[%c56_367, %c0_368] : memref<64x768xf32, #tpu.memory_space<vmem>>, vector<7x768xf32>
    tpu.vector_store %arg7[%c56_367, %c0_368], %474 {strides = array<i32>} : memref<64x768xf32, #tpu.memory_space<vmem>>, vector<7x768xf32>,
    %c0_369 = arith.constant 0 : index
    %c1024 = arith.constant 1024 : index
    %476 = vector.load %arg4[%c0_369, %c1024] : memref<16x1664xf32, #tpu.memory_space<vmem>>, vector<7x63xf32>
    %c0_370 = arith.constant 0 : index
    %c0_371 = arith.constant 0 : index
    %477 = vector.load %arg7[%c0_370, %c0_371] : memref<64x768xf32, #tpu.memory_space<vmem>>, vector<63x768xf32>
    %cst_372 = arith.constant dense<0.000000e+00> : vector<7x768xf32>
    %478 = tpu.matmul %476, %477, %cst_372 {dimension_numbers = #tpu.dot_dimension_numbers<[1], [0], [0], [1], [0, 0, 1, 1], [], []>} : vector<7x63xf32>, vector<63x768xf32>, vector<7x768xf32> -> vector<7x768xf32>
    %c0_373 = arith.constant 0 : index
    %c8_374 = arith.constant 8 : index
    %479 = vector.load %arg5[%c0_373, %c8_374] : memref<16x13xf32, #tpu.memory_space<vmem>>, vector<7x1xf32>
    %480 = vector.broadcast %479 : vector<7x1xf32> to vector<7x768xf32>
    %481 = arith.addf %478, %480 : vector<7x768xf32>
    %cst_375 = arith.constant 0.000000e+00 : f32
    %482 = vector.broadcast %cst_375 : f32 to vector<7x768xf32>
    %483 = arith.cmpf oge, %481, %482 : vector<7x768xf32>
    %cst_376 = arith.constant 3.000000e-01 : f32
    %484 = vector.broadcast %cst_376 : f32 to vector<7x768xf32>
    %485 = arith.mulf %484, %481 : vector<7x768xf32>
    %486 = arith.select %483, %481, %485 : vector<7x768xi1>, vector<7x768xf32>
    %c64_i32_377 = arith.constant 64 : i32
    %487 = tpu.dynamic_rotate %486 by %c64_i32_377 dim 1 : vector<7x768xf32>, i32 -> vector<7x768xf32>
    %c28_378 = arith.constant 28 : index
    %c0_379 = arith.constant 0 : index
    %488 = vector.load %arg3[%c28_378, %c0_379] : memref<32x768xf32, #tpu.memory_space<vmem>>, vector<1x768xf32>
    %489 = vector.broadcast %488 : vector<1x768xf32> to vector<7x768xf32>
    %490 = arith.mulf %487, %489 : vector<7x768xf32>
    %c0_380 = arith.constant 0 : index
    %c0_381 = arith.constant 0 : index
    %491 = vector.load %arg7[%c0_380, %c0_381] : memref<64x768xf32, #tpu.memory_space<vmem>>, vector<7x768xf32>
    tpu.vector_store %arg7[%c0_380, %c0_381], %490 {strides = array<i32>} : memref<64x768xf32, #tpu.memory_space<vmem>>, vector<7x768xf32>,
    %c48_i32_382 = arith.constant 48 : i32
    %492 = tpu.dynamic_rotate %486 by %c48_i32_382 dim 1 : vector<7x768xf32>, i32 -> vector<7x768xf32>
    %c29_383 = arith.constant 29 : index
    %c0_384 = arith.constant 0 : index
    %493 = vector.load %arg3[%c29_383, %c0_384] : memref<32x768xf32, #tpu.memory_space<vmem>>, vector<1x768xf32>
    %494 = vector.broadcast %493 : vector<1x768xf32> to vector<7x768xf32>
    %495 = arith.mulf %492, %494 : vector<7x768xf32>
    %c7_385 = arith.constant 7 : index
    %c0_386 = arith.constant 0 : index
    %496 = vector.load %arg7[%c7_385, %c0_386] : memref<64x768xf32, #tpu.memory_space<vmem>>, vector<7x768xf32>
    tpu.vector_store %arg7[%c7_385, %c0_386], %495 {strides = array<i32>} : memref<64x768xf32, #tpu.memory_space<vmem>>, vector<7x768xf32>,
    %c32_i32_387 = arith.constant 32 : i32
    %497 = tpu.dynamic_rotate %486 by %c32_i32_387 dim 1 : vector<7x768xf32>, i32 -> vector<7x768xf32>
    %c2_388 = arith.constant 2 : index
    %c0_389 = arith.constant 0 : index
    %498 = vector.load %arg3[%c2_388, %c0_389] : memref<32x768xf32, #tpu.memory_space<vmem>>, vector<1x768xf32>
    %499 = vector.broadcast %498 : vector<1x768xf32> to vector<7x768xf32>
    %500 = arith.mulf %497, %499 : vector<7x768xf32>
    %c14_390 = arith.constant 14 : index
    %c0_391 = arith.constant 0 : index
    %501 = vector.load %arg7[%c14_390, %c0_391] : memref<64x768xf32, #tpu.memory_space<vmem>>, vector<7x768xf32>
    tpu.vector_store %arg7[%c14_390, %c0_391], %500 {strides = array<i32>} : memref<64x768xf32, #tpu.memory_space<vmem>>, vector<7x768xf32>,
    %c16_i32_392 = arith.constant 16 : i32
    %502 = tpu.dynamic_rotate %486 by %c16_i32_392 dim 1 : vector<7x768xf32>, i32 -> vector<7x768xf32>
    %c7_393 = arith.constant 7 : index
    %c0_394 = arith.constant 0 : index
    %503 = vector.load %arg3[%c7_393, %c0_394] : memref<32x768xf32, #tpu.memory_space<vmem>>, vector<1x768xf32>
    %504 = vector.broadcast %503 : vector<1x768xf32> to vector<7x768xf32>
    %505 = arith.mulf %502, %504 : vector<7x768xf32>
    %c21_395 = arith.constant 21 : index
    %c0_396 = arith.constant 0 : index
    %506 = vector.load %arg7[%c21_395, %c0_396] : memref<64x768xf32, #tpu.memory_space<vmem>>, vector<7x768xf32>
    tpu.vector_store %arg7[%c21_395, %c0_396], %505 {strides = array<i32>} : memref<64x768xf32, #tpu.memory_space<vmem>>, vector<7x768xf32>,
    %c28_397 = arith.constant 28 : index
    %c0_398 = arith.constant 0 : index
    %507 = vector.load %arg7[%c28_397, %c0_398] : memref<64x768xf32, #tpu.memory_space<vmem>>, vector<7x768xf32>
    tpu.vector_store %arg7[%c28_397, %c0_398], %486 {strides = array<i32>} : memref<64x768xf32, #tpu.memory_space<vmem>>, vector<7x768xf32>,
    %c752_i32_399 = arith.constant 752 : i32
    %508 = tpu.dynamic_rotate %486 by %c752_i32_399 dim 1 : vector<7x768xf32>, i32 -> vector<7x768xf32>
    %c16_400 = arith.constant 16 : index
    %c0_401 = arith.constant 0 : index
    %509 = vector.load %arg3[%c16_400, %c0_401] : memref<32x768xf32, #tpu.memory_space<vmem>>, vector<1x768xf32>
    %510 = vector.broadcast %509 : vector<1x768xf32> to vector<7x768xf32>
    %511 = arith.mulf %508, %510 : vector<7x768xf32>
    %c35_402 = arith.constant 35 : index
    %c0_403 = arith.constant 0 : index
    %512 = vector.load %arg7[%c35_402, %c0_403] : memref<64x768xf32, #tpu.memory_space<vmem>>, vector<7x768xf32>
    tpu.vector_store %arg7[%c35_402, %c0_403], %511 {strides = array<i32>} : memref<64x768xf32, #tpu.memory_space<vmem>>, vector<7x768xf32>,
    %c736_i32_404 = arith.constant 736 : i32
    %513 = tpu.dynamic_rotate %486 by %c736_i32_404 dim 1 : vector<7x768xf32>, i32 -> vector<7x768xf32>
    %c21_405 = arith.constant 21 : index
    %c0_406 = arith.constant 0 : index
    %514 = vector.load %arg3[%c21_405, %c0_406] : memref<32x768xf32, #tpu.memory_space<vmem>>, vector<1x768xf32>
    %515 = vector.broadcast %514 : vector<1x768xf32> to vector<7x768xf32>
    %516 = arith.mulf %513, %515 : vector<7x768xf32>
    %c42_407 = arith.constant 42 : index
    %c0_408 = arith.constant 0 : index
    %517 = vector.load %arg7[%c42_407, %c0_408] : memref<64x768xf32, #tpu.memory_space<vmem>>, vector<7x768xf32>
    tpu.vector_store %arg7[%c42_407, %c0_408], %516 {strides = array<i32>} : memref<64x768xf32, #tpu.memory_space<vmem>>, vector<7x768xf32>,
    %c720_i32_409 = arith.constant 720 : i32
    %518 = tpu.dynamic_rotate %486 by %c720_i32_409 dim 1 : vector<7x768xf32>, i32 -> vector<7x768xf32>
    %c30_410 = arith.constant 30 : index
    %c0_411 = arith.constant 0 : index
    %519 = vector.load %arg3[%c30_410, %c0_411] : memref<32x768xf32, #tpu.memory_space<vmem>>, vector<1x768xf32>
    %520 = vector.broadcast %519 : vector<1x768xf32> to vector<7x768xf32>
    %521 = arith.mulf %518, %520 : vector<7x768xf32>
    %c49_412 = arith.constant 49 : index
    %c0_413 = arith.constant 0 : index
    %522 = vector.load %arg7[%c49_412, %c0_413] : memref<64x768xf32, #tpu.memory_space<vmem>>, vector<7x768xf32>
    tpu.vector_store %arg7[%c49_412, %c0_413], %521 {strides = array<i32>} : memref<64x768xf32, #tpu.memory_space<vmem>>, vector<7x768xf32>,
    %c704_i32_414 = arith.constant 704 : i32
    %523 = tpu.dynamic_rotate %486 by %c704_i32_414 dim 1 : vector<7x768xf32>, i32 -> vector<7x768xf32>
    %c31_415 = arith.constant 31 : index
    %c0_416 = arith.constant 0 : index
    %524 = vector.load %arg3[%c31_415, %c0_416] : memref<32x768xf32, #tpu.memory_space<vmem>>, vector<1x768xf32>
    %525 = vector.broadcast %524 : vector<1x768xf32> to vector<7x768xf32>
    %526 = arith.mulf %523, %525 : vector<7x768xf32>
    %c56_417 = arith.constant 56 : index
    %c0_418 = arith.constant 0 : index
    %527 = vector.load %arg7[%c56_417, %c0_418] : memref<64x768xf32, #tpu.memory_space<vmem>>, vector<7x768xf32>
    tpu.vector_store %arg7[%c56_417, %c0_418], %526 {strides = array<i32>} : memref<64x768xf32, #tpu.memory_space<vmem>>, vector<7x768xf32>,
    %c0_419 = arith.constant 0 : index
    %c1152 = arith.constant 1152 : index
    %528 = vector.load %arg4[%c0_419, %c1152] : memref<16x1664xf32, #tpu.memory_space<vmem>>, vector<7x63xf32>
    %c0_420 = arith.constant 0 : index
    %c0_421 = arith.constant 0 : index
    %529 = vector.load %arg7[%c0_420, %c0_421] : memref<64x768xf32, #tpu.memory_space<vmem>>, vector<63x768xf32>
    %cst_422 = arith.constant dense<0.000000e+00> : vector<7x768xf32>
    %530 = tpu.matmul %528, %529, %cst_422 {dimension_numbers = #tpu.dot_dimension_numbers<[1], [0], [0], [1], [0, 0, 1, 1], [], []>} : vector<7x63xf32>, vector<63x768xf32>, vector<7x768xf32> -> vector<7x768xf32>
    %c0_423 = arith.constant 0 : index
    %c9_424 = arith.constant 9 : index
    %531 = vector.load %arg5[%c0_423, %c9_424] : memref<16x13xf32, #tpu.memory_space<vmem>>, vector<7x1xf32>
    %532 = vector.broadcast %531 : vector<7x1xf32> to vector<7x768xf32>
    %533 = arith.addf %530, %532 : vector<7x768xf32>
    %c32_i32_425 = arith.constant 32 : i32
    %534 = tpu.dynamic_rotate %434 by %c32_i32_425 dim 1 : vector<7x768xf32>, i32 -> vector<7x768xf32>
    %c2_426 = arith.constant 2 : index
    %c0_427 = arith.constant 0 : index
    %535 = vector.load %arg3[%c2_426, %c0_427] : memref<32x768xf32, #tpu.memory_space<vmem>>, vector<1x768xf32>
    %536 = vector.broadcast %535 : vector<1x768xf32> to vector<7x768xf32>
    %537 = arith.mulf %534, %536 : vector<7x768xf32>
    %c0_428 = arith.constant 0 : index
    %c0_429 = arith.constant 0 : index
    %538 = vector.load %arg7[%c0_428, %c0_429] : memref<64x768xf32, #tpu.memory_space<vmem>>, vector<7x768xf32>
    tpu.vector_store %arg7[%c0_428, %c0_429], %537 {strides = array<i32>} : memref<64x768xf32, #tpu.memory_space<vmem>>, vector<7x768xf32>,
    %c16_i32_430 = arith.constant 16 : i32
    %539 = tpu.dynamic_rotate %434 by %c16_i32_430 dim 1 : vector<7x768xf32>, i32 -> vector<7x768xf32>
    %c7_431 = arith.constant 7 : index
    %c0_432 = arith.constant 0 : index
    %540 = vector.load %arg3[%c7_431, %c0_432] : memref<32x768xf32, #tpu.memory_space<vmem>>, vector<1x768xf32>
    %541 = vector.broadcast %540 : vector<1x768xf32> to vector<7x768xf32>
    %542 = arith.mulf %539, %541 : vector<7x768xf32>
    %c7_433 = arith.constant 7 : index
    %c0_434 = arith.constant 0 : index
    %543 = vector.load %arg7[%c7_433, %c0_434] : memref<64x768xf32, #tpu.memory_space<vmem>>, vector<7x768xf32>
    tpu.vector_store %arg7[%c7_433, %c0_434], %542 {strides = array<i32>} : memref<64x768xf32, #tpu.memory_space<vmem>>, vector<7x768xf32>,
    %c14_435 = arith.constant 14 : index
    %c0_436 = arith.constant 0 : index
    %544 = vector.load %arg7[%c14_435, %c0_436] : memref<64x768xf32, #tpu.memory_space<vmem>>, vector<7x768xf32>
    tpu.vector_store %arg7[%c14_435, %c0_436], %434 {strides = array<i32>} : memref<64x768xf32, #tpu.memory_space<vmem>>, vector<7x768xf32>,
    %c752_i32_437 = arith.constant 752 : i32
    %545 = tpu.dynamic_rotate %434 by %c752_i32_437 dim 1 : vector<7x768xf32>, i32 -> vector<7x768xf32>
    %c16_438 = arith.constant 16 : index
    %c0_439 = arith.constant 0 : index
    %546 = vector.load %arg3[%c16_438, %c0_439] : memref<32x768xf32, #tpu.memory_space<vmem>>, vector<1x768xf32>
    %547 = vector.broadcast %546 : vector<1x768xf32> to vector<7x768xf32>
    %548 = arith.mulf %545, %547 : vector<7x768xf32>
    %c21_440 = arith.constant 21 : index
    %c0_441 = arith.constant 0 : index
    %549 = vector.load %arg7[%c21_440, %c0_441] : memref<64x768xf32, #tpu.memory_space<vmem>>, vector<7x768xf32>
    tpu.vector_store %arg7[%c21_440, %c0_441], %548 {strides = array<i32>} : memref<64x768xf32, #tpu.memory_space<vmem>>, vector<7x768xf32>,
    %c736_i32_442 = arith.constant 736 : i32
    %550 = tpu.dynamic_rotate %434 by %c736_i32_442 dim 1 : vector<7x768xf32>, i32 -> vector<7x768xf32>
    %c21_443 = arith.constant 21 : index
    %c0_444 = arith.constant 0 : index
    %551 = vector.load %arg3[%c21_443, %c0_444] : memref<32x768xf32, #tpu.memory_space<vmem>>, vector<1x768xf32>
    %552 = vector.broadcast %551 : vector<1x768xf32> to vector<7x768xf32>
    %553 = arith.mulf %550, %552 : vector<7x768xf32>
    %c28_445 = arith.constant 28 : index
    %c0_446 = arith.constant 0 : index
    %554 = vector.load %arg7[%c28_445, %c0_446] : memref<64x768xf32, #tpu.memory_space<vmem>>, vector<7x768xf32>
    tpu.vector_store %arg7[%c28_445, %c0_446], %553 {strides = array<i32>} : memref<64x768xf32, #tpu.memory_space<vmem>>, vector<7x768xf32>,
    %c0_447 = arith.constant 0 : index
    %c1280 = arith.constant 1280 : index
    %555 = vector.load %arg4[%c0_447, %c1280] : memref<16x1664xf32, #tpu.memory_space<vmem>>, vector<7x35xf32>
    %c0_448 = arith.constant 0 : index
    %c0_449 = arith.constant 0 : index
    %556 = vector.load %arg7[%c0_448, %c0_449] : memref<64x768xf32, #tpu.memory_space<vmem>>, vector<35x768xf32>
    %cst_450 = arith.constant dense<0.000000e+00> : vector<7x768xf32>
    %557 = tpu.matmul %555, %556, %cst_450 {dimension_numbers = #tpu.dot_dimension_numbers<[1], [0], [0], [1], [0, 0, 1, 1], [], []>} : vector<7x35xf32>, vector<35x768xf32>, vector<7x768xf32> -> vector<7x768xf32>
    %c0_451 = arith.constant 0 : index
    %c10_452 = arith.constant 10 : index
    %558 = vector.load %arg5[%c0_451, %c10_452] : memref<16x13xf32, #tpu.memory_space<vmem>>, vector<7x1xf32>
    %559 = vector.broadcast %558 : vector<7x1xf32> to vector<7x768xf32>
    %560 = arith.addf %557, %559 : vector<7x768xf32>
    %cst_453 = arith.constant 0.000000e+00 : f32
    %561 = vector.broadcast %cst_453 : f32 to vector<7x768xf32>
    %562 = arith.cmpf oge, %533, %561 : vector<7x768xf32>
    %cst_454 = arith.constant 3.000000e-01 : f32
    %563 = vector.broadcast %cst_454 : f32 to vector<7x768xf32>
    %564 = arith.mulf %563, %533 : vector<7x768xf32>
    %565 = arith.select %562, %533, %564 : vector<7x768xi1>, vector<7x768xf32>
    %cst_455 = arith.constant 0.000000e+00 : f32
    %566 = vector.broadcast %cst_455 : f32 to vector<7x768xf32>
    %567 = arith.cmpf oge, %560, %566 : vector<7x768xf32>
    %cst_456 = arith.constant 3.000000e-01 : f32
    %568 = vector.broadcast %cst_456 : f32 to vector<7x768xf32>
    %569 = arith.mulf %568, %560 : vector<7x768xf32>
    %570 = arith.select %567, %560, %569 : vector<7x768xi1>, vector<7x768xf32>
    %c0_457 = arith.constant 0 : index
    %c1408 = arith.constant 1408 : index
    %571 = vector.load %arg4[%c0_457, %c1408] : memref<16x1664xf32, #tpu.memory_space<vmem>>, vector<2x7xf32>
    %c0_458 = arith.constant 0 : index
    %c1536 = arith.constant 1536 : index
    %572 = vector.load %arg4[%c0_458, %c1536] : memref<16x1664xf32, #tpu.memory_space<vmem>>, vector<2x7xf32>
    %cst_459 = arith.constant dense<0.000000e+00> : vector<2x768xf32>
    %573 = tpu.matmul %571, %565, %cst_459 {dimension_numbers = #tpu.dot_dimension_numbers<[1], [0], [0], [1], [0, 0, 1, 1], [], []>} : vector<2x7xf32>, vector<7x768xf32>, vector<2x768xf32> -> vector<2x768xf32>
    %cst_460 = arith.constant dense<0.000000e+00> : vector<2x768xf32>
    %574 = tpu.matmul %572, %570, %cst_460 {dimension_numbers = #tpu.dot_dimension_numbers<[1], [0], [0], [1], [0, 0, 1, 1], [], []>} : vector<2x7xf32>, vector<7x768xf32>, vector<2x768xf32> -> vector<2x768xf32>
    %575 = arith.addf %573, %574 : vector<2x768xf32>
    %c0_461 = arith.constant 0 : index
    %c11_462 = arith.constant 11 : index
    %576 = vector.load %arg5[%c0_461, %c11_462] : memref<16x13xf32, #tpu.memory_space<vmem>>, vector<2x1xf32>
    %577 = vector.broadcast %576 : vector<2x1xf32> to vector<2x768xf32>
    %578 = arith.addf %575, %577 : vector<2x768xf32>
    %579 = arith.addf %578, %365 : vector<2x768xf32>
    %cst_463 = arith.constant 0.000000e+00 : f32
    %580 = vector.broadcast %cst_463 : f32 to vector<2x768xf32>
    %581 = arith.cmpf oge, %579, %580 : vector<2x768xf32>
    %cst_464 = arith.constant 3.000000e-01 : f32
    %582 = vector.broadcast %cst_464 : f32 to vector<2x768xf32>
    %583 = arith.mulf %582, %579 : vector<2x768xf32>
    %584 = arith.select %581, %579, %583 : vector<2x768xi1>, vector<2x768xf32>
    %585 = arith.negf %584 : vector<2x768xf32>
    %586 = math.exp %585 : vector<2x768xf32>
    %cst_465 = arith.constant 1.000000e+00 : f32
    %587 = vector.broadcast %cst_465 : f32 to vector<2x768xf32>
    %588 = arith.addf %587, %586 : vector<2x768xf32>
    %589 = arith.divf %587, %588 : vector<2x768xf32>
    %c0_466 = arith.constant 0 : index
    %c0_467 = arith.constant 0 : index
    %590 = vector.load %arg6[%c0_466, %c0_467] : memref<2x768xf32, #tpu.memory_space<vmem>>, vector<2x768xf32>
    tpu.vector_store %arg6[%c0_466, %c0_467], %589 {strides = array<i32>} : memref<2x768xf32, #tpu.memory_space<vmem>>, vector<2x768xf32>,
    return
  }
}

</mosaic_0001>

<llo_original>
// kernel: decoder_forward.1
$region0: #{decoder_forward.1}
  #allocation0 [shape = 'u32[]', space=smem, size = 0x4, offset = 0x4, fixed_abs, tag = 'smem constant byte address 0x4 - core index']
  #allocation1 [shape = 'u32[144,128]{1,0:T(1,128)}', space=vmem, size = 0x12000, scoped, tag = 'internal scratch']
  #allocation2 [shape = 'f32[64,768]{1,0:T(8,128)}', space=vmem, size = 0x30000, scoped, tag = 'scratch operand']
  %s0 = inlined_call_operand.vmem [shape: f32[1,2,128], index: 0, kind: input, shape index: {}]
  %s1 = inlined_call_operand.hbm [shape: f32[256,384], index: 1, kind: input, shape index: {}]
  %s2 = inlined_call_operand.vmem [shape: f32[2,768], index: 2, kind: input, shape index: {}]
  %s3 = inlined_call_operand.hbm [shape: f32[32,768], index: 3, kind: input, shape index: {}]
  %s4 = inlined_call_operand.hbm [shape: f32[16,1664], index: 4, kind: input, shape index: {}]
  %s5 = inlined_call_operand.hbm [shape: f32[16,13], index: 5, kind: input, shape index: {}]
  %s6 = inlined_call_operand.vmem [shape: f32[2,768], index: 6, kind: output, shape index: {}]
  %s7 = sld [smem:[#allocation0]]
  $region50: #{decoder_forward.1} parent=0
    _
  %s9 = ssub.s32 1, %s7
  %s10 = scalar_select 0, %s9, %s7
  $region1: #{decoder_forward.1} parent=0
    #allocation3 [shape = 'u8[393216]{0}', space=vmem, size = 0x60000, scoped, tag = 'input window, operand 1, single buffered']
    #allocation4 [shape = 's32[1]{0}', space=sflag, size = 0x4, scoped, tag = 'scoped memory for decoder_forward.1']
    #allocation5 [shape = 'u8[98304]{0}', space=vmem, size = 0x18000, scoped, tag = 'input window, operand 3, single buffered']
    #allocation6 [shape = 's32[1]{0}', space=sflag, size = 0x4, scoped, tag = 'scoped memory for decoder_forward.1']
    #allocation7 [shape = 'u8[106496]{0}', space=vmem, size = 0x1a000, scoped, tag = 'input window, operand 4, single buffered']
    #allocation8 [shape = 'u8[8192]{0}', space=vmem, size = 0x2000, scoped, tag = 'input window, operand 5, single buffered']
    #allocation9 [shape = 's32[1]{0}', space=sflag, size = 0x4, scoped, tag = 'scoped memory for decoder_forward.1']
    %11 = vsyncpa [#allocation4], 0
    %12 = vsyncpa [#allocation6], 0
    %13 = vsyncpa [#allocation9], 0
    // Predicated region
    $region2: #{decoder_forward.1} parent=1 // pred_check
      _
    $region3: #{decoder_forward.1} parent=1 // pred_check_branch
      %15 = sbr.rel (0) target = $region5
    $region4: #{decoder_forward.1} parent=1 // pred_region
      _
    $region5: #{decoder_forward.1} parent=1 // pred_fallthru
      _
    // Predicated region
    $region6: #{decoder_forward.1} parent=1 // pred_check
      _
    $region7: #{decoder_forward.1} parent=1 // pred_check_branch
      %17 = sbr.rel (0) target = $region9
    $region8: #{decoder_forward.1} parent=1 // pred_region
      %s19 = ssub.s32 12288, 12288
      %20 = vsyncadd [#allocation4], %s19
      %s21 = sshll.u32 [#allocation3], 4
      %s22 = int_to_ptr.vmem [resolvable:$true] %s21
      %27 = dma.hbm_to_vmem [thread:$0]  %s1, 12288, %s22, [#allocation4], 384, 384, 24
    $region9: #{decoder_forward.1} parent=1 // pred_fallthru
      _
    // Predicated region
    $region10: #{decoder_forward.1} parent=1 // pred_check
      _
    $region11: #{decoder_forward.1} parent=1 // pred_check_branch
      %29 = sbr.rel (0) target = $region13
    $region12: #{decoder_forward.1} parent=1 // pred_region
      _
    $region13: #{decoder_forward.1} parent=1 // pred_fallthru
      _
    // Predicated region
    $region14: #{decoder_forward.1} parent=1 // pred_check
      _
    $region15: #{decoder_forward.1} parent=1 // pred_check_branch
      %31 = sbr.rel (0) target = $region17
    $region16: #{decoder_forward.1} parent=1 // pred_region
      %s33 = ssub.s32 3072, 3072
      %34 = vsyncadd [#allocation6], %s33
      %s35 = sshll.u32 [#allocation5], 4
      %s36 = int_to_ptr.vmem [resolvable:$true] %s35
      %41 = dma.hbm_to_vmem [thread:$0]  %s3, 3072, %s36, [#allocation6], 768, 768, 48
    $region17: #{decoder_forward.1} parent=1 // pred_fallthru
      _
    // Predicated region
    $region18: #{decoder_forward.1} parent=1 // pred_check
      _
    $region19: #{decoder_forward.1} parent=1 // pred_check_branch
      %43 = sbr.rel (0) target = $region21
    $region20: #{decoder_forward.1} parent=1 // pred_region
      %s45 = ssub.s32 3328, 3328
      %46 = vsyncadd [#allocation6], %s45
      %s47 = sshll.u32 [#allocation7], 4
      %s48 = int_to_ptr.vmem [resolvable:$true] %s47
      %53 = dma.hbm_to_vmem [thread:$0]  %s4, 3328, %s48, [#allocation6], 1664, 1664, 104
    $region21: #{decoder_forward.1} parent=1 // pred_fallthru
      _
    // Predicated region
    $region22: #{decoder_forward.1} parent=1 // pred_check
      _
    $region23: #{decoder_forward.1} parent=1 // pred_check_branch
      %55 = sbr.rel (0) target = $region25
    $region24: #{decoder_forward.1} parent=1 // pred_region
      %s57 = ssub.s32 256, 256
      %58 = vsyncadd [#allocation9], %s57
      %s59 = sshll.u32 [#allocation8], 4
      %s60 = int_to_ptr.vmem [resolvable:$true] %s59
      %65 = dma.hbm_to_vmem [thread:$0]  %s5, 256, %s60, [#allocation9], 128, 128, 8
    $region25: #{decoder_forward.1} parent=1 // pred_fallthru
      _
    // Predicated region
    $region26: #{decoder_forward.1} parent=1 // pred_check
      _
    $region27: #{decoder_forward.1} parent=1 // pred_check_branch
      %67 = sbr.rel (0) target = $region29
    $region28: #{decoder_forward.1} parent=1 // pred_region
      %68 = dma.done [#allocation4], 12288
    $region29: #{decoder_forward.1} parent=1 // pred_fallthru
      _
    // Predicated region
    $region30: #{decoder_forward.1} parent=1 // pred_check
      _
    $region31: #{decoder_forward.1} parent=1 // pred_check_branch
      %70 = sbr.rel (0) target = $region33
    $region32: #{decoder_forward.1} parent=1 // pred_region
      %71 = dma.done [#allocation6], 3072
    $region33: #{decoder_forward.1} parent=1 // pred_fallthru
      _
    // Predicated region
    $region34: #{decoder_forward.1} parent=1 // pred_check
      _
    $region35: #{decoder_forward.1} parent=1 // pred_check_branch
      %73 = sbr.rel (0) target = $region37
    $region36: #{decoder_forward.1} parent=1 // pred_region
      %74 = dma.done [#allocation6], 3328
    $region37: #{decoder_forward.1} parent=1 // pred_fallthru
      _
    // Predicated region
    $region38: #{decoder_forward.1} parent=1 // pred_check
      _
    $region39: #{decoder_forward.1} parent=1 // pred_check_branch
      %76 = sbr.rel (0) target = $region41
    $region40: #{decoder_forward.1} parent=1 // pred_region
      %77 = dma.done [#allocation9], 256
    $region41: #{decoder_forward.1} parent=1 // pred_fallthru
      _
    %v78 = vld [vmem:[%s0] sm:$0x3]
    %v79 = vld [vmem:[#allocation3] sm:$0xff]
    %v80 = vld [vmem:[#allocation3 + $0x8] sm:$0xff]
    %v81 = vld [vmem:[#allocation3 + $0x10] sm:$0xff]
    %v82 = vld [vmem:[#allocation3 + $0x18] sm:$0xff]
    %v83 = vld [vmem:[#allocation3 + $0x20] sm:$0xff]
    %v84 = vld [vmem:[#allocation3 + $0x28] sm:$0xff]
    %v85 = vld [vmem:[#allocation3 + $0x30] sm:$0xff]
    %v86 = vld [vmem:[#allocation3 + $0x38] sm:$0xff]
    %v87 = vld [vmem:[#allocation3 + $0x40] sm:$0xff]
    %v88 = vld [vmem:[#allocation3 + $0x48] sm:$0xff]
    %v89 = vld [vmem:[#allocation3 + $0x50] sm:$0xff]
    %v90 = vld [vmem:[#allocation3 + $0x58] sm:$0xff]
    %v91 = vld [vmem:[#allocation3 + $0x60] sm:$0xff]
    %v92 = vld [vmem:[#allocation3 + $0x68] sm:$0xff]
    %v93 = vld [vmem:[#allocation3 + $0x70] sm:$0xff]
    %v94 = vld [vmem:[#allocation3 + $0x78] sm:$0xff]
    %v95 = vld [vmem:[#allocation3 + $0x80] sm:$0xff]
    %v96 = vld [vmem:[#allocation3 + $0x88] sm:$0xff]
    %v97 = vld [vmem:[#allocation3 + $0x90] sm:$0xff]
    %v98 = vld [vmem:[#allocation3 + $0x98] sm:$0xff]
    %v99 = vld [vmem:[#allocation3 + $0xa0] sm:$0xff]
    %v100 = vld [vmem:[#allocation3 + $0xa8] sm:$0xff]
    %v101 = vld [vmem:[#allocation3 + $0xb0] sm:$0xff]
    %v102 = vld [vmem:[#allocation3 + $0xb8] sm:$0xff]
    %v103 = vld [vmem:[#allocation3 + $0xc0] sm:$0xff]
    %v104 = vld [vmem:[#allocation3 + $0xc8] sm:$0xff]
    %v105 = vld [vmem:[#allocation3 + $0xd0] sm:$0xff]
    %v106 = vld [vmem:[#allocation3 + $0xd8] sm:$0xff]
    %v107 = vld [vmem:[#allocation3 + $0xe0] sm:$0xff]
    %v108 = vld [vmem:[#allocation3 + $0xe8] sm:$0xff]
    %v109 = vld [vmem:[#allocation3 + $0xf0] sm:$0xff]
    %v110 = vld [vmem:[#allocation3 + $0xf8] sm:$0xff]
    %v111 = vld [vmem:[#allocation3 + $0x100] sm:$0xff]
    %v112 = vld [vmem:[#allocation3 + $0x108] sm:$0xff]
    %v113 = vld [vmem:[#allocation3 + $0x110] sm:$0xff]
    %v114 = vld [vmem:[#allocation3 + $0x118] sm:$0xff]
    %v115 = vld [vmem:[#allocation3 + $0x120] sm:$0xff]
    %v116 = vld [vmem:[#allocation3 + $0x128] sm:$0xff]
    %v117 = vld [vmem:[#allocation3 + $0x130] sm:$0xff]
    %v118 = vld [vmem:[#allocation3 + $0x138] sm:$0xff]
    %v119 = vld [vmem:[#allocation3 + $0x140] sm:$0xff]
    %v120 = vld [vmem:[#allocation3 + $0x148] sm:$0xff]
    %v121 = vld [vmem:[#allocation3 + $0x150] sm:$0xff]
    %v122 = vld [vmem:[#allocation3 + $0x158] sm:$0xff]
    %v123 = vld [vmem:[#allocation3 + $0x160] sm:$0xff]
    %v124 = vld [vmem:[#allocation3 + $0x168] sm:$0xff]
    %v125 = vld [vmem:[#allocation3 + $0x170] sm:$0xff]
    %v126 = vld [vmem:[#allocation3 + $0x178] sm:$0xff]
    %127 = vmatprep.subr.mxu0 %v80
    %128 = vmatpush1.msra.mxu0 %v79
    %129 = vmatprep.subr.mxu0 %v83
    %130 = vmatpush1.msra.mxu0 %v82
    %131 = vmatprep.subr.mxu0 %v86
    %132 = vmatpush1.msra.mxu0 %v85
    %133 = vmatprep.subr.mxu0 %v89
    %134 = vmatpush1.msra.mxu0 %v88
    %135 = vmatprep.subr.mxu0 %v92
    %136 = vmatpush1.msra.mxu0 %v91
    %137 = vmatprep.subr.mxu0 %v95
    %138 = vmatpush1.msra.mxu0 %v94
    %139 = vmatprep.subr.mxu0 %v98
    %140 = vmatpush1.msra.mxu0 %v97
    %141 = vmatprep.subr.mxu0 %v101
    %142 = vmatpush1.msra.mxu0 %v100
    %143 = vmatprep.subr.mxu0 %v104
    %144 = vmatpush1.msra.mxu0 %v103
    %145 = vmatprep.subr.mxu0 %v107
    %146 = vmatpush1.msra.mxu0 %v106
    %147 = vmatprep.subr.mxu0 %v110
    %148 = vmatpush1.msra.mxu0 %v109
    %149 = vmatprep.subr.mxu0 %v113
    %150 = vmatpush1.msra.mxu0 %v112
    %151 = vmatprep.subr.mxu0 %v116
    %152 = vmatpush1.msra.mxu0 %v115
    %153 = vmatprep.subr.mxu0 %v119
    %154 = vmatpush1.msra.mxu0 %v118
    %155 = vmatprep.subr.mxu0 %v122
    %156 = vmatpush1.msra.mxu0 %v121
    %157 = vmatprep.subr.mxu0 %v125
    %158 = vmatpush1.msra.mxu0 %v124
    %159 = vmatprep.subr.mxu0 0.0
    %160 = vmatpush1.msra.mxu0 0.0
    %161 = vmatprep.subr.mxu0 0.0
    %162 = vmatpush1.msra.mxu0 0.0
    %163 = vmatprep.subr.mxu0 0.0
    %164 = vmatpush1.msra.mxu0 0.0
    %165 = vmatprep.subr.mxu0 0.0
    %166 = vmatpush1.msra.mxu0 0.0
    %167 = vmatprep.subr.mxu0 0.0
    %168 = vmatpush1.msra.mxu0 0.0
    %169 = vmatprep.subr.mxu0 0.0
    %170 = vmatpush1.msra.mxu0 0.0
    %171 = vmatprep.subr.mxu0 0.0
    %172 = vmatpush1.msra.mxu0 0.0
    %173 = vmatprep.subr.mxu0 0.0
    %174 = vmatpush1.msra.mxu0 0.0
    %175 = vmatprep.subr.mxu0 0.0
    %176 = vmatpush1.msra.mxu0 0.0
    %177 = vmatprep.subr.mxu0 0.0
    %178 = vmatpush1.msra.mxu0 0.0
    %179 = vmatprep.subr.mxu0 0.0
    %180 = vmatpush1.msra.mxu0 0.0
    %181 = vmatprep.subr.mxu0 0.0
    %182 = vmatpush1.msra.mxu0 0.0
    %183 = vmatprep.subr.mxu0 0.0
    %184 = vmatpush1.msra.mxu0 0.0
    %185 = vmatprep.subr.mxu0 0.0
    %186 = vmatpush1.msra.mxu0 0.0
    %187 = vmatprep.subr.mxu0 0.0
    %188 = vmatpush1.msra.mxu0 0.0
    %189 = vmatprep.subr.mxu0 0.0
    %190 = vmatpush1.msra.mxu0 0.0
    %191 = vmatprep.mubr.f32.mxu0 0.0
    %192 = vmatmul.mubr.f32.gmra.mrb[0].mxu0 %v78
    %v193 = vpop.f32.mrb[0].mxu0
    %v194 = vadd.f32 0.0, %v193
    %v195 = vpop.f32.mrb[0].mxu0
    %v196 = vadd.f32 0.0, %v195
    %197 = vdwg.mxu0
    %198 = vmatprep.subr.mxu0 0.0
    %199 = vmatpush1.msra.mxu0 %v81
    %200 = vmatprep.subr.mxu0 0.0
    %201 = vmatpush1.msra.mxu0 %v84
    %202 = vmatprep.subr.mxu0 0.0
    %203 = vmatpush1.msra.mxu0 %v87
    %204 = vmatprep.subr.mxu0 0.0
    %205 = vmatpush1.msra.mxu0 %v90
    %206 = vmatprep.subr.mxu0 0.0
    %207 = vmatpush1.msra.mxu0 %v93
    %208 = vmatprep.subr.mxu0 0.0
    %209 = vmatpush1.msra.mxu0 %v96
    %210 = vmatprep.subr.mxu0 0.0
    %211 = vmatpush1.msra.mxu0 %v99
    %212 = vmatprep.subr.mxu0 0.0
    %213 = vmatpush1.msra.mxu0 %v102
    %214 = vmatprep.subr.mxu0 0.0
    %215 = vmatpush1.msra.mxu0 %v105
    %216 = vmatprep.subr.mxu0 0.0
    %217 = vmatpush1.msra.mxu0 %v108
    %218 = vmatprep.subr.mxu0 0.0
    %219 = vmatpush1.msra.mxu0 %v111
    %220 = vmatprep.subr.mxu0 0.0
    %221 = vmatpush1.msra.mxu0 %v114
    %222 = vmatprep.subr.mxu0 0.0
    %223 = vmatpush1.msra.mxu0 %v117
    %224 = vmatprep.subr.mxu0 0.0
    %225 = vmatpush1.msra.mxu0 %v120
    %226 = vmatprep.subr.mxu0 0.0
    %227 = vmatpush1.msra.mxu0 %v123
    %228 = vmatprep.subr.mxu0 0.0
    %229 = vmatpush1.msra.mxu0 %v126
    %230 = vmatprep.subr.mxu0 0.0
    %231 = vmatpush1.msra.mxu0 0.0
    %232 = vmatprep.subr.mxu0 0.0
    %233 = vmatpush1.msra.mxu0 0.0
    %234 = vmatprep.subr.mxu0 0.0
    %235 = vmatpush1.msra.mxu0 0.0
    %236 = vmatprep.subr.mxu0 0.0
    %237 = vmatpush1.msra.mxu0 0.0
    %238 = vmatprep.subr.mxu0 0.0
    %239 = vmatpush1.msra.mxu0 0.0
    %240 = vmatprep.subr.mxu0 0.0
    %241 = vmatpush1.msra.mxu0 0.0
    %242 = vmatprep.subr.mxu0 0.0
    %243 = vmatpush1.msra.mxu0 0.0
    %244 = vmatprep.subr.mxu0 0.0
    %245 = vmatpush1.msra.mxu0 0.0
    %246 = vmatprep.subr.mxu0 0.0
    %247 = vmatpush1.msra.mxu0 0.0
    %248 = vmatprep.subr.mxu0 0.0
    %249 = vmatpush1.msra.mxu0 0.0
    %250 = vmatprep.subr.mxu0 0.0
    %251 = vmatpush1.msra.mxu0 0.0
    %252 = vmatprep.subr.mxu0 0.0
    %253 = vmatpush1.msra.mxu0 0.0
    %254 = vmatprep.subr.mxu0 0.0
    %255 = vmatpush1.msra.mxu0 0.0
    %256 = vmatprep.subr.mxu0 0.0
    %257 = vmatpush1.msra.mxu0 0.0
    %258 = vmatprep.subr.mxu0 0.0
    %259 = vmatpush1.msra.mxu0 0.0
    %260 = vmatprep.subr.mxu0 0.0
    %261 = vmatpush1.msra.mxu0 0.0
    %262 = vmatprep.mubr.f32.mxu0 0.0
    %263 = vmatmul.mubr.f32.gmra.mrb[0].mxu0 %v78
    %v264 = vpop.f32.mrb[0].mxu0
    %v265 = vadd.f32 0.0, %v264
    %v266 = vpop.f32.mrb[0].mxu0
    %267 = vdwg.mxu0
    %v271 = vrot.slane %v194, 1
    %v272 = vrot.slane %v196, 1
    %v273 = vrot.slane %v265, 1
    %v277 = vld [vmem:[#allocation3 + $0x180] sm:$0xff]
    %v278 = vld [vmem:[#allocation3 + $0x188] sm:$0xff]
    %v279 = vld [vmem:[#allocation3 + $0x190] sm:$0xff]
    %v280 = vld [vmem:[#allocation3 + $0x198] sm:$0xff]
    %v281 = vld [vmem:[#allocation3 + $0x1a0] sm:$0xff]
    %v282 = vld [vmem:[#allocation3 + $0x1a8] sm:$0xff]
    %v283 = vld [vmem:[#allocation3 + $0x1b0] sm:$0xff]
    %v284 = vld [vmem:[#allocation3 + $0x1b8] sm:$0xff]
    %v285 = vld [vmem:[#allocation3 + $0x1c0] sm:$0xff]
    %v286 = vld [vmem:[#allocation3 + $0x1c8] sm:$0xff]
    %v287 = vld [vmem:[#allocation3 + $0x1d0] sm:$0xff]
    %v288 = vld [vmem:[#allocation3 + $0x1d8] sm:$0xff]
    %v289 = vld [vmem:[#allocation3 + $0x1e0] sm:$0xff]
    %v290 = vld [vmem:[#allocation3 + $0x1e8] sm:$0xff]
    %v291 = vld [vmem:[#allocation3 + $0x1f0] sm:$0xff]
    %v292 = vld [vmem:[#allocation3 + $0x1f8] sm:$0xff]
    %v293 = vld [vmem:[#allocation3 + $0x200] sm:$0xff]
    %v294 = vld [vmem:[#allocation3 + $0x208] sm:$0xff]
    %v295 = vld [vmem:[#allocation3 + $0x210] sm:$0xff]
    %v296 = vld [vmem:[#allocation3 + $0x218] sm:$0xff]
    %v297 = vld [vmem:[#allocation3 + $0x220] sm:$0xff]
    %v298 = vld [vmem:[#allocation3 + $0x228] sm:$0xff]
    %v299 = vld [vmem:[#allocation3 + $0x230] sm:$0xff]
    %v300 = vld [vmem:[#allocation3 + $0x238] sm:$0xff]
    %v301 = vld [vmem:[#allocation3 + $0x240] sm:$0xff]
    %v302 = vld [vmem:[#allocation3 + $0x248] sm:$0xff]
    %v303 = vld [vmem:[#allocation3 + $0x250] sm:$0xff]
    %v304 = vld [vmem:[#allocation3 + $0x258] sm:$0xff]
    %v305 = vld [vmem:[#allocation3 + $0x260] sm:$0xff]
    %v306 = vld [vmem:[#allocation3 + $0x268] sm:$0xff]
    %v307 = vld [vmem:[#allocation3 + $0x270] sm:$0xff]
    %v308 = vld [vmem:[#allocation3 + $0x278] sm:$0xff]
    %v309 = vld [vmem:[#allocation3 + $0x280] sm:$0xff]
    %v310 = vld [vmem:[#allocation3 + $0x288] sm:$0xff]
    %v311 = vld [vmem:[#allocation3 + $0x290] sm:$0xff]
    %v312 = vld [vmem:[#allocation3 + $0x298] sm:$0xff]
    %v313 = vld [vmem:[#allocation3 + $0x2a0] sm:$0xff]
    %v314 = vld [vmem:[#allocation3 + $0x2a8] sm:$0xff]
    %v315 = vld [vmem:[#allocation3 + $0x2b0] sm:$0xff]
    %v316 = vld [vmem:[#allocation3 + $0x2b8] sm:$0xff]
    %v317 = vld [vmem:[#allocation3 + $0x2c0] sm:$0xff]
    %v318 = vld [vmem:[#allocation3 + $0x2c8] sm:$0xff]
    %v319 = vld [vmem:[#allocation3 + $0x2d0] sm:$0xff]
    %v320 = vld [vmem:[#allocation3 + $0x2d8] sm:$0xff]
    %v321 = vld [vmem:[#allocation3 + $0x2e0] sm:$0xff]
    %v322 = vld [vmem:[#allocation3 + $0x2e8] sm:$0xff]
    %v323 = vld [vmem:[#allocation3 + $0x2f0] sm:$0xff]
    %v324 = vld [vmem:[#allocation3 + $0x2f8] sm:$0xff]
    %325 = vmatprep.subr.mxu0 %v278
    %326 = vmatpush1.msra.mxu0 %v277
    %327 = vmatprep.subr.mxu0 %v281
    %328 = vmatpush1.msra.mxu0 %v280
    %329 = vmatprep.subr.mxu0 %v284
    %330 = vmatpush1.msra.mxu0 %v283
    %331 = vmatprep.subr.mxu0 %v287
    %332 = vmatpush1.msra.mxu0 %v286
    %333 = vmatprep.subr.mxu0 %v290
    %334 = vmatpush1.msra.mxu0 %v289
    %335 = vmatprep.subr.mxu0 %v293
    %336 = vmatpush1.msra.mxu0 %v292
    %337 = vmatprep.subr.mxu0 %v296
    %338 = vmatpush1.msra.mxu0 %v295
    %339 = vmatprep.subr.mxu0 %v299
    %340 = vmatpush1.msra.mxu0 %v298
    %341 = vmatprep.subr.mxu0 %v302
    %342 = vmatpush1.msra.mxu0 %v301
    %343 = vmatprep.subr.mxu0 %v305
    %344 = vmatpush1.msra.mxu0 %v304
    %345 = vmatprep.subr.mxu0 %v308
    %346 = vmatpush1.msra.mxu0 %v307
    %347 = vmatprep.subr.mxu0 %v311
    %348 = vmatpush1.msra.mxu0 %v310
    %349 = vmatprep.subr.mxu0 %v314
    %350 = vmatpush1.msra.mxu0 %v313
    %351 = vmatprep.subr.mxu0 %v317
    %352 = vmatpush1.msra.mxu0 %v316
    %353 = vmatprep.subr.mxu0 %v320
    %354 = vmatpush1.msra.mxu0 %v319
    %355 = vmatprep.subr.mxu0 %v323
    %356 = vmatpush1.msra.mxu0 %v322
    %357 = vmatprep.subr.mxu0 0.0
    %358 = vmatpush1.msra.mxu0 0.0
    %359 = vmatprep.subr.mxu0 0.0
    %360 = vmatpush1.msra.mxu0 0.0
    %361 = vmatprep.subr.mxu0 0.0
    %362 = vmatpush1.msra.mxu0 0.0
    %363 = vmatprep.subr.mxu0 0.0
    %364 = vmatpush1.msra.mxu0 0.0
    %365 = vmatprep.subr.mxu0 0.0
    %366 = vmatpush1.msra.mxu0 0.0
    %367 = vmatprep.subr.mxu0 0.0
    %368 = vmatpush1.msra.mxu0 0.0
    %369 = vmatprep.subr.mxu0 0.0
    %370 = vmatpush1.msra.mxu0 0.0
    %371 = vmatprep.subr.mxu0 0.0
    %372 = vmatpush1.msra.mxu0 0.0
    %373 = vmatprep.subr.mxu0 0.0
    %374 = vmatpush1.msra.mxu0 0.0
    %375 = vmatprep.subr.mxu0 0.0
    %376 = vmatpush1.msra.mxu0 0.0
    %377 = vmatprep.subr.mxu0 0.0
    %378 = vmatpush1.msra.mxu0 0.0
    %379 = vmatprep.subr.mxu0 0.0
    %380 = vmatpush1.msra.mxu0 0.0
    %381 = vmatprep.subr.mxu0 0.0
    %382 = vmatpush1.msra.mxu0 0.0
    %383 = vmatprep.subr.mxu0 0.0
    %384 = vmatpush1.msra.mxu0 0.0
    %385 = vmatprep.subr.mxu0 0.0
    %386 = vmatpush1.msra.mxu0 0.0
    %387 = vmatprep.subr.mxu0 0.0
    %388 = vmatpush1.msra.mxu0 0.0
    %389 = vmatprep.mubr.f32.mxu0 0.0
    %390 = vmatmul.mubr.f32.gmra.mrb[0].mxu0 %v78
    %v391 = vpop.f32.mrb[0].mxu0
    %v392 = vadd.f32 0.0, %v391
    %v393 = vpop.f32.mrb[0].mxu0
    %v394 = vadd.f32 0.0, %v393
    %395 = vdwg.mxu0
    %396 = vmatprep.subr.mxu0 0.0
    %397 = vmatpush1.msra.mxu0 %v279
    %398 = vmatprep.subr.mxu0 0.0
    %399 = vmatpush1.msra.mxu0 %v282
    %400 = vmatprep.subr.mxu0 0.0
    %401 = vmatpush1.msra.mxu0 %v285
    %402 = vmatprep.subr.mxu0 0.0
    %403 = vmatpush1.msra.mxu0 %v288
    %404 = vmatprep.subr.mxu0 0.0
    %405 = vmatpush1.msra.mxu0 %v291
    %406 = vmatprep.subr.mxu0 0.0
    %407 = vmatpush1.msra.mxu0 %v294
    %408 = vmatprep.subr.mxu0 0.0
    %409 = vmatpush1.msra.mxu0 %v297
    %410 = vmatprep.subr.mxu0 0.0
    %411 = vmatpush1.msra.mxu0 %v300
    %412 = vmatprep.subr.mxu0 0.0
    %413 = vmatpush1.msra.mxu0 %v303
    %414 = vmatprep.subr.mxu0 0.0
    %415 = vmatpush1.msra.mxu0 %v306
    %416 = vmatprep.subr.mxu0 0.0
    %417 = vmatpush1.msra.mxu0 %v309
    %418 = vmatprep.subr.mxu0 0.0
    %419 = vmatpush1.msra.mxu0 %v312
    %420 = vmatprep.subr.mxu0 0.0
    %421 = vmatpush1.msra.mxu0 %v315
    %422 = vmatprep.subr.mxu0 0.0
    %423 = vmatpush1.msra.mxu0 %v318
    %424 = vmatprep.subr.mxu0 0.0
    %425 = vmatpush1.msra.mxu0 %v321
    %426 = vmatprep.subr.mxu0 0.0
    %427 = vmatpush1.msra.mxu0 %v324
    %428 = vmatprep.subr.mxu0 0.0
    %429 = vmatpush1.msra.mxu0 0.0
    %430 = vmatprep.subr.mxu0 0.0
    %431 = vmatpush1.msra.mxu0 0.0
    %432 = vmatprep.subr.mxu0 0.0
    %433 = vmatpush1.msra.mxu0 0.0
    %434 = vmatprep.subr.mxu0 0.0
    %435 = vmatpush1.msra.mxu0 0.0
    %436 = vmatprep.subr.mxu0 0.0
    %437 = vmatpush1.msra.mxu0 0.0
    %438 = vmatprep.subr.mxu0 0.0
    %439 = vmatpush1.msra.mxu0 0.0
    %440 = vmatprep.subr.mxu0 0.0
    %441 = vmatpush1.msra.mxu0 0.0
    %442 = vmatprep.subr.mxu0 0.0
    %443 = vmatpush1.msra.mxu0 0.0
    %444 = vmatprep.subr.mxu0 0.0
    %445 = vmatpush1.msra.mxu0 0.0
    %446 = vmatprep.subr.mxu0 0.0
    %447 = vmatpush1.msra.mxu0 0.0
    %448 = vmatprep.subr.mxu0 0.0
    %449 = vmatpush1.msra.mxu0 0.0
    %450 = vmatprep.subr.mxu0 0.0
    %451 = vmatpush1.msra.mxu0 0.0
    %452 = vmatprep.subr.mxu0 0.0
    %453 = vmatpush1.msra.mxu0 0.0
    %454 = vmatprep.subr.mxu0 0.0
    %455 = vmatpush1.msra.mxu0 0.0
    %456 = vmatprep.subr.mxu0 0.0
    %457 = vmatpush1.msra.mxu0 0.0
    %458 = vmatprep.subr.mxu0 0.0
    %459 = vmatpush1.msra.mxu0 0.0
    %460 = vmatprep.mubr.f32.mxu0 0.0
    %461 = vmatmul.mubr.f32.gmra.mrb[0].mxu0 %v78
    %v462 = vpop.f32.mrb[0].mxu0
    %v463 = vadd.f32 0.0, %v462
    %v464 = vpop.f32.mrb[0].mxu0
    %465 = vdwg.mxu0
    %v469 = vrot.slane %v392, 1
    %v470 = vrot.slane %v394, 1
    %v471 = vrot.slane %v463, 1
    %v472 = vrot.slane %v392, 7
    %v473 = vrot.slane %v394, 7
    %v474 = vrot.slane %v463, 7
    %v475 = vrot.slane %v469, 7
    %v476 = vrot.slane %v470, 7
    %v477 = vrot.slane %v471, 7
    %vm484 = vcmask 1040384
    %v485 = vsel %vm484, %v194, %v472
    %v486 = vsel %vm484, %v196, %v473
    %v487 = vsel %vm484, %v265, %v474
    %v488 = vsel %vm484, %v271, %v475
    %v489 = vsel %vm484, %v272, %v476
    %v490 = vsel %vm484, %v273, %v477
    %v491 = vld [vmem:[%s2] sm:$0xff]
    %v492 = vld [vmem:[%s2 + $0x8] sm:$0xf]
    %v495 = vcombine.high %v491, %v491
    %v497 = vunpack.c.l.s4 1983009808
    %v498 = vunpack.c.0.s8 %v497
    %v499 = vlaneseq
    %v500 = vshrl.u32 %v499, 7
    %v501 = vsub.s32 %v498, %v500
    %v502 = vrot.slane %v491, %v501
    %v504 = vunpack.c.l.s4 1983009808
    %v505 = vunpack.c.0.s8 %v504
    %v506 = vlaneseq
    %v507 = vshrl.u32 %v506, 7
    %v508 = vsub.s32 %v505, %v507
    %v509 = vrot.slane %v495, %v508
    %v510 = vcombine.high %v502, %v502
    %v511 = vcombine.high %v509, %v509
    %v513 = vunpack.c.l.s4 1983009808
    %v514 = vunpack.c.0.s8 %v513
    %v515 = vlaneseq
    %v516 = vshrl.u32 %v515, 7
    %v517 = vsub.s32 %v514, %v516
    %v518 = vrot.slane %v492, %v517
    %v519 = vcombine.high %v518, %v518
    %v526 = vadd.f32 %v485, %v502
    %v527 = vadd.f32 %v486, %v510
    %v528 = vadd.f32 %v487, %v509
    %v529 = vadd.f32 %v488, %v511
    %v530 = vadd.f32 %v489, %v518
    %v531 = vadd.f32 %v490, %v519
    %532 = vrot.lane.b32.xlu0 %v526, 34
    %v533 = vpop.permute.xlu0 %532
    %534 = vrot.lane.b32.xlu0 %v527, 34
    %v535 = vpop.permute.xlu0 %534
    %536 = vrot.lane.b32.xlu0 %v528, 34
    %v537 = vpop.permute.xlu0 %536
    %538 = vrot.lane.b32.xlu0 %v529, 34
    %v539 = vpop.permute.xlu0 %538
    %540 = vrot.lane.b32.xlu0 %v530, 34
    %v541 = vpop.permute.xlu0 %540
    %542 = vrot.lane.b32.xlu0 %v531, 34
    %v543 = vpop.permute.xlu0 %542
    %v544 = vlaneseq
    %v545 = vand.u32 %v544, 127
    %vm546 = vcmp.lt.s32.totalorder %v545, 34
    %v547 = vsel %vm546, %v541, %v543
    %v548 = vsel %vm546, %v539, %v541
    %v549 = vsel %vm546, %v537, %v539
    %v550 = vsel %vm546, %v535, %v537
    %v551 = vsel %vm546, %v533, %v535
    %v552 = vsel %vm546, %v543, %v533
    %v553 = vld [vmem:[#allocation5] ss:$8 sm:$0xf]
    %v554 = vld [vmem:[#allocation5] ss:$8 sm:$0x30]
    %v555 = vor.u32 %v553, %v554
    %v557 = vlaneseq
    %v558 = vshrl.u32 %v557, 7
    %v559 = vsub.s32 0, %v558
    %v560 = vrot.slane %v555, %v559
    %v561 = vlaneseq
    %v562 = vshrl.u32 %v561, 7
    %v563 = vsub.s32 1, %v562
    %v564 = vrot.slane %v555, %v563
    %v565 = vlaneseq
    %v566 = vshrl.u32 %v565, 7
    %v567 = vsub.s32 2, %v566
    %v568 = vrot.slane %v555, %v567
    %v569 = vlaneseq
    %v570 = vshrl.u32 %v569, 7
    %v571 = vsub.s32 3, %v570
    %v572 = vrot.slane %v555, %v571
    %v573 = vlaneseq
    %v574 = vshrl.u32 %v573, 7
    %v575 = vsub.s32 4, %v574
    %v576 = vrot.slane %v555, %v575
    %v577 = vlaneseq
    %v578 = vshrl.u32 %v577, 7
    %v579 = vsub.s32 5, %v578
    %v580 = vrot.slane %v555, %v579
    %v587 = vmul.f32 %v552, %v560
    %v588 = vmul.f32 %v551, %v564
    %v589 = vmul.f32 %v550, %v568
    %v590 = vmul.f32 %v549, %v572
    %v591 = vmul.f32 %v548, %v576
    %v592 = vmul.f32 %v547, %v580
    %593 = vst [vmem:[#allocation2] sm:$0x3] %v587
    %594 = vst [vmem:[#allocation2 + $0x8] sm:$0x3] %v588
    %595 = vst [vmem:[#allocation2 + $0x10] sm:$0x3] %v589
    %596 = vst [vmem:[#allocation2 + $0x18] sm:$0x3] %v590
    %597 = vst [vmem:[#allocation2 + $0x20] sm:$0x3] %v591
    %598 = vst [vmem:[#allocation2 + $0x28] sm:$0x3] %v592
    %599 = vrot.lane.b32.xlu0 %v526, 33
    %v600 = vpop.permute.xlu0 %599
    %601 = vrot.lane.b32.xlu0 %v527, 33
    %v602 = vpop.permute.xlu0 %601
    %603 = vrot.lane.b32.xlu0 %v528, 33
    %v604 = vpop.permute.xlu0 %603
    %605 = vrot.lane.b32.xlu0 %v529, 33
    %v606 = vpop.permute.xlu0 %605
    %607 = vrot.lane.b32.xlu0 %v530, 33
    %v608 = vpop.permute.xlu0 %607
    %609 = vrot.lane.b32.xlu0 %v531, 33
    %v610 = vpop.permute.xlu0 %609
    %vm611 = vcmp.lt.s32.totalorder %v545, 33
    %v612 = vsel %vm611, %v608, %v610
    %v613 = vsel %vm611, %v606, %v608
    %v614 = vsel %vm611, %v604, %v606
    %v615 = vsel %vm611, %v602, %v604
    %v616 = vsel %vm611, %v600, %v602
    %v617 = vsel %vm611, %v610, %v600
    %s618 = scalar_lea.vmem [#allocation5], 1
    %v619 = vld [vmem:[%s618] ss:$8 sm:$0xf]
    %v620 = vld [vmem:[%s618] ss:$8 sm:$0x30]
    %v621 = vor.u32 %v619, %v620
    %v623 = vlaneseq
    %v624 = vshrl.u32 %v623, 7
    %v625 = vsub.s32 0, %v624
    %v626 = vrot.slane %v621, %v625
    %v627 = vlaneseq
    %v628 = vshrl.u32 %v627, 7
    %v629 = vsub.s32 1, %v628
    %v630 = vrot.slane %v621, %v629
    %v631 = vlaneseq
    %v632 = vshrl.u32 %v631, 7
    %v633 = vsub.s32 2, %v632
    %v634 = vrot.slane %v621, %v633
    %v635 = vlaneseq
    %v636 = vshrl.u32 %v635, 7
    %v637 = vsub.s32 3, %v636
    %v638 = vrot.slane %v621, %v637
    %v639 = vlaneseq
    %v640 = vshrl.u32 %v639, 7
    %v641 = vsub.s32 4, %v640
    %v642 = vrot.slane %v621, %v641
    %v643 = vlaneseq
    %v644 = vshrl.u32 %v643, 7
    %v645 = vsub.s32 5, %v644
    %v646 = vrot.slane %v621, %v645
    %v653 = vmul.f32 %v617, %v626
    %v654 = vmul.f32 %v616, %v630
    %v655 = vmul.f32 %v615, %v634
    %v656 = vmul.f32 %v614, %v638
    %v657 = vmul.f32 %v613, %v642
    %v658 = vmul.f32 %v612, %v646
    %v665 = vrot.slane %v653, 6
    %v666 = vrot.slane %v654, 6
    %v667 = vrot.slane %v655, 6
    %v668 = vrot.slane %v656, 6
    %v669 = vrot.slane %v657, 6
    %v670 = vrot.slane %v658, 6
    %677 = vst [vmem:[#allocation2] sm:$0xc] %v665
    %678 = vst [vmem:[#allocation2 + $0x8] sm:$0xc] %v666
    %679 = vst [vmem:[#allocation2 + $0x10] sm:$0xc] %v667
    %680 = vst [vmem:[#allocation2 + $0x18] sm:$0xc] %v668
    %681 = vst [vmem:[#allocation2 + $0x20] sm:$0xc] %v669
    %682 = vst [vmem:[#allocation2 + $0x28] sm:$0xc] %v670
    %683 = vrot.lane.b32.xlu0 %v526, 32
    %v684 = vpop.permute.xlu0 %683
    %685 = vrot.lane.b32.xlu0 %v527, 32
    %v686 = vpop.permute.xlu0 %685
    %687 = vrot.lane.b32.xlu0 %v528, 32
    %v688 = vpop.permute.xlu0 %687
    %689 = vrot.lane.b32.xlu0 %v529, 32
    %v690 = vpop.permute.xlu0 %689
    %691 = vrot.lane.b32.xlu0 %v530, 32
    %v692 = vpop.permute.xlu0 %691
    %693 = vrot.lane.b32.xlu0 %v531, 32
    %v694 = vpop.permute.xlu0 %693
    %vm695 = vcmp.lt.s32.totalorder %v545, 32
    %v696 = vsel %vm695, %v692, %v694
    %v697 = vsel %vm695, %v690, %v692
    %v698 = vsel %vm695, %v688, %v690
    %v699 = vsel %vm695, %v686, %v688
    %v700 = vsel %vm695, %v684, %v686
    %v701 = vsel %vm695, %v694, %v684
    %s702 = scalar_lea.vmem [#allocation5], 2
    %v703 = vld [vmem:[%s702] ss:$8 sm:$0xf]
    %v704 = vld [vmem:[%s702] ss:$8 sm:$0x30]
    %v705 = vor.u32 %v703, %v704
    %v707 = vlaneseq
    %v708 = vshrl.u32 %v707, 7
    %v709 = vsub.s32 0, %v708
    %v710 = vrot.slane %v705, %v709
    %v711 = vlaneseq
    %v712 = vshrl.u32 %v711, 7
    %v713 = vsub.s32 1, %v712
    %v714 = vrot.slane %v705, %v713
    %v715 = vlaneseq
    %v716 = vshrl.u32 %v715, 7
    %v717 = vsub.s32 2, %v716
    %v718 = vrot.slane %v705, %v717
    %v719 = vlaneseq
    %v720 = vshrl.u32 %v719, 7
    %v721 = vsub.s32 3, %v720
    %v722 = vrot.slane %v705, %v721
    %v723 = vlaneseq
    %v724 = vshrl.u32 %v723, 7
    %v725 = vsub.s32 4, %v724
    %v726 = vrot.slane %v705, %v725
    %v727 = vlaneseq
    %v728 = vshrl.u32 %v727, 7
    %v729 = vsub.s32 5, %v728
    %v730 = vrot.slane %v705, %v729
    %v737 = vmul.f32 %v701, %v710
    %v738 = vmul.f32 %v700, %v714
    %v739 = vmul.f32 %v699, %v718
    %v740 = vmul.f32 %v698, %v722
    %v741 = vmul.f32 %v697, %v726
    %v742 = vmul.f32 %v696, %v730
    %v749 = vrot.slane %v737, 4
    %v750 = vrot.slane %v738, 4
    %v751 = vrot.slane %v739, 4
    %v752 = vrot.slane %v740, 4
    %v753 = vrot.slane %v741, 4
    %v754 = vrot.slane %v742, 4
    %761 = vst [vmem:[#allocation2] sm:$0x30] %v749
    %762 = vst [vmem:[#allocation2 + $0x8] sm:$0x30] %v750
    %763 = vst [vmem:[#allocation2 + $0x10] sm:$0x30] %v751
    %764 = vst [vmem:[#allocation2 + $0x18] sm:$0x30] %v752
    %765 = vst [vmem:[#allocation2 + $0x20] sm:$0x30] %v753
    %766 = vst [vmem:[#allocation2 + $0x28] sm:$0x30] %v754
    %767 = vrot.lane.b32.xlu0 %v526, 31
    %v768 = vpop.permute.xlu0 %767
    %769 = vrot.lane.b32.xlu0 %v527, 31
    %v770 = vpop.permute.xlu0 %769
    %771 = vrot.lane.b32.xlu0 %v528, 31
    %v772 = vpop.permute.xlu0 %771
    %773 = vrot.lane.b32.xlu0 %v529, 31
    %v774 = vpop.permute.xlu0 %773
    %775 = vrot.lane.b32.xlu0 %v530, 31
    %v776 = vpop.permute.xlu0 %775
    %777 = vrot.lane.b32.xlu0 %v531, 31
    %v778 = vpop.permute.xlu0 %777
    %vm779 = vcmp.lt.s32.totalorder %v545, 31
    %v780 = vsel %vm779, %v776, %v778
    %v781 = vsel %vm779, %v774, %v776
    %v782 = vsel %vm779, %v772, %v774
    %v783 = vsel %vm779, %v770, %v772
    %v784 = vsel %vm779, %v768, %v770
    %v785 = vsel %vm779, %v778, %v768
    %s786 = scalar_lea.vmem [#allocation5], 3
    %v787 = vld [vmem:[%s786] ss:$8 sm:$0xf]
    %v788 = vld [vmem:[%s786] ss:$8 sm:$0x30]
    %v789 = vor.u32 %v787, %v788
    %v791 = vlaneseq
    %v792 = vshrl.u32 %v791, 7
    %v793 = vsub.s32 0, %v792
    %v794 = vrot.slane %v789, %v793
    %v795 = vlaneseq
    %v796 = vshrl.u32 %v795, 7
    %v797 = vsub.s32 1, %v796
    %v798 = vrot.slane %v789, %v797
    %v799 = vlaneseq
    %v800 = vshrl.u32 %v799, 7
    %v801 = vsub.s32 2, %v800
    %v802 = vrot.slane %v789, %v801
    %v803 = vlaneseq
    %v804 = vshrl.u32 %v803, 7
    %v805 = vsub.s32 3, %v804
    %v806 = vrot.slane %v789, %v805
    %v807 = vlaneseq
    %v808 = vshrl.u32 %v807, 7
    %v809 = vsub.s32 4, %v808
    %v810 = vrot.slane %v789, %v809
    %v811 = vlaneseq
    %v812 = vshrl.u32 %v811, 7
    %v813 = vsub.s32 5, %v812
    %v814 = vrot.slane %v789, %v813
    %v821 = vmul.f32 %v785, %v794
    %v822 = vmul.f32 %v784, %v798
    %v823 = vmul.f32 %v783, %v802
    %v824 = vmul.f32 %v782, %v806
    %v825 = vmul.f32 %v781, %v810
    %v826 = vmul.f32 %v780, %v814
    %v833 = vrot.slane %v821, 2
    %v834 = vrot.slane %v822, 2
    %v835 = vrot.slane %v823, 2
    %v836 = vrot.slane %v824, 2
    %v837 = vrot.slane %v825, 2
    %v838 = vrot.slane %v826, 2
    %845 = vst [vmem:[#allocation2] sm:$0xc0] %v833
    %846 = vst [vmem:[#allocation2 + $0x8] sm:$0xc0] %v834
    %847 = vst [vmem:[#allocation2 + $0x10] sm:$0xc0] %v835
    %848 = vst [vmem:[#allocation2 + $0x18] sm:$0xc0] %v836
    %849 = vst [vmem:[#allocation2 + $0x20] sm:$0xc0] %v837
    %850 = vst [vmem:[#allocation2 + $0x28] sm:$0xc0] %v838
    %851 = vrot.lane.b32.xlu0 %v526, 30
    %v852 = vpop.permute.xlu0 %851
    %853 = vrot.lane.b32.xlu0 %v527, 30
    %v854 = vpop.permute.xlu0 %853
    %855 = vrot.lane.b32.xlu0 %v528, 30
    %v856 = vpop.permute.xlu0 %855
    %857 = vrot.lane.b32.xlu0 %v529, 30
    %v858 = vpop.permute.xlu0 %857
    %859 = vrot.lane.b32.xlu0 %v530, 30
    %v860 = vpop.permute.xlu0 %859
    %861 = vrot.lane.b32.xlu0 %v531, 30
    %v862 = vpop.permute.xlu0 %861
    %vm863 = vcmp.lt.s32.totalorder %v545, 30
    %v864 = vsel %vm863, %v860, %v862
    %v865 = vsel %vm863, %v858, %v860
    %v866 = vsel %vm863, %v856, %v858
    %v867 = vsel %vm863, %v854, %v856
    %v868 = vsel %vm863, %v852, %v854
    %v869 = vsel %vm863, %v862, %v852
    %s870 = scalar_lea.vmem [#allocation5], 4
    %v871 = vld [vmem:[%s870] ss:$8 sm:$0xf]
    %v872 = vld [vmem:[%s870] ss:$8 sm:$0x30]
    %v873 = vor.u32 %v871, %v872
    %v875 = vlaneseq
    %v876 = vshrl.u32 %v875, 7
    %v877 = vsub.s32 0, %v876
    %v878 = vrot.slane %v873, %v877
    %v879 = vlaneseq
    %v880 = vshrl.u32 %v879, 7
    %v881 = vsub.s32 1, %v880
    %v882 = vrot.slane %v873, %v881
    %v883 = vlaneseq
    %v884 = vshrl.u32 %v883, 7
    %v885 = vsub.s32 2, %v884
    %v886 = vrot.slane %v873, %v885
    %v887 = vlaneseq
    %v888 = vshrl.u32 %v887, 7
    %v889 = vsub.s32 3, %v888
    %v890 = vrot.slane %v873, %v889
    %v891 = vlaneseq
    %v892 = vshrl.u32 %v891, 7
    %v893 = vsub.s32 4, %v892
    %v894 = vrot.slane %v873, %v893
    %v895 = vlaneseq
    %v896 = vshrl.u32 %v895, 7
    %v897 = vsub.s32 5, %v896
    %v898 = vrot.slane %v873, %v897
    %v905 = vmul.f32 %v869, %v878
    %v906 = vmul.f32 %v868, %v882
    %v907 = vmul.f32 %v867, %v886
    %v908 = vmul.f32 %v866, %v890
    %v909 = vmul.f32 %v865, %v894
    %v910 = vmul.f32 %v864, %v898
    %911 = vst [vmem:[#allocation2 + $0x30] sm:$0x3] %v905
    %912 = vst [vmem:[#allocation2 + $0x38] sm:$0x3] %v906
    %913 = vst [vmem:[#allocation2 + $0x40] sm:$0x3] %v907
    %914 = vst [vmem:[#allocation2 + $0x48] sm:$0x3] %v908
    %915 = vst [vmem:[#allocation2 + $0x50] sm:$0x3] %v909
    %916 = vst [vmem:[#allocation2 + $0x58] sm:$0x3] %v910
    %917 = vrot.lane.b32.xlu0 %v526, 18
    %v918 = vpop.permute.xlu0 %917
    %919 = vrot.lane.b32.xlu0 %v527, 18
    %v920 = vpop.permute.xlu0 %919
    %921 = vrot.lane.b32.xlu0 %v528, 18
    %v922 = vpop.permute.xlu0 %921
    %923 = vrot.lane.b32.xlu0 %v529, 18
    %v924 = vpop.permute.xlu0 %923
    %925 = vrot.lane.b32.xlu0 %v530, 18
    %v926 = vpop.permute.xlu0 %925
    %927 = vrot.lane.b32.xlu0 %v531, 18
    %v928 = vpop.permute.xlu0 %927
    %vm929 = vcmp.lt.s32.totalorder %v545, 18
    %v930 = vsel %vm929, %v926, %v928
    %v931 = vsel %vm929, %v924, %v926
    %v932 = vsel %vm929, %v922, %v924
    %v933 = vsel %vm929, %v920, %v922
    %v934 = vsel %vm929, %v918, %v920
    %v935 = vsel %vm929, %v928, %v918
    %s936 = scalar_lea.vmem [#allocation5], 5
    %v937 = vld [vmem:[%s936] ss:$8 sm:$0xf]
    %v938 = vld [vmem:[%s936] ss:$8 sm:$0x30]
    %v939 = vor.u32 %v937, %v938
    %v941 = vlaneseq
    %v942 = vshrl.u32 %v941, 7
    %v943 = vsub.s32 0, %v942
    %v944 = vrot.slane %v939, %v943
    %v945 = vlaneseq
    %v946 = vshrl.u32 %v945, 7
    %v947 = vsub.s32 1, %v946
    %v948 = vrot.slane %v939, %v947
    %v949 = vlaneseq
    %v950 = vshrl.u32 %v949, 7
    %v951 = vsub.s32 2, %v950
    %v952 = vrot.slane %v939, %v951
    %v953 = vlaneseq
    %v954 = vshrl.u32 %v953, 7
    %v955 = vsub.s32 3, %v954
    %v956 = vrot.slane %v939, %v955
    %v957 = vlaneseq
    %v958 = vshrl.u32 %v957, 7
    %v959 = vsub.s32 4, %v958
    %v960 = vrot.slane %v939, %v959
    %v961 = vlaneseq
    %v962 = vshrl.u32 %v961, 7
    %v963 = vsub.s32 5, %v962
    %v964 = vrot.slane %v939, %v963
    %v971 = vmul.f32 %v935, %v944
    %v972 = vmul.f32 %v934, %v948
    %v973 = vmul.f32 %v933, %v952
    %v974 = vmul.f32 %v932, %v956
    %v975 = vmul.f32 %v931, %v960
    %v976 = vmul.f32 %v930, %v964
    %v983 = vrot.slane %v971, 6
    %v984 = vrot.slane %v972, 6
    %v985 = vrot.slane %v973, 6
    %v986 = vrot.slane %v974, 6
    %v987 = vrot.slane %v975, 6
    %v988 = vrot.slane %v976, 6
    %995 = vst [vmem:[#allocation2 + $0x30] sm:$0xc] %v983
    %996 = vst [vmem:[#allocation2 + $0x38] sm:$0xc] %v984
    %997 = vst [vmem:[#allocation2 + $0x40] sm:$0xc] %v985
    %998 = vst [vmem:[#allocation2 + $0x48] sm:$0xc] %v986
    %999 = vst [vmem:[#allocation2 + $0x50] sm:$0xc] %v987
    %1000 = vst [vmem:[#allocation2 + $0x58] sm:$0xc] %v988
    %1001 = vrot.lane.b32.xlu0 %v526, 17
    %v1002 = vpop.permute.xlu0 %1001
    %1003 = vrot.lane.b32.xlu0 %v527, 17
    %v1004 = vpop.permute.xlu0 %1003
    %1005 = vrot.lane.b32.xlu0 %v528, 17
    %v1006 = vpop.permute.xlu0 %1005
    %1007 = vrot.lane.b32.xlu0 %v529, 17
    %v1008 = vpop.permute.xlu0 %1007
    %1009 = vrot.lane.b32.xlu0 %v530, 17
    %v1010 = vpop.permute.xlu0 %1009
    %1011 = vrot.lane.b32.xlu0 %v531, 17
    %v1012 = vpop.permute.xlu0 %1011
    %vm1013 = vcmp.lt.s32.totalorder %v545, 17
    %v1014 = vsel %vm1013, %v1010, %v1012
    %v1015 = vsel %vm1013, %v1008, %v1010
    %v1016 = vsel %vm1013, %v1006, %v1008
    %v1017 = vsel %vm1013, %v1004, %v1006
    %v1018 = vsel %vm1013, %v1002, %v1004
    %v1019 = vsel %vm1013, %v1012, %v1002
    %s1020 = scalar_lea.vmem [#allocation5], 6
    %v1021 = vld [vmem:[%s1020] ss:$8 sm:$0xf]
    %v1022 = vld [vmem:[%s1020] ss:$8 sm:$0x30]
    %v1023 = vor.u32 %v1021, %v1022
    %v1025 = vlaneseq
    %v1026 = vshrl.u32 %v1025, 7
    %v1027 = vsub.s32 0, %v1026
    %v1028 = vrot.slane %v1023, %v1027
    %v1029 = vlaneseq
    %v1030 = vshrl.u32 %v1029, 7
    %v1031 = vsub.s32 1, %v1030
    %v1032 = vrot.slane %v1023, %v1031
    %v1033 = vlaneseq
    %v1034 = vshrl.u32 %v1033, 7
    %v1035 = vsub.s32 2, %v1034
    %v1036 = vrot.slane %v1023, %v1035
    %v1037 = vlaneseq
    %v1038 = vshrl.u32 %v1037, 7
    %v1039 = vsub.s32 3, %v1038
    %v1040 = vrot.slane %v1023, %v1039
    %v1041 = vlaneseq
    %v1042 = vshrl.u32 %v1041, 7
    %v1043 = vsub.s32 4, %v1042
    %v1044 = vrot.slane %v1023, %v1043
    %v1045 = vlaneseq
    %v1046 = vshrl.u32 %v1045, 7
    %v1047 = vsub.s32 5, %v1046
    %v1048 = vrot.slane %v1023, %v1047
    %v1055 = vmul.f32 %v1019, %v1028
    %v1056 = vmul.f32 %v1018, %v1032
    %v1057 = vmul.f32 %v1017, %v1036
    %v1058 = vmul.f32 %v1016, %v1040
    %v1059 = vmul.f32 %v1015, %v1044
    %v1060 = vmul.f32 %v1014, %v1048
    %v1067 = vrot.slane %v1055, 4
    %v1068 = vrot.slane %v1056, 4
    %v1069 = vrot.slane %v1057, 4
    %v1070 = vrot.slane %v1058, 4
    %v1071 = vrot.slane %v1059, 4
    %v1072 = vrot.slane %v1060, 4
    %1079 = vst [vmem:[#allocation2 + $0x30] sm:$0x30] %v1067
    %1080 = vst [vmem:[#allocation2 + $0x38] sm:$0x30] %v1068
    %1081 = vst [vmem:[#allocation2 + $0x40] sm:$0x30] %v1069
    %1082 = vst [vmem:[#allocation2 + $0x48] sm:$0x30] %v1070
    %1083 = vst [vmem:[#allocation2 + $0x50] sm:$0x30] %v1071
    %1084 = vst [vmem:[#allocation2 + $0x58] sm:$0x30] %v1072
    %1085 = vrot.lane.b32.xlu0 %v526, 16
    %v1086 = vpop.permute.xlu0 %1085
    %1087 = vrot.lane.b32.xlu0 %v527, 16
    %v1088 = vpop.permute.xlu0 %1087
    %1089 = vrot.lane.b32.xlu0 %v528, 16
    %v1090 = vpop.permute.xlu0 %1089
    %1091 = vrot.lane.b32.xlu0 %v529, 16
    %v1092 = vpop.permute.xlu0 %1091
    %1093 = vrot.lane.b32.xlu0 %v530, 16
    %v1094 = vpop.permute.xlu0 %1093
    %1095 = vrot.lane.b32.xlu0 %v531, 16
    %v1096 = vpop.permute.xlu0 %1095
    %vm1097 = vcmp.lt.s32.totalorder %v545, 16
    %v1098 = vsel %vm1097, %v1094, %v1096
    %v1099 = vsel %vm1097, %v1092, %v1094
    %v1100 = vsel %vm1097, %v1090, %v1092
    %v1101 = vsel %vm1097, %v1088, %v1090
    %v1102 = vsel %vm1097, %v1086, %v1088
    %v1103 = vsel %vm1097, %v1096, %v1086
    %s1104 = scalar_lea.vmem [#allocation5], 7
    %v1105 = vld [vmem:[%s1104] ss:$8 sm:$0xf]
    %v1106 = vld [vmem:[%s1104] ss:$8 sm:$0x30]
    %v1107 = vor.u32 %v1105, %v1106
    %v1109 = vlaneseq
    %v1110 = vshrl.u32 %v1109, 7
    %v1111 = vsub.s32 0, %v1110
    %v1112 = vrot.slane %v1107, %v1111
    %v1113 = vlaneseq
    %v1114 = vshrl.u32 %v1113, 7
    %v1115 = vsub.s32 1, %v1114
    %v1116 = vrot.slane %v1107, %v1115
    %v1117 = vlaneseq
    %v1118 = vshrl.u32 %v1117, 7
    %v1119 = vsub.s32 2, %v1118
    %v1120 = vrot.slane %v1107, %v1119
    %v1121 = vlaneseq
    %v1122 = vshrl.u32 %v1121, 7
    %v1123 = vsub.s32 3, %v1122
    %v1124 = vrot.slane %v1107, %v1123
    %v1125 = vlaneseq
    %v1126 = vshrl.u32 %v1125, 7
    %v1127 = vsub.s32 4, %v1126
    %v1128 = vrot.slane %v1107, %v1127
    %v1129 = vlaneseq
    %v1130 = vshrl.u32 %v1129, 7
    %v1131 = vsub.s32 5, %v1130
    %v1132 = vrot.slane %v1107, %v1131
    %v1139 = vmul.f32 %v1103, %v1112
    %v1140 = vmul.f32 %v1102, %v1116
    %v1141 = vmul.f32 %v1101, %v1120
    %v1142 = vmul.f32 %v1100, %v1124
    %v1143 = vmul.f32 %v1099, %v1128
    %v1144 = vmul.f32 %v1098, %v1132
    %v1151 = vrot.slane %v1139, 2
    %v1152 = vrot.slane %v1140, 2
    %v1153 = vrot.slane %v1141, 2
    %v1154 = vrot.slane %v1142, 2
    %v1155 = vrot.slane %v1143, 2
    %v1156 = vrot.slane %v1144, 2
    %1163 = vst [vmem:[#allocation2 + $0x30] sm:$0xc0] %v1151
    %1164 = vst [vmem:[#allocation2 + $0x38] sm:$0xc0] %v1152
    %1165 = vst [vmem:[#allocation2 + $0x40] sm:$0xc0] %v1153
    %1166 = vst [vmem:[#allocation2 + $0x48] sm:$0xc0] %v1154
    %1167 = vst [vmem:[#allocation2 + $0x50] sm:$0xc0] %v1155
    %1168 = vst [vmem:[#allocation2 + $0x58] sm:$0xc0] %v1156
    %1169 = vrot.lane.b32.xlu0 %v526, 15
    %v1170 = vpop.permute.xlu0 %1169
    %1171 = vrot.lane.b32.xlu0 %v527, 15
    %v1172 = vpop.permute.xlu0 %1171
    %1173 = vrot.lane.b32.xlu0 %v528, 15
    %v1174 = vpop.permute.xlu0 %1173
    %1175 = vrot.lane.b32.xlu0 %v529, 15
    %v1176 = vpop.permute.xlu0 %1175
    %1177 = vrot.lane.b32.xlu0 %v530, 15
    %v1178 = vpop.permute.xlu0 %1177
    %1179 = vrot.lane.b32.xlu0 %v531, 15
    %v1180 = vpop.permute.xlu0 %1179
    %vm1181 = vcmp.lt.s32.totalorder %v545, 15
    %v1182 = vsel %vm1181, %v1178, %v1180
    %v1183 = vsel %vm1181, %v1176, %v1178
    %v1184 = vsel %vm1181, %v1174, %v1176
    %v1185 = vsel %vm1181, %v1172, %v1174
    %v1186 = vsel %vm1181, %v1170, %v1172
    %v1187 = vsel %vm1181, %v1180, %v1170
    %s1188 = scalar_lea.vmem [#allocation5], 48
    %v1189 = vld [vmem:[%s1188] ss:$8 sm:$0xf]
    %v1190 = vld [vmem:[%s1188] ss:$8 sm:$0x30]
    %v1191 = vor.u32 %v1189, %v1190
    %v1193 = vlaneseq
    %v1194 = vshrl.u32 %v1193, 7
    %v1195 = vsub.s32 0, %v1194
    %v1196 = vrot.slane %v1191, %v1195
    %v1197 = vlaneseq
    %v1198 = vshrl.u32 %v1197, 7
    %v1199 = vsub.s32 1, %v1198
    %v1200 = vrot.slane %v1191, %v1199
    %v1201 = vlaneseq
    %v1202 = vshrl.u32 %v1201, 7
    %v1203 = vsub.s32 2, %v1202
    %v1204 = vrot.slane %v1191, %v1203
    %v1205 = vlaneseq
    %v1206 = vshrl.u32 %v1205, 7
    %v1207 = vsub.s32 3, %v1206
    %v1208 = vrot.slane %v1191, %v1207
    %v1209 = vlaneseq
    %v1210 = vshrl.u32 %v1209, 7
    %v1211 = vsub.s32 4, %v1210
    %v1212 = vrot.slane %v1191, %v1211
    %v1213 = vlaneseq
    %v1214 = vshrl.u32 %v1213, 7
    %v1215 = vsub.s32 5, %v1214
    %v1216 = vrot.slane %v1191, %v1215
    %v1223 = vmul.f32 %v1187, %v1196
    %v1224 = vmul.f32 %v1186, %v1200
    %v1225 = vmul.f32 %v1185, %v1204
    %v1226 = vmul.f32 %v1184, %v1208
    %v1227 = vmul.f32 %v1183, %v1212
    %v1228 = vmul.f32 %v1182, %v1216
    %1229 = vst [vmem:[#allocation2 + $0x60] sm:$0x3] %v1223
    %1230 = vst [vmem:[#allocation2 + $0x68] sm:$0x3] %v1224
    %1231 = vst [vmem:[#allocation2 + $0x70] sm:$0x3] %v1225
    %1232 = vst [vmem:[#allocation2 + $0x78] sm:$0x3] %v1226
    %1233 = vst [vmem:[#allocation2 + $0x80] sm:$0x3] %v1227
    %1234 = vst [vmem:[#allocation2 + $0x88] sm:$0x3] %v1228
    %1235 = vrot.lane.b32.xlu0 %v526, 14
    %v1236 = vpop.permute.xlu0 %1235
    %1237 = vrot.lane.b32.xlu0 %v527, 14
    %v1238 = vpop.permute.xlu0 %1237
    %1239 = vrot.lane.b32.xlu0 %v528, 14
    %v1240 = vpop.permute.xlu0 %1239
    %1241 = vrot.lane.b32.xlu0 %v529, 14
    %v1242 = vpop.permute.xlu0 %1241
    %1243 = vrot.lane.b32.xlu0 %v530, 14
    %v1244 = vpop.permute.xlu0 %1243
    %1245 = vrot.lane.b32.xlu0 %v531, 14
    %v1246 = vpop.permute.xlu0 %1245
    %vm1247 = vcmp.lt.s32.totalorder %v545, 14
    %v1248 = vsel %vm1247, %v1244, %v1246
    %v1249 = vsel %vm1247, %v1242, %v1244
    %v1250 = vsel %vm1247, %v1240, %v1242
    %v1251 = vsel %vm1247, %v1238, %v1240
    %v1252 = vsel %vm1247, %v1236, %v1238
    %v1253 = vsel %vm1247, %v1246, %v1236
    %s1254 = scalar_lea.vmem [#allocation5], 49
    %v1255 = vld [vmem:[%s1254] ss:$8 sm:$0xf]
    %v1256 = vld [vmem:[%s1254] ss:$8 sm:$0x30]
    %v1257 = vor.u32 %v1255, %v1256
    %v1259 = vlaneseq
    %v1260 = vshrl.u32 %v1259, 7
    %v1261 = vsub.s32 0, %v1260
    %v1262 = vrot.slane %v1257, %v1261
    %v1263 = vlaneseq
    %v1264 = vshrl.u32 %v1263, 7
    %v1265 = vsub.s32 1, %v1264
    %v1266 = vrot.slane %v1257, %v1265
    %v1267 = vlaneseq
    %v1268 = vshrl.u32 %v1267, 7
    %v1269 = vsub.s32 2, %v1268
    %v1270 = vrot.slane %v1257, %v1269
    %v1271 = vlaneseq
    %v1272 = vshrl.u32 %v1271, 7
    %v1273 = vsub.s32 3, %v1272
    %v1274 = vrot.slane %v1257, %v1273
    %v1275 = vlaneseq
    %v1276 = vshrl.u32 %v1275, 7
    %v1277 = vsub.s32 4, %v1276
    %v1278 = vrot.slane %v1257, %v1277
    %v1279 = vlaneseq
    %v1280 = vshrl.u32 %v1279, 7
    %v1281 = vsub.s32 5, %v1280
    %v1282 = vrot.slane %v1257, %v1281
    %v1289 = vmul.f32 %v1253, %v1262
    %v1290 = vmul.f32 %v1252, %v1266
    %v1291 = vmul.f32 %v1251, %v1270
    %v1292 = vmul.f32 %v1250, %v1274
    %v1293 = vmul.f32 %v1249, %v1278
    %v1294 = vmul.f32 %v1248, %v1282
    %v1301 = vrot.slane %v1289, 6
    %v1302 = vrot.slane %v1290, 6
    %v1303 = vrot.slane %v1291, 6
    %v1304 = vrot.slane %v1292, 6
    %v1305 = vrot.slane %v1293, 6
    %v1306 = vrot.slane %v1294, 6
    %1313 = vst [vmem:[#allocation2 + $0x60] sm:$0xc] %v1301
    %1314 = vst [vmem:[#allocation2 + $0x68] sm:$0xc] %v1302
    %1315 = vst [vmem:[#allocation2 + $0x70] sm:$0xc] %v1303
    %1316 = vst [vmem:[#allocation2 + $0x78] sm:$0xc] %v1304
    %1317 = vst [vmem:[#allocation2 + $0x80] sm:$0xc] %v1305
    %1318 = vst [vmem:[#allocation2 + $0x88] sm:$0xc] %v1306
    %1319 = vrot.lane.b32.xlu0 %v526, 2
    %v1320 = vpop.permute.xlu0 %1319
    %1321 = vrot.lane.b32.xlu0 %v527, 2
    %v1322 = vpop.permute.xlu0 %1321
    %1323 = vrot.lane.b32.xlu0 %v528, 2
    %v1324 = vpop.permute.xlu0 %1323
    %1325 = vrot.lane.b32.xlu0 %v529, 2
    %v1326 = vpop.permute.xlu0 %1325
    %1327 = vrot.lane.b32.xlu0 %v530, 2
    %v1328 = vpop.permute.xlu0 %1327
    %1329 = vrot.lane.b32.xlu0 %v531, 2
    %v1330 = vpop.permute.xlu0 %1329
    %vm1331 = vcmp.lt.s32.totalorder %v545, 2
    %v1332 = vsel %vm1331, %v1328, %v1330
    %v1333 = vsel %vm1331, %v1326, %v1328
    %v1334 = vsel %vm1331, %v1324, %v1326
    %v1335 = vsel %vm1331, %v1322, %v1324
    %v1336 = vsel %vm1331, %v1320, %v1322
    %v1337 = vsel %vm1331, %v1330, %v1320
    %s1338 = scalar_lea.vmem [#allocation5], 50
    %v1339 = vld [vmem:[%s1338] ss:$8 sm:$0xf]
    %v1340 = vld [vmem:[%s1338] ss:$8 sm:$0x30]
    %v1341 = vor.u32 %v1339, %v1340
    %v1343 = vlaneseq
    %v1344 = vshrl.u32 %v1343, 7
    %v1345 = vsub.s32 0, %v1344
    %v1346 = vrot.slane %v1341, %v1345
    %v1347 = vlaneseq
    %v1348 = vshrl.u32 %v1347, 7
    %v1349 = vsub.s32 1, %v1348
    %v1350 = vrot.slane %v1341, %v1349
    %v1351 = vlaneseq
    %v1352 = vshrl.u32 %v1351, 7
    %v1353 = vsub.s32 2, %v1352
    %v1354 = vrot.slane %v1341, %v1353
    %v1355 = vlaneseq
    %v1356 = vshrl.u32 %v1355, 7
    %v1357 = vsub.s32 3, %v1356
    %v1358 = vrot.slane %v1341, %v1357
    %v1359 = vlaneseq
    %v1360 = vshrl.u32 %v1359, 7
    %v1361 = vsub.s32 4, %v1360
    %v1362 = vrot.slane %v1341, %v1361
    %v1363 = vlaneseq
    %v1364 = vshrl.u32 %v1363, 7
    %v1365 = vsub.s32 5, %v1364
    %v1366 = vrot.slane %v1341, %v1365
    %v1373 = vmul.f32 %v1337, %v1346
    %v1374 = vmul.f32 %v1336, %v1350
    %v1375 = vmul.f32 %v1335, %v1354
    %v1376 = vmul.f32 %v1334, %v1358
    %v1377 = vmul.f32 %v1333, %v1362
    %v1378 = vmul.f32 %v1332, %v1366
    %v1385 = vrot.slane %v1373, 4
    %v1386 = vrot.slane %v1374, 4
    %v1387 = vrot.slane %v1375, 4
    %v1388 = vrot.slane %v1376, 4
    %v1389 = vrot.slane %v1377, 4
    %v1390 = vrot.slane %v1378, 4
    %1397 = vst [vmem:[#allocation2 + $0x60] sm:$0x30] %v1385
    %1398 = vst [vmem:[#allocation2 + $0x68] sm:$0x30] %v1386
    %1399 = vst [vmem:[#allocation2 + $0x70] sm:$0x30] %v1387
    %1400 = vst [vmem:[#allocation2 + $0x78] sm:$0x30] %v1388
    %1401 = vst [vmem:[#allocation2 + $0x80] sm:$0x30] %v1389
    %1402 = vst [vmem:[#allocation2 + $0x88] sm:$0x30] %v1390
    %1403 = vrot.lane.b32.xlu0 %v526, 1
    %v1404 = vpop.permute.xlu0 %1403
    %1405 = vrot.lane.b32.xlu0 %v527, 1
    %v1406 = vpop.permute.xlu0 %1405
    %1407 = vrot.lane.b32.xlu0 %v528, 1
    %v1408 = vpop.permute.xlu0 %1407
    %1409 = vrot.lane.b32.xlu0 %v529, 1
    %v1410 = vpop.permute.xlu0 %1409
    %1411 = vrot.lane.b32.xlu0 %v530, 1
    %v1412 = vpop.permute.xlu0 %1411
    %1413 = vrot.lane.b32.xlu0 %v531, 1
    %v1414 = vpop.permute.xlu0 %1413
    %vm1415 = vcmp.lt.s32.totalorder %v545, 1
    %v1416 = vsel %vm1415, %v1412, %v1414
    %v1417 = vsel %vm1415, %v1410, %v1412
    %v1418 = vsel %vm1415, %v1408, %v1410
    %v1419 = vsel %vm1415, %v1406, %v1408
    %v1420 = vsel %vm1415, %v1404, %v1406
    %v1421 = vsel %vm1415, %v1414, %v1404
    %s1422 = scalar_lea.vmem [#allocation5], 51
    %v1423 = vld [vmem:[%s1422] ss:$8 sm:$0xf]
    %v1424 = vld [vmem:[%s1422] ss:$8 sm:$0x30]
    %v1425 = vor.u32 %v1423, %v1424
    %v1427 = vlaneseq
    %v1428 = vshrl.u32 %v1427, 7
    %v1429 = vsub.s32 0, %v1428
    %v1430 = vrot.slane %v1425, %v1429
    %v1431 = vlaneseq
    %v1432 = vshrl.u32 %v1431, 7
    %v1433 = vsub.s32 1, %v1432
    %v1434 = vrot.slane %v1425, %v1433
    %v1435 = vlaneseq
    %v1436 = vshrl.u32 %v1435, 7
    %v1437 = vsub.s32 2, %v1436
    %v1438 = vrot.slane %v1425, %v1437
    %v1439 = vlaneseq
    %v1440 = vshrl.u32 %v1439, 7
    %v1441 = vsub.s32 3, %v1440
    %v1442 = vrot.slane %v1425, %v1441
    %v1443 = vlaneseq
    %v1444 = vshrl.u32 %v1443, 7
    %v1445 = vsub.s32 4, %v1444
    %v1446 = vrot.slane %v1425, %v1445
    %v1447 = vlaneseq
    %v1448 = vshrl.u32 %v1447, 7
    %v1449 = vsub.s32 5, %v1448
    %v1450 = vrot.slane %v1425, %v1449
    %v1457 = vmul.f32 %v1421, %v1430
    %v1458 = vmul.f32 %v1420, %v1434
    %v1459 = vmul.f32 %v1419, %v1438
    %v1460 = vmul.f32 %v1418, %v1442
    %v1461 = vmul.f32 %v1417, %v1446
    %v1462 = vmul.f32 %v1416, %v1450
    %v1469 = vrot.slane %v1457, 2
    %v1470 = vrot.slane %v1458, 2
    %v1471 = vrot.slane %v1459, 2
    %v1472 = vrot.slane %v1460, 2
    %v1473 = vrot.slane %v1461, 2
    %v1474 = vrot.slane %v1462, 2
    %1481 = vst [vmem:[#allocation2 + $0x60] sm:$0xc0] %v1469
    %1482 = vst [vmem:[#allocation2 + $0x68] sm:$0xc0] %v1470
    %1483 = vst [vmem:[#allocation2 + $0x70] sm:$0xc0] %v1471
    %1484 = vst [vmem:[#allocation2 + $0x78] sm:$0xc0] %v1472
    %1485 = vst [vmem:[#allocation2 + $0x80] sm:$0xc0] %v1473
    %1486 = vst [vmem:[#allocation2 + $0x88] sm:$0xc0] %v1474
    %1487 = vst [vmem:[#allocation2 + $0x90] sm:$0x3] %v526
    %1488 = vst [vmem:[#allocation2 + $0x98] sm:$0x3] %v527
    %1489 = vst [vmem:[#allocation2 + $0xa0] sm:$0x3] %v528
    %1490 = vst [vmem:[#allocation2 + $0xa8] sm:$0x3] %v529
    %1491 = vst [vmem:[#allocation2 + $0xb0] sm:$0x3] %v530
    %1492 = vst [vmem:[#allocation2 + $0xb8] sm:$0x3] %v531
    %1493 = vrot.lane.b32.xlu0 %v526, 127
    %v1494 = vpop.permute.xlu0 %1493
    %1495 = vrot.lane.b32.xlu0 %v527, 127
    %v1496 = vpop.permute.xlu0 %1495
    %1497 = vrot.lane.b32.xlu0 %v528, 127
    %v1498 = vpop.permute.xlu0 %1497
    %1499 = vrot.lane.b32.xlu0 %v529, 127
    %v1500 = vpop.permute.xlu0 %1499
    %1501 = vrot.lane.b32.xlu0 %v530, 127
    %v1502 = vpop.permute.xlu0 %1501
    %1503 = vrot.lane.b32.xlu0 %v531, 127
    %v1504 = vpop.permute.xlu0 %1503
    %vm1505 = vcmp.lt.s32.totalorder %v545, 127
    %v1506 = vsel %vm1505, %v1502, %v1504
    %v1507 = vsel %vm1505, %v1500, %v1502
    %v1508 = vsel %vm1505, %v1498, %v1500
    %v1509 = vsel %vm1505, %v1496, %v1498
    %v1510 = vsel %vm1505, %v1494, %v1496
    %v1511 = vsel %vm1505, %v1504, %v1494
    %s1512 = scalar_lea.vmem [#allocation5], 52
    %v1513 = vld [vmem:[%s1512] ss:$8 sm:$0xf]
    %v1514 = vld [vmem:[%s1512] ss:$8 sm:$0x30]
    %v1515 = vor.u32 %v1513, %v1514
    %v1517 = vlaneseq
    %v1518 = vshrl.u32 %v1517, 7
    %v1519 = vsub.s32 0, %v1518
    %v1520 = vrot.slane %v1515, %v1519
    %v1521 = vlaneseq
    %v1522 = vshrl.u32 %v1521, 7
    %v1523 = vsub.s32 1, %v1522
    %v1524 = vrot.slane %v1515, %v1523
    %v1525 = vlaneseq
    %v1526 = vshrl.u32 %v1525, 7
    %v1527 = vsub.s32 2, %v1526
    %v1528 = vrot.slane %v1515, %v1527
    %v1529 = vlaneseq
    %v1530 = vshrl.u32 %v1529, 7
    %v1531 = vsub.s32 3, %v1530
    %v1532 = vrot.slane %v1515, %v1531
    %v1533 = vlaneseq
    %v1534 = vshrl.u32 %v1533, 7
    %v1535 = vsub.s32 4, %v1534
    %v1536 = vrot.slane %v1515, %v1535
    %v1537 = vlaneseq
    %v1538 = vshrl.u32 %v1537, 7
    %v1539 = vsub.s32 5, %v1538
    %v1540 = vrot.slane %v1515, %v1539
    %v1547 = vmul.f32 %v1510, %v1520
    %v1548 = vmul.f32 %v1509, %v1524
    %v1549 = vmul.f32 %v1508, %v1528
    %v1550 = vmul.f32 %v1507, %v1532
    %v1551 = vmul.f32 %v1506, %v1536
    %v1552 = vmul.f32 %v1511, %v1540
    %v1559 = vrot.slane %v1547, 6
    %v1560 = vrot.slane %v1548, 6
    %v1561 = vrot.slane %v1549, 6
    %v1562 = vrot.slane %v1550, 6
    %v1563 = vrot.slane %v1551, 6
    %v1564 = vrot.slane %v1552, 6
    %1571 = vst [vmem:[#allocation2 + $0x90] sm:$0xc] %v1559
    %1572 = vst [vmem:[#allocation2 + $0x98] sm:$0xc] %v1560
    %1573 = vst [vmem:[#allocation2 + $0xa0] sm:$0xc] %v1561
    %1574 = vst [vmem:[#allocation2 + $0xa8] sm:$0xc] %v1562
    %1575 = vst [vmem:[#allocation2 + $0xb0] sm:$0xc] %v1563
    %1576 = vst [vmem:[#allocation2 + $0xb8] sm:$0xc] %v1564
    %1577 = vrot.lane.b32.xlu0 %v526, 126
    %v1578 = vpop.permute.xlu0 %1577
    %1579 = vrot.lane.b32.xlu0 %v527, 126
    %v1580 = vpop.permute.xlu0 %1579
    %1581 = vrot.lane.b32.xlu0 %v528, 126
    %v1582 = vpop.permute.xlu0 %1581
    %1583 = vrot.lane.b32.xlu0 %v529, 126
    %v1584 = vpop.permute.xlu0 %1583
    %1585 = vrot.lane.b32.xlu0 %v530, 126
    %v1586 = vpop.permute.xlu0 %1585
    %1587 = vrot.lane.b32.xlu0 %v531, 126
    %v1588 = vpop.permute.xlu0 %1587
    %vm1589 = vcmp.lt.s32.totalorder %v545, 126
    %v1590 = vsel %vm1589, %v1586, %v1588
    %v1591 = vsel %vm1589, %v1584, %v1586
    %v1592 = vsel %vm1589, %v1582, %v1584
    %v1593 = vsel %vm1589, %v1580, %v1582
    %v1594 = vsel %vm1589, %v1578, %v1580
    %v1595 = vsel %vm1589, %v1588, %v1578
    %s1596 = scalar_lea.vmem [#allocation5], 53
    %v1597 = vld [vmem:[%s1596] ss:$8 sm:$0xf]
    %v1598 = vld [vmem:[%s1596] ss:$8 sm:$0x30]
    %v1599 = vor.u32 %v1597, %v1598
    %v1601 = vlaneseq
    %v1602 = vshrl.u32 %v1601, 7
    %v1603 = vsub.s32 0, %v1602
    %v1604 = vrot.slane %v1599, %v1603
    %v1605 = vlaneseq
    %v1606 = vshrl.u32 %v1605, 7
    %v1607 = vsub.s32 1, %v1606
    %v1608 = vrot.slane %v1599, %v1607
    %v1609 = vlaneseq
    %v1610 = vshrl.u32 %v1609, 7
    %v1611 = vsub.s32 2, %v1610
    %v1612 = vrot.slane %v1599, %v1611
    %v1613 = vlaneseq
    %v1614 = vshrl.u32 %v1613, 7
    %v1615 = vsub.s32 3, %v1614
    %v1616 = vrot.slane %v1599, %v1615
    %v1617 = vlaneseq
    %v1618 = vshrl.u32 %v1617, 7
    %v1619 = vsub.s32 4, %v1618
    %v1620 = vrot.slane %v1599, %v1619
    %v1621 = vlaneseq
    %v1622 = vshrl.u32 %v1621, 7
    %v1623 = vsub.s32 5, %v1622
    %v1624 = vrot.slane %v1599, %v1623
    %v1631 = vmul.f32 %v1594, %v1604
    %v1632 = vmul.f32 %v1593, %v1608
    %v1633 = vmul.f32 %v1592, %v1612
    %v1634 = vmul.f32 %v1591, %v1616
    %v1635 = vmul.f32 %v1590, %v1620
    %v1636 = vmul.f32 %v1595, %v1624
    %v1643 = vrot.slane %v1631, 4
    %v1644 = vrot.slane %v1632, 4
    %v1645 = vrot.slane %v1633, 4
    %v1646 = vrot.slane %v1634, 4
    %v1647 = vrot.slane %v1635, 4
    %v1648 = vrot.slane %v1636, 4
    %1655 = vst [vmem:[#allocation2 + $0x90] sm:$0x30] %v1643
    %1656 = vst [vmem:[#allocation2 + $0x98] sm:$0x30] %v1644
    %1657 = vst [vmem:[#allocation2 + $0xa0] sm:$0x30] %v1645
    %1658 = vst [vmem:[#allocation2 + $0xa8] sm:$0x30] %v1646
    %1659 = vst [vmem:[#allocation2 + $0xb0] sm:$0x30] %v1647
    %1660 = vst [vmem:[#allocation2 + $0xb8] sm:$0x30] %v1648
    %1661 = vrot.lane.b32.xlu0 %v526, 114
    %v1662 = vpop.permute.xlu0 %1661
    %1663 = vrot.lane.b32.xlu0 %v527, 114
    %v1664 = vpop.permute.xlu0 %1663
    %1665 = vrot.lane.b32.xlu0 %v528, 114
    %v1666 = vpop.permute.xlu0 %1665
    %1667 = vrot.lane.b32.xlu0 %v529, 114
    %v1668 = vpop.permute.xlu0 %1667
    %1669 = vrot.lane.b32.xlu0 %v530, 114
    %v1670 = vpop.permute.xlu0 %1669
    %1671 = vrot.lane.b32.xlu0 %v531, 114
    %v1672 = vpop.permute.xlu0 %1671
    %vm1673 = vcmp.lt.s32.totalorder %v545, 114
    %v1674 = vsel %vm1673, %v1670, %v1672
    %v1675 = vsel %vm1673, %v1668, %v1670
    %v1676 = vsel %vm1673, %v1666, %v1668
    %v1677 = vsel %vm1673, %v1664, %v1666
    %v1678 = vsel %vm1673, %v1662, %v1664
    %v1679 = vsel %vm1673, %v1672, %v1662
    %s1680 = scalar_lea.vmem [#allocation5], 54
    %v1681 = vld [vmem:[%s1680] ss:$8 sm:$0xf]
    %v1682 = vld [vmem:[%s1680] ss:$8 sm:$0x30]
    %v1683 = vor.u32 %v1681, %v1682
    %v1685 = vlaneseq
    %v1686 = vshrl.u32 %v1685, 7
    %v1687 = vsub.s32 0, %v1686
    %v1688 = vrot.slane %v1683, %v1687
    %v1689 = vlaneseq
    %v1690 = vshrl.u32 %v1689, 7
    %v1691 = vsub.s32 1, %v1690
    %v1692 = vrot.slane %v1683, %v1691
    %v1693 = vlaneseq
    %v1694 = vshrl.u32 %v1693, 7
    %v1695 = vsub.s32 2, %v1694
    %v1696 = vrot.slane %v1683, %v1695
    %v1697 = vlaneseq
    %v1698 = vshrl.u32 %v1697, 7
    %v1699 = vsub.s32 3, %v1698
    %v1700 = vrot.slane %v1683, %v1699
    %v1701 = vlaneseq
    %v1702 = vshrl.u32 %v1701, 7
    %v1703 = vsub.s32 4, %v1702
    %v1704 = vrot.slane %v1683, %v1703
    %v1705 = vlaneseq
    %v1706 = vshrl.u32 %v1705, 7
    %v1707 = vsub.s32 5, %v1706
    %v1708 = vrot.slane %v1683, %v1707
    %v1715 = vmul.f32 %v1678, %v1688
    %v1716 = vmul.f32 %v1677, %v1692
    %v1717 = vmul.f32 %v1676, %v1696
    %v1718 = vmul.f32 %v1675, %v1700
    %v1719 = vmul.f32 %v1674, %v1704
    %v1720 = vmul.f32 %v1679, %v1708
    %v1727 = vrot.slane %v1715, 2
    %v1728 = vrot.slane %v1716, 2
    %v1729 = vrot.slane %v1717, 2
    %v1730 = vrot.slane %v1718, 2
    %v1731 = vrot.slane %v1719, 2
    %v1732 = vrot.slane %v1720, 2
    %1739 = vst [vmem:[#allocation2 + $0x90] sm:$0xc0] %v1727
    %1740 = vst [vmem:[#allocation2 + $0x98] sm:$0xc0] %v1728
    %1741 = vst [vmem:[#allocation2 + $0xa0] sm:$0xc0] %v1729
    %1742 = vst [vmem:[#allocation2 + $0xa8] sm:$0xc0] %v1730
    %1743 = vst [vmem:[#allocation2 + $0xb0] sm:$0xc0] %v1731
    %1744 = vst [vmem:[#allocation2 + $0xb8] sm:$0xc0] %v1732
    %1745 = vrot.lane.b32.xlu0 %v526, 113
    %v1746 = vpop.permute.xlu0 %1745
    %1747 = vrot.lane.b32.xlu0 %v527, 113
    %v1748 = vpop.permute.xlu0 %1747
    %1749 = vrot.lane.b32.xlu0 %v528, 113
    %v1750 = vpop.permute.xlu0 %1749
    %1751 = vrot.lane.b32.xlu0 %v529, 113
    %v1752 = vpop.permute.xlu0 %1751
    %1753 = vrot.lane.b32.xlu0 %v530, 113
    %v1754 = vpop.permute.xlu0 %1753
    %1755 = vrot.lane.b32.xlu0 %v531, 113
    %v1756 = vpop.permute.xlu0 %1755
    %vm1757 = vcmp.lt.s32.totalorder %v545, 113
    %v1758 = vsel %vm1757, %v1754, %v1756
    %v1759 = vsel %vm1757, %v1752, %v1754
    %v1760 = vsel %vm1757, %v1750, %v1752
    %v1761 = vsel %vm1757, %v1748, %v1750
    %v1762 = vsel %vm1757, %v1746, %v1748
    %v1763 = vsel %vm1757, %v1756, %v1746
    %s1764 = scalar_lea.vmem [#allocation5], 55
    %v1765 = vld [vmem:[%s1764] ss:$8 sm:$0xf]
    %v1766 = vld [vmem:[%s1764] ss:$8 sm:$0x30]
    %v1767 = vor.u32 %v1765, %v1766
    %v1769 = vlaneseq
    %v1770 = vshrl.u32 %v1769, 7
    %v1771 = vsub.s32 0, %v1770
    %v1772 = vrot.slane %v1767, %v1771
    %v1773 = vlaneseq
    %v1774 = vshrl.u32 %v1773, 7
    %v1775 = vsub.s32 1, %v1774
    %v1776 = vrot.slane %v1767, %v1775
    %v1777 = vlaneseq
    %v1778 = vshrl.u32 %v1777, 7
    %v1779 = vsub.s32 2, %v1778
    %v1780 = vrot.slane %v1767, %v1779
    %v1781 = vlaneseq
    %v1782 = vshrl.u32 %v1781, 7
    %v1783 = vsub.s32 3, %v1782
    %v1784 = vrot.slane %v1767, %v1783
    %v1785 = vlaneseq
    %v1786 = vshrl.u32 %v1785, 7
    %v1787 = vsub.s32 4, %v1786
    %v1788 = vrot.slane %v1767, %v1787
    %v1789 = vlaneseq
    %v1790 = vshrl.u32 %v1789, 7
    %v1791 = vsub.s32 5, %v1790
    %v1792 = vrot.slane %v1767, %v1791
    %v1799 = vmul.f32 %v1762, %v1772
    %v1800 = vmul.f32 %v1761, %v1776
    %v1801 = vmul.f32 %v1760, %v1780
    %v1802 = vmul.f32 %v1759, %v1784
    %v1803 = vmul.f32 %v1758, %v1788
    %v1804 = vmul.f32 %v1763, %v1792
    %1805 = vst [vmem:[#allocation2 + $0xc0] sm:$0x3] %v1799
    %1806 = vst [vmem:[#allocation2 + $0xc8] sm:$0x3] %v1800
    %1807 = vst [vmem:[#allocation2 + $0xd0] sm:$0x3] %v1801
    %1808 = vst [vmem:[#allocation2 + $0xd8] sm:$0x3] %v1802
    %1809 = vst [vmem:[#allocation2 + $0xe0] sm:$0x3] %v1803
    %1810 = vst [vmem:[#allocation2 + $0xe8] sm:$0x3] %v1804
    %1811 = vrot.lane.b32.xlu0 %v526, 112
    %v1812 = vpop.permute.xlu0 %1811
    %1813 = vrot.lane.b32.xlu0 %v527, 112
    %v1814 = vpop.permute.xlu0 %1813
    %1815 = vrot.lane.b32.xlu0 %v528, 112
    %v1816 = vpop.permute.xlu0 %1815
    %1817 = vrot.lane.b32.xlu0 %v529, 112
    %v1818 = vpop.permute.xlu0 %1817
    %1819 = vrot.lane.b32.xlu0 %v530, 112
    %v1820 = vpop.permute.xlu0 %1819
    %1821 = vrot.lane.b32.xlu0 %v531, 112
    %v1822 = vpop.permute.xlu0 %1821
    %vm1823 = vcmp.lt.s32.totalorder %v545, 112
    %v1824 = vsel %vm1823, %v1820, %v1822
    %v1825 = vsel %vm1823, %v1818, %v1820
    %v1826 = vsel %vm1823, %v1816, %v1818
    %v1827 = vsel %vm1823, %v1814, %v1816
    %v1828 = vsel %vm1823, %v1812, %v1814
    %v1829 = vsel %vm1823, %v1822, %v1812
    %s1830 = scalar_lea.vmem [#allocation5], 96
    %v1831 = vld [vmem:[%s1830] ss:$8 sm:$0xf]
    %v1832 = vld [vmem:[%s1830] ss:$8 sm:$0x30]
    %v1833 = vor.u32 %v1831, %v1832
    %v1835 = vlaneseq
    %v1836 = vshrl.u32 %v1835, 7
    %v1837 = vsub.s32 0, %v1836
    %v1838 = vrot.slane %v1833, %v1837
    %v1839 = vlaneseq
    %v1840 = vshrl.u32 %v1839, 7
    %v1841 = vsub.s32 1, %v1840
    %v1842 = vrot.slane %v1833, %v1841
    %v1843 = vlaneseq
    %v1844 = vshrl.u32 %v1843, 7
    %v1845 = vsub.s32 2, %v1844
    %v1846 = vrot.slane %v1833, %v1845
    %v1847 = vlaneseq
    %v1848 = vshrl.u32 %v1847, 7
    %v1849 = vsub.s32 3, %v1848
    %v1850 = vrot.slane %v1833, %v1849
    %v1851 = vlaneseq
    %v1852 = vshrl.u32 %v1851, 7
    %v1853 = vsub.s32 4, %v1852
    %v1854 = vrot.slane %v1833, %v1853
    %v1855 = vlaneseq
    %v1856 = vshrl.u32 %v1855, 7
    %v1857 = vsub.s32 5, %v1856
    %v1858 = vrot.slane %v1833, %v1857
    %v1865 = vmul.f32 %v1828, %v1838
    %v1866 = vmul.f32 %v1827, %v1842
    %v1867 = vmul.f32 %v1826, %v1846
    %v1868 = vmul.f32 %v1825, %v1850
    %v1869 = vmul.f32 %v1824, %v1854
    %v1870 = vmul.f32 %v1829, %v1858
    %v1877 = vrot.slane %v1865, 6
    %v1878 = vrot.slane %v1866, 6
    %v1879 = vrot.slane %v1867, 6
    %v1880 = vrot.slane %v1868, 6
    %v1881 = vrot.slane %v1869, 6
    %v1882 = vrot.slane %v1870, 6
    %1889 = vst [vmem:[#allocation2 + $0xc0] sm:$0xc] %v1877
    %1890 = vst [vmem:[#allocation2 + $0xc8] sm:$0xc] %v1878
    %1891 = vst [vmem:[#allocation2 + $0xd0] sm:$0xc] %v1879
    %1892 = vst [vmem:[#allocation2 + $0xd8] sm:$0xc] %v1880
    %1893 = vst [vmem:[#allocation2 + $0xe0] sm:$0xc] %v1881
    %1894 = vst [vmem:[#allocation2 + $0xe8] sm:$0xc] %v1882
    %1895 = vrot.lane.b32.xlu0 %v526, 111
    %v1896 = vpop.permute.xlu0 %1895
    %1897 = vrot.lane.b32.xlu0 %v527, 111
    %v1898 = vpop.permute.xlu0 %1897
    %1899 = vrot.lane.b32.xlu0 %v528, 111
    %v1900 = vpop.permute.xlu0 %1899
    %1901 = vrot.lane.b32.xlu0 %v529, 111
    %v1902 = vpop.permute.xlu0 %1901
    %1903 = vrot.lane.b32.xlu0 %v530, 111
    %v1904 = vpop.permute.xlu0 %1903
    %1905 = vrot.lane.b32.xlu0 %v531, 111
    %v1906 = vpop.permute.xlu0 %1905
    %vm1907 = vcmp.lt.s32.totalorder %v545, 111
    %v1908 = vsel %vm1907, %v1904, %v1906
    %v1909 = vsel %vm1907, %v1902, %v1904
    %v1910 = vsel %vm1907, %v1900, %v1902
    %v1911 = vsel %vm1907, %v1898, %v1900
    %v1912 = vsel %vm1907, %v1896, %v1898
    %v1913 = vsel %vm1907, %v1906, %v1896
    %s1914 = scalar_lea.vmem [#allocation5], 97
    %v1915 = vld [vmem:[%s1914] ss:$8 sm:$0xf]
    %v1916 = vld [vmem:[%s1914] ss:$8 sm:$0x30]
    %v1917 = vor.u32 %v1915, %v1916
    %v1919 = vlaneseq
    %v1920 = vshrl.u32 %v1919, 7
    %v1921 = vsub.s32 0, %v1920
    %v1922 = vrot.slane %v1917, %v1921
    %v1923 = vlaneseq
    %v1924 = vshrl.u32 %v1923, 7
    %v1925 = vsub.s32 1, %v1924
    %v1926 = vrot.slane %v1917, %v1925
    %v1927 = vlaneseq
    %v1928 = vshrl.u32 %v1927, 7
    %v1929 = vsub.s32 2, %v1928
    %v1930 = vrot.slane %v1917, %v1929
    %v1931 = vlaneseq
    %v1932 = vshrl.u32 %v1931, 7
    %v1933 = vsub.s32 3, %v1932
    %v1934 = vrot.slane %v1917, %v1933
    %v1935 = vlaneseq
    %v1936 = vshrl.u32 %v1935, 7
    %v1937 = vsub.s32 4, %v1936
    %v1938 = vrot.slane %v1917, %v1937
    %v1939 = vlaneseq
    %v1940 = vshrl.u32 %v1939, 7
    %v1941 = vsub.s32 5, %v1940
    %v1942 = vrot.slane %v1917, %v1941
    %v1949 = vmul.f32 %v1912, %v1922
    %v1950 = vmul.f32 %v1911, %v1926
    %v1951 = vmul.f32 %v1910, %v1930
    %v1952 = vmul.f32 %v1909, %v1934
    %v1953 = vmul.f32 %v1908, %v1938
    %v1954 = vmul.f32 %v1913, %v1942
    %v1961 = vrot.slane %v1949, 4
    %v1962 = vrot.slane %v1950, 4
    %v1963 = vrot.slane %v1951, 4
    %v1964 = vrot.slane %v1952, 4
    %v1965 = vrot.slane %v1953, 4
    %v1966 = vrot.slane %v1954, 4
    %1973 = vst [vmem:[#allocation2 + $0xc0] sm:$0x30] %v1961
    %1974 = vst [vmem:[#allocation2 + $0xc8] sm:$0x30] %v1962
    %1975 = vst [vmem:[#allocation2 + $0xd0] sm:$0x30] %v1963
    %1976 = vst [vmem:[#allocation2 + $0xd8] sm:$0x30] %v1964
    %1977 = vst [vmem:[#allocation2 + $0xe0] sm:$0x30] %v1965
    %1978 = vst [vmem:[#allocation2 + $0xe8] sm:$0x30] %v1966
    %1979 = vrot.lane.b32.xlu0 %v526, 110
    %v1980 = vpop.permute.xlu0 %1979
    %1981 = vrot.lane.b32.xlu0 %v527, 110
    %v1982 = vpop.permute.xlu0 %1981
    %1983 = vrot.lane.b32.xlu0 %v528, 110
    %v1984 = vpop.permute.xlu0 %1983
    %1985 = vrot.lane.b32.xlu0 %v529, 110
    %v1986 = vpop.permute.xlu0 %1985
    %1987 = vrot.lane.b32.xlu0 %v530, 110
    %v1988 = vpop.permute.xlu0 %1987
    %1989 = vrot.lane.b32.xlu0 %v531, 110
    %v1990 = vpop.permute.xlu0 %1989
    %vm1991 = vcmp.lt.s32.totalorder %v545, 110
    %v1992 = vsel %vm1991, %v1988, %v1990
    %v1993 = vsel %vm1991, %v1986, %v1988
    %v1994 = vsel %vm1991, %v1984, %v1986
    %v1995 = vsel %vm1991, %v1982, %v1984
    %v1996 = vsel %vm1991, %v1980, %v1982
    %v1997 = vsel %vm1991, %v1990, %v1980
    %s1998 = scalar_lea.vmem [#allocation5], 98
    %v1999 = vld [vmem:[%s1998] ss:$8 sm:$0xf]
    %v2000 = vld [vmem:[%s1998] ss:$8 sm:$0x30]
    %v2001 = vor.u32 %v1999, %v2000
    %v2003 = vlaneseq
    %v2004 = vshrl.u32 %v2003, 7
    %v2005 = vsub.s32 0, %v2004
    %v2006 = vrot.slane %v2001, %v2005
    %v2007 = vlaneseq
    %v2008 = vshrl.u32 %v2007, 7
    %v2009 = vsub.s32 1, %v2008
    %v2010 = vrot.slane %v2001, %v2009
    %v2011 = vlaneseq
    %v2012 = vshrl.u32 %v2011, 7
    %v2013 = vsub.s32 2, %v2012
    %v2014 = vrot.slane %v2001, %v2013
    %v2015 = vlaneseq
    %v2016 = vshrl.u32 %v2015, 7
    %v2017 = vsub.s32 3, %v2016
    %v2018 = vrot.slane %v2001, %v2017
    %v2019 = vlaneseq
    %v2020 = vshrl.u32 %v2019, 7
    %v2021 = vsub.s32 4, %v2020
    %v2022 = vrot.slane %v2001, %v2021
    %v2023 = vlaneseq
    %v2024 = vshrl.u32 %v2023, 7
    %v2025 = vsub.s32 5, %v2024
    %v2026 = vrot.slane %v2001, %v2025
    %v2033 = vmul.f32 %v1996, %v2006
    %v2034 = vmul.f32 %v1995, %v2010
    %v2035 = vmul.f32 %v1994, %v2014
    %v2036 = vmul.f32 %v1993, %v2018
    %v2037 = vmul.f32 %v1992, %v2022
    %v2038 = vmul.f32 %v1997, %v2026
    %v2045 = vrot.slane %v2033, 2
    %v2046 = vrot.slane %v2034, 2
    %v2047 = vrot.slane %v2035, 2
    %v2048 = vrot.slane %v2036, 2
    %v2049 = vrot.slane %v2037, 2
    %v2050 = vrot.slane %v2038, 2
    %2057 = vst [vmem:[#allocation2 + $0xc0] sm:$0xc0] %v2045
    %2058 = vst [vmem:[#allocation2 + $0xc8] sm:$0xc0] %v2046
    %2059 = vst [vmem:[#allocation2 + $0xd0] sm:$0xc0] %v2047
    %2060 = vst [vmem:[#allocation2 + $0xd8] sm:$0xc0] %v2048
    %2061 = vst [vmem:[#allocation2 + $0xe0] sm:$0xc0] %v2049
    %2062 = vst [vmem:[#allocation2 + $0xe8] sm:$0xc0] %v2050
    %2063 = vrot.lane.b32.xlu0 %v526, 98
    %v2064 = vpop.permute.xlu0 %2063
    %2065 = vrot.lane.b32.xlu0 %v527, 98
    %v2066 = vpop.permute.xlu0 %2065
    %2067 = vrot.lane.b32.xlu0 %v528, 98
    %v2068 = vpop.permute.xlu0 %2067
    %2069 = vrot.lane.b32.xlu0 %v529, 98
    %v2070 = vpop.permute.xlu0 %2069
    %2071 = vrot.lane.b32.xlu0 %v530, 98
    %v2072 = vpop.permute.xlu0 %2071
    %2073 = vrot.lane.b32.xlu0 %v531, 98
    %v2074 = vpop.permute.xlu0 %2073
    %vm2075 = vcmp.lt.s32.totalorder %v545, 98
    %v2076 = vsel %vm2075, %v2072, %v2074
    %v2077 = vsel %vm2075, %v2070, %v2072
    %v2078 = vsel %vm2075, %v2068, %v2070
    %v2079 = vsel %vm2075, %v2066, %v2068
    %v2080 = vsel %vm2075, %v2064, %v2066
    %v2081 = vsel %vm2075, %v2074, %v2064
    %s2082 = scalar_lea.vmem [#allocation5], 99
    %v2083 = vld [vmem:[%s2082] ss:$8 sm:$0xf]
    %v2084 = vld [vmem:[%s2082] ss:$8 sm:$0x30]
    %v2085 = vor.u32 %v2083, %v2084
    %v2087 = vlaneseq
    %v2088 = vshrl.u32 %v2087, 7
    %v2089 = vsub.s32 0, %v2088
    %v2090 = vrot.slane %v2085, %v2089
    %v2091 = vlaneseq
    %v2092 = vshrl.u32 %v2091, 7
    %v2093 = vsub.s32 1, %v2092
    %v2094 = vrot.slane %v2085, %v2093
    %v2095 = vlaneseq
    %v2096 = vshrl.u32 %v2095, 7
    %v2097 = vsub.s32 2, %v2096
    %v2098 = vrot.slane %v2085, %v2097
    %v2099 = vlaneseq
    %v2100 = vshrl.u32 %v2099, 7
    %v2101 = vsub.s32 3, %v2100
    %v2102 = vrot.slane %v2085, %v2101
    %v2103 = vlaneseq
    %v2104 = vshrl.u32 %v2103, 7
    %v2105 = vsub.s32 4, %v2104
    %v2106 = vrot.slane %v2085, %v2105
    %v2107 = vlaneseq
    %v2108 = vshrl.u32 %v2107, 7
    %v2109 = vsub.s32 5, %v2108
    %v2110 = vrot.slane %v2085, %v2109
    %v2117 = vmul.f32 %v2080, %v2090
    %v2118 = vmul.f32 %v2079, %v2094
    %v2119 = vmul.f32 %v2078, %v2098
    %v2120 = vmul.f32 %v2077, %v2102
    %v2121 = vmul.f32 %v2076, %v2106
    %v2122 = vmul.f32 %v2081, %v2110
    %2123 = vst [vmem:[#allocation2 + $0xf0] sm:$0x3] %v2117
    %2124 = vst [vmem:[#allocation2 + $0xf8] sm:$0x3] %v2118
    %2125 = vst [vmem:[#allocation2 + $0x100] sm:$0x3] %v2119
    %2126 = vst [vmem:[#allocation2 + $0x108] sm:$0x3] %v2120
    %2127 = vst [vmem:[#allocation2 + $0x110] sm:$0x3] %v2121
    %2128 = vst [vmem:[#allocation2 + $0x118] sm:$0x3] %v2122
    %2129 = vrot.lane.b32.xlu0 %v526, 97
    %v2130 = vpop.permute.xlu0 %2129
    %2131 = vrot.lane.b32.xlu0 %v527, 97
    %v2132 = vpop.permute.xlu0 %2131
    %2133 = vrot.lane.b32.xlu0 %v528, 97
    %v2134 = vpop.permute.xlu0 %2133
    %2135 = vrot.lane.b32.xlu0 %v529, 97
    %v2136 = vpop.permute.xlu0 %2135
    %2137 = vrot.lane.b32.xlu0 %v530, 97
    %v2138 = vpop.permute.xlu0 %2137
    %2139 = vrot.lane.b32.xlu0 %v531, 97
    %v2140 = vpop.permute.xlu0 %2139
    %vm2141 = vcmp.lt.s32.totalorder %v545, 97
    %v2142 = vsel %vm2141, %v2138, %v2140
    %v2143 = vsel %vm2141, %v2136, %v2138
    %v2144 = vsel %vm2141, %v2134, %v2136
    %v2145 = vsel %vm2141, %v2132, %v2134
    %v2146 = vsel %vm2141, %v2130, %v2132
    %v2147 = vsel %vm2141, %v2140, %v2130
    %s2148 = scalar_lea.vmem [#allocation5], 100
    %v2149 = vld [vmem:[%s2148] ss:$8 sm:$0xf]
    %v2150 = vld [vmem:[%s2148] ss:$8 sm:$0x30]
    %v2151 = vor.u32 %v2149, %v2150
    %v2153 = vlaneseq
    %v2154 = vshrl.u32 %v2153, 7
    %v2155 = vsub.s32 0, %v2154
    %v2156 = vrot.slane %v2151, %v2155
    %v2157 = vlaneseq
    %v2158 = vshrl.u32 %v2157, 7
    %v2159 = vsub.s32 1, %v2158
    %v2160 = vrot.slane %v2151, %v2159
    %v2161 = vlaneseq
    %v2162 = vshrl.u32 %v2161, 7
    %v2163 = vsub.s32 2, %v2162
    %v2164 = vrot.slane %v2151, %v2163
    %v2165 = vlaneseq
    %v2166 = vshrl.u32 %v2165, 7
    %v2167 = vsub.s32 3, %v2166
    %v2168 = vrot.slane %v2151, %v2167
    %v2169 = vlaneseq
    %v2170 = vshrl.u32 %v2169, 7
    %v2171 = vsub.s32 4, %v2170
    %v2172 = vrot.slane %v2151, %v2171
    %v2173 = vlaneseq
    %v2174 = vshrl.u32 %v2173, 7
    %v2175 = vsub.s32 5, %v2174
    %v2176 = vrot.slane %v2151, %v2175
    %v2183 = vmul.f32 %v2146, %v2156
    %v2184 = vmul.f32 %v2145, %v2160
    %v2185 = vmul.f32 %v2144, %v2164
    %v2186 = vmul.f32 %v2143, %v2168
    %v2187 = vmul.f32 %v2142, %v2172
    %v2188 = vmul.f32 %v2147, %v2176
    %v2195 = vrot.slane %v2183, 6
    %v2196 = vrot.slane %v2184, 6
    %v2197 = vrot.slane %v2185, 6
    %v2198 = vrot.slane %v2186, 6
    %v2199 = vrot.slane %v2187, 6
    %v2200 = vrot.slane %v2188, 6
    %2207 = vst [vmem:[#allocation2 + $0xf0] sm:$0xc] %v2195
    %2208 = vst [vmem:[#allocation2 + $0xf8] sm:$0xc] %v2196
    %2209 = vst [vmem:[#allocation2 + $0x100] sm:$0xc] %v2197
    %2210 = vst [vmem:[#allocation2 + $0x108] sm:$0xc] %v2198
    %2211 = vst [vmem:[#allocation2 + $0x110] sm:$0xc] %v2199
    %2212 = vst [vmem:[#allocation2 + $0x118] sm:$0xc] %v2200
    %2213 = vrot.lane.b32.xlu0 %v526, 96
    %v2214 = vpop.permute.xlu0 %2213
    %2215 = vrot.lane.b32.xlu0 %v527, 96
    %v2216 = vpop.permute.xlu0 %2215
    %2217 = vrot.lane.b32.xlu0 %v528, 96
    %v2218 = vpop.permute.xlu0 %2217
    %2219 = vrot.lane.b32.xlu0 %v529, 96
    %v2220 = vpop.permute.xlu0 %2219
    %2221 = vrot.lane.b32.xlu0 %v530, 96
    %v2222 = vpop.permute.xlu0 %2221
    %2223 = vrot.lane.b32.xlu0 %v531, 96
    %v2224 = vpop.permute.xlu0 %2223
    %vm2225 = vcmp.lt.s32.totalorder %v545, 96
    %v2226 = vsel %vm2225, %v2222, %v2224
    %v2227 = vsel %vm2225, %v2220, %v2222
    %v2228 = vsel %vm2225, %v2218, %v2220
    %v2229 = vsel %vm2225, %v2216, %v2218
    %v2230 = vsel %vm2225, %v2214, %v2216
    %v2231 = vsel %vm2225, %v2224, %v2214
    %s2232 = scalar_lea.vmem [#allocation5], 101
    %v2233 = vld [vmem:[%s2232] ss:$8 sm:$0xf]
    %v2234 = vld [vmem:[%s2232] ss:$8 sm:$0x30]
    %v2235 = vor.u32 %v2233, %v2234
    %v2237 = vlaneseq
    %v2238 = vshrl.u32 %v2237, 7
    %v2239 = vsub.s32 0, %v2238
    %v2240 = vrot.slane %v2235, %v2239
    %v2241 = vlaneseq
    %v2242 = vshrl.u32 %v2241, 7
    %v2243 = vsub.s32 1, %v2242
    %v2244 = vrot.slane %v2235, %v2243
    %v2245 = vlaneseq
    %v2246 = vshrl.u32 %v2245, 7
    %v2247 = vsub.s32 2, %v2246
    %v2248 = vrot.slane %v2235, %v2247
    %v2249 = vlaneseq
    %v2250 = vshrl.u32 %v2249, 7
    %v2251 = vsub.s32 3, %v2250
    %v2252 = vrot.slane %v2235, %v2251
    %v2253 = vlaneseq
    %v2254 = vshrl.u32 %v2253, 7
    %v2255 = vsub.s32 4, %v2254
    %v2256 = vrot.slane %v2235, %v2255
    %v2257 = vlaneseq
    %v2258 = vshrl.u32 %v2257, 7
    %v2259 = vsub.s32 5, %v2258
    %v2260 = vrot.slane %v2235, %v2259
    %v2267 = vmul.f32 %v2230, %v2240
    %v2268 = vmul.f32 %v2229, %v2244
    %v2269 = vmul.f32 %v2228, %v2248
    %v2270 = vmul.f32 %v2227, %v2252
    %v2271 = vmul.f32 %v2226, %v2256
    %v2272 = vmul.f32 %v2231, %v2260
    %v2279 = vrot.slane %v2267, 4
    %v2280 = vrot.slane %v2268, 4
    %v2281 = vrot.slane %v2269, 4
    %v2282 = vrot.slane %v2270, 4
    %v2283 = vrot.slane %v2271, 4
    %v2284 = vrot.slane %v2272, 4
    %2291 = vst [vmem:[#allocation2 + $0xf0] sm:$0x30] %v2279
    %2292 = vst [vmem:[#allocation2 + $0xf8] sm:$0x30] %v2280
    %2293 = vst [vmem:[#allocation2 + $0x100] sm:$0x30] %v2281
    %2294 = vst [vmem:[#allocation2 + $0x108] sm:$0x30] %v2282
    %2295 = vst [vmem:[#allocation2 + $0x110] sm:$0x30] %v2283
    %2296 = vst [vmem:[#allocation2 + $0x118] sm:$0x30] %v2284
    %2297 = vrot.lane.b32.xlu0 %v526, 95
    %v2298 = vpop.permute.xlu0 %2297
    %2299 = vrot.lane.b32.xlu0 %v527, 95
    %v2300 = vpop.permute.xlu0 %2299
    %2301 = vrot.lane.b32.xlu0 %v528, 95
    %v2302 = vpop.permute.xlu0 %2301
    %2303 = vrot.lane.b32.xlu0 %v529, 95
    %v2304 = vpop.permute.xlu0 %2303
    %2305 = vrot.lane.b32.xlu0 %v530, 95
    %v2306 = vpop.permute.xlu0 %2305
    %2307 = vrot.lane.b32.xlu0 %v531, 95
    %v2308 = vpop.permute.xlu0 %2307
    %vm2309 = vcmp.lt.s32.totalorder %v545, 95
    %v2310 = vsel %vm2309, %v2306, %v2308
    %v2311 = vsel %vm2309, %v2304, %v2306
    %v2312 = vsel %vm2309, %v2302, %v2304
    %v2313 = vsel %vm2309, %v2300, %v2302
    %v2314 = vsel %vm2309, %v2298, %v2300
    %v2315 = vsel %vm2309, %v2308, %v2298
    %s2316 = scalar_lea.vmem [#allocation5], 102
    %v2317 = vld [vmem:[%s2316] ss:$8 sm:$0xf]
    %v2318 = vld [vmem:[%s2316] ss:$8 sm:$0x30]
    %v2319 = vor.u32 %v2317, %v2318
    %v2321 = vlaneseq
    %v2322 = vshrl.u32 %v2321, 7
    %v2323 = vsub.s32 0, %v2322
    %v2324 = vrot.slane %v2319, %v2323
    %v2325 = vlaneseq
    %v2326 = vshrl.u32 %v2325, 7
    %v2327 = vsub.s32 1, %v2326
    %v2328 = vrot.slane %v2319, %v2327
    %v2329 = vlaneseq
    %v2330 = vshrl.u32 %v2329, 7
    %v2331 = vsub.s32 2, %v2330
    %v2332 = vrot.slane %v2319, %v2331
    %v2333 = vlaneseq
    %v2334 = vshrl.u32 %v2333, 7
    %v2335 = vsub.s32 3, %v2334
    %v2336 = vrot.slane %v2319, %v2335
    %v2337 = vlaneseq
    %v2338 = vshrl.u32 %v2337, 7
    %v2339 = vsub.s32 4, %v2338
    %v2340 = vrot.slane %v2319, %v2339
    %v2341 = vlaneseq
    %v2342 = vshrl.u32 %v2341, 7
    %v2343 = vsub.s32 5, %v2342
    %v2344 = vrot.slane %v2319, %v2343
    %v2351 = vmul.f32 %v2314, %v2324
    %v2352 = vmul.f32 %v2313, %v2328
    %v2353 = vmul.f32 %v2312, %v2332
    %v2354 = vmul.f32 %v2311, %v2336
    %v2355 = vmul.f32 %v2310, %v2340
    %v2356 = vmul.f32 %v2315, %v2344
    %v2363 = vrot.slane %v2351, 2
    %v2364 = vrot.slane %v2352, 2
    %v2365 = vrot.slane %v2353, 2
    %v2366 = vrot.slane %v2354, 2
    %v2367 = vrot.slane %v2355, 2
    %v2368 = vrot.slane %v2356, 2
    %2375 = vst [vmem:[#allocation2 + $0xf0] sm:$0xc0] %v2363
    %2376 = vst [vmem:[#allocation2 + $0xf8] sm:$0xc0] %v2364
    %2377 = vst [vmem:[#allocation2 + $0x100] sm:$0xc0] %v2365
    %2378 = vst [vmem:[#allocation2 + $0x108] sm:$0xc0] %v2366
    %2379 = vst [vmem:[#allocation2 + $0x110] sm:$0xc0] %v2367
    %2380 = vst [vmem:[#allocation2 + $0x118] sm:$0xc0] %v2368
    %2381 = vrot.lane.b32.xlu0 %v526, 94
    %v2382 = vpop.permute.xlu0 %2381
    %2383 = vrot.lane.b32.xlu0 %v527, 94
    %v2384 = vpop.permute.xlu0 %2383
    %2385 = vrot.lane.b32.xlu0 %v528, 94
    %v2386 = vpop.permute.xlu0 %2385
    %2387 = vrot.lane.b32.xlu0 %v529, 94
    %v2388 = vpop.permute.xlu0 %2387
    %2389 = vrot.lane.b32.xlu0 %v530, 94
    %v2390 = vpop.permute.xlu0 %2389
    %2391 = vrot.lane.b32.xlu0 %v531, 94
    %v2392 = vpop.permute.xlu0 %2391
    %vm2393 = vcmp.lt.s32.totalorder %v545, 94
    %v2394 = vsel %vm2393, %v2390, %v2392
    %v2395 = vsel %vm2393, %v2388, %v2390
    %v2396 = vsel %vm2393, %v2386, %v2388
    %v2397 = vsel %vm2393, %v2384, %v2386
    %v2398 = vsel %vm2393, %v2382, %v2384
    %v2399 = vsel %vm2393, %v2392, %v2382
    %s2400 = scalar_lea.vmem [#allocation5], 103
    %v2401 = vld [vmem:[%s2400] ss:$8 sm:$0xf]
    %v2402 = vld [vmem:[%s2400] ss:$8 sm:$0x30]
    %v2403 = vor.u32 %v2401, %v2402
    %v2405 = vlaneseq
    %v2406 = vshrl.u32 %v2405, 7
    %v2407 = vsub.s32 0, %v2406
    %v2408 = vrot.slane %v2403, %v2407
    %v2409 = vlaneseq
    %v2410 = vshrl.u32 %v2409, 7
    %v2411 = vsub.s32 1, %v2410
    %v2412 = vrot.slane %v2403, %v2411
    %v2413 = vlaneseq
    %v2414 = vshrl.u32 %v2413, 7
    %v2415 = vsub.s32 2, %v2414
    %v2416 = vrot.slane %v2403, %v2415
    %v2417 = vlaneseq
    %v2418 = vshrl.u32 %v2417, 7
    %v2419 = vsub.s32 3, %v2418
    %v2420 = vrot.slane %v2403, %v2419
    %v2421 = vlaneseq
    %v2422 = vshrl.u32 %v2421, 7
    %v2423 = vsub.s32 4, %v2422
    %v2424 = vrot.slane %v2403, %v2423
    %v2425 = vlaneseq
    %v2426 = vshrl.u32 %v2425, 7
    %v2427 = vsub.s32 5, %v2426
    %v2428 = vrot.slane %v2403, %v2427
    %v2435 = vmul.f32 %v2398, %v2408
    %v2436 = vmul.f32 %v2397, %v2412
    %v2437 = vmul.f32 %v2396, %v2416
    %v2438 = vmul.f32 %v2395, %v2420
    %v2439 = vmul.f32 %v2394, %v2424
    %v2440 = vmul.f32 %v2399, %v2428
    %2441 = vst [vmem:[#allocation2 + $0x120] sm:$0x3] %v2435
    %2442 = vst [vmem:[#allocation2 + $0x128] sm:$0x3] %v2436
    %2443 = vst [vmem:[#allocation2 + $0x130] sm:$0x3] %v2437
    %2444 = vst [vmem:[#allocation2 + $0x138] sm:$0x3] %v2438
    %2445 = vst [vmem:[#allocation2 + $0x140] sm:$0x3] %v2439
    %2446 = vst [vmem:[#allocation2 + $0x148] sm:$0x3] %v2440
    %v2447 = vld [vmem:[#allocation7] sm:$0x3]
    %v2448 = vld [vmem:[#allocation2] sm:$0xff]
    %v2449 = vld [vmem:[#allocation2 + $0x8] sm:$0xff]
    %v2450 = vld [vmem:[#allocation2 + $0x10] sm:$0xff]
    %v2451 = vld [vmem:[#allocation2 + $0x18] sm:$0xff]
    %v2452 = vld [vmem:[#allocation2 + $0x20] sm:$0xff]
    %v2453 = vld [vmem:[#allocation2 + $0x28] sm:$0xff]
    %v2454 = vld [vmem:[#allocation2 + $0x30] sm:$0xff]
    %v2455 = vld [vmem:[#allocation2 + $0x38] sm:$0xff]
    %v2456 = vld [vmem:[#allocation2 + $0x40] sm:$0xff]
    %v2457 = vld [vmem:[#allocation2 + $0x48] sm:$0xff]
    %v2458 = vld [vmem:[#allocation2 + $0x50] sm:$0xff]
    %v2459 = vld [vmem:[#allocation2 + $0x58] sm:$0xff]
    %v2460 = vld [vmem:[#allocation2 + $0x60] sm:$0xff]
    %v2461 = vld [vmem:[#allocation2 + $0x68] sm:$0xff]
    %v2462 = vld [vmem:[#allocation2 + $0x70] sm:$0xff]
    %v2463 = vld [vmem:[#allocation2 + $0x78] sm:$0xff]
    %v2464 = vld [vmem:[#allocation2 + $0x80] sm:$0xff]
    %v2465 = vld [vmem:[#allocation2 + $0x88] sm:$0xff]
    %v2466 = vld [vmem:[#allocation2 + $0x90] sm:$0xff]
    %v2467 = vld [vmem:[#allocation2 + $0x98] sm:$0xff]
    %v2468 = vld [vmem:[#allocation2 + $0xa0] sm:$0xff]
    %v2469 = vld [vmem:[#allocation2 + $0xa8] sm:$0xff]
    %v2470 = vld [vmem:[#allocation2 + $0xb0] sm:$0xff]
    %v2471 = vld [vmem:[#allocation2 + $0xb8] sm:$0xff]
    %v2472 = vld [vmem:[#allocation2 + $0xc0] sm:$0xff]
    %v2473 = vld [vmem:[#allocation2 + $0xc8] sm:$0xff]
    %v2474 = vld [vmem:[#allocation2 + $0xd0] sm:$0xff]
    %v2475 = vld [vmem:[#allocation2 + $0xd8] sm:$0xff]
    %v2476 = vld [vmem:[#allocation2 + $0xe0] sm:$0xff]
    %v2477 = vld [vmem:[#allocation2 + $0xe8] sm:$0xff]
    %v2478 = vld [vmem:[#allocation2 + $0xf0] sm:$0xff]
    %v2479 = vld [vmem:[#allocation2 + $0xf8] sm:$0xff]
    %v2480 = vld [vmem:[#allocation2 + $0x100] sm:$0xff]
    %v2481 = vld [vmem:[#allocation2 + $0x108] sm:$0xff]
    %v2482 = vld [vmem:[#allocation2 + $0x110] sm:$0xff]
    %v2483 = vld [vmem:[#allocation2 + $0x118] sm:$0xff]
    %v2484 = vld [vmem:[#allocation2 + $0x120] sm:$0x3]
    %v2485 = vld [vmem:[#allocation2 + $0x128] sm:$0x3]
    %v2486 = vld [vmem:[#allocation2 + $0x130] sm:$0x3]
    %v2487 = vld [vmem:[#allocation2 + $0x138] sm:$0x3]
    %v2488 = vld [vmem:[#allocation2 + $0x140] sm:$0x3]
    %v2489 = vld [vmem:[#allocation2 + $0x148] sm:$0x3]
    %v2490 = vld [vmem:[#allocation8] sm:$0x3]
    %2492 = vset.pattern.permute.xlu0 0
    %2493 = vperm.xlu0 %2492, %v2490
    %v2494 = vpop.permute.xlu0 %2493
    %vm2496 = vcmask 408576
    %v2498 = vsel %vm2496, %v2447, 0
    %vm2500 = vcmask 1041408
    %v2502 = vsel %vm2500, %v2484, 0
    %v2505 = vsel %vm2500, %v2485, 0
    %v2508 = vsel %vm2500, %v2486, 0
    %v2511 = vsel %vm2500, %v2487, 0
    %v2514 = vsel %vm2500, %v2488, 0
    %v2517 = vsel %vm2500, %v2489, 0
    %2519 = vmatprep.subr.mxu0 %v2449
    %2520 = vmatpush1.msra.mxu0 %v2448
    %2521 = vmatprep.subr.mxu0 %v2455
    %2522 = vmatpush1.msra.mxu0 %v2454
    %2523 = vmatprep.subr.mxu0 %v2461
    %2524 = vmatpush1.msra.mxu0 %v2460
    %2525 = vmatprep.subr.mxu0 %v2467
    %2526 = vmatpush1.msra.mxu0 %v2466
    %2527 = vmatprep.subr.mxu0 %v2473
    %2528 = vmatpush1.msra.mxu0 %v2472
    %2529 = vmatprep.subr.mxu0 %v2479
    %2530 = vmatpush1.msra.mxu0 %v2478
    %2531 = vmatprep.subr.mxu0 %v2505
    %2532 = vmatpush1.msra.mxu0 %v2502
    %2533 = vmatprep.subr.mxu0 0.0
    %2534 = vmatpush1.msra.mxu0 0.0
    %2535 = vmatprep.subr.mxu0 0.0
    %2536 = vmatpush1.msra.mxu0 0.0
    %2537 = vmatprep.subr.mxu0 0.0
    %2538 = vmatpush1.msra.mxu0 0.0
    %2539 = vmatprep.subr.mxu0 0.0
    %2540 = vmatpush1.msra.mxu0 0.0
    %2541 = vmatprep.subr.mxu0 0.0
    %2542 = vmatpush1.msra.mxu0 0.0
    %2543 = vmatprep.subr.mxu0 0.0
    %2544 = vmatpush1.msra.mxu0 0.0
    %2545 = vmatprep.subr.mxu0 0.0
    %2546 = vmatpush1.msra.mxu0 0.0
    %2547 = vmatprep.subr.mxu0 0.0
    %2548 = vmatpush1.msra.mxu0 0.0
    %2549 = vmatprep.subr.mxu0 0.0
    %2550 = vmatpush1.msra.mxu0 0.0
    %2551 = vmatprep.subr.mxu0 0.0
    %2552 = vmatpush1.msra.mxu0 0.0
    %2553 = vmatprep.subr.mxu0 0.0
    %2554 = vmatpush1.msra.mxu0 0.0
    %2555 = vmatprep.subr.mxu0 0.0
    %2556 = vmatpush1.msra.mxu0 0.0
    %2557 = vmatprep.subr.mxu0 0.0
    %2558 = vmatpush1.msra.mxu0 0.0
    %2559 = vmatprep.subr.mxu0 0.0
    %2560 = vmatpush1.msra.mxu0 0.0
    %2561 = vmatprep.subr.mxu0 0.0
    %2562 = vmatpush1.msra.mxu0 0.0
    %2563 = vmatprep.subr.mxu0 0.0
    %2564 = vmatpush1.msra.mxu0 0.0
    %2565 = vmatprep.subr.mxu0 0.0
    %2566 = vmatpush1.msra.mxu0 0.0
    %2567 = vmatprep.subr.mxu0 0.0
    %2568 = vmatpush1.msra.mxu0 0.0
    %2569 = vmatprep.subr.mxu0 0.0
    %2570 = vmatpush1.msra.mxu0 0.0
    %2571 = vmatprep.subr.mxu0 0.0
    %2572 = vmatpush1.msra.mxu0 0.0
    %2573 = vmatprep.subr.mxu0 0.0
    %2574 = vmatpush1.msra.mxu0 0.0
    %2575 = vmatprep.subr.mxu0 0.0
    %2576 = vmatpush1.msra.mxu0 0.0
    %2577 = vmatprep.subr.mxu0 0.0
    %2578 = vmatpush1.msra.mxu0 0.0
    %2579 = vmatprep.subr.mxu0 0.0
    %2580 = vmatpush1.msra.mxu0 0.0
    %2581 = vmatprep.subr.mxu0 0.0
    %2582 = vmatpush1.msra.mxu0 0.0
    %2583 = vmatprep.mubr.f32.mxu0 0.0
    %2584 = vmatmul.mubr.f32.gmra.mrb[0].mxu0 %v2498
    %v2585 = vpop.f32.mrb[0].mxu0
    %v2586 = vadd.f32 %v2494, %v2585
    %v2587 = vpop.f32.mrb[0].mxu0
    %v2588 = vadd.f32 %v2494, %v2587
    %2589 = vdwg.mxu0
    %2590 = vmatprep.subr.mxu0 %v2451
    %2591 = vmatpush1.msra.mxu0 %v2450
    %2592 = vmatprep.subr.mxu0 %v2457
    %2593 = vmatpush1.msra.mxu0 %v2456
    %2594 = vmatprep.subr.mxu0 %v2463
    %2595 = vmatpush1.msra.mxu0 %v2462
    %2596 = vmatprep.subr.mxu0 %v2469
    %2597 = vmatpush1.msra.mxu0 %v2468
    %2598 = vmatprep.subr.mxu0 %v2475
    %2599 = vmatpush1.msra.mxu0 %v2474
    %2600 = vmatprep.subr.mxu0 %v2481
    %2601 = vmatpush1.msra.mxu0 %v2480
    %2602 = vmatprep.subr.mxu0 %v2511
    %2603 = vmatpush1.msra.mxu0 %v2508
    %2604 = vmatprep.subr.mxu0 0.0
    %2605 = vmatpush1.msra.mxu0 0.0
    %2606 = vmatprep.subr.mxu0 0.0
    %2607 = vmatpush1.msra.mxu0 0.0
    %2608 = vmatprep.subr.mxu0 0.0
    %2609 = vmatpush1.msra.mxu0 0.0
    %2610 = vmatprep.subr.mxu0 0.0
    %2611 = vmatpush1.msra.mxu0 0.0
    %2612 = vmatprep.subr.mxu0 0.0
    %2613 = vmatpush1.msra.mxu0 0.0
    %2614 = vmatprep.subr.mxu0 0.0
    %2615 = vmatpush1.msra.mxu0 0.0
    %2616 = vmatprep.subr.mxu0 0.0
    %2617 = vmatpush1.msra.mxu0 0.0
    %2618 = vmatprep.subr.mxu0 0.0
    %2619 = vmatpush1.msra.mxu0 0.0
    %2620 = vmatprep.subr.mxu0 0.0
    %2621 = vmatpush1.msra.mxu0 0.0
    %2622 = vmatprep.subr.mxu0 0.0
    %2623 = vmatpush1.msra.mxu0 0.0
    %2624 = vmatprep.subr.mxu0 0.0
    %2625 = vmatpush1.msra.mxu0 0.0
    %2626 = vmatprep.subr.mxu0 0.0
    %2627 = vmatpush1.msra.mxu0 0.0
    %2628 = vmatprep.subr.mxu0 0.0
    %2629 = vmatpush1.msra.mxu0 0.0
    %2630 = vmatprep.subr.mxu0 0.0
    %2631 = vmatpush1.msra.mxu0 0.0
    %2632 = vmatprep.subr.mxu0 0.0
    %2633 = vmatpush1.msra.mxu0 0.0
    %2634 = vmatprep.subr.mxu0 0.0
    %2635 = vmatpush1.msra.mxu0 0.0
    %2636 = vmatprep.subr.mxu0 0.0
    %2637 = vmatpush1.msra.mxu0 0.0
    %2638 = vmatprep.subr.mxu0 0.0
    %2639 = vmatpush1.msra.mxu0 0.0
    %2640 = vmatprep.subr.mxu0 0.0
    %2641 = vmatpush1.msra.mxu0 0.0
    %2642 = vmatprep.subr.mxu0 0.0
    %2643 = vmatpush1.msra.mxu0 0.0
    %2644 = vmatprep.subr.mxu0 0.0
    %2645 = vmatpush1.msra.mxu0 0.0
    %2646 = vmatprep.subr.mxu0 0.0
    %2647 = vmatpush1.msra.mxu0 0.0
    %2648 = vmatprep.subr.mxu0 0.0
    %2649 = vmatpush1.msra.mxu0 0.0
    %2650 = vmatprep.subr.mxu0 0.0
    %2651 = vmatpush1.msra.mxu0 0.0
    %2652 = vmatprep.subr.mxu0 0.0
    %2653 = vmatpush1.msra.mxu0 0.0
    %2654 = vmatprep.mubr.f32.mxu0 0.0
    %2655 = vmatmul.mubr.f32.gmra.mrb[0].mxu0 %v2498
    %v2656 = vpop.f32.mrb[0].mxu0
    %v2657 = vadd.f32 %v2494, %v2656
    %v2658 = vpop.f32.mrb[0].mxu0
    %v2659 = vadd.f32 %v2494, %v2658
    %2660 = vdwg.mxu0
    %2661 = vmatprep.subr.mxu0 %v2453
    %2662 = vmatpush1.msra.mxu0 %v2452
    %2663 = vmatprep.subr.mxu0 %v2459
    %2664 = vmatpush1.msra.mxu0 %v2458
    %2665 = vmatprep.subr.mxu0 %v2465
    %2666 = vmatpush1.msra.mxu0 %v2464
    %2667 = vmatprep.subr.mxu0 %v2471
    %2668 = vmatpush1.msra.mxu0 %v2470
    %2669 = vmatprep.subr.mxu0 %v2477
    %2670 = vmatpush1.msra.mxu0 %v2476
    %2671 = vmatprep.subr.mxu0 %v2483
    %2672 = vmatpush1.msra.mxu0 %v2482
    %2673 = vmatprep.subr.mxu0 %v2517
    %2674 = vmatpush1.msra.mxu0 %v2514
    %2675 = vmatprep.subr.mxu0 0.0
    %2676 = vmatpush1.msra.mxu0 0.0
    %2677 = vmatprep.subr.mxu0 0.0
    %2678 = vmatpush1.msra.mxu0 0.0
    %2679 = vmatprep.subr.mxu0 0.0
    %2680 = vmatpush1.msra.mxu0 0.0
    %2681 = vmatprep.subr.mxu0 0.0
    %2682 = vmatpush1.msra.mxu0 0.0
    %2683 = vmatprep.subr.mxu0 0.0
    %2684 = vmatpush1.msra.mxu0 0.0
    %2685 = vmatprep.subr.mxu0 0.0
    %2686 = vmatpush1.msra.mxu0 0.0
    %2687 = vmatprep.subr.mxu0 0.0
    %2688 = vmatpush1.msra.mxu0 0.0
    %2689 = vmatprep.subr.mxu0 0.0
    %2690 = vmatpush1.msra.mxu0 0.0
    %2691 = vmatprep.subr.mxu0 0.0
    %2692 = vmatpush1.msra.mxu0 0.0
    %2693 = vmatprep.subr.mxu0 0.0
    %2694 = vmatpush1.msra.mxu0 0.0
    %2695 = vmatprep.subr.mxu0 0.0
    %2696 = vmatpush1.msra.mxu0 0.0
    %2697 = vmatprep.subr.mxu0 0.0
    %2698 = vmatpush1.msra.mxu0 0.0
    %2699 = vmatprep.subr.mxu0 0.0
    %2700 = vmatpush1.msra.mxu0 0.0
    %2701 = vmatprep.subr.mxu0 0.0
    %2702 = vmatpush1.msra.mxu0 0.0
    %2703 = vmatprep.subr.mxu0 0.0
    %2704 = vmatpush1.msra.mxu0 0.0
    %2705 = vmatprep.subr.mxu0 0.0
    %2706 = vmatpush1.msra.mxu0 0.0
    %2707 = vmatprep.subr.mxu0 0.0
    %2708 = vmatpush1.msra.mxu0 0.0
    %2709 = vmatprep.subr.mxu0 0.0
    %2710 = vmatpush1.msra.mxu0 0.0
    %2711 = vmatprep.subr.mxu0 0.0
    %2712 = vmatpush1.msra.mxu0 0.0
    %2713 = vmatprep.subr.mxu0 0.0
    %2714 = vmatpush1.msra.mxu0 0.0
    %2715 = vmatprep.subr.mxu0 0.0
    %2716 = vmatpush1.msra.mxu0 0.0
    %2717 = vmatprep.subr.mxu0 0.0
    %2718 = vmatpush1.msra.mxu0 0.0
    %2719 = vmatprep.subr.mxu0 0.0
    %2720 = vmatpush1.msra.mxu0 0.0
    %2721 = vmatprep.subr.mxu0 0.0
    %2722 = vmatpush1.msra.mxu0 0.0
    %2723 = vmatprep.subr.mxu0 0.0
    %2724 = vmatpush1.msra.mxu0 0.0
    %2725 = vmatprep.mubr.f32.mxu0 0.0
    %2726 = vmatmul.mubr.f32.gmra.mrb[0].mxu0 %v2498
    %v2727 = vpop.f32.mrb[0].mxu0
    %v2728 = vadd.f32 %v2494, %v2727
    %v2729 = vpop.f32.mrb[0].mxu0
    %v2730 = vadd.f32 %v2494, %v2729
    %2731 = vdwg.mxu0
    %vm2732 = vcmp.ge.f32.partialorder %v2586, 0.0
    %vm2733 = vcmp.ge.f32.partialorder %v2588, 0.0
    %vm2734 = vcmp.ge.f32.partialorder %v2657, 0.0
    %vm2735 = vcmp.ge.f32.partialorder %v2659, 0.0
    %vm2736 = vcmp.ge.f32.partialorder %v2728, 0.0
    %vm2737 = vcmp.ge.f32.partialorder %v2730, 0.0
    %v2738 = vmul.f32 %v2586, 0.3
    %v2739 = vmul.f32 %v2588, 0.3
    %v2740 = vmul.f32 %v2657, 0.3
    %v2741 = vmul.f32 %v2659, 0.3
    %v2742 = vmul.f32 %v2728, 0.3
    %v2743 = vmul.f32 %v2730, 0.3
    %v2744 = vsel %vm2732, %v2586, %v2738
    %v2745 = vsel %vm2733, %v2588, %v2739
    %v2746 = vsel %vm2734, %v2657, %v2740
    %v2747 = vsel %vm2735, %v2659, %v2741
    %v2748 = vsel %vm2736, %v2728, %v2742
    %v2749 = vsel %vm2737, %v2730, %v2743
    %2750 = vrot.lane.b32.xlu0 %v2744, 17
    %v2751 = vpop.permute.xlu0 %2750
    %2752 = vrot.lane.b32.xlu0 %v2745, 17
    %v2753 = vpop.permute.xlu0 %2752
    %2754 = vrot.lane.b32.xlu0 %v2746, 17
    %v2755 = vpop.permute.xlu0 %2754
    %2756 = vrot.lane.b32.xlu0 %v2747, 17
    %v2757 = vpop.permute.xlu0 %2756
    %2758 = vrot.lane.b32.xlu0 %v2748, 17
    %v2759 = vpop.permute.xlu0 %2758
    %2760 = vrot.lane.b32.xlu0 %v2749, 17
    %v2761 = vpop.permute.xlu0 %2760
    %v2762 = vsel %vm1013, %v2759, %v2761
    %v2763 = vsel %vm1013, %v2757, %v2759
    %v2764 = vsel %vm1013, %v2755, %v2757
    %v2765 = vsel %vm1013, %v2753, %v2755
    %v2766 = vsel %vm1013, %v2751, %v2753
    %v2767 = vsel %vm1013, %v2761, %v2751
    %v2768 = vld [vmem:[%s1020] ss:$8 sm:$0xf]
    %v2769 = vld [vmem:[%s1020] ss:$8 sm:$0x30]
    %v2770 = vor.u32 %v2768, %v2769
    %v2772 = vlaneseq
    %v2773 = vshrl.u32 %v2772, 7
    %v2774 = vsub.s32 0, %v2773
    %v2775 = vrot.slane %v2770, %v2774
    %v2776 = vlaneseq
    %v2777 = vshrl.u32 %v2776, 7
    %v2778 = vsub.s32 1, %v2777
    %v2779 = vrot.slane %v2770, %v2778
    %v2780 = vlaneseq
    %v2781 = vshrl.u32 %v2780, 7
    %v2782 = vsub.s32 2, %v2781
    %v2783 = vrot.slane %v2770, %v2782
    %v2784 = vlaneseq
    %v2785 = vshrl.u32 %v2784, 7
    %v2786 = vsub.s32 3, %v2785
    %v2787 = vrot.slane %v2770, %v2786
    %v2788 = vlaneseq
    %v2789 = vshrl.u32 %v2788, 7
    %v2790 = vsub.s32 4, %v2789
    %v2791 = vrot.slane %v2770, %v2790
    %v2792 = vlaneseq
    %v2793 = vshrl.u32 %v2792, 7
    %v2794 = vsub.s32 5, %v2793
    %v2795 = vrot.slane %v2770, %v2794
    %v2802 = vmul.f32 %v2767, %v2775
    %v2803 = vmul.f32 %v2766, %v2779
    %v2804 = vmul.f32 %v2765, %v2783
    %v2805 = vmul.f32 %v2764, %v2787
    %v2806 = vmul.f32 %v2763, %v2791
    %v2807 = vmul.f32 %v2762, %v2795
    %2808 = vst [vmem:[#allocation2] sm:$0x3] %v2802
    %2809 = vst [vmem:[#allocation2 + $0x8] sm:$0x3] %v2803
    %2810 = vst [vmem:[#allocation2 + $0x10] sm:$0x3] %v2804
    %2811 = vst [vmem:[#allocation2 + $0x18] sm:$0x3] %v2805
    %2812 = vst [vmem:[#allocation2 + $0x20] sm:$0x3] %v2806
    %2813 = vst [vmem:[#allocation2 + $0x28] sm:$0x3] %v2807
    %2814 = vrot.lane.b32.xlu0 %v2744, 16
    %v2815 = vpop.permute.xlu0 %2814
    %2816 = vrot.lane.b32.xlu0 %v2745, 16
    %v2817 = vpop.permute.xlu0 %2816
    %2818 = vrot.lane.b32.xlu0 %v2746, 16
    %v2819 = vpop.permute.xlu0 %2818
    %2820 = vrot.lane.b32.xlu0 %v2747, 16
    %v2821 = vpop.permute.xlu0 %2820
    %2822 = vrot.lane.b32.xlu0 %v2748, 16
    %v2823 = vpop.permute.xlu0 %2822
    %2824 = vrot.lane.b32.xlu0 %v2749, 16
    %v2825 = vpop.permute.xlu0 %2824
    %v2826 = vsel %vm1097, %v2823, %v2825
    %v2827 = vsel %vm1097, %v2821, %v2823
    %v2828 = vsel %vm1097, %v2819, %v2821
    %v2829 = vsel %vm1097, %v2817, %v2819
    %v2830 = vsel %vm1097, %v2815, %v2817
    %v2831 = vsel %vm1097, %v2825, %v2815
    %v2832 = vld [vmem:[%s1104] ss:$8 sm:$0xf]
    %v2833 = vld [vmem:[%s1104] ss:$8 sm:$0x30]
    %v2834 = vor.u32 %v2832, %v2833
    %v2836 = vlaneseq
    %v2837 = vshrl.u32 %v2836, 7
    %v2838 = vsub.s32 0, %v2837
    %v2839 = vrot.slane %v2834, %v2838
    %v2840 = vlaneseq
    %v2841 = vshrl.u32 %v2840, 7
    %v2842 = vsub.s32 1, %v2841
    %v2843 = vrot.slane %v2834, %v2842
    %v2844 = vlaneseq
    %v2845 = vshrl.u32 %v2844, 7
    %v2846 = vsub.s32 2, %v2845
    %v2847 = vrot.slane %v2834, %v2846
    %v2848 = vlaneseq
    %v2849 = vshrl.u32 %v2848, 7
    %v2850 = vsub.s32 3, %v2849
    %v2851 = vrot.slane %v2834, %v2850
    %v2852 = vlaneseq
    %v2853 = vshrl.u32 %v2852, 7
    %v2854 = vsub.s32 4, %v2853
    %v2855 = vrot.slane %v2834, %v2854
    %v2856 = vlaneseq
    %v2857 = vshrl.u32 %v2856, 7
    %v2858 = vsub.s32 5, %v2857
    %v2859 = vrot.slane %v2834, %v2858
    %v2866 = vmul.f32 %v2831, %v2839
    %v2867 = vmul.f32 %v2830, %v2843
    %v2868 = vmul.f32 %v2829, %v2847
    %v2869 = vmul.f32 %v2828, %v2851
    %v2870 = vmul.f32 %v2827, %v2855
    %v2871 = vmul.f32 %v2826, %v2859
    %v2878 = vrot.slane %v2866, 6
    %v2879 = vrot.slane %v2867, 6
    %v2880 = vrot.slane %v2868, 6
    %v2881 = vrot.slane %v2869, 6
    %v2882 = vrot.slane %v2870, 6
    %v2883 = vrot.slane %v2871, 6
    %2890 = vst [vmem:[#allocation2] sm:$0xc] %v2878
    %2891 = vst [vmem:[#allocation2 + $0x8] sm:$0xc] %v2879
    %2892 = vst [vmem:[#allocation2 + $0x10] sm:$0xc] %v2880
    %2893 = vst [vmem:[#allocation2 + $0x18] sm:$0xc] %v2881
    %2894 = vst [vmem:[#allocation2 + $0x20] sm:$0xc] %v2882
    %2895 = vst [vmem:[#allocation2 + $0x28] sm:$0xc] %v2883
    %2896 = vrot.lane.b32.xlu0 %v2744, 15
    %v2897 = vpop.permute.xlu0 %2896
    %2898 = vrot.lane.b32.xlu0 %v2745, 15
    %v2899 = vpop.permute.xlu0 %2898
    %2900 = vrot.lane.b32.xlu0 %v2746, 15
    %v2901 = vpop.permute.xlu0 %2900
    %2902 = vrot.lane.b32.xlu0 %v2747, 15
    %v2903 = vpop.permute.xlu0 %2902
    %2904 = vrot.lane.b32.xlu0 %v2748, 15
    %v2905 = vpop.permute.xlu0 %2904
    %2906 = vrot.lane.b32.xlu0 %v2749, 15
    %v2907 = vpop.permute.xlu0 %2906
    %v2908 = vsel %vm1181, %v2905, %v2907
    %v2909 = vsel %vm1181, %v2903, %v2905
    %v2910 = vsel %vm1181, %v2901, %v2903
    %v2911 = vsel %vm1181, %v2899, %v2901
    %v2912 = vsel %vm1181, %v2897, %v2899
    %v2913 = vsel %vm1181, %v2907, %v2897
    %v2914 = vld [vmem:[%s1188] ss:$8 sm:$0xf]
    %v2915 = vld [vmem:[%s1188] ss:$8 sm:$0x30]
    %v2916 = vor.u32 %v2914, %v2915
    %v2918 = vlaneseq
    %v2919 = vshrl.u32 %v2918, 7
    %v2920 = vsub.s32 0, %v2919
    %v2921 = vrot.slane %v2916, %v2920
    %v2922 = vlaneseq
    %v2923 = vshrl.u32 %v2922, 7
    %v2924 = vsub.s32 1, %v2923
    %v2925 = vrot.slane %v2916, %v2924
    %v2926 = vlaneseq
    %v2927 = vshrl.u32 %v2926, 7
    %v2928 = vsub.s32 2, %v2927
    %v2929 = vrot.slane %v2916, %v2928
    %v2930 = vlaneseq
    %v2931 = vshrl.u32 %v2930, 7
    %v2932 = vsub.s32 3, %v2931
    %v2933 = vrot.slane %v2916, %v2932
    %v2934 = vlaneseq
    %v2935 = vshrl.u32 %v2934, 7
    %v2936 = vsub.s32 4, %v2935
    %v2937 = vrot.slane %v2916, %v2936
    %v2938 = vlaneseq
    %v2939 = vshrl.u32 %v2938, 7
    %v2940 = vsub.s32 5, %v2939
    %v2941 = vrot.slane %v2916, %v2940
    %v2948 = vmul.f32 %v2913, %v2921
    %v2949 = vmul.f32 %v2912, %v2925
    %v2950 = vmul.f32 %v2911, %v2929
    %v2951 = vmul.f32 %v2910, %v2933
    %v2952 = vmul.f32 %v2909, %v2937
    %v2953 = vmul.f32 %v2908, %v2941
    %v2960 = vrot.slane %v2948, 4
    %v2961 = vrot.slane %v2949, 4
    %v2962 = vrot.slane %v2950, 4
    %v2963 = vrot.slane %v2951, 4
    %v2964 = vrot.slane %v2952, 4
    %v2965 = vrot.slane %v2953, 4
    %2972 = vst [vmem:[#allocation2] sm:$0x30] %v2960
    %2973 = vst [vmem:[#allocation2 + $0x8] sm:$0x30] %v2961
    %2974 = vst [vmem:[#allocation2 + $0x10] sm:$0x30] %v2962
    %2975 = vst [vmem:[#allocation2 + $0x18] sm:$0x30] %v2963
    %2976 = vst [vmem:[#allocation2 + $0x20] sm:$0x30] %v2964
    %2977 = vst [vmem:[#allocation2 + $0x28] sm:$0x30] %v2965
    %2978 = vrot.lane.b32.xlu0 %v2744, 1
    %v2979 = vpop.permute.xlu0 %2978
    %2980 = vrot.lane.b32.xlu0 %v2745, 1
    %v2981 = vpop.permute.xlu0 %2980
    %2982 = vrot.lane.b32.xlu0 %v2746, 1
    %v2983 = vpop.permute.xlu0 %2982
    %2984 = vrot.lane.b32.xlu0 %v2747, 1
    %v2985 = vpop.permute.xlu0 %2984
    %2986 = vrot.lane.b32.xlu0 %v2748, 1
    %v2987 = vpop.permute.xlu0 %2986
    %2988 = vrot.lane.b32.xlu0 %v2749, 1
    %v2989 = vpop.permute.xlu0 %2988
    %v2990 = vsel %vm1415, %v2987, %v2989
    %v2991 = vsel %vm1415, %v2985, %v2987
    %v2992 = vsel %vm1415, %v2983, %v2985
    %v2993 = vsel %vm1415, %v2981, %v2983
    %v2994 = vsel %vm1415, %v2979, %v2981
    %v2995 = vsel %vm1415, %v2989, %v2979
    %v2996 = vld [vmem:[%s1422] ss:$8 sm:$0xf]
    %v2997 = vld [vmem:[%s1422] ss:$8 sm:$0x30]
    %v2998 = vor.u32 %v2996, %v2997
    %v3000 = vlaneseq
    %v3001 = vshrl.u32 %v3000, 7
    %v3002 = vsub.s32 0, %v3001
    %v3003 = vrot.slane %v2998, %v3002
    %v3004 = vlaneseq
    %v3005 = vshrl.u32 %v3004, 7
    %v3006 = vsub.s32 1, %v3005
    %v3007 = vrot.slane %v2998, %v3006
    %v3008 = vlaneseq
    %v3009 = vshrl.u32 %v3008, 7
    %v3010 = vsub.s32 2, %v3009
    %v3011 = vrot.slane %v2998, %v3010
    %v3012 = vlaneseq
    %v3013 = vshrl.u32 %v3012, 7
    %v3014 = vsub.s32 3, %v3013
    %v3015 = vrot.slane %v2998, %v3014
    %v3016 = vlaneseq
    %v3017 = vshrl.u32 %v3016, 7
    %v3018 = vsub.s32 4, %v3017
    %v3019 = vrot.slane %v2998, %v3018
    %v3020 = vlaneseq
    %v3021 = vshrl.u32 %v3020, 7
    %v3022 = vsub.s32 5, %v3021
    %v3023 = vrot.slane %v2998, %v3022
    %v3030 = vmul.f32 %v2995, %v3003
    %v3031 = vmul.f32 %v2994, %v3007
    %v3032 = vmul.f32 %v2993, %v3011
    %v3033 = vmul.f32 %v2992, %v3015
    %v3034 = vmul.f32 %v2991, %v3019
    %v3035 = vmul.f32 %v2990, %v3023
    %v3042 = vrot.slane %v3030, 2
    %v3043 = vrot.slane %v3031, 2
    %v3044 = vrot.slane %v3032, 2
    %v3045 = vrot.slane %v3033, 2
    %v3046 = vrot.slane %v3034, 2
    %v3047 = vrot.slane %v3035, 2
    %3054 = vst [vmem:[#allocation2] sm:$0xc0] %v3042
    %3055 = vst [vmem:[#allocation2 + $0x8] sm:$0xc0] %v3043
    %3056 = vst [vmem:[#allocation2 + $0x10] sm:$0xc0] %v3044
    %3057 = vst [vmem:[#allocation2 + $0x18] sm:$0xc0] %v3045
    %3058 = vst [vmem:[#allocation2 + $0x20] sm:$0xc0] %v3046
    %3059 = vst [vmem:[#allocation2 + $0x28] sm:$0xc0] %v3047
    %3060 = vst [vmem:[#allocation2 + $0x30] sm:$0x3] %v2744
    %3061 = vst [vmem:[#allocation2 + $0x38] sm:$0x3] %v2745
    %3062 = vst [vmem:[#allocation2 + $0x40] sm:$0x3] %v2746
    %3063 = vst [vmem:[#allocation2 + $0x48] sm:$0x3] %v2747
    %3064 = vst [vmem:[#allocation2 + $0x50] sm:$0x3] %v2748
    %3065 = vst [vmem:[#allocation2 + $0x58] sm:$0x3] %v2749
    %3066 = vrot.lane.b32.xlu0 %v2744, 127
    %v3067 = vpop.permute.xlu0 %3066
    %3068 = vrot.lane.b32.xlu0 %v2745, 127
    %v3069 = vpop.permute.xlu0 %3068
    %3070 = vrot.lane.b32.xlu0 %v2746, 127
    %v3071 = vpop.permute.xlu0 %3070
    %3072 = vrot.lane.b32.xlu0 %v2747, 127
    %v3073 = vpop.permute.xlu0 %3072
    %3074 = vrot.lane.b32.xlu0 %v2748, 127
    %v3075 = vpop.permute.xlu0 %3074
    %3076 = vrot.lane.b32.xlu0 %v2749, 127
    %v3077 = vpop.permute.xlu0 %3076
    %v3078 = vsel %vm1505, %v3075, %v3077
    %v3079 = vsel %vm1505, %v3073, %v3075
    %v3080 = vsel %vm1505, %v3071, %v3073
    %v3081 = vsel %vm1505, %v3069, %v3071
    %v3082 = vsel %vm1505, %v3067, %v3069
    %v3083 = vsel %vm1505, %v3077, %v3067
    %v3084 = vld [vmem:[%s1512] ss:$8 sm:$0xf]
    %v3085 = vld [vmem:[%s1512] ss:$8 sm:$0x30]
    %v3086 = vor.u32 %v3084, %v3085
    %v3088 = vlaneseq
    %v3089 = vshrl.u32 %v3088, 7
    %v3090 = vsub.s32 0, %v3089
    %v3091 = vrot.slane %v3086, %v3090
    %v3092 = vlaneseq
    %v3093 = vshrl.u32 %v3092, 7
    %v3094 = vsub.s32 1, %v3093
    %v3095 = vrot.slane %v3086, %v3094
    %v3096 = vlaneseq
    %v3097 = vshrl.u32 %v3096, 7
    %v3098 = vsub.s32 2, %v3097
    %v3099 = vrot.slane %v3086, %v3098
    %v3100 = vlaneseq
    %v3101 = vshrl.u32 %v3100, 7
    %v3102 = vsub.s32 3, %v3101
    %v3103 = vrot.slane %v3086, %v3102
    %v3104 = vlaneseq
    %v3105 = vshrl.u32 %v3104, 7
    %v3106 = vsub.s32 4, %v3105
    %v3107 = vrot.slane %v3086, %v3106
    %v3108 = vlaneseq
    %v3109 = vshrl.u32 %v3108, 7
    %v3110 = vsub.s32 5, %v3109
    %v3111 = vrot.slane %v3086, %v3110
    %v3118 = vmul.f32 %v3082, %v3091
    %v3119 = vmul.f32 %v3081, %v3095
    %v3120 = vmul.f32 %v3080, %v3099
    %v3121 = vmul.f32 %v3079, %v3103
    %v3122 = vmul.f32 %v3078, %v3107
    %v3123 = vmul.f32 %v3083, %v3111
    %v3130 = vrot.slane %v3118, 6
    %v3131 = vrot.slane %v3119, 6
    %v3132 = vrot.slane %v3120, 6
    %v3133 = vrot.slane %v3121, 6
    %v3134 = vrot.slane %v3122, 6
    %v3135 = vrot.slane %v3123, 6
    %3142 = vst [vmem:[#allocation2 + $0x30] sm:$0xc] %v3130
    %3143 = vst [vmem:[#allocation2 + $0x38] sm:$0xc] %v3131
    %3144 = vst [vmem:[#allocation2 + $0x40] sm:$0xc] %v3132
    %3145 = vst [vmem:[#allocation2 + $0x48] sm:$0xc] %v3133
    %3146 = vst [vmem:[#allocation2 + $0x50] sm:$0xc] %v3134
    %3147 = vst [vmem:[#allocation2 + $0x58] sm:$0xc] %v3135
    %3148 = vrot.lane.b32.xlu0 %v2744, 113
    %v3149 = vpop.permute.xlu0 %3148
    %3150 = vrot.lane.b32.xlu0 %v2745, 113
    %v3151 = vpop.permute.xlu0 %3150
    %3152 = vrot.lane.b32.xlu0 %v2746, 113
    %v3153 = vpop.permute.xlu0 %3152
    %3154 = vrot.lane.b32.xlu0 %v2747, 113
    %v3155 = vpop.permute.xlu0 %3154
    %3156 = vrot.lane.b32.xlu0 %v2748, 113
    %v3157 = vpop.permute.xlu0 %3156
    %3158 = vrot.lane.b32.xlu0 %v2749, 113
    %v3159 = vpop.permute.xlu0 %3158
    %v3160 = vsel %vm1757, %v3157, %v3159
    %v3161 = vsel %vm1757, %v3155, %v3157
    %v3162 = vsel %vm1757, %v3153, %v3155
    %v3163 = vsel %vm1757, %v3151, %v3153
    %v3164 = vsel %vm1757, %v3149, %v3151
    %v3165 = vsel %vm1757, %v3159, %v3149
    %v3166 = vld [vmem:[%s1764] ss:$8 sm:$0xf]
    %v3167 = vld [vmem:[%s1764] ss:$8 sm:$0x30]
    %v3168 = vor.u32 %v3166, %v3167
    %v3170 = vlaneseq
    %v3171 = vshrl.u32 %v3170, 7
    %v3172 = vsub.s32 0, %v3171
    %v3173 = vrot.slane %v3168, %v3172
    %v3174 = vlaneseq
    %v3175 = vshrl.u32 %v3174, 7
    %v3176 = vsub.s32 1, %v3175
    %v3177 = vrot.slane %v3168, %v3176
    %v3178 = vlaneseq
    %v3179 = vshrl.u32 %v3178, 7
    %v3180 = vsub.s32 2, %v3179
    %v3181 = vrot.slane %v3168, %v3180
    %v3182 = vlaneseq
    %v3183 = vshrl.u32 %v3182, 7
    %v3184 = vsub.s32 3, %v3183
    %v3185 = vrot.slane %v3168, %v3184
    %v3186 = vlaneseq
    %v3187 = vshrl.u32 %v3186, 7
    %v3188 = vsub.s32 4, %v3187
    %v3189 = vrot.slane %v3168, %v3188
    %v3190 = vlaneseq
    %v3191 = vshrl.u32 %v3190, 7
    %v3192 = vsub.s32 5, %v3191
    %v3193 = vrot.slane %v3168, %v3192
    %v3200 = vmul.f32 %v3164, %v3173
    %v3201 = vmul.f32 %v3163, %v3177
    %v3202 = vmul.f32 %v3162, %v3181
    %v3203 = vmul.f32 %v3161, %v3185
    %v3204 = vmul.f32 %v3160, %v3189
    %v3205 = vmul.f32 %v3165, %v3193
    %v3212 = vrot.slane %v3200, 4
    %v3213 = vrot.slane %v3201, 4
    %v3214 = vrot.slane %v3202, 4
    %v3215 = vrot.slane %v3203, 4
    %v3216 = vrot.slane %v3204, 4
    %v3217 = vrot.slane %v3205, 4
    %3224 = vst [vmem:[#allocation2 + $0x30] sm:$0x30] %v3212
    %3225 = vst [vmem:[#allocation2 + $0x38] sm:$0x30] %v3213
    %3226 = vst [vmem:[#allocation2 + $0x40] sm:$0x30] %v3214
    %3227 = vst [vmem:[#allocation2 + $0x48] sm:$0x30] %v3215
    %3228 = vst [vmem:[#allocation2 + $0x50] sm:$0x30] %v3216
    %3229 = vst [vmem:[#allocation2 + $0x58] sm:$0x30] %v3217
    %3230 = vrot.lane.b32.xlu0 %v2744, 112
    %v3231 = vpop.permute.xlu0 %3230
    %3232 = vrot.lane.b32.xlu0 %v2745, 112
    %v3233 = vpop.permute.xlu0 %3232
    %3234 = vrot.lane.b32.xlu0 %v2746, 112
    %v3235 = vpop.permute.xlu0 %3234
    %3236 = vrot.lane.b32.xlu0 %v2747, 112
    %v3237 = vpop.permute.xlu0 %3236
    %3238 = vrot.lane.b32.xlu0 %v2748, 112
    %v3239 = vpop.permute.xlu0 %3238
    %3240 = vrot.lane.b32.xlu0 %v2749, 112
    %v3241 = vpop.permute.xlu0 %3240
    %v3242 = vsel %vm1823, %v3239, %v3241
    %v3243 = vsel %vm1823, %v3237, %v3239
    %v3244 = vsel %vm1823, %v3235, %v3237
    %v3245 = vsel %vm1823, %v3233, %v3235
    %v3246 = vsel %vm1823, %v3231, %v3233
    %v3247 = vsel %vm1823, %v3241, %v3231
    %v3248 = vld [vmem:[%s1830] ss:$8 sm:$0xf]
    %v3249 = vld [vmem:[%s1830] ss:$8 sm:$0x30]
    %v3250 = vor.u32 %v3248, %v3249
    %v3252 = vlaneseq
    %v3253 = vshrl.u32 %v3252, 7
    %v3254 = vsub.s32 0, %v3253
    %v3255 = vrot.slane %v3250, %v3254
    %v3256 = vlaneseq
    %v3257 = vshrl.u32 %v3256, 7
    %v3258 = vsub.s32 1, %v3257
    %v3259 = vrot.slane %v3250, %v3258
    %v3260 = vlaneseq
    %v3261 = vshrl.u32 %v3260, 7
    %v3262 = vsub.s32 2, %v3261
    %v3263 = vrot.slane %v3250, %v3262
    %v3264 = vlaneseq
    %v3265 = vshrl.u32 %v3264, 7
    %v3266 = vsub.s32 3, %v3265
    %v3267 = vrot.slane %v3250, %v3266
    %v3268 = vlaneseq
    %v3269 = vshrl.u32 %v3268, 7
    %v3270 = vsub.s32 4, %v3269
    %v3271 = vrot.slane %v3250, %v3270
    %v3272 = vlaneseq
    %v3273 = vshrl.u32 %v3272, 7
    %v3274 = vsub.s32 5, %v3273
    %v3275 = vrot.slane %v3250, %v3274
    %v3282 = vmul.f32 %v3246, %v3255
    %v3283 = vmul.f32 %v3245, %v3259
    %v3284 = vmul.f32 %v3244, %v3263
    %v3285 = vmul.f32 %v3243, %v3267
    %v3286 = vmul.f32 %v3242, %v3271
    %v3287 = vmul.f32 %v3247, %v3275
    %v3294 = vrot.slane %v3282, 2
    %v3295 = vrot.slane %v3283, 2
    %v3296 = vrot.slane %v3284, 2
    %v3297 = vrot.slane %v3285, 2
    %v3298 = vrot.slane %v3286, 2
    %v3299 = vrot.slane %v3287, 2
    %3306 = vst [vmem:[#allocation2 + $0x30] sm:$0xc0] %v3294
    %3307 = vst [vmem:[#allocation2 + $0x38] sm:$0xc0] %v3295
    %3308 = vst [vmem:[#allocation2 + $0x40] sm:$0xc0] %v3296
    %3309 = vst [vmem:[#allocation2 + $0x48] sm:$0xc0] %v3297
    %3310 = vst [vmem:[#allocation2 + $0x50] sm:$0xc0] %v3298
    %3311 = vst [vmem:[#allocation2 + $0x58] sm:$0xc0] %v3299
    %3312 = vrot.lane.b32.xlu0 %v2744, 111
    %v3313 = vpop.permute.xlu0 %3312
    %3314 = vrot.lane.b32.xlu0 %v2745, 111
    %v3315 = vpop.permute.xlu0 %3314
    %3316 = vrot.lane.b32.xlu0 %v2746, 111
    %v3317 = vpop.permute.xlu0 %3316
    %3318 = vrot.lane.b32.xlu0 %v2747, 111
    %v3319 = vpop.permute.xlu0 %3318
    %3320 = vrot.lane.b32.xlu0 %v2748, 111
    %v3321 = vpop.permute.xlu0 %3320
    %3322 = vrot.lane.b32.xlu0 %v2749, 111
    %v3323 = vpop.permute.xlu0 %3322
    %v3324 = vsel %vm1907, %v3321, %v3323
    %v3325 = vsel %vm1907, %v3319, %v3321
    %v3326 = vsel %vm1907, %v3317, %v3319
    %v3327 = vsel %vm1907, %v3315, %v3317
    %v3328 = vsel %vm1907, %v3313, %v3315
    %v3329 = vsel %vm1907, %v3323, %v3313
    %v3330 = vld [vmem:[%s1914] ss:$8 sm:$0xf]
    %v3331 = vld [vmem:[%s1914] ss:$8 sm:$0x30]
    %v3332 = vor.u32 %v3330, %v3331
    %v3334 = vlaneseq
    %v3335 = vshrl.u32 %v3334, 7
    %v3336 = vsub.s32 0, %v3335
    %v3337 = vrot.slane %v3332, %v3336
    %v3338 = vlaneseq
    %v3339 = vshrl.u32 %v3338, 7
    %v3340 = vsub.s32 1, %v3339
    %v3341 = vrot.slane %v3332, %v3340
    %v3342 = vlaneseq
    %v3343 = vshrl.u32 %v3342, 7
    %v3344 = vsub.s32 2, %v3343
    %v3345 = vrot.slane %v3332, %v3344
    %v3346 = vlaneseq
    %v3347 = vshrl.u32 %v3346, 7
    %v3348 = vsub.s32 3, %v3347
    %v3349 = vrot.slane %v3332, %v3348
    %v3350 = vlaneseq
    %v3351 = vshrl.u32 %v3350, 7
    %v3352 = vsub.s32 4, %v3351
    %v3353 = vrot.slane %v3332, %v3352
    %v3354 = vlaneseq
    %v3355 = vshrl.u32 %v3354, 7
    %v3356 = vsub.s32 5, %v3355
    %v3357 = vrot.slane %v3332, %v3356
    %v3364 = vmul.f32 %v3328, %v3337
    %v3365 = vmul.f32 %v3327, %v3341
    %v3366 = vmul.f32 %v3326, %v3345
    %v3367 = vmul.f32 %v3325, %v3349
    %v3368 = vmul.f32 %v3324, %v3353
    %v3369 = vmul.f32 %v3329, %v3357
    %3370 = vst [vmem:[#allocation2 + $0x60] sm:$0x3] %v3364
    %3371 = vst [vmem:[#allocation2 + $0x68] sm:$0x3] %v3365
    %3372 = vst [vmem:[#allocation2 + $0x70] sm:$0x3] %v3366
    %3373 = vst [vmem:[#allocation2 + $0x78] sm:$0x3] %v3367
    %3374 = vst [vmem:[#allocation2 + $0x80] sm:$0x3] %v3368
    %3375 = vst [vmem:[#allocation2 + $0x88] sm:$0x3] %v3369
    %3376 = vrot.lane.b32.xlu0 %v2744, 2
    %v3377 = vpop.permute.xlu0 %3376
    %3378 = vrot.lane.b32.xlu0 %v2745, 2
    %v3379 = vpop.permute.xlu0 %3378
    %3380 = vrot.lane.b32.xlu0 %v2746, 2
    %v3381 = vpop.permute.xlu0 %3380
    %3382 = vrot.lane.b32.xlu0 %v2747, 2
    %v3383 = vpop.permute.xlu0 %3382
    %3384 = vrot.lane.b32.xlu0 %v2748, 2
    %v3385 = vpop.permute.xlu0 %3384
    %3386 = vrot.lane.b32.xlu0 %v2749, 2
    %v3387 = vpop.permute.xlu0 %3386
    %v3388 = vsel %vm1331, %v3385, %v3387
    %v3389 = vsel %vm1331, %v3383, %v3385
    %v3390 = vsel %vm1331, %v3381, %v3383
    %v3391 = vsel %vm1331, %v3379, %v3381
    %v3392 = vsel %vm1331, %v3377, %v3379
    %v3393 = vsel %vm1331, %v3387, %v3377
    %v3394 = vld [vmem:[%s1338] ss:$8 sm:$0xf]
    %v3395 = vld [vmem:[%s1338] ss:$8 sm:$0x30]
    %v3396 = vor.u32 %v3394, %v3395
    %v3398 = vlaneseq
    %v3399 = vshrl.u32 %v3398, 7
    %v3400 = vsub.s32 0, %v3399
    %v3401 = vrot.slane %v3396, %v3400
    %v3402 = vlaneseq
    %v3403 = vshrl.u32 %v3402, 7
    %v3404 = vsub.s32 1, %v3403
    %v3405 = vrot.slane %v3396, %v3404
    %v3406 = vlaneseq
    %v3407 = vshrl.u32 %v3406, 7
    %v3408 = vsub.s32 2, %v3407
    %v3409 = vrot.slane %v3396, %v3408
    %v3410 = vlaneseq
    %v3411 = vshrl.u32 %v3410, 7
    %v3412 = vsub.s32 3, %v3411
    %v3413 = vrot.slane %v3396, %v3412
    %v3414 = vlaneseq
    %v3415 = vshrl.u32 %v3414, 7
    %v3416 = vsub.s32 4, %v3415
    %v3417 = vrot.slane %v3396, %v3416
    %v3418 = vlaneseq
    %v3419 = vshrl.u32 %v3418, 7
    %v3420 = vsub.s32 5, %v3419
    %v3421 = vrot.slane %v3396, %v3420
    %v3428 = vmul.f32 %v3393, %v3401
    %v3429 = vmul.f32 %v3392, %v3405
    %v3430 = vmul.f32 %v3391, %v3409
    %v3431 = vmul.f32 %v3390, %v3413
    %v3432 = vmul.f32 %v3389, %v3417
    %v3433 = vmul.f32 %v3388, %v3421
    %v3440 = vrot.slane %v3428, 6
    %v3441 = vrot.slane %v3429, 6
    %v3442 = vrot.slane %v3430, 6
    %v3443 = vrot.slane %v3431, 6
    %v3444 = vrot.slane %v3432, 6
    %v3445 = vrot.slane %v3433, 6
    %3452 = vst [vmem:[#allocation2 + $0x60] sm:$0xc] %v3440
    %3453 = vst [vmem:[#allocation2 + $0x68] sm:$0xc] %v3441
    %3454 = vst [vmem:[#allocation2 + $0x70] sm:$0xc] %v3442
    %3455 = vst [vmem:[#allocation2 + $0x78] sm:$0xc] %v3443
    %3456 = vst [vmem:[#allocation2 + $0x80] sm:$0xc] %v3444
    %3457 = vst [vmem:[#allocation2 + $0x88] sm:$0xc] %v3445
    %3458 = vrot.lane.b32.xlu0 %v2744, 126
    %v3459 = vpop.permute.xlu0 %3458
    %3460 = vrot.lane.b32.xlu0 %v2745, 126
    %v3461 = vpop.permute.xlu0 %3460
    %3462 = vrot.lane.b32.xlu0 %v2746, 126
    %v3463 = vpop.permute.xlu0 %3462
    %3464 = vrot.lane.b32.xlu0 %v2747, 126
    %v3465 = vpop.permute.xlu0 %3464
    %3466 = vrot.lane.b32.xlu0 %v2748, 126
    %v3467 = vpop.permute.xlu0 %3466
    %3468 = vrot.lane.b32.xlu0 %v2749, 126
    %v3469 = vpop.permute.xlu0 %3468
    %v3470 = vsel %vm1589, %v3467, %v3469
    %v3471 = vsel %vm1589, %v3465, %v3467
    %v3472 = vsel %vm1589, %v3463, %v3465
    %v3473 = vsel %vm1589, %v3461, %v3463
    %v3474 = vsel %vm1589, %v3459, %v3461
    %v3475 = vsel %vm1589, %v3469, %v3459
    %v3476 = vld [vmem:[%s1596] ss:$8 sm:$0xf]
    %v3477 = vld [vmem:[%s1596] ss:$8 sm:$0x30]
    %v3478 = vor.u32 %v3476, %v3477
    %v3480 = vlaneseq
    %v3481 = vshrl.u32 %v3480, 7
    %v3482 = vsub.s32 0, %v3481
    %v3483 = vrot.slane %v3478, %v3482
    %v3484 = vlaneseq
    %v3485 = vshrl.u32 %v3484, 7
    %v3486 = vsub.s32 1, %v3485
    %v3487 = vrot.slane %v3478, %v3486
    %v3488 = vlaneseq
    %v3489 = vshrl.u32 %v3488, 7
    %v3490 = vsub.s32 2, %v3489
    %v3491 = vrot.slane %v3478, %v3490
    %v3492 = vlaneseq
    %v3493 = vshrl.u32 %v3492, 7
    %v3494 = vsub.s32 3, %v3493
    %v3495 = vrot.slane %v3478, %v3494
    %v3496 = vlaneseq
    %v3497 = vshrl.u32 %v3496, 7
    %v3498 = vsub.s32 4, %v3497
    %v3499 = vrot.slane %v3478, %v3498
    %v3500 = vlaneseq
    %v3501 = vshrl.u32 %v3500, 7
    %v3502 = vsub.s32 5, %v3501
    %v3503 = vrot.slane %v3478, %v3502
    %v3510 = vmul.f32 %v3474, %v3483
    %v3511 = vmul.f32 %v3473, %v3487
    %v3512 = vmul.f32 %v3472, %v3491
    %v3513 = vmul.f32 %v3471, %v3495
    %v3514 = vmul.f32 %v3470, %v3499
    %v3515 = vmul.f32 %v3475, %v3503
    %v3522 = vrot.slane %v3510, 4
    %v3523 = vrot.slane %v3511, 4
    %v3524 = vrot.slane %v3512, 4
    %v3525 = vrot.slane %v3513, 4
    %v3526 = vrot.slane %v3514, 4
    %v3527 = vrot.slane %v3515, 4
    %3534 = vst [vmem:[#allocation2 + $0x60] sm:$0x30] %v3522
    %3535 = vst [vmem:[#allocation2 + $0x68] sm:$0x30] %v3523
    %3536 = vst [vmem:[#allocation2 + $0x70] sm:$0x30] %v3524
    %3537 = vst [vmem:[#allocation2 + $0x78] sm:$0x30] %v3525
    %3538 = vst [vmem:[#allocation2 + $0x80] sm:$0x30] %v3526
    %3539 = vst [vmem:[#allocation2 + $0x88] sm:$0x30] %v3527
    %v3540 = vld [vmem:[#allocation7 + $0x8] sm:$0xff]
    %v3541 = vld [vmem:[#allocation7 + $0x70] sm:$0xff]
    %v3542 = vld [vmem:[#allocation2] sm:$0xff]
    %v3543 = vld [vmem:[#allocation2 + $0x8] sm:$0xff]
    %v3544 = vld [vmem:[#allocation2 + $0x10] sm:$0xff]
    %v3545 = vld [vmem:[#allocation2 + $0x18] sm:$0xff]
    %v3546 = vld [vmem:[#allocation2 + $0x20] sm:$0xff]
    %v3547 = vld [vmem:[#allocation2 + $0x28] sm:$0xff]
    %v3548 = vld [vmem:[#allocation2 + $0x30] sm:$0xff]
    %v3549 = vld [vmem:[#allocation2 + $0x38] sm:$0xff]
    %v3550 = vld [vmem:[#allocation2 + $0x40] sm:$0xff]
    %v3551 = vld [vmem:[#allocation2 + $0x48] sm:$0xff]
    %v3552 = vld [vmem:[#allocation2 + $0x50] sm:$0xff]
    %v3553 = vld [vmem:[#allocation2 + $0x58] sm:$0xff]
    %v3554 = vld [vmem:[#allocation2 + $0x60] sm:$0x3f]
    %v3555 = vld [vmem:[#allocation2 + $0x68] sm:$0x3f]
    %v3556 = vld [vmem:[#allocation2 + $0x70] sm:$0x3f]
    %v3557 = vld [vmem:[#allocation2 + $0x78] sm:$0x3f]
    %v3558 = vld [vmem:[#allocation2 + $0x80] sm:$0x3f]
    %v3559 = vld [vmem:[#allocation2 + $0x88] sm:$0x3f]
    %v3560 = vld [vmem:[#allocation8] sm:$0xff]
    %v3561 = vld [vmem:[#allocation8 + $0x8] sm:$0xff]
    %3563 = vset.pattern.permute.xlu0 1
    %3564 = vperm.xlu0 %3563, %v3560
    %v3565 = vpop.permute.xlu0 %3564
    %3568 = vset.pattern.permute.xlu0 1
    %3569 = vperm.xlu0 %3568, %v3561
    %v3570 = vpop.permute.xlu0 %3569
    %vm3572 = vcmask 179200
    %v3574 = vsel %vm3572, %v3540, 0
    %v3577 = vsel %vm3572, %v3541, 0
    %vm3579 = vcmask 1045504
    %v3581 = vsel %vm3579, %v3554, 0
    %v3584 = vsel %vm3579, %v3555, 0
    %v3587 = vsel %vm3579, %v3556, 0
    %v3590 = vsel %vm3579, %v3557, 0
    %v3593 = vsel %vm3579, %v3558, 0
    %v3596 = vsel %vm3579, %v3559, 0
    %3598 = vmatprep.subr.mxu0 %v3543
    %3599 = vmatpush1.msra.mxu0 %v3542
    %3600 = vmatprep.subr.mxu0 %v3549
    %3601 = vmatpush1.msra.mxu0 %v3548
    %3602 = vmatprep.subr.mxu0 %v3584
    %3603 = vmatpush1.msra.mxu0 %v3581
    %3604 = vmatprep.subr.mxu0 0.0
    %3605 = vmatpush1.msra.mxu0 0.0
    %3606 = vmatprep.subr.mxu0 0.0
    %3607 = vmatpush1.msra.mxu0 0.0
    %3608 = vmatprep.subr.mxu0 0.0
    %3609 = vmatpush1.msra.mxu0 0.0
    %3610 = vmatprep.subr.mxu0 0.0
    %3611 = vmatpush1.msra.mxu0 0.0
    %3612 = vmatprep.subr.mxu0 0.0
    %3613 = vmatpush1.msra.mxu0 0.0
    %3614 = vmatprep.subr.mxu0 0.0
    %3615 = vmatpush1.msra.mxu0 0.0
    %3616 = vmatprep.subr.mxu0 0.0
    %3617 = vmatpush1.msra.mxu0 0.0
    %3618 = vmatprep.subr.mxu0 0.0
    %3619 = vmatpush1.msra.mxu0 0.0
    %3620 = vmatprep.subr.mxu0 0.0
    %3621 = vmatpush1.msra.mxu0 0.0
    %3622 = vmatprep.subr.mxu0 0.0
    %3623 = vmatpush1.msra.mxu0 0.0
    %3624 = vmatprep.subr.mxu0 0.0
    %3625 = vmatpush1.msra.mxu0 0.0
    %3626 = vmatprep.subr.mxu0 0.0
    %3627 = vmatpush1.msra.mxu0 0.0
    %3628 = vmatprep.subr.mxu0 0.0
    %3629 = vmatpush1.msra.mxu0 0.0
    %3630 = vmatprep.subr.mxu0 0.0
    %3631 = vmatpush1.msra.mxu0 0.0
    %3632 = vmatprep.subr.mxu0 0.0
    %3633 = vmatpush1.msra.mxu0 0.0
    %3634 = vmatprep.subr.mxu0 0.0
    %3635 = vmatpush1.msra.mxu0 0.0
    %3636 = vmatprep.subr.mxu0 0.0
    %3637 = vmatpush1.msra.mxu0 0.0
    %3638 = vmatprep.subr.mxu0 0.0
    %3639 = vmatpush1.msra.mxu0 0.0
    %3640 = vmatprep.subr.mxu0 0.0
    %3641 = vmatpush1.msra.mxu0 0.0
    %3642 = vmatprep.subr.mxu0 0.0
    %3643 = vmatpush1.msra.mxu0 0.0
    %3644 = vmatprep.subr.mxu0 0.0
    %3645 = vmatpush1.msra.mxu0 0.0
    %3646 = vmatprep.subr.mxu0 0.0
    %3647 = vmatpush1.msra.mxu0 0.0
    %3648 = vmatprep.subr.mxu0 0.0
    %3649 = vmatpush1.msra.mxu0 0.0
    %3650 = vmatprep.subr.mxu0 0.0
    %3651 = vmatpush1.msra.mxu0 0.0
    %3652 = vmatprep.subr.mxu0 0.0
    %3653 = vmatpush1.msra.mxu0 0.0
    %3654 = vmatprep.subr.mxu0 0.0
    %3655 = vmatpush1.msra.mxu0 0.0
    %3656 = vmatprep.subr.mxu0 0.0
    %3657 = vmatpush1.msra.mxu0 0.0
    %3658 = vmatprep.subr.mxu0 0.0
    %3659 = vmatpush1.msra.mxu0 0.0
    %3660 = vmatprep.subr.mxu0 0.0
    %3661 = vmatpush1.msra.mxu0 0.0
    %3662 = vmatprep.mubr.f32.mxu0 0.0
    %3663 = vmatmul.mubr.f32.gmra.mrb[0].mxu0 %v3574
    %v3664 = vpop.f32.mrb[0].mxu0
    %v3665 = vadd.f32 %v3565, %v3664
    %v3666 = vpop.f32.mrb[0].mxu0
    %v3667 = vadd.f32 %v3565, %v3666
    %3668 = vmatprep.mubr.f32.mxu0 0.0
    %3669 = vmatmul.mubr.f32.gmra.mrb[0].mxu0 %v3577
    %v3670 = vpop.f32.mrb[0].mxu0
    %v3671 = vadd.f32 %v3570, %v3670
    %v3672 = vpop.f32.mrb[0].mxu0
    %v3673 = vadd.f32 %v3570, %v3672
    %3674 = vdwg.mxu0
    %3675 = vmatprep.subr.mxu0 %v3545
    %3676 = vmatpush1.msra.mxu0 %v3544
    %3677 = vmatprep.subr.mxu0 %v3551
    %3678 = vmatpush1.msra.mxu0 %v3550
    %3679 = vmatprep.subr.mxu0 %v3590
    %3680 = vmatpush1.msra.mxu0 %v3587
    %3681 = vmatprep.subr.mxu0 0.0
    %3682 = vmatpush1.msra.mxu0 0.0
    %3683 = vmatprep.subr.mxu0 0.0
    %3684 = vmatpush1.msra.mxu0 0.0
    %3685 = vmatprep.subr.mxu0 0.0
    %3686 = vmatpush1.msra.mxu0 0.0
    %3687 = vmatprep.subr.mxu0 0.0
    %3688 = vmatpush1.msra.mxu0 0.0
    %3689 = vmatprep.subr.mxu0 0.0
    %3690 = vmatpush1.msra.mxu0 0.0
    %3691 = vmatprep.subr.mxu0 0.0
    %3692 = vmatpush1.msra.mxu0 0.0
    %3693 = vmatprep.subr.mxu0 0.0
    %3694 = vmatpush1.msra.mxu0 0.0
    %3695 = vmatprep.subr.mxu0 0.0
    %3696 = vmatpush1.msra.mxu0 0.0
    %3697 = vmatprep.subr.mxu0 0.0
    %3698 = vmatpush1.msra.mxu0 0.0
    %3699 = vmatprep.subr.mxu0 0.0
    %3700 = vmatpush1.msra.mxu0 0.0
    %3701 = vmatprep.subr.mxu0 0.0
    %3702 = vmatpush1.msra.mxu0 0.0
    %3703 = vmatprep.subr.mxu0 0.0
    %3704 = vmatpush1.msra.mxu0 0.0
    %3705 = vmatprep.subr.mxu0 0.0
    %3706 = vmatpush1.msra.mxu0 0.0
    %3707 = vmatprep.subr.mxu0 0.0
    %3708 = vmatpush1.msra.mxu0 0.0
    %3709 = vmatprep.subr.mxu0 0.0
    %3710 = vmatpush1.msra.mxu0 0.0
    %3711 = vmatprep.subr.mxu0 0.0
    %3712 = vmatpush1.msra.mxu0 0.0
    %3713 = vmatprep.subr.mxu0 0.0
    %3714 = vmatpush1.msra.mxu0 0.0
    %3715 = vmatprep.subr.mxu0 0.0
    %3716 = vmatpush1.msra.mxu0 0.0
    %3717 = vmatprep.subr.mxu0 0.0
    %3718 = vmatpush1.msra.mxu0 0.0
    %3719 = vmatprep.subr.mxu0 0.0
    %3720 = vmatpush1.msra.mxu0 0.0
    %3721 = vmatprep.subr.mxu0 0.0
    %3722 = vmatpush1.msra.mxu0 0.0
    %3723 = vmatprep.subr.mxu0 0.0
    %3724 = vmatpush1.msra.mxu0 0.0
    %3725 = vmatprep.subr.mxu0 0.0
    %3726 = vmatpush1.msra.mxu0 0.0
    %3727 = vmatprep.subr.mxu0 0.0
    %3728 = vmatpush1.msra.mxu0 0.0
    %3729 = vmatprep.subr.mxu0 0.0
    %3730 = vmatpush1.msra.mxu0 0.0
    %3731 = vmatprep.subr.mxu0 0.0
    %3732 = vmatpush1.msra.mxu0 0.0
    %3733 = vmatprep.subr.mxu0 0.0
    %3734 = vmatpush1.msra.mxu0 0.0
    %3735 = vmatprep.subr.mxu0 0.0
    %3736 = vmatpush1.msra.mxu0 0.0
    %3737 = vmatprep.subr.mxu0 0.0
    %3738 = vmatpush1.msra.mxu0 0.0
    %3739 = vmatprep.mubr.f32.mxu0 0.0
    %3740 = vmatmul.mubr.f32.gmra.mrb[0].mxu0 %v3574
    %v3741 = vpop.f32.mrb[0].mxu0
    %v3742 = vadd.f32 %v3565, %v3741
    %v3743 = vpop.f32.mrb[0].mxu0
    %v3744 = vadd.f32 %v3565, %v3743
    %3745 = vmatprep.mubr.f32.mxu0 0.0
    %3746 = vmatmul.mubr.f32.gmra.mrb[0].mxu0 %v3577
    %v3747 = vpop.f32.mrb[0].mxu0
    %v3748 = vadd.f32 %v3570, %v3747
    %v3749 = vpop.f32.mrb[0].mxu0
    %v3750 = vadd.f32 %v3570, %v3749
    %3751 = vdwg.mxu0
    %3752 = vmatprep.subr.mxu0 %v3547
    %3753 = vmatpush1.msra.mxu0 %v3546
    %3754 = vmatprep.subr.mxu0 %v3553
    %3755 = vmatpush1.msra.mxu0 %v3552
    %3756 = vmatprep.subr.mxu0 %v3596
    %3757 = vmatpush1.msra.mxu0 %v3593
    %3758 = vmatprep.subr.mxu0 0.0
    %3759 = vmatpush1.msra.mxu0 0.0
    %3760 = vmatprep.subr.mxu0 0.0
    %3761 = vmatpush1.msra.mxu0 0.0
    %3762 = vmatprep.subr.mxu0 0.0
    %3763 = vmatpush1.msra.mxu0 0.0
    %3764 = vmatprep.subr.mxu0 0.0
    %3765 = vmatpush1.msra.mxu0 0.0
    %3766 = vmatprep.subr.mxu0 0.0
    %3767 = vmatpush1.msra.mxu0 0.0
    %3768 = vmatprep.subr.mxu0 0.0
    %3769 = vmatpush1.msra.mxu0 0.0
    %3770 = vmatprep.subr.mxu0 0.0
    %3771 = vmatpush1.msra.mxu0 0.0
    %3772 = vmatprep.subr.mxu0 0.0
    %3773 = vmatpush1.msra.mxu0 0.0
    %3774 = vmatprep.subr.mxu0 0.0
    %3775 = vmatpush1.msra.mxu0 0.0
    %3776 = vmatprep.subr.mxu0 0.0
    %3777 = vmatpush1.msra.mxu0 0.0
    %3778 = vmatprep.subr.mxu0 0.0
    %3779 = vmatpush1.msra.mxu0 0.0
    %3780 = vmatprep.subr.mxu0 0.0
    %3781 = vmatpush1.msra.mxu0 0.0
    %3782 = vmatprep.subr.mxu0 0.0
    %3783 = vmatpush1.msra.mxu0 0.0
    %3784 = vmatprep.subr.mxu0 0.0
    %3785 = vmatpush1.msra.mxu0 0.0
    %3786 = vmatprep.subr.mxu0 0.0
    %3787 = vmatpush1.msra.mxu0 0.0
    %3788 = vmatprep.subr.mxu0 0.0
    %3789 = vmatpush1.msra.mxu0 0.0
    %3790 = vmatprep.subr.mxu0 0.0
    %3791 = vmatpush1.msra.mxu0 0.0
    %3792 = vmatprep.subr.mxu0 0.0
    %3793 = vmatpush1.msra.mxu0 0.0
    %3794 = vmatprep.subr.mxu0 0.0
    %3795 = vmatpush1.msra.mxu0 0.0
    %3796 = vmatprep.subr.mxu0 0.0
    %3797 = vmatpush1.msra.mxu0 0.0
    %3798 = vmatprep.subr.mxu0 0.0
    %3799 = vmatpush1.msra.mxu0 0.0
    %3800 = vmatprep.subr.mxu0 0.0
    %3801 = vmatpush1.msra.mxu0 0.0
    %3802 = vmatprep.subr.mxu0 0.0
    %3803 = vmatpush1.msra.mxu0 0.0
    %3804 = vmatprep.subr.mxu0 0.0
    %3805 = vmatpush1.msra.mxu0 0.0
    %3806 = vmatprep.subr.mxu0 0.0
    %3807 = vmatpush1.msra.mxu0 0.0
    %3808 = vmatprep.subr.mxu0 0.0
    %3809 = vmatpush1.msra.mxu0 0.0
    %3810 = vmatprep.subr.mxu0 0.0
    %3811 = vmatpush1.msra.mxu0 0.0
    %3812 = vmatprep.subr.mxu0 0.0
    %3813 = vmatpush1.msra.mxu0 0.0
    %3814 = vmatprep.subr.mxu0 0.0
    %3815 = vmatpush1.msra.mxu0 0.0
    %3816 = vmatprep.mubr.f32.mxu0 0.0
    %3817 = vmatmul.mubr.f32.gmra.mrb[0].mxu0 %v3574
    %v3818 = vpop.f32.mrb[0].mxu0
    %v3819 = vadd.f32 %v3565, %v3818
    %v3820 = vpop.f32.mrb[0].mxu0
    %v3821 = vadd.f32 %v3565, %v3820
    %3822 = vmatprep.mubr.f32.mxu0 0.0
    %3823 = vmatmul.mubr.f32.gmra.mrb[0].mxu0 %v3577
    %v3824 = vpop.f32.mrb[0].mxu0
    %v3825 = vadd.f32 %v3570, %v3824
    %v3826 = vpop.f32.mrb[0].mxu0
    %v3827 = vadd.f32 %v3570, %v3826
    %3828 = vdwg.mxu0
    %vm3829 = vcmp.ge.f32.partialorder %v3665, 0.0
    %vm3830 = vcmp.ge.f32.partialorder %v3667, 0.0
    %vm3831 = vcmp.ge.f32.partialorder %v3742, 0.0
    %vm3832 = vcmp.ge.f32.partialorder %v3744, 0.0
    %vm3833 = vcmp.ge.f32.partialorder %v3819, 0.0
    %vm3834 = vcmp.ge.f32.partialorder %v3821, 0.0
    %v3835 = vmul.f32 %v3665, 0.3
    %v3836 = vmul.f32 %v3667, 0.3
    %v3837 = vmul.f32 %v3742, 0.3
    %v3838 = vmul.f32 %v3744, 0.3
    %v3839 = vmul.f32 %v3819, 0.3
    %v3840 = vmul.f32 %v3821, 0.3
    %v3841 = vsel %vm3829, %v3665, %v3835
    %v3842 = vsel %vm3830, %v3667, %v3836
    %v3843 = vsel %vm3831, %v3742, %v3837
    %v3844 = vsel %vm3832, %v3744, %v3838
    %v3845 = vsel %vm3833, %v3819, %v3839
    %v3846 = vsel %vm3834, %v3821, %v3840
    %vm3847 = vcmp.ge.f32.partialorder %v3671, 0.0
    %vm3848 = vcmp.ge.f32.partialorder %v3673, 0.0
    %vm3849 = vcmp.ge.f32.partialorder %v3748, 0.0
    %vm3850 = vcmp.ge.f32.partialorder %v3750, 0.0
    %vm3851 = vcmp.ge.f32.partialorder %v3825, 0.0
    %vm3852 = vcmp.ge.f32.partialorder %v3827, 0.0
    %v3853 = vmul.f32 %v3671, 0.3
    %v3854 = vmul.f32 %v3673, 0.3
    %v3855 = vmul.f32 %v3748, 0.3
    %v3856 = vmul.f32 %v3750, 0.3
    %v3857 = vmul.f32 %v3825, 0.3
    %v3858 = vmul.f32 %v3827, 0.3
    %v3859 = vsel %vm3847, %v3671, %v3853
    %v3860 = vsel %vm3848, %v3673, %v3854
    %v3861 = vsel %vm3849, %v3748, %v3855
    %v3862 = vsel %vm3850, %v3750, %v3856
    %v3863 = vsel %vm3851, %v3825, %v3857
    %v3864 = vsel %vm3852, %v3827, %v3858
    %3865 = vrot.lane.b32.xlu0 %v3841, 4
    %v3866 = vpop.permute.xlu0 %3865
    %3867 = vrot.lane.b32.xlu0 %v3842, 4
    %v3868 = vpop.permute.xlu0 %3867
    %3869 = vrot.lane.b32.xlu0 %v3843, 4
    %v3870 = vpop.permute.xlu0 %3869
    %3871 = vrot.lane.b32.xlu0 %v3844, 4
    %v3872 = vpop.permute.xlu0 %3871
    %3873 = vrot.lane.b32.xlu0 %v3845, 4
    %v3874 = vpop.permute.xlu0 %3873
    %3875 = vrot.lane.b32.xlu0 %v3846, 4
    %v3876 = vpop.permute.xlu0 %3875
    %vm3877 = vcmp.lt.s32.totalorder %v545, 4
    %v3878 = vsel %vm3877, %v3874, %v3876
    %v3879 = vsel %vm3877, %v3872, %v3874
    %v3880 = vsel %vm3877, %v3870, %v3872
    %v3881 = vsel %vm3877, %v3868, %v3870
    %v3882 = vsel %vm3877, %v3866, %v3868
    %v3883 = vsel %vm3877, %v3876, %v3866
    %s3884 = scalar_lea.vmem [#allocation5], 144
    %v3885 = vld [vmem:[%s3884] ss:$8 sm:$0xf]
    %v3886 = vld [vmem:[%s3884] ss:$8 sm:$0x30]
    %v3887 = vor.u32 %v3885, %v3886
    %v3889 = vlaneseq
    %v3890 = vshrl.u32 %v3889, 7
    %v3891 = vsub.s32 0, %v3890
    %v3892 = vrot.slane %v3887, %v3891
    %v3893 = vlaneseq
    %v3894 = vshrl.u32 %v3893, 7
    %v3895 = vsub.s32 1, %v3894
    %v3896 = vrot.slane %v3887, %v3895
    %v3897 = vlaneseq
    %v3898 = vshrl.u32 %v3897, 7
    %v3899 = vsub.s32 2, %v3898
    %v3900 = vrot.slane %v3887, %v3899
    %v3901 = vlaneseq
    %v3902 = vshrl.u32 %v3901, 7
    %v3903 = vsub.s32 3, %v3902
    %v3904 = vrot.slane %v3887, %v3903
    %v3905 = vlaneseq
    %v3906 = vshrl.u32 %v3905, 7
    %v3907 = vsub.s32 4, %v3906
    %v3908 = vrot.slane %v3887, %v3907
    %v3909 = vlaneseq
    %v3910 = vshrl.u32 %v3909, 7
    %v3911 = vsub.s32 5, %v3910
    %v3912 = vrot.slane %v3887, %v3911
    %v3919 = vmul.f32 %v3883, %v3892
    %v3920 = vmul.f32 %v3882, %v3896
    %v3921 = vmul.f32 %v3881, %v3900
    %v3922 = vmul.f32 %v3880, %v3904
    %v3923 = vmul.f32 %v3879, %v3908
    %v3924 = vmul.f32 %v3878, %v3912
    %3925 = vst [vmem:[#allocation2] sm:$0x7f] %v3919
    %3926 = vst [vmem:[#allocation2 + $0x8] sm:$0x7f] %v3920
    %3927 = vst [vmem:[#allocation2 + $0x10] sm:$0x7f] %v3921
    %3928 = vst [vmem:[#allocation2 + $0x18] sm:$0x7f] %v3922
    %3929 = vst [vmem:[#allocation2 + $0x20] sm:$0x7f] %v3923
    %3930 = vst [vmem:[#allocation2 + $0x28] sm:$0x7f] %v3924
    %3931 = vrot.lane.b32.xlu0 %v3841, 3
    %v3932 = vpop.permute.xlu0 %3931
    %3933 = vrot.lane.b32.xlu0 %v3842, 3
    %v3934 = vpop.permute.xlu0 %3933
    %3935 = vrot.lane.b32.xlu0 %v3843, 3
    %v3936 = vpop.permute.xlu0 %3935
    %3937 = vrot.lane.b32.xlu0 %v3844, 3
    %v3938 = vpop.permute.xlu0 %3937
    %3939 = vrot.lane.b32.xlu0 %v3845, 3
    %v3940 = vpop.permute.xlu0 %3939
    %3941 = vrot.lane.b32.xlu0 %v3846, 3
    %v3942 = vpop.permute.xlu0 %3941
    %vm3943 = vcmp.lt.s32.totalorder %v545, 3
    %v3944 = vsel %vm3943, %v3940, %v3942
    %v3945 = vsel %vm3943, %v3938, %v3940
    %v3946 = vsel %vm3943, %v3936, %v3938
    %v3947 = vsel %vm3943, %v3934, %v3936
    %v3948 = vsel %vm3943, %v3932, %v3934
    %v3949 = vsel %vm3943, %v3942, %v3932
    %s3950 = scalar_lea.vmem [#allocation5], 145
    %v3951 = vld [vmem:[%s3950] ss:$8 sm:$0xf]
    %v3952 = vld [vmem:[%s3950] ss:$8 sm:$0x30]
    %v3953 = vor.u32 %v3951, %v3952
    %v3955 = vlaneseq
    %v3956 = vshrl.u32 %v3955, 7
    %v3957 = vsub.s32 0, %v3956
    %v3958 = vrot.slane %v3953, %v3957
    %v3959 = vlaneseq
    %v3960 = vshrl.u32 %v3959, 7
    %v3961 = vsub.s32 1, %v3960
    %v3962 = vrot.slane %v3953, %v3961
    %v3963 = vlaneseq
    %v3964 = vshrl.u32 %v3963, 7
    %v3965 = vsub.s32 2, %v3964
    %v3966 = vrot.slane %v3953, %v3965
    %v3967 = vlaneseq
    %v3968 = vshrl.u32 %v3967, 7
    %v3969 = vsub.s32 3, %v3968
    %v3970 = vrot.slane %v3953, %v3969
    %v3971 = vlaneseq
    %v3972 = vshrl.u32 %v3971, 7
    %v3973 = vsub.s32 4, %v3972
    %v3974 = vrot.slane %v3953, %v3973
    %v3975 = vlaneseq
    %v3976 = vshrl.u32 %v3975, 7
    %v3977 = vsub.s32 5, %v3976
    %v3978 = vrot.slane %v3953, %v3977
    %v3985 = vmul.f32 %v3949, %v3958
    %v3986 = vmul.f32 %v3948, %v3962
    %v3987 = vmul.f32 %v3947, %v3966
    %v3988 = vmul.f32 %v3946, %v3970
    %v3989 = vmul.f32 %v3945, %v3974
    %v3990 = vmul.f32 %v3944, %v3978
    %v3997 = vrot.slane %v3985, 1
    %v3998 = vrot.slane %v3986, 1
    %v3999 = vrot.slane %v3987, 1
    %v4000 = vrot.slane %v3988, 1
    %v4001 = vrot.slane %v3989, 1
    %v4002 = vrot.slane %v3990, 1
    %4009 = vst [vmem:[#allocation2] sm:$0x80] %v3997
    %4010 = vst [vmem:[#allocation2 + $0x8] sm:$0x80] %v3998
    %4011 = vst [vmem:[#allocation2 + $0x10] sm:$0x80] %v3999
    %4012 = vst [vmem:[#allocation2 + $0x18] sm:$0x80] %v4000
    %4013 = vst [vmem:[#allocation2 + $0x20] sm:$0x80] %v4001
    %4014 = vst [vmem:[#allocation2 + $0x28] sm:$0x80] %v4002
    %4015 = vst [vmem:[#allocation2 + $0x30] sm:$0x3f] %v3997
    %4016 = vst [vmem:[#allocation2 + $0x38] sm:$0x3f] %v3998
    %4017 = vst [vmem:[#allocation2 + $0x40] sm:$0x3f] %v3999
    %4018 = vst [vmem:[#allocation2 + $0x48] sm:$0x3f] %v4000
    %4019 = vst [vmem:[#allocation2 + $0x50] sm:$0x3f] %v4001
    %4020 = vst [vmem:[#allocation2 + $0x58] sm:$0x3f] %v4002
    %4021 = vrot.lane.b32.xlu0 %v3841, 2
    %v4022 = vpop.permute.xlu0 %4021
    %4023 = vrot.lane.b32.xlu0 %v3842, 2
    %v4024 = vpop.permute.xlu0 %4023
    %4025 = vrot.lane.b32.xlu0 %v3843, 2
    %v4026 = vpop.permute.xlu0 %4025
    %4027 = vrot.lane.b32.xlu0 %v3844, 2
    %v4028 = vpop.permute.xlu0 %4027
    %4029 = vrot.lane.b32.xlu0 %v3845, 2
    %v4030 = vpop.permute.xlu0 %4029
    %4031 = vrot.lane.b32.xlu0 %v3846, 2
    %v4032 = vpop.permute.xlu0 %4031
    %v4033 = vsel %vm1331, %v4030, %v4032
    %v4034 = vsel %vm1331, %v4028, %v4030
    %v4035 = vsel %vm1331, %v4026, %v4028
    %v4036 = vsel %vm1331, %v4024, %v4026
    %v4037 = vsel %vm1331, %v4022, %v4024
    %v4038 = vsel %vm1331, %v4032, %v4022
    %v4039 = vld [vmem:[%s1338] ss:$8 sm:$0xf]
    %v4040 = vld [vmem:[%s1338] ss:$8 sm:$0x30]
    %v4041 = vor.u32 %v4039, %v4040
    %v4043 = vlaneseq
    %v4044 = vshrl.u32 %v4043, 7
    %v4045 = vsub.s32 0, %v4044
    %v4046 = vrot.slane %v4041, %v4045
    %v4047 = vlaneseq
    %v4048 = vshrl.u32 %v4047, 7
    %v4049 = vsub.s32 1, %v4048
    %v4050 = vrot.slane %v4041, %v4049
    %v4051 = vlaneseq
    %v4052 = vshrl.u32 %v4051, 7
    %v4053 = vsub.s32 2, %v4052
    %v4054 = vrot.slane %v4041, %v4053
    %v4055 = vlaneseq
    %v4056 = vshrl.u32 %v4055, 7
    %v4057 = vsub.s32 3, %v4056
    %v4058 = vrot.slane %v4041, %v4057
    %v4059 = vlaneseq
    %v4060 = vshrl.u32 %v4059, 7
    %v4061 = vsub.s32 4, %v4060
    %v4062 = vrot.slane %v4041, %v4061
    %v4063 = vlaneseq
    %v4064 = vshrl.u32 %v4063, 7
    %v4065 = vsub.s32 5, %v4064
    %v4066 = vrot.slane %v4041, %v4065
    %v4073 = vmul.f32 %v4038, %v4046
    %v4074 = vmul.f32 %v4037, %v4050
    %v4075 = vmul.f32 %v4036, %v4054
    %v4076 = vmul.f32 %v4035, %v4058
    %v4077 = vmul.f32 %v4034, %v4062
    %v4078 = vmul.f32 %v4033, %v4066
    %v4085 = vrot.slane %v4073, 2
    %v4086 = vrot.slane %v4074, 2
    %v4087 = vrot.slane %v4075, 2
    %v4088 = vrot.slane %v4076, 2
    %v4089 = vrot.slane %v4077, 2
    %v4090 = vrot.slane %v4078, 2
    %4097 = vst [vmem:[#allocation2 + $0x30] sm:$0xc0] %v4085
    %4098 = vst [vmem:[#allocation2 + $0x38] sm:$0xc0] %v4086
    %4099 = vst [vmem:[#allocation2 + $0x40] sm:$0xc0] %v4087
    %4100 = vst [vmem:[#allocation2 + $0x48] sm:$0xc0] %v4088
    %4101 = vst [vmem:[#allocation2 + $0x50] sm:$0xc0] %v4089
    %4102 = vst [vmem:[#allocation2 + $0x58] sm:$0xc0] %v4090
    %4103 = vst [vmem:[#allocation2 + $0x60] sm:$0x1f] %v4085
    %4104 = vst [vmem:[#allocation2 + $0x68] sm:$0x1f] %v4086
    %4105 = vst [vmem:[#allocation2 + $0x70] sm:$0x1f] %v4087
    %4106 = vst [vmem:[#allocation2 + $0x78] sm:$0x1f] %v4088
    %4107 = vst [vmem:[#allocation2 + $0x80] sm:$0x1f] %v4089
    %4108 = vst [vmem:[#allocation2 + $0x88] sm:$0x1f] %v4090
    %4109 = vrot.lane.b32.xlu0 %v3841, 1
    %v4110 = vpop.permute.xlu0 %4109
    %4111 = vrot.lane.b32.xlu0 %v3842, 1
    %v4112 = vpop.permute.xlu0 %4111
    %4113 = vrot.lane.b32.xlu0 %v3843, 1
    %v4114 = vpop.permute.xlu0 %4113
    %4115 = vrot.lane.b32.xlu0 %v3844, 1
    %v4116 = vpop.permute.xlu0 %4115
    %4117 = vrot.lane.b32.xlu0 %v3845, 1
    %v4118 = vpop.permute.xlu0 %4117
    %4119 = vrot.lane.b32.xlu0 %v3846, 1
    %v4120 = vpop.permute.xlu0 %4119
    %v4121 = vsel %vm1415, %v4118, %v4120
    %v4122 = vsel %vm1415, %v4116, %v4118
    %v4123 = vsel %vm1415, %v4114, %v4116
    %v4124 = vsel %vm1415, %v4112, %v4114
    %v4125 = vsel %vm1415, %v4110, %v4112
    %v4126 = vsel %vm1415, %v4120, %v4110
    %v4127 = vld [vmem:[%s1422] ss:$8 sm:$0xf]
    %v4128 = vld [vmem:[%s1422] ss:$8 sm:$0x30]
    %v4129 = vor.u32 %v4127, %v4128
    %v4131 = vlaneseq
    %v4132 = vshrl.u32 %v4131, 7
    %v4133 = vsub.s32 0, %v4132
    %v4134 = vrot.slane %v4129, %v4133
    %v4135 = vlaneseq
    %v4136 = vshrl.u32 %v4135, 7
    %v4137 = vsub.s32 1, %v4136
    %v4138 = vrot.slane %v4129, %v4137
    %v4139 = vlaneseq
    %v4140 = vshrl.u32 %v4139, 7
    %v4141 = vsub.s32 2, %v4140
    %v4142 = vrot.slane %v4129, %v4141
    %v4143 = vlaneseq
    %v4144 = vshrl.u32 %v4143, 7
    %v4145 = vsub.s32 3, %v4144
    %v4146 = vrot.slane %v4129, %v4145
    %v4147 = vlaneseq
    %v4148 = vshrl.u32 %v4147, 7
    %v4149 = vsub.s32 4, %v4148
    %v4150 = vrot.slane %v4129, %v4149
    %v4151 = vlaneseq
    %v4152 = vshrl.u32 %v4151, 7
    %v4153 = vsub.s32 5, %v4152
    %v4154 = vrot.slane %v4129, %v4153
    %v4161 = vmul.f32 %v4126, %v4134
    %v4162 = vmul.f32 %v4125, %v4138
    %v4163 = vmul.f32 %v4124, %v4142
    %v4164 = vmul.f32 %v4123, %v4146
    %v4165 = vmul.f32 %v4122, %v4150
    %v4166 = vmul.f32 %v4121, %v4154
    %v4173 = vrot.slane %v4161, 3
    %v4174 = vrot.slane %v4162, 3
    %v4175 = vrot.slane %v4163, 3
    %v4176 = vrot.slane %v4164, 3
    %v4177 = vrot.slane %v4165, 3
    %v4178 = vrot.slane %v4166, 3
    %4185 = vst [vmem:[#allocation2 + $0x60] sm:$0xe0] %v4173
    %4186 = vst [vmem:[#allocation2 + $0x68] sm:$0xe0] %v4174
    %4187 = vst [vmem:[#allocation2 + $0x70] sm:$0xe0] %v4175
    %4188 = vst [vmem:[#allocation2 + $0x78] sm:$0xe0] %v4176
    %4189 = vst [vmem:[#allocation2 + $0x80] sm:$0xe0] %v4177
    %4190 = vst [vmem:[#allocation2 + $0x88] sm:$0xe0] %v4178
    %4191 = vst [vmem:[#allocation2 + $0x90] sm:$0xf] %v4173
    %4192 = vst [vmem:[#allocation2 + $0x98] sm:$0xf] %v4174
    %4193 = vst [vmem:[#allocation2 + $0xa0] sm:$0xf] %v4175
    %4194 = vst [vmem:[#allocation2 + $0xa8] sm:$0xf] %v4176
    %4195 = vst [vmem:[#allocation2 + $0xb0] sm:$0xf] %v4177
    %4196 = vst [vmem:[#allocation2 + $0xb8] sm:$0xf] %v4178
    %v4203 = vrot.slane %v3841, 4
    %v4204 = vrot.slane %v3842, 4
    %v4205 = vrot.slane %v3843, 4
    %v4206 = vrot.slane %v3844, 4
    %v4207 = vrot.slane %v3845, 4
    %v4208 = vrot.slane %v3846, 4
    %4215 = vst [vmem:[#allocation2 + $0x90] sm:$0xf0] %v4203
    %4216 = vst [vmem:[#allocation2 + $0x98] sm:$0xf0] %v4204
    %4217 = vst [vmem:[#allocation2 + $0xa0] sm:$0xf0] %v4205
    %4218 = vst [vmem:[#allocation2 + $0xa8] sm:$0xf0] %v4206
    %4219 = vst [vmem:[#allocation2 + $0xb0] sm:$0xf0] %v4207
    %4220 = vst [vmem:[#allocation2 + $0xb8] sm:$0xf0] %v4208
    %4221 = vst [vmem:[#allocation2 + $0xc0] sm:$0x7] %v4203
    %4222 = vst [vmem:[#allocation2 + $0xc8] sm:$0x7] %v4204
    %4223 = vst [vmem:[#allocation2 + $0xd0] sm:$0x7] %v4205
    %4224 = vst [vmem:[#allocation2 + $0xd8] sm:$0x7] %v4206
    %4225 = vst [vmem:[#allocation2 + $0xe0] sm:$0x7] %v4207
    %4226 = vst [vmem:[#allocation2 + $0xe8] sm:$0x7] %v4208
    %4227 = vrot.lane.b32.xlu0 %v3841, 127
    %v4228 = vpop.permute.xlu0 %4227
    %4229 = vrot.lane.b32.xlu0 %v3842, 127
    %v4230 = vpop.permute.xlu0 %4229
    %4231 = vrot.lane.b32.xlu0 %v3843, 127
    %v4232 = vpop.permute.xlu0 %4231
    %4233 = vrot.lane.b32.xlu0 %v3844, 127
    %v4234 = vpop.permute.xlu0 %4233
    %4235 = vrot.lane.b32.xlu0 %v3845, 127
    %v4236 = vpop.permute.xlu0 %4235
    %4237 = vrot.lane.b32.xlu0 %v3846, 127
    %v4238 = vpop.permute.xlu0 %4237
    %v4239 = vsel %vm1505, %v4236, %v4238
    %v4240 = vsel %vm1505, %v4234, %v4236
    %v4241 = vsel %vm1505, %v4232, %v4234
    %v4242 = vsel %vm1505, %v4230, %v4232
    %v4243 = vsel %vm1505, %v4228, %v4230
    %v4244 = vsel %vm1505, %v4238, %v4228
    %v4245 = vld [vmem:[%s1512] ss:$8 sm:$0xf]
    %v4246 = vld [vmem:[%s1512] ss:$8 sm:$0x30]
    %v4247 = vor.u32 %v4245, %v4246
    %v4249 = vlaneseq
    %v4250 = vshrl.u32 %v4249, 7
    %v4251 = vsub.s32 0, %v4250
    %v4252 = vrot.slane %v4247, %v4251
    %v4253 = vlaneseq
    %v4254 = vshrl.u32 %v4253, 7
    %v4255 = vsub.s32 1, %v4254
    %v4256 = vrot.slane %v4247, %v4255
    %v4257 = vlaneseq
    %v4258 = vshrl.u32 %v4257, 7
    %v4259 = vsub.s32 2, %v4258
    %v4260 = vrot.slane %v4247, %v4259
    %v4261 = vlaneseq
    %v4262 = vshrl.u32 %v4261, 7
    %v4263 = vsub.s32 3, %v4262
    %v4264 = vrot.slane %v4247, %v4263
    %v4265 = vlaneseq
    %v4266 = vshrl.u32 %v4265, 7
    %v4267 = vsub.s32 4, %v4266
    %v4268 = vrot.slane %v4247, %v4267
    %v4269 = vlaneseq
    %v4270 = vshrl.u32 %v4269, 7
    %v4271 = vsub.s32 5, %v4270
    %v4272 = vrot.slane %v4247, %v4271
    %v4279 = vmul.f32 %v4243, %v4252
    %v4280 = vmul.f32 %v4242, %v4256
    %v4281 = vmul.f32 %v4241, %v4260
    %v4282 = vmul.f32 %v4240, %v4264
    %v4283 = vmul.f32 %v4239, %v4268
    %v4284 = vmul.f32 %v4244, %v4272
    %v4291 = vrot.slane %v4279, 5
    %v4292 = vrot.slane %v4280, 5
    %v4293 = vrot.slane %v4281, 5
    %v4294 = vrot.slane %v4282, 5
    %v4295 = vrot.slane %v4283, 5
    %v4296 = vrot.slane %v4284, 5
    %4303 = vst [vmem:[#allocation2 + $0xc0] sm:$0xf8] %v4291
    %4304 = vst [vmem:[#allocation2 + $0xc8] sm:$0xf8] %v4292
    %4305 = vst [vmem:[#allocation2 + $0xd0] sm:$0xf8] %v4293
    %4306 = vst [vmem:[#allocation2 + $0xd8] sm:$0xf8] %v4294
    %4307 = vst [vmem:[#allocation2 + $0xe0] sm:$0xf8] %v4295
    %4308 = vst [vmem:[#allocation2 + $0xe8] sm:$0xf8] %v4296
    %4309 = vst [vmem:[#allocation2 + $0xf0] sm:$0x3] %v4291
    %4310 = vst [vmem:[#allocation2 + $0xf8] sm:$0x3] %v4292
    %4311 = vst [vmem:[#allocation2 + $0x100] sm:$0x3] %v4293
    %4312 = vst [vmem:[#allocation2 + $0x108] sm:$0x3] %v4294
    %4313 = vst [vmem:[#allocation2 + $0x110] sm:$0x3] %v4295
    %4314 = vst [vmem:[#allocation2 + $0x118] sm:$0x3] %v4296
    %4315 = vrot.lane.b32.xlu0 %v3841, 126
    %v4316 = vpop.permute.xlu0 %4315
    %4317 = vrot.lane.b32.xlu0 %v3842, 126
    %v4318 = vpop.permute.xlu0 %4317
    %4319 = vrot.lane.b32.xlu0 %v3843, 126
    %v4320 = vpop.permute.xlu0 %4319
    %4321 = vrot.lane.b32.xlu0 %v3844, 126
    %v4322 = vpop.permute.xlu0 %4321
    %4323 = vrot.lane.b32.xlu0 %v3845, 126
    %v4324 = vpop.permute.xlu0 %4323
    %4325 = vrot.lane.b32.xlu0 %v3846, 126
    %v4326 = vpop.permute.xlu0 %4325
    %v4327 = vsel %vm1589, %v4324, %v4326
    %v4328 = vsel %vm1589, %v4322, %v4324
    %v4329 = vsel %vm1589, %v4320, %v4322
    %v4330 = vsel %vm1589, %v4318, %v4320
    %v4331 = vsel %vm1589, %v4316, %v4318
    %v4332 = vsel %vm1589, %v4326, %v4316
    %v4333 = vld [vmem:[%s1596] ss:$8 sm:$0xf]
    %v4334 = vld [vmem:[%s1596] ss:$8 sm:$0x30]
    %v4335 = vor.u32 %v4333, %v4334
    %v4337 = vlaneseq
    %v4338 = vshrl.u32 %v4337, 7
    %v4339 = vsub.s32 0, %v4338
    %v4340 = vrot.slane %v4335, %v4339
    %v4341 = vlaneseq
    %v4342 = vshrl.u32 %v4341, 7
    %v4343 = vsub.s32 1, %v4342
    %v4344 = vrot.slane %v4335, %v4343
    %v4345 = vlaneseq
    %v4346 = vshrl.u32 %v4345, 7
    %v4347 = vsub.s32 2, %v4346
    %v4348 = vrot.slane %v4335, %v4347
    %v4349 = vlaneseq
    %v4350 = vshrl.u32 %v4349, 7
    %v4351 = vsub.s32 3, %v4350
    %v4352 = vrot.slane %v4335, %v4351
    %v4353 = vlaneseq
    %v4354 = vshrl.u32 %v4353, 7
    %v4355 = vsub.s32 4, %v4354
    %v4356 = vrot.slane %v4335, %v4355
    %v4357 = vlaneseq
    %v4358 = vshrl.u32 %v4357, 7
    %v4359 = vsub.s32 5, %v4358
    %v4360 = vrot.slane %v4335, %v4359
    %v4367 = vmul.f32 %v4331, %v4340
    %v4368 = vmul.f32 %v4330, %v4344
    %v4369 = vmul.f32 %v4329, %v4348
    %v4370 = vmul.f32 %v4328, %v4352
    %v4371 = vmul.f32 %v4327, %v4356
    %v4372 = vmul.f32 %v4332, %v4360
    %v4379 = vrot.slane %v4367, 6
    %v4380 = vrot.slane %v4368, 6
    %v4381 = vrot.slane %v4369, 6
    %v4382 = vrot.slane %v4370, 6
    %v4383 = vrot.slane %v4371, 6
    %v4384 = vrot.slane %v4372, 6
    %4391 = vst [vmem:[#allocation2 + $0xf0] sm:$0xfc] %v4379
    %4392 = vst [vmem:[#allocation2 + $0xf8] sm:$0xfc] %v4380
    %4393 = vst [vmem:[#allocation2 + $0x100] sm:$0xfc] %v4381
    %4394 = vst [vmem:[#allocation2 + $0x108] sm:$0xfc] %v4382
    %4395 = vst [vmem:[#allocation2 + $0x110] sm:$0xfc] %v4383
    %4396 = vst [vmem:[#allocation2 + $0x118] sm:$0xfc] %v4384
    %4397 = vst [vmem:[#allocation2 + $0x120] sm:$0x1] %v4379
    %4398 = vst [vmem:[#allocation2 + $0x128] sm:$0x1] %v4380
    %4399 = vst [vmem:[#allocation2 + $0x130] sm:$0x1] %v4381
    %4400 = vst [vmem:[#allocation2 + $0x138] sm:$0x1] %v4382
    %4401 = vst [vmem:[#allocation2 + $0x140] sm:$0x1] %v4383
    %4402 = vst [vmem:[#allocation2 + $0x148] sm:$0x1] %v4384
    %4403 = vrot.lane.b32.xlu0 %v3841, 125
    %v4404 = vpop.permute.xlu0 %4403
    %4405 = vrot.lane.b32.xlu0 %v3842, 125
    %v4406 = vpop.permute.xlu0 %4405
    %4407 = vrot.lane.b32.xlu0 %v3843, 125
    %v4408 = vpop.permute.xlu0 %4407
    %4409 = vrot.lane.b32.xlu0 %v3844, 125
    %v4410 = vpop.permute.xlu0 %4409
    %4411 = vrot.lane.b32.xlu0 %v3845, 125
    %v4412 = vpop.permute.xlu0 %4411
    %4413 = vrot.lane.b32.xlu0 %v3846, 125
    %v4414 = vpop.permute.xlu0 %4413
    %vm4415 = vcmp.lt.s32.totalorder %v545, 125
    %v4416 = vsel %vm4415, %v4412, %v4414
    %v4417 = vsel %vm4415, %v4410, %v4412
    %v4418 = vsel %vm4415, %v4408, %v4410
    %v4419 = vsel %vm4415, %v4406, %v4408
    %v4420 = vsel %vm4415, %v4404, %v4406
    %v4421 = vsel %vm4415, %v4414, %v4404
    %s4422 = scalar_lea.vmem [#allocation5], 146
    %v4423 = vld [vmem:[%s4422] ss:$8 sm:$0xf]
    %v4424 = vld [vmem:[%s4422] ss:$8 sm:$0x30]
    %v4425 = vor.u32 %v4423, %v4424
    %v4427 = vlaneseq
    %v4428 = vshrl.u32 %v4427, 7
    %v4429 = vsub.s32 0, %v4428
    %v4430 = vrot.slane %v4425, %v4429
    %v4431 = vlaneseq
    %v4432 = vshrl.u32 %v4431, 7
    %v4433 = vsub.s32 1, %v4432
    %v4434 = vrot.slane %v4425, %v4433
    %v4435 = vlaneseq
    %v4436 = vshrl.u32 %v4435, 7
    %v4437 = vsub.s32 2, %v4436
    %v4438 = vrot.slane %v4425, %v4437
    %v4439 = vlaneseq
    %v4440 = vshrl.u32 %v4439, 7
    %v4441 = vsub.s32 3, %v4440
    %v4442 = vrot.slane %v4425, %v4441
    %v4443 = vlaneseq
    %v4444 = vshrl.u32 %v4443, 7
    %v4445 = vsub.s32 4, %v4444
    %v4446 = vrot.slane %v4425, %v4445
    %v4447 = vlaneseq
    %v4448 = vshrl.u32 %v4447, 7
    %v4449 = vsub.s32 5, %v4448
    %v4450 = vrot.slane %v4425, %v4449
    %v4457 = vmul.f32 %v4420, %v4430
    %v4458 = vmul.f32 %v4419, %v4434
    %v4459 = vmul.f32 %v4418, %v4438
    %v4460 = vmul.f32 %v4417, %v4442
    %v4461 = vmul.f32 %v4416, %v4446
    %v4462 = vmul.f32 %v4421, %v4450
    %v4469 = vrot.slane %v4457, 7
    %v4470 = vrot.slane %v4458, 7
    %v4471 = vrot.slane %v4459, 7
    %v4472 = vrot.slane %v4460, 7
    %v4473 = vrot.slane %v4461, 7
    %v4474 = vrot.slane %v4462, 7
    %4481 = vst [vmem:[#allocation2 + $0x120] sm:$0xfe] %v4469
    %4482 = vst [vmem:[#allocation2 + $0x128] sm:$0xfe] %v4470
    %4483 = vst [vmem:[#allocation2 + $0x130] sm:$0xfe] %v4471
    %4484 = vst [vmem:[#allocation2 + $0x138] sm:$0xfe] %v4472
    %4485 = vst [vmem:[#allocation2 + $0x140] sm:$0xfe] %v4473
    %4486 = vst [vmem:[#allocation2 + $0x148] sm:$0xfe] %v4474
    %4487 = vrot.lane.b32.xlu0 %v3841, 124
    %v4488 = vpop.permute.xlu0 %4487
    %4489 = vrot.lane.b32.xlu0 %v3842, 124
    %v4490 = vpop.permute.xlu0 %4489
    %4491 = vrot.lane.b32.xlu0 %v3843, 124
    %v4492 = vpop.permute.xlu0 %4491
    %4493 = vrot.lane.b32.xlu0 %v3844, 124
    %v4494 = vpop.permute.xlu0 %4493
    %4495 = vrot.lane.b32.xlu0 %v3845, 124
    %v4496 = vpop.permute.xlu0 %4495
    %4497 = vrot.lane.b32.xlu0 %v3846, 124
    %v4498 = vpop.permute.xlu0 %4497
    %vm4499 = vcmp.lt.s32.totalorder %v545, 124
    %v4500 = vsel %vm4499, %v4496, %v4498
    %v4501 = vsel %vm4499, %v4494, %v4496
    %v4502 = vsel %vm4499, %v4492, %v4494
    %v4503 = vsel %vm4499, %v4490, %v4492
    %v4504 = vsel %vm4499, %v4488, %v4490
    %v4505 = vsel %vm4499, %v4498, %v4488
    %s4506 = scalar_lea.vmem [#allocation5], 147
    %v4507 = vld [vmem:[%s4506] ss:$8 sm:$0xf]
    %v4508 = vld [vmem:[%s4506] ss:$8 sm:$0x30]
    %v4509 = vor.u32 %v4507, %v4508
    %v4511 = vlaneseq
    %v4512 = vshrl.u32 %v4511, 7
    %v4513 = vsub.s32 0, %v4512
    %v4514 = vrot.slane %v4509, %v4513
    %v4515 = vlaneseq
    %v4516 = vshrl.u32 %v4515, 7
    %v4517 = vsub.s32 1, %v4516
    %v4518 = vrot.slane %v4509, %v4517
    %v4519 = vlaneseq
    %v4520 = vshrl.u32 %v4519, 7
    %v4521 = vsub.s32 2, %v4520
    %v4522 = vrot.slane %v4509, %v4521
    %v4523 = vlaneseq
    %v4524 = vshrl.u32 %v4523, 7
    %v4525 = vsub.s32 3, %v4524
    %v4526 = vrot.slane %v4509, %v4525
    %v4527 = vlaneseq
    %v4528 = vshrl.u32 %v4527, 7
    %v4529 = vsub.s32 4, %v4528
    %v4530 = vrot.slane %v4509, %v4529
    %v4531 = vlaneseq
    %v4532 = vshrl.u32 %v4531, 7
    %v4533 = vsub.s32 5, %v4532
    %v4534 = vrot.slane %v4509, %v4533
    %v4541 = vmul.f32 %v4504, %v4514
    %v4542 = vmul.f32 %v4503, %v4518
    %v4543 = vmul.f32 %v4502, %v4522
    %v4544 = vmul.f32 %v4501, %v4526
    %v4545 = vmul.f32 %v4500, %v4530
    %v4546 = vmul.f32 %v4505, %v4534
    %4547 = vst [vmem:[#allocation2 + $0x150] sm:$0x7f] %v4541
    %4548 = vst [vmem:[#allocation2 + $0x158] sm:$0x7f] %v4542
    %4549 = vst [vmem:[#allocation2 + $0x160] sm:$0x7f] %v4543
    %4550 = vst [vmem:[#allocation2 + $0x168] sm:$0x7f] %v4544
    %4551 = vst [vmem:[#allocation2 + $0x170] sm:$0x7f] %v4545
    %4552 = vst [vmem:[#allocation2 + $0x178] sm:$0x7f] %v4546
    %v4553 = vld [vmem:[#allocation7 + $0x10] sm:$0x7f]
    %v4554 = vld [vmem:[#allocation2] sm:$0xff]
    %v4555 = vld [vmem:[#allocation2 + $0x8] sm:$0xff]
    %v4556 = vld [vmem:[#allocation2 + $0x10] sm:$0xff]
    %v4557 = vld [vmem:[#allocation2 + $0x18] sm:$0xff]
    %v4558 = vld [vmem:[#allocation2 + $0x20] sm:$0xff]
    %v4559 = vld [vmem:[#allocation2 + $0x28] sm:$0xff]
    %v4560 = vld [vmem:[#allocation2 + $0x30] sm:$0xff]
    %v4561 = vld [vmem:[#allocation2 + $0x38] sm:$0xff]
    %v4562 = vld [vmem:[#allocation2 + $0x40] sm:$0xff]
    %v4563 = vld [vmem:[#allocation2 + $0x48] sm:$0xff]
    %v4564 = vld [vmem:[#allocation2 + $0x50] sm:$0xff]
    %v4565 = vld [vmem:[#allocation2 + $0x58] sm:$0xff]
    %v4566 = vld [vmem:[#allocation2 + $0x60] sm:$0xff]
    %v4567 = vld [vmem:[#allocation2 + $0x68] sm:$0xff]
    %v4568 = vld [vmem:[#allocation2 + $0x70] sm:$0xff]
    %v4569 = vld [vmem:[#allocation2 + $0x78] sm:$0xff]
    %v4570 = vld [vmem:[#allocation2 + $0x80] sm:$0xff]
    %v4571 = vld [vmem:[#allocation2 + $0x88] sm:$0xff]
    %v4572 = vld [vmem:[#allocation2 + $0x90] sm:$0xff]
    %v4573 = vld [vmem:[#allocation2 + $0x98] sm:$0xff]
    %v4574 = vld [vmem:[#allocation2 + $0xa0] sm:$0xff]
    %v4575 = vld [vmem:[#allocation2 + $0xa8] sm:$0xff]
    %v4576 = vld [vmem:[#allocation2 + $0xb0] sm:$0xff]
    %v4577 = vld [vmem:[#allocation2 + $0xb8] sm:$0xff]
    %v4578 = vld [vmem:[#allocation2 + $0xc0] sm:$0xff]
    %v4579 = vld [vmem:[#allocation2 + $0xc8] sm:$0xff]
    %v4580 = vld [vmem:[#allocation2 + $0xd0] sm:$0xff]
    %v4581 = vld [vmem:[#allocation2 + $0xd8] sm:$0xff]
    %v4582 = vld [vmem:[#allocation2 + $0xe0] sm:$0xff]
    %v4583 = vld [vmem:[#allocation2 + $0xe8] sm:$0xff]
    %v4584 = vld [vmem:[#allocation2 + $0xf0] sm:$0xff]
    %v4585 = vld [vmem:[#allocation2 + $0xf8] sm:$0xff]
    %v4586 = vld [vmem:[#allocation2 + $0x100] sm:$0xff]
    %v4587 = vld [vmem:[#allocation2 + $0x108] sm:$0xff]
    %v4588 = vld [vmem:[#allocation2 + $0x110] sm:$0xff]
    %v4589 = vld [vmem:[#allocation2 + $0x118] sm:$0xff]
    %v4590 = vld [vmem:[#allocation2 + $0x120] sm:$0xff]
    %v4591 = vld [vmem:[#allocation2 + $0x128] sm:$0xff]
    %v4592 = vld [vmem:[#allocation2 + $0x130] sm:$0xff]
    %v4593 = vld [vmem:[#allocation2 + $0x138] sm:$0xff]
    %v4594 = vld [vmem:[#allocation2 + $0x140] sm:$0xff]
    %v4595 = vld [vmem:[#allocation2 + $0x148] sm:$0xff]
    %v4596 = vld [vmem:[#allocation2 + $0x150] sm:$0x7f]
    %v4597 = vld [vmem:[#allocation2 + $0x158] sm:$0x7f]
    %v4598 = vld [vmem:[#allocation2 + $0x160] sm:$0x7f]
    %v4599 = vld [vmem:[#allocation2 + $0x168] sm:$0x7f]
    %v4600 = vld [vmem:[#allocation2 + $0x170] sm:$0x7f]
    %v4601 = vld [vmem:[#allocation2 + $0x178] sm:$0x7f]
    %v4602 = vld [vmem:[#allocation8] sm:$0x7f]
    %4604 = vset.pattern.permute.xlu0 2
    %4605 = vperm.xlu0 %4604, %v4602
    %v4606 = vpop.permute.xlu0 %4605
    %vm4608 = vcmask 515072
    %v4610 = vsel %vm4608, %v4553, 0
    %vm4612 = vcmask 1046528
    %v4614 = vsel %vm4612, %v4596, 0
    %v4617 = vsel %vm4612, %v4597, 0
    %v4620 = vsel %vm4612, %v4598, 0
    %v4623 = vsel %vm4612, %v4599, 0
    %v4626 = vsel %vm4612, %v4600, 0
    %v4629 = vsel %vm4612, %v4601, 0
    %4631 = vmatprep.subr.mxu0 %v4555
    %4632 = vmatpush1.msra.mxu0 %v4554
    %4633 = vmatprep.subr.mxu0 %v4561
    %4634 = vmatpush1.msra.mxu0 %v4560
    %4635 = vmatprep.subr.mxu0 %v4567
    %4636 = vmatpush1.msra.mxu0 %v4566
    %4637 = vmatprep.subr.mxu0 %v4573
    %4638 = vmatpush1.msra.mxu0 %v4572
    %4639 = vmatprep.subr.mxu0 %v4579
    %4640 = vmatpush1.msra.mxu0 %v4578
    %4641 = vmatprep.subr.mxu0 %v4585
    %4642 = vmatpush1.msra.mxu0 %v4584
    %4643 = vmatprep.subr.mxu0 %v4591
    %4644 = vmatpush1.msra.mxu0 %v4590
    %4645 = vmatprep.subr.mxu0 %v4617
    %4646 = vmatpush1.msra.mxu0 %v4614
    %4647 = vmatprep.subr.mxu0 0.0
    %4648 = vmatpush1.msra.mxu0 0.0
    %4649 = vmatprep.subr.mxu0 0.0
    %4650 = vmatpush1.msra.mxu0 0.0
    %4651 = vmatprep.subr.mxu0 0.0
    %4652 = vmatpush1.msra.mxu0 0.0
    %4653 = vmatprep.subr.mxu0 0.0
    %4654 = vmatpush1.msra.mxu0 0.0
    %4655 = vmatprep.subr.mxu0 0.0
    %4656 = vmatpush1.msra.mxu0 0.0
    %4657 = vmatprep.subr.mxu0 0.0
    %4658 = vmatpush1.msra.mxu0 0.0
    %4659 = vmatprep.subr.mxu0 0.0
    %4660 = vmatpush1.msra.mxu0 0.0
    %4661 = vmatprep.subr.mxu0 0.0
    %4662 = vmatpush1.msra.mxu0 0.0
    %4663 = vmatprep.subr.mxu0 0.0
    %4664 = vmatpush1.msra.mxu0 0.0
    %4665 = vmatprep.subr.mxu0 0.0
    %4666 = vmatpush1.msra.mxu0 0.0
    %4667 = vmatprep.subr.mxu0 0.0
    %4668 = vmatpush1.msra.mxu0 0.0
    %4669 = vmatprep.subr.mxu0 0.0
    %4670 = vmatpush1.msra.mxu0 0.0
    %4671 = vmatprep.subr.mxu0 0.0
    %4672 = vmatpush1.msra.mxu0 0.0
    %4673 = vmatprep.subr.mxu0 0.0
    %4674 = vmatpush1.msra.mxu0 0.0
    %4675 = vmatprep.subr.mxu0 0.0
    %4676 = vmatpush1.msra.mxu0 0.0
    %4677 = vmatprep.subr.mxu0 0.0
    %4678 = vmatpush1.msra.mxu0 0.0
    %4679 = vmatprep.subr.mxu0 0.0
    %4680 = vmatpush1.msra.mxu0 0.0
    %4681 = vmatprep.subr.mxu0 0.0
    %4682 = vmatpush1.msra.mxu0 0.0
    %4683 = vmatprep.subr.mxu0 0.0
    %4684 = vmatpush1.msra.mxu0 0.0
    %4685 = vmatprep.subr.mxu0 0.0
    %4686 = vmatpush1.msra.mxu0 0.0
    %4687 = vmatprep.subr.mxu0 0.0
    %4688 = vmatpush1.msra.mxu0 0.0
    %4689 = vmatprep.subr.mxu0 0.0
    %4690 = vmatpush1.msra.mxu0 0.0
    %4691 = vmatprep.subr.mxu0 0.0
    %4692 = vmatpush1.msra.mxu0 0.0
    %4693 = vmatprep.subr.mxu0 0.0
    %4694 = vmatpush1.msra.mxu0 0.0
    %4695 = vmatprep.mubr.f32.mxu0 0.0
    %4696 = vmatmul.mubr.f32.gmra.mrb[0].mxu0 %v4610
    %v4697 = vpop.f32.mrb[0].mxu0
    %v4698 = vadd.f32 %v4606, %v4697
    %v4699 = vpop.f32.mrb[0].mxu0
    %v4700 = vadd.f32 %v4606, %v4699
    %4701 = vdwg.mxu0
    %4702 = vmatprep.subr.mxu0 %v4557
    %4703 = vmatpush1.msra.mxu0 %v4556
    %4704 = vmatprep.subr.mxu0 %v4563
    %4705 = vmatpush1.msra.mxu0 %v4562
    %4706 = vmatprep.subr.mxu0 %v4569
    %4707 = vmatpush1.msra.mxu0 %v4568
    %4708 = vmatprep.subr.mxu0 %v4575
    %4709 = vmatpush1.msra.mxu0 %v4574
    %4710 = vmatprep.subr.mxu0 %v4581
    %4711 = vmatpush1.msra.mxu0 %v4580
    %4712 = vmatprep.subr.mxu0 %v4587
    %4713 = vmatpush1.msra.mxu0 %v4586
    %4714 = vmatprep.subr.mxu0 %v4593
    %4715 = vmatpush1.msra.mxu0 %v4592
    %4716 = vmatprep.subr.mxu0 %v4623
    %4717 = vmatpush1.msra.mxu0 %v4620
    %4718 = vmatprep.subr.mxu0 0.0
    %4719 = vmatpush1.msra.mxu0 0.0
    %4720 = vmatprep.subr.mxu0 0.0
    %4721 = vmatpush1.msra.mxu0 0.0
    %4722 = vmatprep.subr.mxu0 0.0
    %4723 = vmatpush1.msra.mxu0 0.0
    %4724 = vmatprep.subr.mxu0 0.0
    %4725 = vmatpush1.msra.mxu0 0.0
    %4726 = vmatprep.subr.mxu0 0.0
    %4727 = vmatpush1.msra.mxu0 0.0
    %4728 = vmatprep.subr.mxu0 0.0
    %4729 = vmatpush1.msra.mxu0 0.0
    %4730 = vmatprep.subr.mxu0 0.0
    %4731 = vmatpush1.msra.mxu0 0.0
    %4732 = vmatprep.subr.mxu0 0.0
    %4733 = vmatpush1.msra.mxu0 0.0
    %4734 = vmatprep.subr.mxu0 0.0
    %4735 = vmatpush1.msra.mxu0 0.0
    %4736 = vmatprep.subr.mxu0 0.0
    %4737 = vmatpush1.msra.mxu0 0.0
    %4738 = vmatprep.subr.mxu0 0.0
    %4739 = vmatpush1.msra.mxu0 0.0
    %4740 = vmatprep.subr.mxu0 0.0
    %4741 = vmatpush1.msra.mxu0 0.0
    %4742 = vmatprep.subr.mxu0 0.0
    %4743 = vmatpush1.msra.mxu0 0.0
    %4744 = vmatprep.subr.mxu0 0.0
    %4745 = vmatpush1.msra.mxu0 0.0
    %4746 = vmatprep.subr.mxu0 0.0
    %4747 = vmatpush1.msra.mxu0 0.0
    %4748 = vmatprep.subr.mxu0 0.0
    %4749 = vmatpush1.msra.mxu0 0.0
    %4750 = vmatprep.subr.mxu0 0.0
    %4751 = vmatpush1.msra.mxu0 0.0
    %4752 = vmatprep.subr.mxu0 0.0
    %4753 = vmatpush1.msra.mxu0 0.0
    %4754 = vmatprep.subr.mxu0 0.0
    %4755 = vmatpush1.msra.mxu0 0.0
    %4756 = vmatprep.subr.mxu0 0.0
    %4757 = vmatpush1.msra.mxu0 0.0
    %4758 = vmatprep.subr.mxu0 0.0
    %4759 = vmatpush1.msra.mxu0 0.0
    %4760 = vmatprep.subr.mxu0 0.0
    %4761 = vmatpush1.msra.mxu0 0.0
    %4762 = vmatprep.subr.mxu0 0.0
    %4763 = vmatpush1.msra.mxu0 0.0
    %4764 = vmatprep.subr.mxu0 0.0
    %4765 = vmatpush1.msra.mxu0 0.0
    %4766 = vmatprep.mubr.f32.mxu0 0.0
    %4767 = vmatmul.mubr.f32.gmra.mrb[0].mxu0 %v4610
    %v4768 = vpop.f32.mrb[0].mxu0
    %v4769 = vadd.f32 %v4606, %v4768
    %v4770 = vpop.f32.mrb[0].mxu0
    %v4771 = vadd.f32 %v4606, %v4770
    %4772 = vdwg.mxu0
    %4773 = vmatprep.subr.mxu0 %v4559
    %4774 = vmatpush1.msra.mxu0 %v4558
    %4775 = vmatprep.subr.mxu0 %v4565
    %4776 = vmatpush1.msra.mxu0 %v4564
    %4777 = vmatprep.subr.mxu0 %v4571
    %4778 = vmatpush1.msra.mxu0 %v4570
    %4779 = vmatprep.subr.mxu0 %v4577
    %4780 = vmatpush1.msra.mxu0 %v4576
    %4781 = vmatprep.subr.mxu0 %v4583
    %4782 = vmatpush1.msra.mxu0 %v4582
    %4783 = vmatprep.subr.mxu0 %v4589
    %4784 = vmatpush1.msra.mxu0 %v4588
    %4785 = vmatprep.subr.mxu0 %v4595
    %4786 = vmatpush1.msra.mxu0 %v4594
    %4787 = vmatprep.subr.mxu0 %v4629
    %4788 = vmatpush1.msra.mxu0 %v4626
    %4789 = vmatprep.subr.mxu0 0.0
    %4790 = vmatpush1.msra.mxu0 0.0
    %4791 = vmatprep.subr.mxu0 0.0
    %4792 = vmatpush1.msra.mxu0 0.0
    %4793 = vmatprep.subr.mxu0 0.0
    %4794 = vmatpush1.msra.mxu0 0.0
    %4795 = vmatprep.subr.mxu0 0.0
    %4796 = vmatpush1.msra.mxu0 0.0
    %4797 = vmatprep.subr.mxu0 0.0
    %4798 = vmatpush1.msra.mxu0 0.0
    %4799 = vmatprep.subr.mxu0 0.0
    %4800 = vmatpush1.msra.mxu0 0.0
    %4801 = vmatprep.subr.mxu0 0.0
    %4802 = vmatpush1.msra.mxu0 0.0
    %4803 = vmatprep.subr.mxu0 0.0
    %4804 = vmatpush1.msra.mxu0 0.0
    %4805 = vmatprep.subr.mxu0 0.0
    %4806 = vmatpush1.msra.mxu0 0.0
    %4807 = vmatprep.subr.mxu0 0.0
    %4808 = vmatpush1.msra.mxu0 0.0
    %4809 = vmatprep.subr.mxu0 0.0
    %4810 = vmatpush1.msra.mxu0 0.0
    %4811 = vmatprep.subr.mxu0 0.0
    %4812 = vmatpush1.msra.mxu0 0.0
    %4813 = vmatprep.subr.mxu0 0.0
    %4814 = vmatpush1.msra.mxu0 0.0
    %4815 = vmatprep.subr.mxu0 0.0
    %4816 = vmatpush1.msra.mxu0 0.0
    %4817 = vmatprep.subr.mxu0 0.0
    %4818 = vmatpush1.msra.mxu0 0.0
    %4819 = vmatprep.subr.mxu0 0.0
    %4820 = vmatpush1.msra.mxu0 0.0
    %4821 = vmatprep.subr.mxu0 0.0
    %4822 = vmatpush1.msra.mxu0 0.0
    %4823 = vmatprep.subr.mxu0 0.0
    %4824 = vmatpush1.msra.mxu0 0.0
    %4825 = vmatprep.subr.mxu0 0.0
    %4826 = vmatpush1.msra.mxu0 0.0
    %4827 = vmatprep.subr.mxu0 0.0
    %4828 = vmatpush1.msra.mxu0 0.0
    %4829 = vmatprep.subr.mxu0 0.0
    %4830 = vmatpush1.msra.mxu0 0.0
    %4831 = vmatprep.subr.mxu0 0.0
    %4832 = vmatpush1.msra.mxu0 0.0
    %4833 = vmatprep.subr.mxu0 0.0
    %4834 = vmatpush1.msra.mxu0 0.0
    %4835 = vmatprep.subr.mxu0 0.0
    %4836 = vmatpush1.msra.mxu0 0.0
    %4837 = vmatprep.mubr.f32.mxu0 0.0
    %4838 = vmatmul.mubr.f32.gmra.mrb[0].mxu0 %v4610
    %v4839 = vpop.f32.mrb[0].mxu0
    %v4840 = vadd.f32 %v4606, %v4839
    %v4841 = vpop.f32.mrb[0].mxu0
    %v4842 = vadd.f32 %v4606, %v4841
    %4843 = vdwg.mxu0
    %vm4844 = vcmp.ge.f32.partialorder %v4698, 0.0
    %vm4845 = vcmp.ge.f32.partialorder %v4700, 0.0
    %vm4846 = vcmp.ge.f32.partialorder %v4769, 0.0
    %vm4847 = vcmp.ge.f32.partialorder %v4771, 0.0
    %vm4848 = vcmp.ge.f32.partialorder %v4840, 0.0
    %vm4849 = vcmp.ge.f32.partialorder %v4842, 0.0
    %v4850 = vmul.f32 %v4698, 0.3
    %v4851 = vmul.f32 %v4700, 0.3
    %v4852 = vmul.f32 %v4769, 0.3
    %v4853 = vmul.f32 %v4771, 0.3
    %v4854 = vmul.f32 %v4840, 0.3
    %v4855 = vmul.f32 %v4842, 0.3
    %v4856 = vsel %vm4844, %v4698, %v4850
    %v4857 = vsel %vm4845, %v4700, %v4851
    %v4858 = vsel %vm4846, %v4769, %v4852
    %v4859 = vsel %vm4847, %v4771, %v4853
    %v4860 = vsel %vm4848, %v4840, %v4854
    %v4861 = vsel %vm4849, %v4842, %v4855
    %4862 = vrot.lane.b32.xlu0 %v4856, 64
    %v4863 = vpop.permute.xlu0 %4862
    %4864 = vrot.lane.b32.xlu0 %v4857, 64
    %v4865 = vpop.permute.xlu0 %4864
    %4866 = vrot.lane.b32.xlu0 %v4858, 64
    %v4867 = vpop.permute.xlu0 %4866
    %4868 = vrot.lane.b32.xlu0 %v4859, 64
    %v4869 = vpop.permute.xlu0 %4868
    %4870 = vrot.lane.b32.xlu0 %v4860, 64
    %v4871 = vpop.permute.xlu0 %4870
    %4872 = vrot.lane.b32.xlu0 %v4861, 64
    %v4873 = vpop.permute.xlu0 %4872
    %vm4874 = vcmp.lt.s32.totalorder %v545, 64
    %v4875 = vsel %vm4874, %v4871, %v4873
    %v4876 = vsel %vm4874, %v4869, %v4871
    %v4877 = vsel %vm4874, %v4867, %v4869
    %v4878 = vsel %vm4874, %v4865, %v4867
    %v4879 = vsel %vm4874, %v4863, %v4865
    %v4880 = vsel %vm4874, %v4873, %v4863
    %s4881 = scalar_lea.vmem [#allocation5], 148
    %v4882 = vld [vmem:[%s4881] ss:$8 sm:$0xf]
    %v4883 = vld [vmem:[%s4881] ss:$8 sm:$0x30]
    %v4884 = vor.u32 %v4882, %v4883
    %v4886 = vlaneseq
    %v4887 = vshrl.u32 %v4886, 7
    %v4888 = vsub.s32 0, %v4887
    %v4889 = vrot.slane %v4884, %v4888
    %v4890 = vlaneseq
    %v4891 = vshrl.u32 %v4890, 7
    %v4892 = vsub.s32 1, %v4891
    %v4893 = vrot.slane %v4884, %v4892
    %v4894 = vlaneseq
    %v4895 = vshrl.u32 %v4894, 7
    %v4896 = vsub.s32 2, %v4895
    %v4897 = vrot.slane %v4884, %v4896
    %v4898 = vlaneseq
    %v4899 = vshrl.u32 %v4898, 7
    %v4900 = vsub.s32 3, %v4899
    %v4901 = vrot.slane %v4884, %v4900
    %v4902 = vlaneseq
    %v4903 = vshrl.u32 %v4902, 7
    %v4904 = vsub.s32 4, %v4903
    %v4905 = vrot.slane %v4884, %v4904
    %v4906 = vlaneseq
    %v4907 = vshrl.u32 %v4906, 7
    %v4908 = vsub.s32 5, %v4907
    %v4909 = vrot.slane %v4884, %v4908
    %v4916 = vmul.f32 %v4880, %v4889
    %v4917 = vmul.f32 %v4879, %v4893
    %v4918 = vmul.f32 %v4878, %v4897
    %v4919 = vmul.f32 %v4877, %v4901
    %v4920 = vmul.f32 %v4876, %v4905
    %v4921 = vmul.f32 %v4875, %v4909
    %4922 = vst [vmem:[#allocation2] sm:$0x7f] %v4916
    %4923 = vst [vmem:[#allocation2 + $0x8] sm:$0x7f] %v4917
    %4924 = vst [vmem:[#allocation2 + $0x10] sm:$0x7f] %v4918
    %4925 = vst [vmem:[#allocation2 + $0x18] sm:$0x7f] %v4919
    %4926 = vst [vmem:[#allocation2 + $0x20] sm:$0x7f] %v4920
    %4927 = vst [vmem:[#allocation2 + $0x28] sm:$0x7f] %v4921
    %4928 = vrot.lane.b32.xlu0 %v4856, 48
    %v4929 = vpop.permute.xlu0 %4928
    %4930 = vrot.lane.b32.xlu0 %v4857, 48
    %v4931 = vpop.permute.xlu0 %4930
    %4932 = vrot.lane.b32.xlu0 %v4858, 48
    %v4933 = vpop.permute.xlu0 %4932
    %4934 = vrot.lane.b32.xlu0 %v4859, 48
    %v4935 = vpop.permute.xlu0 %4934
    %4936 = vrot.lane.b32.xlu0 %v4860, 48
    %v4937 = vpop.permute.xlu0 %4936
    %4938 = vrot.lane.b32.xlu0 %v4861, 48
    %v4939 = vpop.permute.xlu0 %4938
    %vm4940 = vcmp.lt.s32.totalorder %v545, 48
    %v4941 = vsel %vm4940, %v4937, %v4939
    %v4942 = vsel %vm4940, %v4935, %v4937
    %v4943 = vsel %vm4940, %v4933, %v4935
    %v4944 = vsel %vm4940, %v4931, %v4933
    %v4945 = vsel %vm4940, %v4929, %v4931
    %v4946 = vsel %vm4940, %v4939, %v4929
    %s4947 = scalar_lea.vmem [#allocation5], 149
    %v4948 = vld [vmem:[%s4947] ss:$8 sm:$0xf]
    %v4949 = vld [vmem:[%s4947] ss:$8 sm:$0x30]
    %v4950 = vor.u32 %v4948, %v4949
    %v4952 = vlaneseq
    %v4953 = vshrl.u32 %v4952, 7
    %v4954 = vsub.s32 0, %v4953
    %v4955 = vrot.slane %v4950, %v4954
    %v4956 = vlaneseq
    %v4957 = vshrl.u32 %v4956, 7
    %v4958 = vsub.s32 1, %v4957
    %v4959 = vrot.slane %v4950, %v4958
    %v4960 = vlaneseq
    %v4961 = vshrl.u32 %v4960, 7
    %v4962 = vsub.s32 2, %v4961
    %v4963 = vrot.slane %v4950, %v4962
    %v4964 = vlaneseq
    %v4965 = vshrl.u32 %v4964, 7
    %v4966 = vsub.s32 3, %v4965
    %v4967 = vrot.slane %v4950, %v4966
    %v4968 = vlaneseq
    %v4969 = vshrl.u32 %v4968, 7
    %v4970 = vsub.s32 4, %v4969
    %v4971 = vrot.slane %v4950, %v4970
    %v4972 = vlaneseq
    %v4973 = vshrl.u32 %v4972, 7
    %v4974 = vsub.s32 5, %v4973
    %v4975 = vrot.slane %v4950, %v4974
    %v4982 = vmul.f32 %v4946, %v4955
    %v4983 = vmul.f32 %v4945, %v4959
    %v4984 = vmul.f32 %v4944, %v4963
    %v4985 = vmul.f32 %v4943, %v4967
    %v4986 = vmul.f32 %v4942, %v4971
    %v4987 = vmul.f32 %v4941, %v4975
    %v4994 = vrot.slane %v4982, 1
    %v4995 = vrot.slane %v4983, 1
    %v4996 = vrot.slane %v4984, 1
    %v4997 = vrot.slane %v4985, 1
    %v4998 = vrot.slane %v4986, 1
    %v4999 = vrot.slane %v4987, 1
    %5006 = vst [vmem:[#allocation2] sm:$0x80] %v4994
    %5007 = vst [vmem:[#allocation2 + $0x8] sm:$0x80] %v4995
    %5008 = vst [vmem:[#allocation2 + $0x10] sm:$0x80] %v4996
    %5009 = vst [vmem:[#allocation2 + $0x18] sm:$0x80] %v4997
    %5010 = vst [vmem:[#allocation2 + $0x20] sm:$0x80] %v4998
    %5011 = vst [vmem:[#allocation2 + $0x28] sm:$0x80] %v4999
    %5012 = vst [vmem:[#allocation2 + $0x30] sm:$0x3f] %v4994
    %5013 = vst [vmem:[#allocation2 + $0x38] sm:$0x3f] %v4995
    %5014 = vst [vmem:[#allocation2 + $0x40] sm:$0x3f] %v4996
    %5015 = vst [vmem:[#allocation2 + $0x48] sm:$0x3f] %v4997
    %5016 = vst [vmem:[#allocation2 + $0x50] sm:$0x3f] %v4998
    %5017 = vst [vmem:[#allocation2 + $0x58] sm:$0x3f] %v4999
    %5018 = vrot.lane.b32.xlu0 %v4856, 32
    %v5019 = vpop.permute.xlu0 %5018
    %5020 = vrot.lane.b32.xlu0 %v4857, 32
    %v5021 = vpop.permute.xlu0 %5020
    %5022 = vrot.lane.b32.xlu0 %v4858, 32
    %v5023 = vpop.permute.xlu0 %5022
    %5024 = vrot.lane.b32.xlu0 %v4859, 32
    %v5025 = vpop.permute.xlu0 %5024
    %5026 = vrot.lane.b32.xlu0 %v4860, 32
    %v5027 = vpop.permute.xlu0 %5026
    %5028 = vrot.lane.b32.xlu0 %v4861, 32
    %v5029 = vpop.permute.xlu0 %5028
    %v5030 = vsel %vm695, %v5027, %v5029
    %v5031 = vsel %vm695, %v5025, %v5027
    %v5032 = vsel %vm695, %v5023, %v5025
    %v5033 = vsel %vm695, %v5021, %v5023
    %v5034 = vsel %vm695, %v5019, %v5021
    %v5035 = vsel %vm695, %v5029, %v5019
    %v5036 = vld [vmem:[%s702] ss:$8 sm:$0xf]
    %v5037 = vld [vmem:[%s702] ss:$8 sm:$0x30]
    %v5038 = vor.u32 %v5036, %v5037
    %v5040 = vlaneseq
    %v5041 = vshrl.u32 %v5040, 7
    %v5042 = vsub.s32 0, %v5041
    %v5043 = vrot.slane %v5038, %v5042
    %v5044 = vlaneseq
    %v5045 = vshrl.u32 %v5044, 7
    %v5046 = vsub.s32 1, %v5045
    %v5047 = vrot.slane %v5038, %v5046
    %v5048 = vlaneseq
    %v5049 = vshrl.u32 %v5048, 7
    %v5050 = vsub.s32 2, %v5049
    %v5051 = vrot.slane %v5038, %v5050
    %v5052 = vlaneseq
    %v5053 = vshrl.u32 %v5052, 7
    %v5054 = vsub.s32 3, %v5053
    %v5055 = vrot.slane %v5038, %v5054
    %v5056 = vlaneseq
    %v5057 = vshrl.u32 %v5056, 7
    %v5058 = vsub.s32 4, %v5057
    %v5059 = vrot.slane %v5038, %v5058
    %v5060 = vlaneseq
    %v5061 = vshrl.u32 %v5060, 7
    %v5062 = vsub.s32 5, %v5061
    %v5063 = vrot.slane %v5038, %v5062
    %v5070 = vmul.f32 %v5035, %v5043
    %v5071 = vmul.f32 %v5034, %v5047
    %v5072 = vmul.f32 %v5033, %v5051
    %v5073 = vmul.f32 %v5032, %v5055
    %v5074 = vmul.f32 %v5031, %v5059
    %v5075 = vmul.f32 %v5030, %v5063
    %v5082 = vrot.slane %v5070, 2
    %v5083 = vrot.slane %v5071, 2
    %v5084 = vrot.slane %v5072, 2
    %v5085 = vrot.slane %v5073, 2
    %v5086 = vrot.slane %v5074, 2
    %v5087 = vrot.slane %v5075, 2
    %5094 = vst [vmem:[#allocation2 + $0x30] sm:$0xc0] %v5082
    %5095 = vst [vmem:[#allocation2 + $0x38] sm:$0xc0] %v5083
    %5096 = vst [vmem:[#allocation2 + $0x40] sm:$0xc0] %v5084
    %5097 = vst [vmem:[#allocation2 + $0x48] sm:$0xc0] %v5085
    %5098 = vst [vmem:[#allocation2 + $0x50] sm:$0xc0] %v5086
    %5099 = vst [vmem:[#allocation2 + $0x58] sm:$0xc0] %v5087
    %5100 = vst [vmem:[#allocation2 + $0x60] sm:$0x1f] %v5082
    %5101 = vst [vmem:[#allocation2 + $0x68] sm:$0x1f] %v5083
    %5102 = vst [vmem:[#allocation2 + $0x70] sm:$0x1f] %v5084
    %5103 = vst [vmem:[#allocation2 + $0x78] sm:$0x1f] %v5085
    %5104 = vst [vmem:[#allocation2 + $0x80] sm:$0x1f] %v5086
    %5105 = vst [vmem:[#allocation2 + $0x88] sm:$0x1f] %v5087
    %5106 = vrot.lane.b32.xlu0 %v4856, 16
    %v5107 = vpop.permute.xlu0 %5106
    %5108 = vrot.lane.b32.xlu0 %v4857, 16
    %v5109 = vpop.permute.xlu0 %5108
    %5110 = vrot.lane.b32.xlu0 %v4858, 16
    %v5111 = vpop.permute.xlu0 %5110
    %5112 = vrot.lane.b32.xlu0 %v4859, 16
    %v5113 = vpop.permute.xlu0 %5112
    %5114 = vrot.lane.b32.xlu0 %v4860, 16
    %v5115 = vpop.permute.xlu0 %5114
    %5116 = vrot.lane.b32.xlu0 %v4861, 16
    %v5117 = vpop.permute.xlu0 %5116
    %v5118 = vsel %vm1097, %v5115, %v5117
    %v5119 = vsel %vm1097, %v5113, %v5115
    %v5120 = vsel %vm1097, %v5111, %v5113
    %v5121 = vsel %vm1097, %v5109, %v5111
    %v5122 = vsel %vm1097, %v5107, %v5109
    %v5123 = vsel %vm1097, %v5117, %v5107
    %v5124 = vld [vmem:[%s1104] ss:$8 sm:$0xf]
    %v5125 = vld [vmem:[%s1104] ss:$8 sm:$0x30]
    %v5126 = vor.u32 %v5124, %v5125
    %v5128 = vlaneseq
    %v5129 = vshrl.u32 %v5128, 7
    %v5130 = vsub.s32 0, %v5129
    %v5131 = vrot.slane %v5126, %v5130
    %v5132 = vlaneseq
    %v5133 = vshrl.u32 %v5132, 7
    %v5134 = vsub.s32 1, %v5133
    %v5135 = vrot.slane %v5126, %v5134
    %v5136 = vlaneseq
    %v5137 = vshrl.u32 %v5136, 7
    %v5138 = vsub.s32 2, %v5137
    %v5139 = vrot.slane %v5126, %v5138
    %v5140 = vlaneseq
    %v5141 = vshrl.u32 %v5140, 7
    %v5142 = vsub.s32 3, %v5141
    %v5143 = vrot.slane %v5126, %v5142
    %v5144 = vlaneseq
    %v5145 = vshrl.u32 %v5144, 7
    %v5146 = vsub.s32 4, %v5145
    %v5147 = vrot.slane %v5126, %v5146
    %v5148 = vlaneseq
    %v5149 = vshrl.u32 %v5148, 7
    %v5150 = vsub.s32 5, %v5149
    %v5151 = vrot.slane %v5126, %v5150
    %v5158 = vmul.f32 %v5123, %v5131
    %v5159 = vmul.f32 %v5122, %v5135
    %v5160 = vmul.f32 %v5121, %v5139
    %v5161 = vmul.f32 %v5120, %v5143
    %v5162 = vmul.f32 %v5119, %v5147
    %v5163 = vmul.f32 %v5118, %v5151
    %v5170 = vrot.slane %v5158, 3
    %v5171 = vrot.slane %v5159, 3
    %v5172 = vrot.slane %v5160, 3
    %v5173 = vrot.slane %v5161, 3
    %v5174 = vrot.slane %v5162, 3
    %v5175 = vrot.slane %v5163, 3
    %5182 = vst [vmem:[#allocation2 + $0x60] sm:$0xe0] %v5170
    %5183 = vst [vmem:[#allocation2 + $0x68] sm:$0xe0] %v5171
    %5184 = vst [vmem:[#allocation2 + $0x70] sm:$0xe0] %v5172
    %5185 = vst [vmem:[#allocation2 + $0x78] sm:$0xe0] %v5173
    %5186 = vst [vmem:[#allocation2 + $0x80] sm:$0xe0] %v5174
    %5187 = vst [vmem:[#allocation2 + $0x88] sm:$0xe0] %v5175
    %5188 = vst [vmem:[#allocation2 + $0x90] sm:$0xf] %v5170
    %5189 = vst [vmem:[#allocation2 + $0x98] sm:$0xf] %v5171
    %5190 = vst [vmem:[#allocation2 + $0xa0] sm:$0xf] %v5172
    %5191 = vst [vmem:[#allocation2 + $0xa8] sm:$0xf] %v5173
    %5192 = vst [vmem:[#allocation2 + $0xb0] sm:$0xf] %v5174
    %5193 = vst [vmem:[#allocation2 + $0xb8] sm:$0xf] %v5175
    %v5200 = vrot.slane %v4856, 4
    %v5201 = vrot.slane %v4857, 4
    %v5202 = vrot.slane %v4858, 4
    %v5203 = vrot.slane %v4859, 4
    %v5204 = vrot.slane %v4860, 4
    %v5205 = vrot.slane %v4861, 4
    %5212 = vst [vmem:[#allocation2 + $0x90] sm:$0xf0] %v5200
    %5213 = vst [vmem:[#allocation2 + $0x98] sm:$0xf0] %v5201
    %5214 = vst [vmem:[#allocation2 + $0xa0] sm:$0xf0] %v5202
    %5215 = vst [vmem:[#allocation2 + $0xa8] sm:$0xf0] %v5203
    %5216 = vst [vmem:[#allocation2 + $0xb0] sm:$0xf0] %v5204
    %5217 = vst [vmem:[#allocation2 + $0xb8] sm:$0xf0] %v5205
    %5218 = vst [vmem:[#allocation2 + $0xc0] sm:$0x7] %v5200
    %5219 = vst [vmem:[#allocation2 + $0xc8] sm:$0x7] %v5201
    %5220 = vst [vmem:[#allocation2 + $0xd0] sm:$0x7] %v5202
    %5221 = vst [vmem:[#allocation2 + $0xd8] sm:$0x7] %v5203
    %5222 = vst [vmem:[#allocation2 + $0xe0] sm:$0x7] %v5204
    %5223 = vst [vmem:[#allocation2 + $0xe8] sm:$0x7] %v5205
    %5224 = vrot.lane.b32.xlu0 %v4856, 112
    %v5225 = vpop.permute.xlu0 %5224
    %5226 = vrot.lane.b32.xlu0 %v4857, 112
    %v5227 = vpop.permute.xlu0 %5226
    %5228 = vrot.lane.b32.xlu0 %v4858, 112
    %v5229 = vpop.permute.xlu0 %5228
    %5230 = vrot.lane.b32.xlu0 %v4859, 112
    %v5231 = vpop.permute.xlu0 %5230
    %5232 = vrot.lane.b32.xlu0 %v4860, 112
    %v5233 = vpop.permute.xlu0 %5232
    %5234 = vrot.lane.b32.xlu0 %v4861, 112
    %v5235 = vpop.permute.xlu0 %5234
    %v5236 = vsel %vm1823, %v5233, %v5235
    %v5237 = vsel %vm1823, %v5231, %v5233
    %v5238 = vsel %vm1823, %v5229, %v5231
    %v5239 = vsel %vm1823, %v5227, %v5229
    %v5240 = vsel %vm1823, %v5225, %v5227
    %v5241 = vsel %vm1823, %v5235, %v5225
    %v5242 = vld [vmem:[%s1830] ss:$8 sm:$0xf]
    %v5243 = vld [vmem:[%s1830] ss:$8 sm:$0x30]
    %v5244 = vor.u32 %v5242, %v5243
    %v5246 = vlaneseq
    %v5247 = vshrl.u32 %v5246, 7
    %v5248 = vsub.s32 0, %v5247
    %v5249 = vrot.slane %v5244, %v5248
    %v5250 = vlaneseq
    %v5251 = vshrl.u32 %v5250, 7
    %v5252 = vsub.s32 1, %v5251
    %v5253 = vrot.slane %v5244, %v5252
    %v5254 = vlaneseq
    %v5255 = vshrl.u32 %v5254, 7
    %v5256 = vsub.s32 2, %v5255
    %v5257 = vrot.slane %v5244, %v5256
    %v5258 = vlaneseq
    %v5259 = vshrl.u32 %v5258, 7
    %v5260 = vsub.s32 3, %v5259
    %v5261 = vrot.slane %v5244, %v5260
    %v5262 = vlaneseq
    %v5263 = vshrl.u32 %v5262, 7
    %v5264 = vsub.s32 4, %v5263
    %v5265 = vrot.slane %v5244, %v5264
    %v5266 = vlaneseq
    %v5267 = vshrl.u32 %v5266, 7
    %v5268 = vsub.s32 5, %v5267
    %v5269 = vrot.slane %v5244, %v5268
    %v5276 = vmul.f32 %v5240, %v5249
    %v5277 = vmul.f32 %v5239, %v5253
    %v5278 = vmul.f32 %v5238, %v5257
    %v5279 = vmul.f32 %v5237, %v5261
    %v5280 = vmul.f32 %v5236, %v5265
    %v5281 = vmul.f32 %v5241, %v5269
    %v5288 = vrot.slane %v5276, 5
    %v5289 = vrot.slane %v5277, 5
    %v5290 = vrot.slane %v5278, 5
    %v5291 = vrot.slane %v5279, 5
    %v5292 = vrot.slane %v5280, 5
    %v5293 = vrot.slane %v5281, 5
    %5300 = vst [vmem:[#allocation2 + $0xc0] sm:$0xf8] %v5288
    %5301 = vst [vmem:[#allocation2 + $0xc8] sm:$0xf8] %v5289
    %5302 = vst [vmem:[#allocation2 + $0xd0] sm:$0xf8] %v5290
    %5303 = vst [vmem:[#allocation2 + $0xd8] sm:$0xf8] %v5291
    %5304 = vst [vmem:[#allocation2 + $0xe0] sm:$0xf8] %v5292
    %5305 = vst [vmem:[#allocation2 + $0xe8] sm:$0xf8] %v5293
    %5306 = vst [vmem:[#allocation2 + $0xf0] sm:$0x3] %v5288
    %5307 = vst [vmem:[#allocation2 + $0xf8] sm:$0x3] %v5289
    %5308 = vst [vmem:[#allocation2 + $0x100] sm:$0x3] %v5290
    %5309 = vst [vmem:[#allocation2 + $0x108] sm:$0x3] %v5291
    %5310 = vst [vmem:[#allocation2 + $0x110] sm:$0x3] %v5292
    %5311 = vst [vmem:[#allocation2 + $0x118] sm:$0x3] %v5293
    %5312 = vrot.lane.b32.xlu0 %v4856, 96
    %v5313 = vpop.permute.xlu0 %5312
    %5314 = vrot.lane.b32.xlu0 %v4857, 96
    %v5315 = vpop.permute.xlu0 %5314
    %5316 = vrot.lane.b32.xlu0 %v4858, 96
    %v5317 = vpop.permute.xlu0 %5316
    %5318 = vrot.lane.b32.xlu0 %v4859, 96
    %v5319 = vpop.permute.xlu0 %5318
    %5320 = vrot.lane.b32.xlu0 %v4860, 96
    %v5321 = vpop.permute.xlu0 %5320
    %5322 = vrot.lane.b32.xlu0 %v4861, 96
    %v5323 = vpop.permute.xlu0 %5322
    %v5324 = vsel %vm2225, %v5321, %v5323
    %v5325 = vsel %vm2225, %v5319, %v5321
    %v5326 = vsel %vm2225, %v5317, %v5319
    %v5327 = vsel %vm2225, %v5315, %v5317
    %v5328 = vsel %vm2225, %v5313, %v5315
    %v5329 = vsel %vm2225, %v5323, %v5313
    %v5330 = vld [vmem:[%s2232] ss:$8 sm:$0xf]
    %v5331 = vld [vmem:[%s2232] ss:$8 sm:$0x30]
    %v5332 = vor.u32 %v5330, %v5331
    %v5334 = vlaneseq
    %v5335 = vshrl.u32 %v5334, 7
    %v5336 = vsub.s32 0, %v5335
    %v5337 = vrot.slane %v5332, %v5336
    %v5338 = vlaneseq
    %v5339 = vshrl.u32 %v5338, 7
    %v5340 = vsub.s32 1, %v5339
    %v5341 = vrot.slane %v5332, %v5340
    %v5342 = vlaneseq
    %v5343 = vshrl.u32 %v5342, 7
    %v5344 = vsub.s32 2, %v5343
    %v5345 = vrot.slane %v5332, %v5344
    %v5346 = vlaneseq
    %v5347 = vshrl.u32 %v5346, 7
    %v5348 = vsub.s32 3, %v5347
    %v5349 = vrot.slane %v5332, %v5348
    %v5350 = vlaneseq
    %v5351 = vshrl.u32 %v5350, 7
    %v5352 = vsub.s32 4, %v5351
    %v5353 = vrot.slane %v5332, %v5352
    %v5354 = vlaneseq
    %v5355 = vshrl.u32 %v5354, 7
    %v5356 = vsub.s32 5, %v5355
    %v5357 = vrot.slane %v5332, %v5356
    %v5364 = vmul.f32 %v5328, %v5337
    %v5365 = vmul.f32 %v5327, %v5341
    %v5366 = vmul.f32 %v5326, %v5345
    %v5367 = vmul.f32 %v5325, %v5349
    %v5368 = vmul.f32 %v5324, %v5353
    %v5369 = vmul.f32 %v5329, %v5357
    %v5376 = vrot.slane %v5364, 6
    %v5377 = vrot.slane %v5365, 6
    %v5378 = vrot.slane %v5366, 6
    %v5379 = vrot.slane %v5367, 6
    %v5380 = vrot.slane %v5368, 6
    %v5381 = vrot.slane %v5369, 6
    %5388 = vst [vmem:[#allocation2 + $0xf0] sm:$0xfc] %v5376
    %5389 = vst [vmem:[#allocation2 + $0xf8] sm:$0xfc] %v5377
    %5390 = vst [vmem:[#allocation2 + $0x100] sm:$0xfc] %v5378
    %5391 = vst [vmem:[#allocation2 + $0x108] sm:$0xfc] %v5379
    %5392 = vst [vmem:[#allocation2 + $0x110] sm:$0xfc] %v5380
    %5393 = vst [vmem:[#allocation2 + $0x118] sm:$0xfc] %v5381
    %5394 = vst [vmem:[#allocation2 + $0x120] sm:$0x1] %v5376
    %5395 = vst [vmem:[#allocation2 + $0x128] sm:$0x1] %v5377
    %5396 = vst [vmem:[#allocation2 + $0x130] sm:$0x1] %v5378
    %5397 = vst [vmem:[#allocation2 + $0x138] sm:$0x1] %v5379
    %5398 = vst [vmem:[#allocation2 + $0x140] sm:$0x1] %v5380
    %5399 = vst [vmem:[#allocation2 + $0x148] sm:$0x1] %v5381
    %5400 = vrot.lane.b32.xlu0 %v4856, 80
    %v5401 = vpop.permute.xlu0 %5400
    %5402 = vrot.lane.b32.xlu0 %v4857, 80
    %v5403 = vpop.permute.xlu0 %5402
    %5404 = vrot.lane.b32.xlu0 %v4858, 80
    %v5405 = vpop.permute.xlu0 %5404
    %5406 = vrot.lane.b32.xlu0 %v4859, 80
    %v5407 = vpop.permute.xlu0 %5406
    %5408 = vrot.lane.b32.xlu0 %v4860, 80
    %v5409 = vpop.permute.xlu0 %5408
    %5410 = vrot.lane.b32.xlu0 %v4861, 80
    %v5411 = vpop.permute.xlu0 %5410
    %vm5412 = vcmp.lt.s32.totalorder %v545, 80
    %v5413 = vsel %vm5412, %v5409, %v5411
    %v5414 = vsel %vm5412, %v5407, %v5409
    %v5415 = vsel %vm5412, %v5405, %v5407
    %v5416 = vsel %vm5412, %v5403, %v5405
    %v5417 = vsel %vm5412, %v5401, %v5403
    %v5418 = vsel %vm5412, %v5411, %v5401
    %s5419 = scalar_lea.vmem [#allocation5], 150
    %v5420 = vld [vmem:[%s5419] ss:$8 sm:$0xf]
    %v5421 = vld [vmem:[%s5419] ss:$8 sm:$0x30]
    %v5422 = vor.u32 %v5420, %v5421
    %v5424 = vlaneseq
    %v5425 = vshrl.u32 %v5424, 7
    %v5426 = vsub.s32 0, %v5425
    %v5427 = vrot.slane %v5422, %v5426
    %v5428 = vlaneseq
    %v5429 = vshrl.u32 %v5428, 7
    %v5430 = vsub.s32 1, %v5429
    %v5431 = vrot.slane %v5422, %v5430
    %v5432 = vlaneseq
    %v5433 = vshrl.u32 %v5432, 7
    %v5434 = vsub.s32 2, %v5433
    %v5435 = vrot.slane %v5422, %v5434
    %v5436 = vlaneseq
    %v5437 = vshrl.u32 %v5436, 7
    %v5438 = vsub.s32 3, %v5437
    %v5439 = vrot.slane %v5422, %v5438
    %v5440 = vlaneseq
    %v5441 = vshrl.u32 %v5440, 7
    %v5442 = vsub.s32 4, %v5441
    %v5443 = vrot.slane %v5422, %v5442
    %v5444 = vlaneseq
    %v5445 = vshrl.u32 %v5444, 7
    %v5446 = vsub.s32 5, %v5445
    %v5447 = vrot.slane %v5422, %v5446
    %v5454 = vmul.f32 %v5417, %v5427
    %v5455 = vmul.f32 %v5416, %v5431
    %v5456 = vmul.f32 %v5415, %v5435
    %v5457 = vmul.f32 %v5414, %v5439
    %v5458 = vmul.f32 %v5413, %v5443
    %v5459 = vmul.f32 %v5418, %v5447
    %v5466 = vrot.slane %v5454, 7
    %v5467 = vrot.slane %v5455, 7
    %v5468 = vrot.slane %v5456, 7
    %v5469 = vrot.slane %v5457, 7
    %v5470 = vrot.slane %v5458, 7
    %v5471 = vrot.slane %v5459, 7
    %5478 = vst [vmem:[#allocation2 + $0x120] sm:$0xfe] %v5466
    %5479 = vst [vmem:[#allocation2 + $0x128] sm:$0xfe] %v5467
    %5480 = vst [vmem:[#allocation2 + $0x130] sm:$0xfe] %v5468
    %5481 = vst [vmem:[#allocation2 + $0x138] sm:$0xfe] %v5469
    %5482 = vst [vmem:[#allocation2 + $0x140] sm:$0xfe] %v5470
    %5483 = vst [vmem:[#allocation2 + $0x148] sm:$0xfe] %v5471
    %s5484 = scalar_lea.vmem [#allocation5], 151
    %v5485 = vld [vmem:[%s5484] ss:$8 sm:$0xf]
    %v5486 = vld [vmem:[%s5484] ss:$8 sm:$0x30]
    %v5487 = vor.u32 %v5485, %v5486
    %v5489 = vlaneseq
    %v5490 = vshrl.u32 %v5489, 7
    %v5491 = vsub.s32 0, %v5490
    %v5492 = vrot.slane %v5487, %v5491
    %v5493 = vlaneseq
    %v5494 = vshrl.u32 %v5493, 7
    %v5495 = vsub.s32 1, %v5494
    %v5496 = vrot.slane %v5487, %v5495
    %v5497 = vlaneseq
    %v5498 = vshrl.u32 %v5497, 7
    %v5499 = vsub.s32 2, %v5498
    %v5500 = vrot.slane %v5487, %v5499
    %v5501 = vlaneseq
    %v5502 = vshrl.u32 %v5501, 7
    %v5503 = vsub.s32 3, %v5502
    %v5504 = vrot.slane %v5487, %v5503
    %v5505 = vlaneseq
    %v5506 = vshrl.u32 %v5505, 7
    %v5507 = vsub.s32 4, %v5506
    %v5508 = vrot.slane %v5487, %v5507
    %v5509 = vlaneseq
    %v5510 = vshrl.u32 %v5509, 7
    %v5511 = vsub.s32 5, %v5510
    %v5512 = vrot.slane %v5487, %v5511
    %v5519 = vmul.f32 %v4879, %v5492
    %v5520 = vmul.f32 %v4878, %v5496
    %v5521 = vmul.f32 %v4877, %v5500
    %v5522 = vmul.f32 %v4876, %v5504
    %v5523 = vmul.f32 %v4875, %v5508
    %v5524 = vmul.f32 %v4880, %v5512
    %5525 = vst [vmem:[#allocation2 + $0x150] sm:$0x7f] %v5519
    %5526 = vst [vmem:[#allocation2 + $0x158] sm:$0x7f] %v5520
    %5527 = vst [vmem:[#allocation2 + $0x160] sm:$0x7f] %v5521
    %5528 = vst [vmem:[#allocation2 + $0x168] sm:$0x7f] %v5522
    %5529 = vst [vmem:[#allocation2 + $0x170] sm:$0x7f] %v5523
    %5530 = vst [vmem:[#allocation2 + $0x178] sm:$0x7f] %v5524
    %v5531 = vld [vmem:[#allocation7 + $0x18] sm:$0x7f]
    %v5532 = vld [vmem:[#allocation2] sm:$0xff]
    %v5533 = vld [vmem:[#allocation2 + $0x8] sm:$0xff]
    %v5534 = vld [vmem:[#allocation2 + $0x10] sm:$0xff]
    %v5535 = vld [vmem:[#allocation2 + $0x18] sm:$0xff]
    %v5536 = vld [vmem:[#allocation2 + $0x20] sm:$0xff]
    %v5537 = vld [vmem:[#allocation2 + $0x28] sm:$0xff]
    %v5538 = vld [vmem:[#allocation2 + $0x30] sm:$0xff]
    %v5539 = vld [vmem:[#allocation2 + $0x38] sm:$0xff]
    %v5540 = vld [vmem:[#allocation2 + $0x40] sm:$0xff]
    %v5541 = vld [vmem:[#allocation2 + $0x48] sm:$0xff]
    %v5542 = vld [vmem:[#allocation2 + $0x50] sm:$0xff]
    %v5543 = vld [vmem:[#allocation2 + $0x58] sm:$0xff]
    %v5544 = vld [vmem:[#allocation2 + $0x60] sm:$0xff]
    %v5545 = vld [vmem:[#allocation2 + $0x68] sm:$0xff]
    %v5546 = vld [vmem:[#allocation2 + $0x70] sm:$0xff]
    %v5547 = vld [vmem:[#allocation2 + $0x78] sm:$0xff]
    %v5548 = vld [vmem:[#allocation2 + $0x80] sm:$0xff]
    %v5549 = vld [vmem:[#allocation2 + $0x88] sm:$0xff]
    %v5550 = vld [vmem:[#allocation2 + $0x90] sm:$0xff]
    %v5551 = vld [vmem:[#allocation2 + $0x98] sm:$0xff]
    %v5552 = vld [vmem:[#allocation2 + $0xa0] sm:$0xff]
    %v5553 = vld [vmem:[#allocation2 + $0xa8] sm:$0xff]
    %v5554 = vld [vmem:[#allocation2 + $0xb0] sm:$0xff]
    %v5555 = vld [vmem:[#allocation2 + $0xb8] sm:$0xff]
    %v5556 = vld [vmem:[#allocation2 + $0xc0] sm:$0xff]
    %v5557 = vld [vmem:[#allocation2 + $0xc8] sm:$0xff]
    %v5558 = vld [vmem:[#allocation2 + $0xd0] sm:$0xff]
    %v5559 = vld [vmem:[#allocation2 + $0xd8] sm:$0xff]
    %v5560 = vld [vmem:[#allocation2 + $0xe0] sm:$0xff]
    %v5561 = vld [vmem:[#allocation2 + $0xe8] sm:$0xff]
    %v5562 = vld [vmem:[#allocation2 + $0xf0] sm:$0xff]
    %v5563 = vld [vmem:[#allocation2 + $0xf8] sm:$0xff]
    %v5564 = vld [vmem:[#allocation2 + $0x100] sm:$0xff]
    %v5565 = vld [vmem:[#allocation2 + $0x108] sm:$0xff]
    %v5566 = vld [vmem:[#allocation2 + $0x110] sm:$0xff]
    %v5567 = vld [vmem:[#allocation2 + $0x118] sm:$0xff]
    %v5568 = vld [vmem:[#allocation2 + $0x120] sm:$0xff]
    %v5569 = vld [vmem:[#allocation2 + $0x128] sm:$0xff]
    %v5570 = vld [vmem:[#allocation2 + $0x130] sm:$0xff]
    %v5571 = vld [vmem:[#allocation2 + $0x138] sm:$0xff]
    %v5572 = vld [vmem:[#allocation2 + $0x140] sm:$0xff]
    %v5573 = vld [vmem:[#allocation2 + $0x148] sm:$0xff]
    %v5574 = vld [vmem:[#allocation2 + $0x150] sm:$0x7f]
    %v5575 = vld [vmem:[#allocation2 + $0x158] sm:$0x7f]
    %v5576 = vld [vmem:[#allocation2 + $0x160] sm:$0x7f]
    %v5577 = vld [vmem:[#allocation2 + $0x168] sm:$0x7f]
    %v5578 = vld [vmem:[#allocation2 + $0x170] sm:$0x7f]
    %v5579 = vld [vmem:[#allocation2 + $0x178] sm:$0x7f]
    %v5580 = vld [vmem:[#allocation8] sm:$0x7f]
    %5582 = vset.pattern.permute.xlu0 3
    %5583 = vperm.xlu0 %5582, %v5580
    %v5584 = vpop.permute.xlu0 %5583
    %v5587 = vsel %vm4608, %v5531, 0
    %v5590 = vsel %vm4612, %v5574, 0
    %v5593 = vsel %vm4612, %v5575, 0
    %v5596 = vsel %vm4612, %v5576, 0
    %v5599 = vsel %vm4612, %v5577, 0
    %v5602 = vsel %vm4612, %v5578, 0
    %v5605 = vsel %vm4612, %v5579, 0
    %5607 = vmatprep.subr.mxu0 %v5533
    %5608 = vmatpush1.msra.mxu0 %v5532
    %5609 = vmatprep.subr.mxu0 %v5539
    %5610 = vmatpush1.msra.mxu0 %v5538
    %5611 = vmatprep.subr.mxu0 %v5545
    %5612 = vmatpush1.msra.mxu0 %v5544
    %5613 = vmatprep.subr.mxu0 %v5551
    %5614 = vmatpush1.msra.mxu0 %v5550
    %5615 = vmatprep.subr.mxu0 %v5557
    %5616 = vmatpush1.msra.mxu0 %v5556
    %5617 = vmatprep.subr.mxu0 %v5563
    %5618 = vmatpush1.msra.mxu0 %v5562
    %5619 = vmatprep.subr.mxu0 %v5569
    %5620 = vmatpush1.msra.mxu0 %v5568
    %5621 = vmatprep.subr.mxu0 %v5593
    %5622 = vmatpush1.msra.mxu0 %v5590
    %5623 = vmatprep.subr.mxu0 0.0
    %5624 = vmatpush1.msra.mxu0 0.0
    %5625 = vmatprep.subr.mxu0 0.0
    %5626 = vmatpush1.msra.mxu0 0.0
    %5627 = vmatprep.subr.mxu0 0.0
    %5628 = vmatpush1.msra.mxu0 0.0
    %5629 = vmatprep.subr.mxu0 0.0
    %5630 = vmatpush1.msra.mxu0 0.0
    %5631 = vmatprep.subr.mxu0 0.0
    %5632 = vmatpush1.msra.mxu0 0.0
    %5633 = vmatprep.subr.mxu0 0.0
    %5634 = vmatpush1.msra.mxu0 0.0
    %5635 = vmatprep.subr.mxu0 0.0
    %5636 = vmatpush1.msra.mxu0 0.0
    %5637 = vmatprep.subr.mxu0 0.0
    %5638 = vmatpush1.msra.mxu0 0.0
    %5639 = vmatprep.subr.mxu0 0.0
    %5640 = vmatpush1.msra.mxu0 0.0
    %5641 = vmatprep.subr.mxu0 0.0
    %5642 = vmatpush1.msra.mxu0 0.0
    %5643 = vmatprep.subr.mxu0 0.0
    %5644 = vmatpush1.msra.mxu0 0.0
    %5645 = vmatprep.subr.mxu0 0.0
    %5646 = vmatpush1.msra.mxu0 0.0
    %5647 = vmatprep.subr.mxu0 0.0
    %5648 = vmatpush1.msra.mxu0 0.0
    %5649 = vmatprep.subr.mxu0 0.0
    %5650 = vmatpush1.msra.mxu0 0.0
    %5651 = vmatprep.subr.mxu0 0.0
    %5652 = vmatpush1.msra.mxu0 0.0
    %5653 = vmatprep.subr.mxu0 0.0
    %5654 = vmatpush1.msra.mxu0 0.0
    %5655 = vmatprep.subr.mxu0 0.0
    %5656 = vmatpush1.msra.mxu0 0.0
    %5657 = vmatprep.subr.mxu0 0.0
    %5658 = vmatpush1.msra.mxu0 0.0
    %5659 = vmatprep.subr.mxu0 0.0
    %5660 = vmatpush1.msra.mxu0 0.0
    %5661 = vmatprep.subr.mxu0 0.0
    %5662 = vmatpush1.msra.mxu0 0.0
    %5663 = vmatprep.subr.mxu0 0.0
    %5664 = vmatpush1.msra.mxu0 0.0
    %5665 = vmatprep.subr.mxu0 0.0
    %5666 = vmatpush1.msra.mxu0 0.0
    %5667 = vmatprep.subr.mxu0 0.0
    %5668 = vmatpush1.msra.mxu0 0.0
    %5669 = vmatprep.subr.mxu0 0.0
    %5670 = vmatpush1.msra.mxu0 0.0
    %5671 = vmatprep.mubr.f32.mxu0 0.0
    %5672 = vmatmul.mubr.f32.gmra.mrb[0].mxu0 %v5587
    %v5673 = vpop.f32.mrb[0].mxu0
    %v5674 = vadd.f32 %v5584, %v5673
    %v5675 = vpop.f32.mrb[0].mxu0
    %v5676 = vadd.f32 %v5584, %v5675
    %5677 = vdwg.mxu0
    %5678 = vmatprep.subr.mxu0 %v5535
    %5679 = vmatpush1.msra.mxu0 %v5534
    %5680 = vmatprep.subr.mxu0 %v5541
    %5681 = vmatpush1.msra.mxu0 %v5540
    %5682 = vmatprep.subr.mxu0 %v5547
    %5683 = vmatpush1.msra.mxu0 %v5546
    %5684 = vmatprep.subr.mxu0 %v5553
    %5685 = vmatpush1.msra.mxu0 %v5552
    %5686 = vmatprep.subr.mxu0 %v5559
    %5687 = vmatpush1.msra.mxu0 %v5558
    %5688 = vmatprep.subr.mxu0 %v5565
    %5689 = vmatpush1.msra.mxu0 %v5564
    %5690 = vmatprep.subr.mxu0 %v5571
    %5691 = vmatpush1.msra.mxu0 %v5570
    %5692 = vmatprep.subr.mxu0 %v5599
    %5693 = vmatpush1.msra.mxu0 %v5596
    %5694 = vmatprep.subr.mxu0 0.0
    %5695 = vmatpush1.msra.mxu0 0.0
    %5696 = vmatprep.subr.mxu0 0.0
    %5697 = vmatpush1.msra.mxu0 0.0
    %5698 = vmatprep.subr.mxu0 0.0
    %5699 = vmatpush1.msra.mxu0 0.0
    %5700 = vmatprep.subr.mxu0 0.0
    %5701 = vmatpush1.msra.mxu0 0.0
    %5702 = vmatprep.subr.mxu0 0.0
    %5703 = vmatpush1.msra.mxu0 0.0
    %5704 = vmatprep.subr.mxu0 0.0
    %5705 = vmatpush1.msra.mxu0 0.0
    %5706 = vmatprep.subr.mxu0 0.0
    %5707 = vmatpush1.msra.mxu0 0.0
    %5708 = vmatprep.subr.mxu0 0.0
    %5709 = vmatpush1.msra.mxu0 0.0
    %5710 = vmatprep.subr.mxu0 0.0
    %5711 = vmatpush1.msra.mxu0 0.0
    %5712 = vmatprep.subr.mxu0 0.0
    %5713 = vmatpush1.msra.mxu0 0.0
    %5714 = vmatprep.subr.mxu0 0.0
    %5715 = vmatpush1.msra.mxu0 0.0
    %5716 = vmatprep.subr.mxu0 0.0
    %5717 = vmatpush1.msra.mxu0 0.0
    %5718 = vmatprep.subr.mxu0 0.0
    %5719 = vmatpush1.msra.mxu0 0.0
    %5720 = vmatprep.subr.mxu0 0.0
    %5721 = vmatpush1.msra.mxu0 0.0
    %5722 = vmatprep.subr.mxu0 0.0
    %5723 = vmatpush1.msra.mxu0 0.0
    %5724 = vmatprep.subr.mxu0 0.0
    %5725 = vmatpush1.msra.mxu0 0.0
    %5726 = vmatprep.subr.mxu0 0.0
    %5727 = vmatpush1.msra.mxu0 0.0
    %5728 = vmatprep.subr.mxu0 0.0
    %5729 = vmatpush1.msra.mxu0 0.0
    %5730 = vmatprep.subr.mxu0 0.0
    %5731 = vmatpush1.msra.mxu0 0.0
    %5732 = vmatprep.subr.mxu0 0.0
    %5733 = vmatpush1.msra.mxu0 0.0
    %5734 = vmatprep.subr.mxu0 0.0
    %5735 = vmatpush1.msra.mxu0 0.0
    %5736 = vmatprep.subr.mxu0 0.0
    %5737 = vmatpush1.msra.mxu0 0.0
    %5738 = vmatprep.subr.mxu0 0.0
    %5739 = vmatpush1.msra.mxu0 0.0
    %5740 = vmatprep.subr.mxu0 0.0
    %5741 = vmatpush1.msra.mxu0 0.0
    %5742 = vmatprep.mubr.f32.mxu0 0.0
    %5743 = vmatmul.mubr.f32.gmra.mrb[0].mxu0 %v5587
    %v5744 = vpop.f32.mrb[0].mxu0
    %v5745 = vadd.f32 %v5584, %v5744
    %v5746 = vpop.f32.mrb[0].mxu0
    %v5747 = vadd.f32 %v5584, %v5746
    %5748 = vdwg.mxu0
    %5749 = vmatprep.subr.mxu0 %v5537
    %5750 = vmatpush1.msra.mxu0 %v5536
    %5751 = vmatprep.subr.mxu0 %v5543
    %5752 = vmatpush1.msra.mxu0 %v5542
    %5753 = vmatprep.subr.mxu0 %v5549
    %5754 = vmatpush1.msra.mxu0 %v5548
    %5755 = vmatprep.subr.mxu0 %v5555
    %5756 = vmatpush1.msra.mxu0 %v5554
    %5757 = vmatprep.subr.mxu0 %v5561
    %5758 = vmatpush1.msra.mxu0 %v5560
    %5759 = vmatprep.subr.mxu0 %v5567
    %5760 = vmatpush1.msra.mxu0 %v5566
    %5761 = vmatprep.subr.mxu0 %v5573
    %5762 = vmatpush1.msra.mxu0 %v5572
    %5763 = vmatprep.subr.mxu0 %v5605
    %5764 = vmatpush1.msra.mxu0 %v5602
    %5765 = vmatprep.subr.mxu0 0.0
    %5766 = vmatpush1.msra.mxu0 0.0
    %5767 = vmatprep.subr.mxu0 0.0
    %5768 = vmatpush1.msra.mxu0 0.0
    %5769 = vmatprep.subr.mxu0 0.0
    %5770 = vmatpush1.msra.mxu0 0.0
    %5771 = vmatprep.subr.mxu0 0.0
    %5772 = vmatpush1.msra.mxu0 0.0
    %5773 = vmatprep.subr.mxu0 0.0
    %5774 = vmatpush1.msra.mxu0 0.0
    %5775 = vmatprep.subr.mxu0 0.0
    %5776 = vmatpush1.msra.mxu0 0.0
    %5777 = vmatprep.subr.mxu0 0.0
    %5778 = vmatpush1.msra.mxu0 0.0
    %5779 = vmatprep.subr.mxu0 0.0
    %5780 = vmatpush1.msra.mxu0 0.0
    %5781 = vmatprep.subr.mxu0 0.0
    %5782 = vmatpush1.msra.mxu0 0.0
    %5783 = vmatprep.subr.mxu0 0.0
    %5784 = vmatpush1.msra.mxu0 0.0
    %5785 = vmatprep.subr.mxu0 0.0
    %5786 = vmatpush1.msra.mxu0 0.0
    %5787 = vmatprep.subr.mxu0 0.0
    %5788 = vmatpush1.msra.mxu0 0.0
    %5789 = vmatprep.subr.mxu0 0.0
    %5790 = vmatpush1.msra.mxu0 0.0
    %5791 = vmatprep.subr.mxu0 0.0
    %5792 = vmatpush1.msra.mxu0 0.0
    %5793 = vmatprep.subr.mxu0 0.0
    %5794 = vmatpush1.msra.mxu0 0.0
    %5795 = vmatprep.subr.mxu0 0.0
    %5796 = vmatpush1.msra.mxu0 0.0
    %5797 = vmatprep.subr.mxu0 0.0
    %5798 = vmatpush1.msra.mxu0 0.0
    %5799 = vmatprep.subr.mxu0 0.0
    %5800 = vmatpush1.msra.mxu0 0.0
    %5801 = vmatprep.subr.mxu0 0.0
    %5802 = vmatpush1.msra.mxu0 0.0
    %5803 = vmatprep.subr.mxu0 0.0
    %5804 = vmatpush1.msra.mxu0 0.0
    %5805 = vmatprep.subr.mxu0 0.0
    %5806 = vmatpush1.msra.mxu0 0.0
    %5807 = vmatprep.subr.mxu0 0.0
    %5808 = vmatpush1.msra.mxu0 0.0
    %5809 = vmatprep.subr.mxu0 0.0
    %5810 = vmatpush1.msra.mxu0 0.0
    %5811 = vmatprep.subr.mxu0 0.0
    %5812 = vmatpush1.msra.mxu0 0.0
    %5813 = vmatprep.mubr.f32.mxu0 0.0
    %5814 = vmatmul.mubr.f32.gmra.mrb[0].mxu0 %v5587
    %v5815 = vpop.f32.mrb[0].mxu0
    %v5816 = vadd.f32 %v5584, %v5815
    %v5817 = vpop.f32.mrb[0].mxu0
    %v5818 = vadd.f32 %v5584, %v5817
    %5819 = vdwg.mxu0
    %5820 = vrot.lane.b32.xlu0 %v3859, 32
    %v5821 = vpop.permute.xlu0 %5820
    %5822 = vrot.lane.b32.xlu0 %v3860, 32
    %v5823 = vpop.permute.xlu0 %5822
    %5824 = vrot.lane.b32.xlu0 %v3861, 32
    %v5825 = vpop.permute.xlu0 %5824
    %5826 = vrot.lane.b32.xlu0 %v3862, 32
    %v5827 = vpop.permute.xlu0 %5826
    %5828 = vrot.lane.b32.xlu0 %v3863, 32
    %v5829 = vpop.permute.xlu0 %5828
    %5830 = vrot.lane.b32.xlu0 %v3864, 32
    %v5831 = vpop.permute.xlu0 %5830
    %v5832 = vsel %vm695, %v5829, %v5831
    %v5833 = vsel %vm695, %v5827, %v5829
    %v5834 = vsel %vm695, %v5825, %v5827
    %v5835 = vsel %vm695, %v5823, %v5825
    %v5836 = vsel %vm695, %v5821, %v5823
    %v5837 = vsel %vm695, %v5831, %v5821
    %v5838 = vld [vmem:[%s702] ss:$8 sm:$0xf]
    %v5839 = vld [vmem:[%s702] ss:$8 sm:$0x30]
    %v5840 = vor.u32 %v5838, %v5839
    %v5842 = vlaneseq
    %v5843 = vshrl.u32 %v5842, 7
    %v5844 = vsub.s32 0, %v5843
    %v5845 = vrot.slane %v5840, %v5844
    %v5846 = vlaneseq
    %v5847 = vshrl.u32 %v5846, 7
    %v5848 = vsub.s32 1, %v5847
    %v5849 = vrot.slane %v5840, %v5848
    %v5850 = vlaneseq
    %v5851 = vshrl.u32 %v5850, 7
    %v5852 = vsub.s32 2, %v5851
    %v5853 = vrot.slane %v5840, %v5852
    %v5854 = vlaneseq
    %v5855 = vshrl.u32 %v5854, 7
    %v5856 = vsub.s32 3, %v5855
    %v5857 = vrot.slane %v5840, %v5856
    %v5858 = vlaneseq
    %v5859 = vshrl.u32 %v5858, 7
    %v5860 = vsub.s32 4, %v5859
    %v5861 = vrot.slane %v5840, %v5860
    %v5862 = vlaneseq
    %v5863 = vshrl.u32 %v5862, 7
    %v5864 = vsub.s32 5, %v5863
    %v5865 = vrot.slane %v5840, %v5864
    %v5872 = vmul.f32 %v5837, %v5845
    %v5873 = vmul.f32 %v5836, %v5849
    %v5874 = vmul.f32 %v5835, %v5853
    %v5875 = vmul.f32 %v5834, %v5857
    %v5876 = vmul.f32 %v5833, %v5861
    %v5877 = vmul.f32 %v5832, %v5865
    %5878 = vst [vmem:[#allocation2] sm:$0x7f] %v5872
    %5879 = vst [vmem:[#allocation2 + $0x8] sm:$0x7f] %v5873
    %5880 = vst [vmem:[#allocation2 + $0x10] sm:$0x7f] %v5874
    %5881 = vst [vmem:[#allocation2 + $0x18] sm:$0x7f] %v5875
    %5882 = vst [vmem:[#allocation2 + $0x20] sm:$0x7f] %v5876
    %5883 = vst [vmem:[#allocation2 + $0x28] sm:$0x7f] %v5877
    %5884 = vrot.lane.b32.xlu0 %v3859, 16
    %v5885 = vpop.permute.xlu0 %5884
    %5886 = vrot.lane.b32.xlu0 %v3860, 16
    %v5887 = vpop.permute.xlu0 %5886
    %5888 = vrot.lane.b32.xlu0 %v3861, 16
    %v5889 = vpop.permute.xlu0 %5888
    %5890 = vrot.lane.b32.xlu0 %v3862, 16
    %v5891 = vpop.permute.xlu0 %5890
    %5892 = vrot.lane.b32.xlu0 %v3863, 16
    %v5893 = vpop.permute.xlu0 %5892
    %5894 = vrot.lane.b32.xlu0 %v3864, 16
    %v5895 = vpop.permute.xlu0 %5894
    %v5896 = vsel %vm1097, %v5893, %v5895
    %v5897 = vsel %vm1097, %v5891, %v5893
    %v5898 = vsel %vm1097, %v5889, %v5891
    %v5899 = vsel %vm1097, %v5887, %v5889
    %v5900 = vsel %vm1097, %v5885, %v5887
    %v5901 = vsel %vm1097, %v5895, %v5885
    %v5902 = vld [vmem:[%s1104] ss:$8 sm:$0xf]
    %v5903 = vld [vmem:[%s1104] ss:$8 sm:$0x30]
    %v5904 = vor.u32 %v5902, %v5903
    %v5906 = vlaneseq
    %v5907 = vshrl.u32 %v5906, 7
    %v5908 = vsub.s32 0, %v5907
    %v5909 = vrot.slane %v5904, %v5908
    %v5910 = vlaneseq
    %v5911 = vshrl.u32 %v5910, 7
    %v5912 = vsub.s32 1, %v5911
    %v5913 = vrot.slane %v5904, %v5912
    %v5914 = vlaneseq
    %v5915 = vshrl.u32 %v5914, 7
    %v5916 = vsub.s32 2, %v5915
    %v5917 = vrot.slane %v5904, %v5916
    %v5918 = vlaneseq
    %v5919 = vshrl.u32 %v5918, 7
    %v5920 = vsub.s32 3, %v5919
    %v5921 = vrot.slane %v5904, %v5920
    %v5922 = vlaneseq
    %v5923 = vshrl.u32 %v5922, 7
    %v5924 = vsub.s32 4, %v5923
    %v5925 = vrot.slane %v5904, %v5924
    %v5926 = vlaneseq
    %v5927 = vshrl.u32 %v5926, 7
    %v5928 = vsub.s32 5, %v5927
    %v5929 = vrot.slane %v5904, %v5928
    %v5936 = vmul.f32 %v5901, %v5909
    %v5937 = vmul.f32 %v5900, %v5913
    %v5938 = vmul.f32 %v5899, %v5917
    %v5939 = vmul.f32 %v5898, %v5921
    %v5940 = vmul.f32 %v5897, %v5925
    %v5941 = vmul.f32 %v5896, %v5929
    %v5948 = vrot.slane %v5936, 1
    %v5949 = vrot.slane %v5937, 1
    %v5950 = vrot.slane %v5938, 1
    %v5951 = vrot.slane %v5939, 1
    %v5952 = vrot.slane %v5940, 1
    %v5953 = vrot.slane %v5941, 1
    %5960 = vst [vmem:[#allocation2] sm:$0x80] %v5948
    %5961 = vst [vmem:[#allocation2 + $0x8] sm:$0x80] %v5949
    %5962 = vst [vmem:[#allocation2 + $0x10] sm:$0x80] %v5950
    %5963 = vst [vmem:[#allocation2 + $0x18] sm:$0x80] %v5951
    %5964 = vst [vmem:[#allocation2 + $0x20] sm:$0x80] %v5952
    %5965 = vst [vmem:[#allocation2 + $0x28] sm:$0x80] %v5953
    %5966 = vst [vmem:[#allocation2 + $0x30] sm:$0x3f] %v5948
    %5967 = vst [vmem:[#allocation2 + $0x38] sm:$0x3f] %v5949
    %5968 = vst [vmem:[#allocation2 + $0x40] sm:$0x3f] %v5950
    %5969 = vst [vmem:[#allocation2 + $0x48] sm:$0x3f] %v5951
    %5970 = vst [vmem:[#allocation2 + $0x50] sm:$0x3f] %v5952
    %5971 = vst [vmem:[#allocation2 + $0x58] sm:$0x3f] %v5953
    %v5978 = vrot.slane %v3859, 2
    %v5979 = vrot.slane %v3860, 2
    %v5980 = vrot.slane %v3861, 2
    %v5981 = vrot.slane %v3862, 2
    %v5982 = vrot.slane %v3863, 2
    %v5983 = vrot.slane %v3864, 2
    %5990 = vst [vmem:[#allocation2 + $0x30] sm:$0xc0] %v5978
    %5991 = vst [vmem:[#allocation2 + $0x38] sm:$0xc0] %v5979
    %5992 = vst [vmem:[#allocation2 + $0x40] sm:$0xc0] %v5980
    %5993 = vst [vmem:[#allocation2 + $0x48] sm:$0xc0] %v5981
    %5994 = vst [vmem:[#allocation2 + $0x50] sm:$0xc0] %v5982
    %5995 = vst [vmem:[#allocation2 + $0x58] sm:$0xc0] %v5983
    %5996 = vst [vmem:[#allocation2 + $0x60] sm:$0x1f] %v5978
    %5997 = vst [vmem:[#allocation2 + $0x68] sm:$0x1f] %v5979
    %5998 = vst [vmem:[#allocation2 + $0x70] sm:$0x1f] %v5980
    %5999 = vst [vmem:[#allocation2 + $0x78] sm:$0x1f] %v5981
    %6000 = vst [vmem:[#allocation2 + $0x80] sm:$0x1f] %v5982
    %6001 = vst [vmem:[#allocation2 + $0x88] sm:$0x1f] %v5983
    %6002 = vrot.lane.b32.xlu0 %v3859, 112
    %v6003 = vpop.permute.xlu0 %6002
    %6004 = vrot.lane.b32.xlu0 %v3860, 112
    %v6005 = vpop.permute.xlu0 %6004
    %6006 = vrot.lane.b32.xlu0 %v3861, 112
    %v6007 = vpop.permute.xlu0 %6006
    %6008 = vrot.lane.b32.xlu0 %v3862, 112
    %v6009 = vpop.permute.xlu0 %6008
    %6010 = vrot.lane.b32.xlu0 %v3863, 112
    %v6011 = vpop.permute.xlu0 %6010
    %6012 = vrot.lane.b32.xlu0 %v3864, 112
    %v6013 = vpop.permute.xlu0 %6012
    %v6014 = vsel %vm1823, %v6011, %v6013
    %v6015 = vsel %vm1823, %v6009, %v6011
    %v6016 = vsel %vm1823, %v6007, %v6009
    %v6017 = vsel %vm1823, %v6005, %v6007
    %v6018 = vsel %vm1823, %v6003, %v6005
    %v6019 = vsel %vm1823, %v6013, %v6003
    %v6020 = vld [vmem:[%s1830] ss:$8 sm:$0xf]
    %v6021 = vld [vmem:[%s1830] ss:$8 sm:$0x30]
    %v6022 = vor.u32 %v6020, %v6021
    %v6024 = vlaneseq
    %v6025 = vshrl.u32 %v6024, 7
    %v6026 = vsub.s32 0, %v6025
    %v6027 = vrot.slane %v6022, %v6026
    %v6028 = vlaneseq
    %v6029 = vshrl.u32 %v6028, 7
    %v6030 = vsub.s32 1, %v6029
    %v6031 = vrot.slane %v6022, %v6030
    %v6032 = vlaneseq
    %v6033 = vshrl.u32 %v6032, 7
    %v6034 = vsub.s32 2, %v6033
    %v6035 = vrot.slane %v6022, %v6034
    %v6036 = vlaneseq
    %v6037 = vshrl.u32 %v6036, 7
    %v6038 = vsub.s32 3, %v6037
    %v6039 = vrot.slane %v6022, %v6038
    %v6040 = vlaneseq
    %v6041 = vshrl.u32 %v6040, 7
    %v6042 = vsub.s32 4, %v6041
    %v6043 = vrot.slane %v6022, %v6042
    %v6044 = vlaneseq
    %v6045 = vshrl.u32 %v6044, 7
    %v6046 = vsub.s32 5, %v6045
    %v6047 = vrot.slane %v6022, %v6046
    %v6054 = vmul.f32 %v6018, %v6027
    %v6055 = vmul.f32 %v6017, %v6031
    %v6056 = vmul.f32 %v6016, %v6035
    %v6057 = vmul.f32 %v6015, %v6039
    %v6058 = vmul.f32 %v6014, %v6043
    %v6059 = vmul.f32 %v6019, %v6047
    %v6066 = vrot.slane %v6054, 3
    %v6067 = vrot.slane %v6055, 3
    %v6068 = vrot.slane %v6056, 3
    %v6069 = vrot.slane %v6057, 3
    %v6070 = vrot.slane %v6058, 3
    %v6071 = vrot.slane %v6059, 3
    %6078 = vst [vmem:[#allocation2 + $0x60] sm:$0xe0] %v6066
    %6079 = vst [vmem:[#allocation2 + $0x68] sm:$0xe0] %v6067
    %6080 = vst [vmem:[#allocation2 + $0x70] sm:$0xe0] %v6068
    %6081 = vst [vmem:[#allocation2 + $0x78] sm:$0xe0] %v6069
    %6082 = vst [vmem:[#allocation2 + $0x80] sm:$0xe0] %v6070
    %6083 = vst [vmem:[#allocation2 + $0x88] sm:$0xe0] %v6071
    %6084 = vst [vmem:[#allocation2 + $0x90] sm:$0xf] %v6066
    %6085 = vst [vmem:[#allocation2 + $0x98] sm:$0xf] %v6067
    %6086 = vst [vmem:[#allocation2 + $0xa0] sm:$0xf] %v6068
    %6087 = vst [vmem:[#allocation2 + $0xa8] sm:$0xf] %v6069
    %6088 = vst [vmem:[#allocation2 + $0xb0] sm:$0xf] %v6070
    %6089 = vst [vmem:[#allocation2 + $0xb8] sm:$0xf] %v6071
    %6090 = vrot.lane.b32.xlu0 %v3859, 96
    %v6091 = vpop.permute.xlu0 %6090
    %6092 = vrot.lane.b32.xlu0 %v3860, 96
    %v6093 = vpop.permute.xlu0 %6092
    %6094 = vrot.lane.b32.xlu0 %v3861, 96
    %v6095 = vpop.permute.xlu0 %6094
    %6096 = vrot.lane.b32.xlu0 %v3862, 96
    %v6097 = vpop.permute.xlu0 %6096
    %6098 = vrot.lane.b32.xlu0 %v3863, 96
    %v6099 = vpop.permute.xlu0 %6098
    %6100 = vrot.lane.b32.xlu0 %v3864, 96
    %v6101 = vpop.permute.xlu0 %6100
    %v6102 = vsel %vm2225, %v6099, %v6101
    %v6103 = vsel %vm2225, %v6097, %v6099
    %v6104 = vsel %vm2225, %v6095, %v6097
    %v6105 = vsel %vm2225, %v6093, %v6095
    %v6106 = vsel %vm2225, %v6091, %v6093
    %v6107 = vsel %vm2225, %v6101, %v6091
    %v6108 = vld [vmem:[%s2232] ss:$8 sm:$0xf]
    %v6109 = vld [vmem:[%s2232] ss:$8 sm:$0x30]
    %v6110 = vor.u32 %v6108, %v6109
    %v6112 = vlaneseq
    %v6113 = vshrl.u32 %v6112, 7
    %v6114 = vsub.s32 0, %v6113
    %v6115 = vrot.slane %v6110, %v6114
    %v6116 = vlaneseq
    %v6117 = vshrl.u32 %v6116, 7
    %v6118 = vsub.s32 1, %v6117
    %v6119 = vrot.slane %v6110, %v6118
    %v6120 = vlaneseq
    %v6121 = vshrl.u32 %v6120, 7
    %v6122 = vsub.s32 2, %v6121
    %v6123 = vrot.slane %v6110, %v6122
    %v6124 = vlaneseq
    %v6125 = vshrl.u32 %v6124, 7
    %v6126 = vsub.s32 3, %v6125
    %v6127 = vrot.slane %v6110, %v6126
    %v6128 = vlaneseq
    %v6129 = vshrl.u32 %v6128, 7
    %v6130 = vsub.s32 4, %v6129
    %v6131 = vrot.slane %v6110, %v6130
    %v6132 = vlaneseq
    %v6133 = vshrl.u32 %v6132, 7
    %v6134 = vsub.s32 5, %v6133
    %v6135 = vrot.slane %v6110, %v6134
    %v6142 = vmul.f32 %v6106, %v6115
    %v6143 = vmul.f32 %v6105, %v6119
    %v6144 = vmul.f32 %v6104, %v6123
    %v6145 = vmul.f32 %v6103, %v6127
    %v6146 = vmul.f32 %v6102, %v6131
    %v6147 = vmul.f32 %v6107, %v6135
    %v6154 = vrot.slane %v6142, 4
    %v6155 = vrot.slane %v6143, 4
    %v6156 = vrot.slane %v6144, 4
    %v6157 = vrot.slane %v6145, 4
    %v6158 = vrot.slane %v6146, 4
    %v6159 = vrot.slane %v6147, 4
    %6166 = vst [vmem:[#allocation2 + $0x90] sm:$0xf0] %v6154
    %6167 = vst [vmem:[#allocation2 + $0x98] sm:$0xf0] %v6155
    %6168 = vst [vmem:[#allocation2 + $0xa0] sm:$0xf0] %v6156
    %6169 = vst [vmem:[#allocation2 + $0xa8] sm:$0xf0] %v6157
    %6170 = vst [vmem:[#allocation2 + $0xb0] sm:$0xf0] %v6158
    %6171 = vst [vmem:[#allocation2 + $0xb8] sm:$0xf0] %v6159
    %6172 = vst [vmem:[#allocation2 + $0xc0] sm:$0x7] %v6154
    %6173 = vst [vmem:[#allocation2 + $0xc8] sm:$0x7] %v6155
    %6174 = vst [vmem:[#allocation2 + $0xd0] sm:$0x7] %v6156
    %6175 = vst [vmem:[#allocation2 + $0xd8] sm:$0x7] %v6157
    %6176 = vst [vmem:[#allocation2 + $0xe0] sm:$0x7] %v6158
    %6177 = vst [vmem:[#allocation2 + $0xe8] sm:$0x7] %v6159
    %v6178 = vld [vmem:[#allocation7 + $0x20] sm:$0x7f]
    %v6179 = vld [vmem:[#allocation2] sm:$0xff]
    %v6180 = vld [vmem:[#allocation2 + $0x8] sm:$0xff]
    %v6181 = vld [vmem:[#allocation2 + $0x10] sm:$0xff]
    %v6182 = vld [vmem:[#allocation2 + $0x18] sm:$0xff]
    %v6183 = vld [vmem:[#allocation2 + $0x20] sm:$0xff]
    %v6184 = vld [vmem:[#allocation2 + $0x28] sm:$0xff]
    %v6185 = vld [vmem:[#allocation2 + $0x30] sm:$0xff]
    %v6186 = vld [vmem:[#allocation2 + $0x38] sm:$0xff]
    %v6187 = vld [vmem:[#allocation2 + $0x40] sm:$0xff]
    %v6188 = vld [vmem:[#allocation2 + $0x48] sm:$0xff]
    %v6189 = vld [vmem:[#allocation2 + $0x50] sm:$0xff]
    %v6190 = vld [vmem:[#allocation2 + $0x58] sm:$0xff]
    %v6191 = vld [vmem:[#allocation2 + $0x60] sm:$0xff]
    %v6192 = vld [vmem:[#allocation2 + $0x68] sm:$0xff]
    %v6193 = vld [vmem:[#allocation2 + $0x70] sm:$0xff]
    %v6194 = vld [vmem:[#allocation2 + $0x78] sm:$0xff]
    %v6195 = vld [vmem:[#allocation2 + $0x80] sm:$0xff]
    %v6196 = vld [vmem:[#allocation2 + $0x88] sm:$0xff]
    %v6197 = vld [vmem:[#allocation2 + $0x90] sm:$0xff]
    %v6198 = vld [vmem:[#allocation2 + $0x98] sm:$0xff]
    %v6199 = vld [vmem:[#allocation2 + $0xa0] sm:$0xff]
    %v6200 = vld [vmem:[#allocation2 + $0xa8] sm:$0xff]
    %v6201 = vld [vmem:[#allocation2 + $0xb0] sm:$0xff]
    %v6202 = vld [vmem:[#allocation2 + $0xb8] sm:$0xff]
    %v6203 = vld [vmem:[#allocation2 + $0xc0] sm:$0x7]
    %v6204 = vld [vmem:[#allocation2 + $0xc8] sm:$0x7]
    %v6205 = vld [vmem:[#allocation2 + $0xd0] sm:$0x7]
    %v6206 = vld [vmem:[#allocation2 + $0xd8] sm:$0x7]
    %v6207 = vld [vmem:[#allocation2 + $0xe0] sm:$0x7]
    %v6208 = vld [vmem:[#allocation2 + $0xe8] sm:$0x7]
    %v6209 = vld [vmem:[#allocation8] sm:$0x7f]
    %6211 = vset.pattern.permute.xlu0 4
    %6212 = vperm.xlu0 %6211, %v6209
    %v6213 = vpop.permute.xlu0 %6212
    %vm6215 = vcmask 285696
    %v6217 = vsel %vm6215, %v6178, 0
    %vm6219 = vcmask 1042432
    %v6221 = vsel %vm6219, %v6203, 0
    %v6224 = vsel %vm6219, %v6204, 0
    %v6227 = vsel %vm6219, %v6205, 0
    %v6230 = vsel %vm6219, %v6206, 0
    %v6233 = vsel %vm6219, %v6207, 0
    %v6236 = vsel %vm6219, %v6208, 0
    %6238 = vmatprep.subr.mxu0 %v6180
    %6239 = vmatpush1.msra.mxu0 %v6179
    %6240 = vmatprep.subr.mxu0 %v6186
    %6241 = vmatpush1.msra.mxu0 %v6185
    %6242 = vmatprep.subr.mxu0 %v6192
    %6243 = vmatpush1.msra.mxu0 %v6191
    %6244 = vmatprep.subr.mxu0 %v6198
    %6245 = vmatpush1.msra.mxu0 %v6197
    %6246 = vmatprep.subr.mxu0 %v6224
    %6247 = vmatpush1.msra.mxu0 %v6221
    %6248 = vmatprep.subr.mxu0 0.0
    %6249 = vmatpush1.msra.mxu0 0.0
    %6250 = vmatprep.subr.mxu0 0.0
    %6251 = vmatpush1.msra.mxu0 0.0
    %6252 = vmatprep.subr.mxu0 0.0
    %6253 = vmatpush1.msra.mxu0 0.0
    %6254 = vmatprep.subr.mxu0 0.0
    %6255 = vmatpush1.msra.mxu0 0.0
    %6256 = vmatprep.subr.mxu0 0.0
    %6257 = vmatpush1.msra.mxu0 0.0
    %6258 = vmatprep.subr.mxu0 0.0
    %6259 = vmatpush1.msra.mxu0 0.0
    %6260 = vmatprep.subr.mxu0 0.0
    %6261 = vmatpush1.msra.mxu0 0.0
    %6262 = vmatprep.subr.mxu0 0.0
    %6263 = vmatpush1.msra.mxu0 0.0
    %6264 = vmatprep.subr.mxu0 0.0
    %6265 = vmatpush1.msra.mxu0 0.0
    %6266 = vmatprep.subr.mxu0 0.0
    %6267 = vmatpush1.msra.mxu0 0.0
    %6268 = vmatprep.subr.mxu0 0.0
    %6269 = vmatpush1.msra.mxu0 0.0
    %6270 = vmatprep.subr.mxu0 0.0
    %6271 = vmatpush1.msra.mxu0 0.0
    %6272 = vmatprep.subr.mxu0 0.0
    %6273 = vmatpush1.msra.mxu0 0.0
    %6274 = vmatprep.subr.mxu0 0.0
    %6275 = vmatpush1.msra.mxu0 0.0
    %6276 = vmatprep.subr.mxu0 0.0
    %6277 = vmatpush1.msra.mxu0 0.0
    %6278 = vmatprep.subr.mxu0 0.0
    %6279 = vmatpush1.msra.mxu0 0.0
    %6280 = vmatprep.subr.mxu0 0.0
    %6281 = vmatpush1.msra.mxu0 0.0
    %6282 = vmatprep.subr.mxu0 0.0
    %6283 = vmatpush1.msra.mxu0 0.0
    %6284 = vmatprep.subr.mxu0 0.0
    %6285 = vmatpush1.msra.mxu0 0.0
    %6286 = vmatprep.subr.mxu0 0.0
    %6287 = vmatpush1.msra.mxu0 0.0
    %6288 = vmatprep.subr.mxu0 0.0
    %6289 = vmatpush1.msra.mxu0 0.0
    %6290 = vmatprep.subr.mxu0 0.0
    %6291 = vmatpush1.msra.mxu0 0.0
    %6292 = vmatprep.subr.mxu0 0.0
    %6293 = vmatpush1.msra.mxu0 0.0
    %6294 = vmatprep.subr.mxu0 0.0
    %6295 = vmatpush1.msra.mxu0 0.0
    %6296 = vmatprep.subr.mxu0 0.0
    %6297 = vmatpush1.msra.mxu0 0.0
    %6298 = vmatprep.subr.mxu0 0.0
    %6299 = vmatpush1.msra.mxu0 0.0
    %6300 = vmatprep.subr.mxu0 0.0
    %6301 = vmatpush1.msra.mxu0 0.0
    %6302 = vmatprep.mubr.f32.mxu0 0.0
    %6303 = vmatmul.mubr.f32.gmra.mrb[0].mxu0 %v6217
    %v6304 = vpop.f32.mrb[0].mxu0
    %v6305 = vadd.f32 %v6213, %v6304
    %v6306 = vpop.f32.mrb[0].mxu0
    %v6307 = vadd.f32 %v6213, %v6306
    %6308 = vdwg.mxu0
    %6309 = vmatprep.subr.mxu0 %v6182
    %6310 = vmatpush1.msra.mxu0 %v6181
    %6311 = vmatprep.subr.mxu0 %v6188
    %6312 = vmatpush1.msra.mxu0 %v6187
    %6313 = vmatprep.subr.mxu0 %v6194
    %6314 = vmatpush1.msra.mxu0 %v6193
    %6315 = vmatprep.subr.mxu0 %v6200
    %6316 = vmatpush1.msra.mxu0 %v6199
    %6317 = vmatprep.subr.mxu0 %v6230
    %6318 = vmatpush1.msra.mxu0 %v6227
    %6319 = vmatprep.subr.mxu0 0.0
    %6320 = vmatpush1.msra.mxu0 0.0
    %6321 = vmatprep.subr.mxu0 0.0
    %6322 = vmatpush1.msra.mxu0 0.0
    %6323 = vmatprep.subr.mxu0 0.0
    %6324 = vmatpush1.msra.mxu0 0.0
    %6325 = vmatprep.subr.mxu0 0.0
    %6326 = vmatpush1.msra.mxu0 0.0
    %6327 = vmatprep.subr.mxu0 0.0
    %6328 = vmatpush1.msra.mxu0 0.0
    %6329 = vmatprep.subr.mxu0 0.0
    %6330 = vmatpush1.msra.mxu0 0.0
    %6331 = vmatprep.subr.mxu0 0.0
    %6332 = vmatpush1.msra.mxu0 0.0
    %6333 = vmatprep.subr.mxu0 0.0
    %6334 = vmatpush1.msra.mxu0 0.0
    %6335 = vmatprep.subr.mxu0 0.0
    %6336 = vmatpush1.msra.mxu0 0.0
    %6337 = vmatprep.subr.mxu0 0.0
    %6338 = vmatpush1.msra.mxu0 0.0
    %6339 = vmatprep.subr.mxu0 0.0
    %6340 = vmatpush1.msra.mxu0 0.0
    %6341 = vmatprep.subr.mxu0 0.0
    %6342 = vmatpush1.msra.mxu0 0.0
    %6343 = vmatprep.subr.mxu0 0.0
    %6344 = vmatpush1.msra.mxu0 0.0
    %6345 = vmatprep.subr.mxu0 0.0
    %6346 = vmatpush1.msra.mxu0 0.0
    %6347 = vmatprep.subr.mxu0 0.0
    %6348 = vmatpush1.msra.mxu0 0.0
    %6349 = vmatprep.subr.mxu0 0.0
    %6350 = vmatpush1.msra.mxu0 0.0
    %6351 = vmatprep.subr.mxu0 0.0
    %6352 = vmatpush1.msra.mxu0 0.0
    %6353 = vmatprep.subr.mxu0 0.0
    %6354 = vmatpush1.msra.mxu0 0.0
    %6355 = vmatprep.subr.mxu0 0.0
    %6356 = vmatpush1.msra.mxu0 0.0
    %6357 = vmatprep.subr.mxu0 0.0
    %6358 = vmatpush1.msra.mxu0 0.0
    %6359 = vmatprep.subr.mxu0 0.0
    %6360 = vmatpush1.msra.mxu0 0.0
    %6361 = vmatprep.subr.mxu0 0.0
    %6362 = vmatpush1.msra.mxu0 0.0
    %6363 = vmatprep.subr.mxu0 0.0
    %6364 = vmatpush1.msra.mxu0 0.0
    %6365 = vmatprep.subr.mxu0 0.0
    %6366 = vmatpush1.msra.mxu0 0.0
    %6367 = vmatprep.subr.mxu0 0.0
    %6368 = vmatpush1.msra.mxu0 0.0
    %6369 = vmatprep.subr.mxu0 0.0
    %6370 = vmatpush1.msra.mxu0 0.0
    %6371 = vmatprep.subr.mxu0 0.0
    %6372 = vmatpush1.msra.mxu0 0.0
    %6373 = vmatprep.mubr.f32.mxu0 0.0
    %6374 = vmatmul.mubr.f32.gmra.mrb[0].mxu0 %v6217
    %v6375 = vpop.f32.mrb[0].mxu0
    %v6376 = vadd.f32 %v6213, %v6375
    %v6377 = vpop.f32.mrb[0].mxu0
    %v6378 = vadd.f32 %v6213, %v6377
    %6379 = vdwg.mxu0
    %6380 = vmatprep.subr.mxu0 %v6184
    %6381 = vmatpush1.msra.mxu0 %v6183
    %6382 = vmatprep.subr.mxu0 %v6190
    %6383 = vmatpush1.msra.mxu0 %v6189
    %6384 = vmatprep.subr.mxu0 %v6196
    %6385 = vmatpush1.msra.mxu0 %v6195
    %6386 = vmatprep.subr.mxu0 %v6202
    %6387 = vmatpush1.msra.mxu0 %v6201
    %6388 = vmatprep.subr.mxu0 %v6236
    %6389 = vmatpush1.msra.mxu0 %v6233
    %6390 = vmatprep.subr.mxu0 0.0
    %6391 = vmatpush1.msra.mxu0 0.0
    %6392 = vmatprep.subr.mxu0 0.0
    %6393 = vmatpush1.msra.mxu0 0.0
    %6394 = vmatprep.subr.mxu0 0.0
    %6395 = vmatpush1.msra.mxu0 0.0
    %6396 = vmatprep.subr.mxu0 0.0
    %6397 = vmatpush1.msra.mxu0 0.0
    %6398 = vmatprep.subr.mxu0 0.0
    %6399 = vmatpush1.msra.mxu0 0.0
    %6400 = vmatprep.subr.mxu0 0.0
    %6401 = vmatpush1.msra.mxu0 0.0
    %6402 = vmatprep.subr.mxu0 0.0
    %6403 = vmatpush1.msra.mxu0 0.0
    %6404 = vmatprep.subr.mxu0 0.0
    %6405 = vmatpush1.msra.mxu0 0.0
    %6406 = vmatprep.subr.mxu0 0.0
    %6407 = vmatpush1.msra.mxu0 0.0
    %6408 = vmatprep.subr.mxu0 0.0
    %6409 = vmatpush1.msra.mxu0 0.0
    %6410 = vmatprep.subr.mxu0 0.0
    %6411 = vmatpush1.msra.mxu0 0.0
    %6412 = vmatprep.subr.mxu0 0.0
    %6413 = vmatpush1.msra.mxu0 0.0
    %6414 = vmatprep.subr.mxu0 0.0
    %6415 = vmatpush1.msra.mxu0 0.0
    %6416 = vmatprep.subr.mxu0 0.0
    %6417 = vmatpush1.msra.mxu0 0.0
    %6418 = vmatprep.subr.mxu0 0.0
    %6419 = vmatpush1.msra.mxu0 0.0
    %6420 = vmatprep.subr.mxu0 0.0
    %6421 = vmatpush1.msra.mxu0 0.0
    %6422 = vmatprep.subr.mxu0 0.0
    %6423 = vmatpush1.msra.mxu0 0.0
    %6424 = vmatprep.subr.mxu0 0.0
    %6425 = vmatpush1.msra.mxu0 0.0
    %6426 = vmatprep.subr.mxu0 0.0
    %6427 = vmatpush1.msra.mxu0 0.0
    %6428 = vmatprep.subr.mxu0 0.0
    %6429 = vmatpush1.msra.mxu0 0.0
    %6430 = vmatprep.subr.mxu0 0.0
    %6431 = vmatpush1.msra.mxu0 0.0
    %6432 = vmatprep.subr.mxu0 0.0
    %6433 = vmatpush1.msra.mxu0 0.0
    %6434 = vmatprep.subr.mxu0 0.0
    %6435 = vmatpush1.msra.mxu0 0.0
    %6436 = vmatprep.subr.mxu0 0.0
    %6437 = vmatpush1.msra.mxu0 0.0
    %6438 = vmatprep.subr.mxu0 0.0
    %6439 = vmatpush1.msra.mxu0 0.0
    %6440 = vmatprep.subr.mxu0 0.0
    %6441 = vmatpush1.msra.mxu0 0.0
    %6442 = vmatprep.subr.mxu0 0.0
    %6443 = vmatpush1.msra.mxu0 0.0
    %6444 = vmatprep.mubr.f32.mxu0 0.0
    %6445 = vmatmul.mubr.f32.gmra.mrb[0].mxu0 %v6217
    %v6446 = vpop.f32.mrb[0].mxu0
    %v6447 = vadd.f32 %v6213, %v6446
    %v6448 = vpop.f32.mrb[0].mxu0
    %v6449 = vadd.f32 %v6213, %v6448
    %6450 = vdwg.mxu0
    %vm6451 = vcmp.ge.f32.partialorder %v5674, 0.0
    %vm6452 = vcmp.ge.f32.partialorder %v5676, 0.0
    %vm6453 = vcmp.ge.f32.partialorder %v5745, 0.0
    %vm6454 = vcmp.ge.f32.partialorder %v5747, 0.0
    %vm6455 = vcmp.ge.f32.partialorder %v5816, 0.0
    %vm6456 = vcmp.ge.f32.partialorder %v5818, 0.0
    %v6457 = vmul.f32 %v5674, 0.3
    %v6458 = vmul.f32 %v5676, 0.3
    %v6459 = vmul.f32 %v5745, 0.3
    %v6460 = vmul.f32 %v5747, 0.3
    %v6461 = vmul.f32 %v5816, 0.3
    %v6462 = vmul.f32 %v5818, 0.3
    %v6463 = vsel %vm6451, %v5674, %v6457
    %v6464 = vsel %vm6452, %v5676, %v6458
    %v6465 = vsel %vm6453, %v5745, %v6459
    %v6466 = vsel %vm6454, %v5747, %v6460
    %v6467 = vsel %vm6455, %v5816, %v6461
    %v6468 = vsel %vm6456, %v5818, %v6462
    %vm6469 = vcmp.ge.f32.partialorder %v6305, 0.0
    %vm6470 = vcmp.ge.f32.partialorder %v6307, 0.0
    %vm6471 = vcmp.ge.f32.partialorder %v6376, 0.0
    %vm6472 = vcmp.ge.f32.partialorder %v6378, 0.0
    %vm6473 = vcmp.ge.f32.partialorder %v6447, 0.0
    %vm6474 = vcmp.ge.f32.partialorder %v6449, 0.0
    %v6475 = vmul.f32 %v6305, 0.3
    %v6476 = vmul.f32 %v6307, 0.3
    %v6477 = vmul.f32 %v6376, 0.3
    %v6478 = vmul.f32 %v6378, 0.3
    %v6479 = vmul.f32 %v6447, 0.3
    %v6480 = vmul.f32 %v6449, 0.3
    %v6481 = vsel %vm6469, %v6305, %v6475
    %v6482 = vsel %vm6470, %v6307, %v6476
    %v6483 = vsel %vm6471, %v6376, %v6477
    %v6484 = vsel %vm6472, %v6378, %v6478
    %v6485 = vsel %vm6473, %v6447, %v6479
    %v6486 = vsel %vm6474, %v6449, %v6480
    %v6487 = vld [vmem:[#allocation7 + $0x28] sm:$0x3]
    %v6488 = vld [vmem:[#allocation7 + $0x30] sm:$0x3]
    %vm6489 = vcmask 56320
    %v6491 = vsel %vm6489, %v6488, 0
    %v6494 = vsel %vm4612, %v6481, 0
    %v6497 = vsel %vm4612, %v6482, 0
    %v6500 = vsel %vm4612, %v6483, 0
    %v6503 = vsel %vm4612, %v6484, 0
    %v6506 = vsel %vm4612, %v6485, 0
    %v6509 = vsel %vm4612, %v6486, 0
    %6511 = vmatprep.subr.mxu0 %v6497
    %6512 = vmatpush1.msra.mxu0 %v6494
    %6513 = vmatprep.subr.mxu0 0.0
    %6514 = vmatpush1.msra.mxu0 0.0
    %6515 = vmatprep.subr.mxu0 0.0
    %6516 = vmatpush1.msra.mxu0 0.0
    %6517 = vmatprep.subr.mxu0 0.0
    %6518 = vmatpush1.msra.mxu0 0.0
    %6519 = vmatprep.subr.mxu0 0.0
    %6520 = vmatpush1.msra.mxu0 0.0
    %6521 = vmatprep.subr.mxu0 0.0
    %6522 = vmatpush1.msra.mxu0 0.0
    %6523 = vmatprep.subr.mxu0 0.0
    %6524 = vmatpush1.msra.mxu0 0.0
    %6525 = vmatprep.subr.mxu0 0.0
    %6526 = vmatpush1.msra.mxu0 0.0
    %6527 = vmatprep.subr.mxu0 0.0
    %6528 = vmatpush1.msra.mxu0 0.0
    %6529 = vmatprep.subr.mxu0 0.0
    %6530 = vmatpush1.msra.mxu0 0.0
    %6531 = vmatprep.subr.mxu0 0.0
    %6532 = vmatpush1.msra.mxu0 0.0
    %6533 = vmatprep.subr.mxu0 0.0
    %6534 = vmatpush1.msra.mxu0 0.0
    %6535 = vmatprep.subr.mxu0 0.0
    %6536 = vmatpush1.msra.mxu0 0.0
    %6537 = vmatprep.subr.mxu0 0.0
    %6538 = vmatpush1.msra.mxu0 0.0
    %6539 = vmatprep.subr.mxu0 0.0
    %6540 = vmatpush1.msra.mxu0 0.0
    %6541 = vmatprep.subr.mxu0 0.0
    %6542 = vmatpush1.msra.mxu0 0.0
    %6543 = vmatprep.subr.mxu0 0.0
    %6544 = vmatpush1.msra.mxu0 0.0
    %6545 = vmatprep.subr.mxu0 0.0
    %6546 = vmatpush1.msra.mxu0 0.0
    %6547 = vmatprep.subr.mxu0 0.0
    %6548 = vmatpush1.msra.mxu0 0.0
    %6549 = vmatprep.subr.mxu0 0.0
    %6550 = vmatpush1.msra.mxu0 0.0
    %6551 = vmatprep.subr.mxu0 0.0
    %6552 = vmatpush1.msra.mxu0 0.0
    %6553 = vmatprep.subr.mxu0 0.0
    %6554 = vmatpush1.msra.mxu0 0.0
    %6555 = vmatprep.subr.mxu0 0.0
    %6556 = vmatpush1.msra.mxu0 0.0
    %6557 = vmatprep.subr.mxu0 0.0
    %6558 = vmatpush1.msra.mxu0 0.0
    %6559 = vmatprep.subr.mxu0 0.0
    %6560 = vmatpush1.msra.mxu0 0.0
    %6561 = vmatprep.subr.mxu0 0.0
    %6562 = vmatpush1.msra.mxu0 0.0
    %6563 = vmatprep.subr.mxu0 0.0
    %6564 = vmatpush1.msra.mxu0 0.0
    %6565 = vmatprep.subr.mxu0 0.0
    %6566 = vmatpush1.msra.mxu0 0.0
    %6567 = vmatprep.subr.mxu0 0.0
    %6568 = vmatpush1.msra.mxu0 0.0
    %6569 = vmatprep.subr.mxu0 0.0
    %6570 = vmatpush1.msra.mxu0 0.0
    %6571 = vmatprep.subr.mxu0 0.0
    %6572 = vmatpush1.msra.mxu0 0.0
    %6573 = vmatprep.subr.mxu0 0.0
    %6574 = vmatpush1.msra.mxu0 0.0
    %6575 = vmatprep.mubr.f32.mxu0 0.0
    %6576 = vmatmul.mubr.f32.gmra.mrb[0].mxu0 %v6491
    %v6577 = vpop.f32.mrb[0].mxu0
    %v6578 = vadd.f32 0.0, %v6577
    %v6579 = vpop.f32.mrb[0].mxu0
    %v6580 = vadd.f32 0.0, %v6579
    %6581 = vdwg.mxu0
    %6582 = vmatprep.subr.mxu0 %v6503
    %6583 = vmatpush1.msra.mxu0 %v6500
    %6584 = vmatprep.subr.mxu0 0.0
    %6585 = vmatpush1.msra.mxu0 0.0
    %6586 = vmatprep.subr.mxu0 0.0
    %6587 = vmatpush1.msra.mxu0 0.0
    %6588 = vmatprep.subr.mxu0 0.0
    %6589 = vmatpush1.msra.mxu0 0.0
    %6590 = vmatprep.subr.mxu0 0.0
    %6591 = vmatpush1.msra.mxu0 0.0
    %6592 = vmatprep.subr.mxu0 0.0
    %6593 = vmatpush1.msra.mxu0 0.0
    %6594 = vmatprep.subr.mxu0 0.0
    %6595 = vmatpush1.msra.mxu0 0.0
    %6596 = vmatprep.subr.mxu0 0.0
    %6597 = vmatpush1.msra.mxu0 0.0
    %6598 = vmatprep.subr.mxu0 0.0
    %6599 = vmatpush1.msra.mxu0 0.0
    %6600 = vmatprep.subr.mxu0 0.0
    %6601 = vmatpush1.msra.mxu0 0.0
    %6602 = vmatprep.subr.mxu0 0.0
    %6603 = vmatpush1.msra.mxu0 0.0
    %6604 = vmatprep.subr.mxu0 0.0
    %6605 = vmatpush1.msra.mxu0 0.0
    %6606 = vmatprep.subr.mxu0 0.0
    %6607 = vmatpush1.msra.mxu0 0.0
    %6608 = vmatprep.subr.mxu0 0.0
    %6609 = vmatpush1.msra.mxu0 0.0
    %6610 = vmatprep.subr.mxu0 0.0
    %6611 = vmatpush1.msra.mxu0 0.0
    %6612 = vmatprep.subr.mxu0 0.0
    %6613 = vmatpush1.msra.mxu0 0.0
    %6614 = vmatprep.subr.mxu0 0.0
    %6615 = vmatpush1.msra.mxu0 0.0
    %6616 = vmatprep.subr.mxu0 0.0
    %6617 = vmatpush1.msra.mxu0 0.0
    %6618 = vmatprep.subr.mxu0 0.0
    %6619 = vmatpush1.msra.mxu0 0.0
    %6620 = vmatprep.subr.mxu0 0.0
    %6621 = vmatpush1.msra.mxu0 0.0
    %6622 = vmatprep.subr.mxu0 0.0
    %6623 = vmatpush1.msra.mxu0 0.0
    %6624 = vmatprep.subr.mxu0 0.0
    %6625 = vmatpush1.msra.mxu0 0.0
    %6626 = vmatprep.subr.mxu0 0.0
    %6627 = vmatpush1.msra.mxu0 0.0
    %6628 = vmatprep.subr.mxu0 0.0
    %6629 = vmatpush1.msra.mxu0 0.0
    %6630 = vmatprep.subr.mxu0 0.0
    %6631 = vmatpush1.msra.mxu0 0.0
    %6632 = vmatprep.subr.mxu0 0.0
    %6633 = vmatpush1.msra.mxu0 0.0
    %6634 = vmatprep.subr.mxu0 0.0
    %6635 = vmatpush1.msra.mxu0 0.0
    %6636 = vmatprep.subr.mxu0 0.0
    %6637 = vmatpush1.msra.mxu0 0.0
    %6638 = vmatprep.subr.mxu0 0.0
    %6639 = vmatpush1.msra.mxu0 0.0
    %6640 = vmatprep.subr.mxu0 0.0
    %6641 = vmatpush1.msra.mxu0 0.0
    %6642 = vmatprep.subr.mxu0 0.0
    %6643 = vmatpush1.msra.mxu0 0.0
    %6644 = vmatprep.subr.mxu0 0.0
    %6645 = vmatpush1.msra.mxu0 0.0
    %6646 = vmatprep.mubr.f32.mxu0 0.0
    %6647 = vmatmul.mubr.f32.gmra.mrb[0].mxu0 %v6491
    %v6648 = vpop.f32.mrb[0].mxu0
    %v6649 = vadd.f32 0.0, %v6648
    %v6650 = vpop.f32.mrb[0].mxu0
    %v6651 = vadd.f32 0.0, %v6650
    %6652 = vdwg.mxu0
    %6653 = vmatprep.subr.mxu0 %v6509
    %6654 = vmatpush1.msra.mxu0 %v6506
    %6655 = vmatprep.subr.mxu0 0.0
    %6656 = vmatpush1.msra.mxu0 0.0
    %6657 = vmatprep.subr.mxu0 0.0
    %6658 = vmatpush1.msra.mxu0 0.0
    %6659 = vmatprep.subr.mxu0 0.0
    %6660 = vmatpush1.msra.mxu0 0.0
    %6661 = vmatprep.subr.mxu0 0.0
    %6662 = vmatpush1.msra.mxu0 0.0
    %6663 = vmatprep.subr.mxu0 0.0
    %6664 = vmatpush1.msra.mxu0 0.0
    %6665 = vmatprep.subr.mxu0 0.0
    %6666 = vmatpush1.msra.mxu0 0.0
    %6667 = vmatprep.subr.mxu0 0.0
    %6668 = vmatpush1.msra.mxu0 0.0
    %6669 = vmatprep.subr.mxu0 0.0
    %6670 = vmatpush1.msra.mxu0 0.0
    %6671 = vmatprep.subr.mxu0 0.0
    %6672 = vmatpush1.msra.mxu0 0.0
    %6673 = vmatprep.subr.mxu0 0.0
    %6674 = vmatpush1.msra.mxu0 0.0
    %6675 = vmatprep.subr.mxu0 0.0
    %6676 = vmatpush1.msra.mxu0 0.0
    %6677 = vmatprep.subr.mxu0 0.0
    %6678 = vmatpush1.msra.mxu0 0.0
    %6679 = vmatprep.subr.mxu0 0.0
    %6680 = vmatpush1.msra.mxu0 0.0
    %6681 = vmatprep.subr.mxu0 0.0
    %6682 = vmatpush1.msra.mxu0 0.0
    %6683 = vmatprep.subr.mxu0 0.0
    %6684 = vmatpush1.msra.mxu0 0.0
    %6685 = vmatprep.subr.mxu0 0.0
    %6686 = vmatpush1.msra.mxu0 0.0
    %6687 = vmatprep.subr.mxu0 0.0
    %6688 = vmatpush1.msra.mxu0 0.0
    %6689 = vmatprep.subr.mxu0 0.0
    %6690 = vmatpush1.msra.mxu0 0.0
    %6691 = vmatprep.subr.mxu0 0.0
    %6692 = vmatpush1.msra.mxu0 0.0
    %6693 = vmatprep.subr.mxu0 0.0
    %6694 = vmatpush1.msra.mxu0 0.0
    %6695 = vmatprep.subr.mxu0 0.0
    %6696 = vmatpush1.msra.mxu0 0.0
    %6697 = vmatprep.subr.mxu0 0.0
    %6698 = vmatpush1.msra.mxu0 0.0
    %6699 = vmatprep.subr.mxu0 0.0
    %6700 = vmatpush1.msra.mxu0 0.0
    %6701 = vmatprep.subr.mxu0 0.0
    %6702 = vmatpush1.msra.mxu0 0.0
    %6703 = vmatprep.subr.mxu0 0.0
    %6704 = vmatpush1.msra.mxu0 0.0
    %6705 = vmatprep.subr.mxu0 0.0
    %6706 = vmatpush1.msra.mxu0 0.0
    %6707 = vmatprep.subr.mxu0 0.0
    %6708 = vmatpush1.msra.mxu0 0.0
    %6709 = vmatprep.subr.mxu0 0.0
    %6710 = vmatpush1.msra.mxu0 0.0
    %6711 = vmatprep.subr.mxu0 0.0
    %6712 = vmatpush1.msra.mxu0 0.0
    %6713 = vmatprep.subr.mxu0 0.0
    %6714 = vmatpush1.msra.mxu0 0.0
    %6715 = vmatprep.subr.mxu0 0.0
    %6716 = vmatpush1.msra.mxu0 0.0
    %6717 = vmatprep.mubr.f32.mxu0 0.0
    %6718 = vmatmul.mubr.f32.gmra.mrb[0].mxu0 %v6491
    %v6719 = vpop.f32.mrb[0].mxu0
    %v6720 = vadd.f32 0.0, %v6719
    %v6721 = vpop.f32.mrb[0].mxu0
    %v6722 = vadd.f32 0.0, %v6721
    %6723 = vdwg.mxu0
    %v6725 = vsel %vm6489, %v6487, 0
    %v6728 = vsel %vm4612, %v6463, 0
    %v6731 = vsel %vm4612, %v6464, 0
    %v6734 = vsel %vm4612, %v6465, 0
    %v6737 = vsel %vm4612, %v6466, 0
    %v6740 = vsel %vm4612, %v6467, 0
    %v6743 = vsel %vm4612, %v6468, 0
    %6745 = vmatprep.subr.mxu0 %v6731
    %6746 = vmatpush1.msra.mxu0 %v6728
    %6747 = vmatprep.subr.mxu0 0.0
    %6748 = vmatpush1.msra.mxu0 0.0
    %6749 = vmatprep.subr.mxu0 0.0
    %6750 = vmatpush1.msra.mxu0 0.0
    %6751 = vmatprep.subr.mxu0 0.0
    %6752 = vmatpush1.msra.mxu0 0.0
    %6753 = vmatprep.subr.mxu0 0.0
    %6754 = vmatpush1.msra.mxu0 0.0
    %6755 = vmatprep.subr.mxu0 0.0
    %6756 = vmatpush1.msra.mxu0 0.0
    %6757 = vmatprep.subr.mxu0 0.0
    %6758 = vmatpush1.msra.mxu0 0.0
    %6759 = vmatprep.subr.mxu0 0.0
    %6760 = vmatpush1.msra.mxu0 0.0
    %6761 = vmatprep.subr.mxu0 0.0
    %6762 = vmatpush1.msra.mxu0 0.0
    %6763 = vmatprep.subr.mxu0 0.0
    %6764 = vmatpush1.msra.mxu0 0.0
    %6765 = vmatprep.subr.mxu0 0.0
    %6766 = vmatpush1.msra.mxu0 0.0
    %6767 = vmatprep.subr.mxu0 0.0
    %6768 = vmatpush1.msra.mxu0 0.0
    %6769 = vmatprep.subr.mxu0 0.0
    %6770 = vmatpush1.msra.mxu0 0.0
    %6771 = vmatprep.subr.mxu0 0.0
    %6772 = vmatpush1.msra.mxu0 0.0
    %6773 = vmatprep.subr.mxu0 0.0
    %6774 = vmatpush1.msra.mxu0 0.0
    %6775 = vmatprep.subr.mxu0 0.0
    %6776 = vmatpush1.msra.mxu0 0.0
    %6777 = vmatprep.subr.mxu0 0.0
    %6778 = vmatpush1.msra.mxu0 0.0
    %6779 = vmatprep.subr.mxu0 0.0
    %6780 = vmatpush1.msra.mxu0 0.0
    %6781 = vmatprep.subr.mxu0 0.0
    %6782 = vmatpush1.msra.mxu0 0.0
    %6783 = vmatprep.subr.mxu0 0.0
    %6784 = vmatpush1.msra.mxu0 0.0
    %6785 = vmatprep.subr.mxu0 0.0
    %6786 = vmatpush1.msra.mxu0 0.0
    %6787 = vmatprep.subr.mxu0 0.0
    %6788 = vmatpush1.msra.mxu0 0.0
    %6789 = vmatprep.subr.mxu0 0.0
    %6790 = vmatpush1.msra.mxu0 0.0
    %6791 = vmatprep.subr.mxu0 0.0
    %6792 = vmatpush1.msra.mxu0 0.0
    %6793 = vmatprep.subr.mxu0 0.0
    %6794 = vmatpush1.msra.mxu0 0.0
    %6795 = vmatprep.subr.mxu0 0.0
    %6796 = vmatpush1.msra.mxu0 0.0
    %6797 = vmatprep.subr.mxu0 0.0
    %6798 = vmatpush1.msra.mxu0 0.0
    %6799 = vmatprep.subr.mxu0 0.0
    %6800 = vmatpush1.msra.mxu0 0.0
    %6801 = vmatprep.subr.mxu0 0.0
    %6802 = vmatpush1.msra.mxu0 0.0
    %6803 = vmatprep.subr.mxu0 0.0
    %6804 = vmatpush1.msra.mxu0 0.0
    %6805 = vmatprep.subr.mxu0 0.0
    %6806 = vmatpush1.msra.mxu0 0.0
    %6807 = vmatprep.subr.mxu0 0.0
    %6808 = vmatpush1.msra.mxu0 0.0
    %6809 = vmatprep.mubr.f32.mxu0 0.0
    %6810 = vmatmul.mubr.f32.gmra.mrb[0].mxu0 %v6725
    %v6811 = vpop.f32.mrb[0].mxu0
    %v6812 = vadd.f32 %v6578, %v6811
    %v6813 = vpop.f32.mrb[0].mxu0
    %v6814 = vadd.f32 %v6580, %v6813
    %6815 = vdwg.mxu0
    %6816 = vmatprep.subr.mxu0 %v6737
    %6817 = vmatpush1.msra.mxu0 %v6734
    %6818 = vmatprep.subr.mxu0 0.0
    %6819 = vmatpush1.msra.mxu0 0.0
    %6820 = vmatprep.subr.mxu0 0.0
    %6821 = vmatpush1.msra.mxu0 0.0
    %6822 = vmatprep.subr.mxu0 0.0
    %6823 = vmatpush1.msra.mxu0 0.0
    %6824 = vmatprep.subr.mxu0 0.0
    %6825 = vmatpush1.msra.mxu0 0.0
    %6826 = vmatprep.subr.mxu0 0.0
    %6827 = vmatpush1.msra.mxu0 0.0
    %6828 = vmatprep.subr.mxu0 0.0
    %6829 = vmatpush1.msra.mxu0 0.0
    %6830 = vmatprep.subr.mxu0 0.0
    %6831 = vmatpush1.msra.mxu0 0.0
    %6832 = vmatprep.subr.mxu0 0.0
    %6833 = vmatpush1.msra.mxu0 0.0
    %6834 = vmatprep.subr.mxu0 0.0
    %6835 = vmatpush1.msra.mxu0 0.0
    %6836 = vmatprep.subr.mxu0 0.0
    %6837 = vmatpush1.msra.mxu0 0.0
    %6838 = vmatprep.subr.mxu0 0.0
    %6839 = vmatpush1.msra.mxu0 0.0
    %6840 = vmatprep.subr.mxu0 0.0
    %6841 = vmatpush1.msra.mxu0 0.0
    %6842 = vmatprep.subr.mxu0 0.0
    %6843 = vmatpush1.msra.mxu0 0.0
    %6844 = vmatprep.subr.mxu0 0.0
    %6845 = vmatpush1.msra.mxu0 0.0
    %6846 = vmatprep.subr.mxu0 0.0
    %6847 = vmatpush1.msra.mxu0 0.0
    %6848 = vmatprep.subr.mxu0 0.0
    %6849 = vmatpush1.msra.mxu0 0.0
    %6850 = vmatprep.subr.mxu0 0.0
    %6851 = vmatpush1.msra.mxu0 0.0
    %6852 = vmatprep.subr.mxu0 0.0
    %6853 = vmatpush1.msra.mxu0 0.0
    %6854 = vmatprep.subr.mxu0 0.0
    %6855 = vmatpush1.msra.mxu0 0.0
    %6856 = vmatprep.subr.mxu0 0.0
    %6857 = vmatpush1.msra.mxu0 0.0
    %6858 = vmatprep.subr.mxu0 0.0
    %6859 = vmatpush1.msra.mxu0 0.0
    %6860 = vmatprep.subr.mxu0 0.0
    %6861 = vmatpush1.msra.mxu0 0.0
    %6862 = vmatprep.subr.mxu0 0.0
    %6863 = vmatpush1.msra.mxu0 0.0
    %6864 = vmatprep.subr.mxu0 0.0
    %6865 = vmatpush1.msra.mxu0 0.0
    %6866 = vmatprep.subr.mxu0 0.0
    %6867 = vmatpush1.msra.mxu0 0.0
    %6868 = vmatprep.subr.mxu0 0.0
    %6869 = vmatpush1.msra.mxu0 0.0
    %6870 = vmatprep.subr.mxu0 0.0
    %6871 = vmatpush1.msra.mxu0 0.0
    %6872 = vmatprep.subr.mxu0 0.0
    %6873 = vmatpush1.msra.mxu0 0.0
    %6874 = vmatprep.subr.mxu0 0.0
    %6875 = vmatpush1.msra.mxu0 0.0
    %6876 = vmatprep.subr.mxu0 0.0
    %6877 = vmatpush1.msra.mxu0 0.0
    %6878 = vmatprep.subr.mxu0 0.0
    %6879 = vmatpush1.msra.mxu0 0.0
    %6880 = vmatprep.mubr.f32.mxu0 0.0
    %6881 = vmatmul.mubr.f32.gmra.mrb[0].mxu0 %v6725
    %v6882 = vpop.f32.mrb[0].mxu0
    %v6883 = vadd.f32 %v6649, %v6882
    %v6884 = vpop.f32.mrb[0].mxu0
    %v6885 = vadd.f32 %v6651, %v6884
    %6886 = vdwg.mxu0
    %6887 = vmatprep.subr.mxu0 %v6743
    %6888 = vmatpush1.msra.mxu0 %v6740
    %6889 = vmatprep.subr.mxu0 0.0
    %6890 = vmatpush1.msra.mxu0 0.0
    %6891 = vmatprep.subr.mxu0 0.0
    %6892 = vmatpush1.msra.mxu0 0.0
    %6893 = vmatprep.subr.mxu0 0.0
    %6894 = vmatpush1.msra.mxu0 0.0
    %6895 = vmatprep.subr.mxu0 0.0
    %6896 = vmatpush1.msra.mxu0 0.0
    %6897 = vmatprep.subr.mxu0 0.0
    %6898 = vmatpush1.msra.mxu0 0.0
    %6899 = vmatprep.subr.mxu0 0.0
    %6900 = vmatpush1.msra.mxu0 0.0
    %6901 = vmatprep.subr.mxu0 0.0
    %6902 = vmatpush1.msra.mxu0 0.0
    %6903 = vmatprep.subr.mxu0 0.0
    %6904 = vmatpush1.msra.mxu0 0.0
    %6905 = vmatprep.subr.mxu0 0.0
    %6906 = vmatpush1.msra.mxu0 0.0
    %6907 = vmatprep.subr.mxu0 0.0
    %6908 = vmatpush1.msra.mxu0 0.0
    %6909 = vmatprep.subr.mxu0 0.0
    %6910 = vmatpush1.msra.mxu0 0.0
    %6911 = vmatprep.subr.mxu0 0.0
    %6912 = vmatpush1.msra.mxu0 0.0
    %6913 = vmatprep.subr.mxu0 0.0
    %6914 = vmatpush1.msra.mxu0 0.0
    %6915 = vmatprep.subr.mxu0 0.0
    %6916 = vmatpush1.msra.mxu0 0.0
    %6917 = vmatprep.subr.mxu0 0.0
    %6918 = vmatpush1.msra.mxu0 0.0
    %6919 = vmatprep.subr.mxu0 0.0
    %6920 = vmatpush1.msra.mxu0 0.0
    %6921 = vmatprep.subr.mxu0 0.0
    %6922 = vmatpush1.msra.mxu0 0.0
    %6923 = vmatprep.subr.mxu0 0.0
    %6924 = vmatpush1.msra.mxu0 0.0
    %6925 = vmatprep.subr.mxu0 0.0
    %6926 = vmatpush1.msra.mxu0 0.0
    %6927 = vmatprep.subr.mxu0 0.0
    %6928 = vmatpush1.msra.mxu0 0.0
    %6929 = vmatprep.subr.mxu0 0.0
    %6930 = vmatpush1.msra.mxu0 0.0
    %6931 = vmatprep.subr.mxu0 0.0
    %6932 = vmatpush1.msra.mxu0 0.0
    %6933 = vmatprep.subr.mxu0 0.0
    %6934 = vmatpush1.msra.mxu0 0.0
    %6935 = vmatprep.subr.mxu0 0.0
    %6936 = vmatpush1.msra.mxu0 0.0
    %6937 = vmatprep.subr.mxu0 0.0
    %6938 = vmatpush1.msra.mxu0 0.0
    %6939 = vmatprep.subr.mxu0 0.0
    %6940 = vmatpush1.msra.mxu0 0.0
    %6941 = vmatprep.subr.mxu0 0.0
    %6942 = vmatpush1.msra.mxu0 0.0
    %6943 = vmatprep.subr.mxu0 0.0
    %6944 = vmatpush1.msra.mxu0 0.0
    %6945 = vmatprep.subr.mxu0 0.0
    %6946 = vmatpush1.msra.mxu0 0.0
    %6947 = vmatprep.subr.mxu0 0.0
    %6948 = vmatpush1.msra.mxu0 0.0
    %6949 = vmatprep.subr.mxu0 0.0
    %6950 = vmatpush1.msra.mxu0 0.0
    %6951 = vmatprep.mubr.f32.mxu0 0.0
    %6952 = vmatmul.mubr.f32.gmra.mrb[0].mxu0 %v6725
    %v6953 = vpop.f32.mrb[0].mxu0
    %v6954 = vadd.f32 %v6720, %v6953
    %v6955 = vpop.f32.mrb[0].mxu0
    %v6956 = vadd.f32 %v6722, %v6955
    %6957 = vdwg.mxu0
    %v6958 = vld [vmem:[#allocation8] sm:$0x3]
    %6960 = vset.pattern.permute.xlu0 5
    %6961 = vperm.xlu0 %6960, %v6958
    %v6962 = vpop.permute.xlu0 %6961
    %v6964 = vadd.f32 %v6812, %v6962
    %v6965 = vadd.f32 %v6814, %v6962
    %v6966 = vadd.f32 %v6883, %v6962
    %v6967 = vadd.f32 %v6885, %v6962
    %v6968 = vadd.f32 %v6954, %v6962
    %v6969 = vadd.f32 %v6956, %v6962
    %v6970 = vadd.f32 %v6964, %v2744
    %v6971 = vadd.f32 %v6965, %v2745
    %v6972 = vadd.f32 %v6966, %v2746
    %v6973 = vadd.f32 %v6967, %v2747
    %v6974 = vadd.f32 %v6968, %v2748
    %v6975 = vadd.f32 %v6969, %v2749
    %vm6976 = vcmp.ge.f32.partialorder %v6970, 0.0
    %vm6977 = vcmp.ge.f32.partialorder %v6971, 0.0
    %vm6978 = vcmp.ge.f32.partialorder %v6972, 0.0
    %vm6979 = vcmp.ge.f32.partialorder %v6973, 0.0
    %vm6980 = vcmp.ge.f32.partialorder %v6974, 0.0
    %vm6981 = vcmp.ge.f32.partialorder %v6975, 0.0
    %v6982 = vmul.f32 %v6970, 0.3
    %v6983 = vmul.f32 %v6971, 0.3
    %v6984 = vmul.f32 %v6972, 0.3
    %v6985 = vmul.f32 %v6973, 0.3
    %v6986 = vmul.f32 %v6974, 0.3
    %v6987 = vmul.f32 %v6975, 0.3
    %v6988 = vsel %vm6976, %v6970, %v6982
    %v6989 = vsel %vm6977, %v6971, %v6983
    %v6990 = vsel %vm6978, %v6972, %v6984
    %v6991 = vsel %vm6979, %v6973, %v6985
    %v6992 = vsel %vm6980, %v6974, %v6986
    %v6993 = vsel %vm6981, %v6975, %v6987
    %6994 = vrot.lane.b32.xlu0 %v6988, 17
    %v6995 = vpop.permute.xlu0 %6994
    %6996 = vrot.lane.b32.xlu0 %v6989, 17
    %v6997 = vpop.permute.xlu0 %6996
    %6998 = vrot.lane.b32.xlu0 %v6990, 17
    %v6999 = vpop.permute.xlu0 %6998
    %7000 = vrot.lane.b32.xlu0 %v6991, 17
    %v7001 = vpop.permute.xlu0 %7000
    %7002 = vrot.lane.b32.xlu0 %v6992, 17
    %v7003 = vpop.permute.xlu0 %7002
    %7004 = vrot.lane.b32.xlu0 %v6993, 17
    %v7005 = vpop.permute.xlu0 %7004
    %v7006 = vsel %vm1013, %v7003, %v7005
    %v7007 = vsel %vm1013, %v7001, %v7003
    %v7008 = vsel %vm1013, %v6999, %v7001
    %v7009 = vsel %vm1013, %v6997, %v6999
    %v7010 = vsel %vm1013, %v6995, %v6997
    %v7011 = vsel %vm1013, %v7005, %v6995
    %v7012 = vld [vmem:[%s1020] ss:$8 sm:$0xf]
    %v7013 = vld [vmem:[%s1020] ss:$8 sm:$0x30]
    %v7014 = vor.u32 %v7012, %v7013
    %v7016 = vlaneseq
    %v7017 = vshrl.u32 %v7016, 7
    %v7018 = vsub.s32 0, %v7017
    %v7019 = vrot.slane %v7014, %v7018
    %v7020 = vlaneseq
    %v7021 = vshrl.u32 %v7020, 7
    %v7022 = vsub.s32 1, %v7021
    %v7023 = vrot.slane %v7014, %v7022
    %v7024 = vlaneseq
    %v7025 = vshrl.u32 %v7024, 7
    %v7026 = vsub.s32 2, %v7025
    %v7027 = vrot.slane %v7014, %v7026
    %v7028 = vlaneseq
    %v7029 = vshrl.u32 %v7028, 7
    %v7030 = vsub.s32 3, %v7029
    %v7031 = vrot.slane %v7014, %v7030
    %v7032 = vlaneseq
    %v7033 = vshrl.u32 %v7032, 7
    %v7034 = vsub.s32 4, %v7033
    %v7035 = vrot.slane %v7014, %v7034
    %v7036 = vlaneseq
    %v7037 = vshrl.u32 %v7036, 7
    %v7038 = vsub.s32 5, %v7037
    %v7039 = vrot.slane %v7014, %v7038
    %v7046 = vmul.f32 %v7011, %v7019
    %v7047 = vmul.f32 %v7010, %v7023
    %v7048 = vmul.f32 %v7009, %v7027
    %v7049 = vmul.f32 %v7008, %v7031
    %v7050 = vmul.f32 %v7007, %v7035
    %v7051 = vmul.f32 %v7006, %v7039
    %7052 = vst [vmem:[#allocation2] sm:$0x3] %v7046
    %7053 = vst [vmem:[#allocation2 + $0x8] sm:$0x3] %v7047
    %7054 = vst [vmem:[#allocation2 + $0x10] sm:$0x3] %v7048
    %7055 = vst [vmem:[#allocation2 + $0x18] sm:$0x3] %v7049
    %7056 = vst [vmem:[#allocation2 + $0x20] sm:$0x3] %v7050
    %7057 = vst [vmem:[#allocation2 + $0x28] sm:$0x3] %v7051
    %7058 = vrot.lane.b32.xlu0 %v6988, 16
    %v7059 = vpop.permute.xlu0 %7058
    %7060 = vrot.lane.b32.xlu0 %v6989, 16
    %v7061 = vpop.permute.xlu0 %7060
    %7062 = vrot.lane.b32.xlu0 %v6990, 16
    %v7063 = vpop.permute.xlu0 %7062
    %7064 = vrot.lane.b32.xlu0 %v6991, 16
    %v7065 = vpop.permute.xlu0 %7064
    %7066 = vrot.lane.b32.xlu0 %v6992, 16
    %v7067 = vpop.permute.xlu0 %7066
    %7068 = vrot.lane.b32.xlu0 %v6993, 16
    %v7069 = vpop.permute.xlu0 %7068
    %v7070 = vsel %vm1097, %v7067, %v7069
    %v7071 = vsel %vm1097, %v7065, %v7067
    %v7072 = vsel %vm1097, %v7063, %v7065
    %v7073 = vsel %vm1097, %v7061, %v7063
    %v7074 = vsel %vm1097, %v7059, %v7061
    %v7075 = vsel %vm1097, %v7069, %v7059
    %v7076 = vld [vmem:[%s1104] ss:$8 sm:$0xf]
    %v7077 = vld [vmem:[%s1104] ss:$8 sm:$0x30]
    %v7078 = vor.u32 %v7076, %v7077
    %v7080 = vlaneseq
    %v7081 = vshrl.u32 %v7080, 7
    %v7082 = vsub.s32 0, %v7081
    %v7083 = vrot.slane %v7078, %v7082
    %v7084 = vlaneseq
    %v7085 = vshrl.u32 %v7084, 7
    %v7086 = vsub.s32 1, %v7085
    %v7087 = vrot.slane %v7078, %v7086
    %v7088 = vlaneseq
    %v7089 = vshrl.u32 %v7088, 7
    %v7090 = vsub.s32 2, %v7089
    %v7091 = vrot.slane %v7078, %v7090
    %v7092 = vlaneseq
    %v7093 = vshrl.u32 %v7092, 7
    %v7094 = vsub.s32 3, %v7093
    %v7095 = vrot.slane %v7078, %v7094
    %v7096 = vlaneseq
    %v7097 = vshrl.u32 %v7096, 7
    %v7098 = vsub.s32 4, %v7097
    %v7099 = vrot.slane %v7078, %v7098
    %v7100 = vlaneseq
    %v7101 = vshrl.u32 %v7100, 7
    %v7102 = vsub.s32 5, %v7101
    %v7103 = vrot.slane %v7078, %v7102
    %v7110 = vmul.f32 %v7075, %v7083
    %v7111 = vmul.f32 %v7074, %v7087
    %v7112 = vmul.f32 %v7073, %v7091
    %v7113 = vmul.f32 %v7072, %v7095
    %v7114 = vmul.f32 %v7071, %v7099
    %v7115 = vmul.f32 %v7070, %v7103
    %v7122 = vrot.slane %v7110, 6
    %v7123 = vrot.slane %v7111, 6
    %v7124 = vrot.slane %v7112, 6
    %v7125 = vrot.slane %v7113, 6
    %v7126 = vrot.slane %v7114, 6
    %v7127 = vrot.slane %v7115, 6
    %7134 = vst [vmem:[#allocation2] sm:$0xc] %v7122
    %7135 = vst [vmem:[#allocation2 + $0x8] sm:$0xc] %v7123
    %7136 = vst [vmem:[#allocation2 + $0x10] sm:$0xc] %v7124
    %7137 = vst [vmem:[#allocation2 + $0x18] sm:$0xc] %v7125
    %7138 = vst [vmem:[#allocation2 + $0x20] sm:$0xc] %v7126
    %7139 = vst [vmem:[#allocation2 + $0x28] sm:$0xc] %v7127
    %7140 = vrot.lane.b32.xlu0 %v6988, 15
    %v7141 = vpop.permute.xlu0 %7140
    %7142 = vrot.lane.b32.xlu0 %v6989, 15
    %v7143 = vpop.permute.xlu0 %7142
    %7144 = vrot.lane.b32.xlu0 %v6990, 15
    %v7145 = vpop.permute.xlu0 %7144
    %7146 = vrot.lane.b32.xlu0 %v6991, 15
    %v7147 = vpop.permute.xlu0 %7146
    %7148 = vrot.lane.b32.xlu0 %v6992, 15
    %v7149 = vpop.permute.xlu0 %7148
    %7150 = vrot.lane.b32.xlu0 %v6993, 15
    %v7151 = vpop.permute.xlu0 %7150
    %v7152 = vsel %vm1181, %v7149, %v7151
    %v7153 = vsel %vm1181, %v7147, %v7149
    %v7154 = vsel %vm1181, %v7145, %v7147
    %v7155 = vsel %vm1181, %v7143, %v7145
    %v7156 = vsel %vm1181, %v7141, %v7143
    %v7157 = vsel %vm1181, %v7151, %v7141
    %v7158 = vld [vmem:[%s1188] ss:$8 sm:$0xf]
    %v7159 = vld [vmem:[%s1188] ss:$8 sm:$0x30]
    %v7160 = vor.u32 %v7158, %v7159
    %v7162 = vlaneseq
    %v7163 = vshrl.u32 %v7162, 7
    %v7164 = vsub.s32 0, %v7163
    %v7165 = vrot.slane %v7160, %v7164
    %v7166 = vlaneseq
    %v7167 = vshrl.u32 %v7166, 7
    %v7168 = vsub.s32 1, %v7167
    %v7169 = vrot.slane %v7160, %v7168
    %v7170 = vlaneseq
    %v7171 = vshrl.u32 %v7170, 7
    %v7172 = vsub.s32 2, %v7171
    %v7173 = vrot.slane %v7160, %v7172
    %v7174 = vlaneseq
    %v7175 = vshrl.u32 %v7174, 7
    %v7176 = vsub.s32 3, %v7175
    %v7177 = vrot.slane %v7160, %v7176
    %v7178 = vlaneseq
    %v7179 = vshrl.u32 %v7178, 7
    %v7180 = vsub.s32 4, %v7179
    %v7181 = vrot.slane %v7160, %v7180
    %v7182 = vlaneseq
    %v7183 = vshrl.u32 %v7182, 7
    %v7184 = vsub.s32 5, %v7183
    %v7185 = vrot.slane %v7160, %v7184
    %v7192 = vmul.f32 %v7157, %v7165
    %v7193 = vmul.f32 %v7156, %v7169
    %v7194 = vmul.f32 %v7155, %v7173
    %v7195 = vmul.f32 %v7154, %v7177
    %v7196 = vmul.f32 %v7153, %v7181
    %v7197 = vmul.f32 %v7152, %v7185
    %v7204 = vrot.slane %v7192, 4
    %v7205 = vrot.slane %v7193, 4
    %v7206 = vrot.slane %v7194, 4
    %v7207 = vrot.slane %v7195, 4
    %v7208 = vrot.slane %v7196, 4
    %v7209 = vrot.slane %v7197, 4
    %7216 = vst [vmem:[#allocation2] sm:$0x30] %v7204
    %7217 = vst [vmem:[#allocation2 + $0x8] sm:$0x30] %v7205
    %7218 = vst [vmem:[#allocation2 + $0x10] sm:$0x30] %v7206
    %7219 = vst [vmem:[#allocation2 + $0x18] sm:$0x30] %v7207
    %7220 = vst [vmem:[#allocation2 + $0x20] sm:$0x30] %v7208
    %7221 = vst [vmem:[#allocation2 + $0x28] sm:$0x30] %v7209
    %7222 = vrot.lane.b32.xlu0 %v6988, 1
    %v7223 = vpop.permute.xlu0 %7222
    %7224 = vrot.lane.b32.xlu0 %v6989, 1
    %v7225 = vpop.permute.xlu0 %7224
    %7226 = vrot.lane.b32.xlu0 %v6990, 1
    %v7227 = vpop.permute.xlu0 %7226
    %7228 = vrot.lane.b32.xlu0 %v6991, 1
    %v7229 = vpop.permute.xlu0 %7228
    %7230 = vrot.lane.b32.xlu0 %v6992, 1
    %v7231 = vpop.permute.xlu0 %7230
    %7232 = vrot.lane.b32.xlu0 %v6993, 1
    %v7233 = vpop.permute.xlu0 %7232
    %v7234 = vsel %vm1415, %v7231, %v7233
    %v7235 = vsel %vm1415, %v7229, %v7231
    %v7236 = vsel %vm1415, %v7227, %v7229
    %v7237 = vsel %vm1415, %v7225, %v7227
    %v7238 = vsel %vm1415, %v7223, %v7225
    %v7239 = vsel %vm1415, %v7233, %v7223
    %v7240 = vld [vmem:[%s1422] ss:$8 sm:$0xf]
    %v7241 = vld [vmem:[%s1422] ss:$8 sm:$0x30]
    %v7242 = vor.u32 %v7240, %v7241
    %v7244 = vlaneseq
    %v7245 = vshrl.u32 %v7244, 7
    %v7246 = vsub.s32 0, %v7245
    %v7247 = vrot.slane %v7242, %v7246
    %v7248 = vlaneseq
    %v7249 = vshrl.u32 %v7248, 7
    %v7250 = vsub.s32 1, %v7249
    %v7251 = vrot.slane %v7242, %v7250
    %v7252 = vlaneseq
    %v7253 = vshrl.u32 %v7252, 7
    %v7254 = vsub.s32 2, %v7253
    %v7255 = vrot.slane %v7242, %v7254
    %v7256 = vlaneseq
    %v7257 = vshrl.u32 %v7256, 7
    %v7258 = vsub.s32 3, %v7257
    %v7259 = vrot.slane %v7242, %v7258
    %v7260 = vlaneseq
    %v7261 = vshrl.u32 %v7260, 7
    %v7262 = vsub.s32 4, %v7261
    %v7263 = vrot.slane %v7242, %v7262
    %v7264 = vlaneseq
    %v7265 = vshrl.u32 %v7264, 7
    %v7266 = vsub.s32 5, %v7265
    %v7267 = vrot.slane %v7242, %v7266
    %v7274 = vmul.f32 %v7239, %v7247
    %v7275 = vmul.f32 %v7238, %v7251
    %v7276 = vmul.f32 %v7237, %v7255
    %v7277 = vmul.f32 %v7236, %v7259
    %v7278 = vmul.f32 %v7235, %v7263
    %v7279 = vmul.f32 %v7234, %v7267
    %v7286 = vrot.slane %v7274, 2
    %v7287 = vrot.slane %v7275, 2
    %v7288 = vrot.slane %v7276, 2
    %v7289 = vrot.slane %v7277, 2
    %v7290 = vrot.slane %v7278, 2
    %v7291 = vrot.slane %v7279, 2
    %7298 = vst [vmem:[#allocation2] sm:$0xc0] %v7286
    %7299 = vst [vmem:[#allocation2 + $0x8] sm:$0xc0] %v7287
    %7300 = vst [vmem:[#allocation2 + $0x10] sm:$0xc0] %v7288
    %7301 = vst [vmem:[#allocation2 + $0x18] sm:$0xc0] %v7289
    %7302 = vst [vmem:[#allocation2 + $0x20] sm:$0xc0] %v7290
    %7303 = vst [vmem:[#allocation2 + $0x28] sm:$0xc0] %v7291
    %7304 = vst [vmem:[#allocation2 + $0x30] sm:$0x3] %v6988
    %7305 = vst [vmem:[#allocation2 + $0x38] sm:$0x3] %v6989
    %7306 = vst [vmem:[#allocation2 + $0x40] sm:$0x3] %v6990
    %7307 = vst [vmem:[#allocation2 + $0x48] sm:$0x3] %v6991
    %7308 = vst [vmem:[#allocation2 + $0x50] sm:$0x3] %v6992
    %7309 = vst [vmem:[#allocation2 + $0x58] sm:$0x3] %v6993
    %7310 = vrot.lane.b32.xlu0 %v6988, 127
    %v7311 = vpop.permute.xlu0 %7310
    %7312 = vrot.lane.b32.xlu0 %v6989, 127
    %v7313 = vpop.permute.xlu0 %7312
    %7314 = vrot.lane.b32.xlu0 %v6990, 127
    %v7315 = vpop.permute.xlu0 %7314
    %7316 = vrot.lane.b32.xlu0 %v6991, 127
    %v7317 = vpop.permute.xlu0 %7316
    %7318 = vrot.lane.b32.xlu0 %v6992, 127
    %v7319 = vpop.permute.xlu0 %7318
    %7320 = vrot.lane.b32.xlu0 %v6993, 127
    %v7321 = vpop.permute.xlu0 %7320
    %v7322 = vsel %vm1505, %v7319, %v7321
    %v7323 = vsel %vm1505, %v7317, %v7319
    %v7324 = vsel %vm1505, %v7315, %v7317
    %v7325 = vsel %vm1505, %v7313, %v7315
    %v7326 = vsel %vm1505, %v7311, %v7313
    %v7327 = vsel %vm1505, %v7321, %v7311
    %v7328 = vld [vmem:[%s1512] ss:$8 sm:$0xf]
    %v7329 = vld [vmem:[%s1512] ss:$8 sm:$0x30]
    %v7330 = vor.u32 %v7328, %v7329
    %v7332 = vlaneseq
    %v7333 = vshrl.u32 %v7332, 7
    %v7334 = vsub.s32 0, %v7333
    %v7335 = vrot.slane %v7330, %v7334
    %v7336 = vlaneseq
    %v7337 = vshrl.u32 %v7336, 7
    %v7338 = vsub.s32 1, %v7337
    %v7339 = vrot.slane %v7330, %v7338
    %v7340 = vlaneseq
    %v7341 = vshrl.u32 %v7340, 7
    %v7342 = vsub.s32 2, %v7341
    %v7343 = vrot.slane %v7330, %v7342
    %v7344 = vlaneseq
    %v7345 = vshrl.u32 %v7344, 7
    %v7346 = vsub.s32 3, %v7345
    %v7347 = vrot.slane %v7330, %v7346
    %v7348 = vlaneseq
    %v7349 = vshrl.u32 %v7348, 7
    %v7350 = vsub.s32 4, %v7349
    %v7351 = vrot.slane %v7330, %v7350
    %v7352 = vlaneseq
    %v7353 = vshrl.u32 %v7352, 7
    %v7354 = vsub.s32 5, %v7353
    %v7355 = vrot.slane %v7330, %v7354
    %v7362 = vmul.f32 %v7326, %v7335
    %v7363 = vmul.f32 %v7325, %v7339
    %v7364 = vmul.f32 %v7324, %v7343
    %v7365 = vmul.f32 %v7323, %v7347
    %v7366 = vmul.f32 %v7322, %v7351
    %v7367 = vmul.f32 %v7327, %v7355
    %v7374 = vrot.slane %v7362, 6
    %v7375 = vrot.slane %v7363, 6
    %v7376 = vrot.slane %v7364, 6
    %v7377 = vrot.slane %v7365, 6
    %v7378 = vrot.slane %v7366, 6
    %v7379 = vrot.slane %v7367, 6
    %7386 = vst [vmem:[#allocation2 + $0x30] sm:$0xc] %v7374
    %7387 = vst [vmem:[#allocation2 + $0x38] sm:$0xc] %v7375
    %7388 = vst [vmem:[#allocation2 + $0x40] sm:$0xc] %v7376
    %7389 = vst [vmem:[#allocation2 + $0x48] sm:$0xc] %v7377
    %7390 = vst [vmem:[#allocation2 + $0x50] sm:$0xc] %v7378
    %7391 = vst [vmem:[#allocation2 + $0x58] sm:$0xc] %v7379
    %7392 = vrot.lane.b32.xlu0 %v6988, 113
    %v7393 = vpop.permute.xlu0 %7392
    %7394 = vrot.lane.b32.xlu0 %v6989, 113
    %v7395 = vpop.permute.xlu0 %7394
    %7396 = vrot.lane.b32.xlu0 %v6990, 113
    %v7397 = vpop.permute.xlu0 %7396
    %7398 = vrot.lane.b32.xlu0 %v6991, 113
    %v7399 = vpop.permute.xlu0 %7398
    %7400 = vrot.lane.b32.xlu0 %v6992, 113
    %v7401 = vpop.permute.xlu0 %7400
    %7402 = vrot.lane.b32.xlu0 %v6993, 113
    %v7403 = vpop.permute.xlu0 %7402
    %v7404 = vsel %vm1757, %v7401, %v7403
    %v7405 = vsel %vm1757, %v7399, %v7401
    %v7406 = vsel %vm1757, %v7397, %v7399
    %v7407 = vsel %vm1757, %v7395, %v7397
    %v7408 = vsel %vm1757, %v7393, %v7395
    %v7409 = vsel %vm1757, %v7403, %v7393
    %v7410 = vld [vmem:[%s1764] ss:$8 sm:$0xf]
    %v7411 = vld [vmem:[%s1764] ss:$8 sm:$0x30]
    %v7412 = vor.u32 %v7410, %v7411
    %v7414 = vlaneseq
    %v7415 = vshrl.u32 %v7414, 7
    %v7416 = vsub.s32 0, %v7415
    %v7417 = vrot.slane %v7412, %v7416
    %v7418 = vlaneseq
    %v7419 = vshrl.u32 %v7418, 7
    %v7420 = vsub.s32 1, %v7419
    %v7421 = vrot.slane %v7412, %v7420
    %v7422 = vlaneseq
    %v7423 = vshrl.u32 %v7422, 7
    %v7424 = vsub.s32 2, %v7423
    %v7425 = vrot.slane %v7412, %v7424
    %v7426 = vlaneseq
    %v7427 = vshrl.u32 %v7426, 7
    %v7428 = vsub.s32 3, %v7427
    %v7429 = vrot.slane %v7412, %v7428
    %v7430 = vlaneseq
    %v7431 = vshrl.u32 %v7430, 7
    %v7432 = vsub.s32 4, %v7431
    %v7433 = vrot.slane %v7412, %v7432
    %v7434 = vlaneseq
    %v7435 = vshrl.u32 %v7434, 7
    %v7436 = vsub.s32 5, %v7435
    %v7437 = vrot.slane %v7412, %v7436
    %v7444 = vmul.f32 %v7408, %v7417
    %v7445 = vmul.f32 %v7407, %v7421
    %v7446 = vmul.f32 %v7406, %v7425
    %v7447 = vmul.f32 %v7405, %v7429
    %v7448 = vmul.f32 %v7404, %v7433
    %v7449 = vmul.f32 %v7409, %v7437
    %v7456 = vrot.slane %v7444, 4
    %v7457 = vrot.slane %v7445, 4
    %v7458 = vrot.slane %v7446, 4
    %v7459 = vrot.slane %v7447, 4
    %v7460 = vrot.slane %v7448, 4
    %v7461 = vrot.slane %v7449, 4
    %7468 = vst [vmem:[#allocation2 + $0x30] sm:$0x30] %v7456
    %7469 = vst [vmem:[#allocation2 + $0x38] sm:$0x30] %v7457
    %7470 = vst [vmem:[#allocation2 + $0x40] sm:$0x30] %v7458
    %7471 = vst [vmem:[#allocation2 + $0x48] sm:$0x30] %v7459
    %7472 = vst [vmem:[#allocation2 + $0x50] sm:$0x30] %v7460
    %7473 = vst [vmem:[#allocation2 + $0x58] sm:$0x30] %v7461
    %7474 = vrot.lane.b32.xlu0 %v6988, 112
    %v7475 = vpop.permute.xlu0 %7474
    %7476 = vrot.lane.b32.xlu0 %v6989, 112
    %v7477 = vpop.permute.xlu0 %7476
    %7478 = vrot.lane.b32.xlu0 %v6990, 112
    %v7479 = vpop.permute.xlu0 %7478
    %7480 = vrot.lane.b32.xlu0 %v6991, 112
    %v7481 = vpop.permute.xlu0 %7480
    %7482 = vrot.lane.b32.xlu0 %v6992, 112
    %v7483 = vpop.permute.xlu0 %7482
    %7484 = vrot.lane.b32.xlu0 %v6993, 112
    %v7485 = vpop.permute.xlu0 %7484
    %v7486 = vsel %vm1823, %v7483, %v7485
    %v7487 = vsel %vm1823, %v7481, %v7483
    %v7488 = vsel %vm1823, %v7479, %v7481
    %v7489 = vsel %vm1823, %v7477, %v7479
    %v7490 = vsel %vm1823, %v7475, %v7477
    %v7491 = vsel %vm1823, %v7485, %v7475
    %v7492 = vld [vmem:[%s1830] ss:$8 sm:$0xf]
    %v7493 = vld [vmem:[%s1830] ss:$8 sm:$0x30]
    %v7494 = vor.u32 %v7492, %v7493
    %v7496 = vlaneseq
    %v7497 = vshrl.u32 %v7496, 7
    %v7498 = vsub.s32 0, %v7497
    %v7499 = vrot.slane %v7494, %v7498
    %v7500 = vlaneseq
    %v7501 = vshrl.u32 %v7500, 7
    %v7502 = vsub.s32 1, %v7501
    %v7503 = vrot.slane %v7494, %v7502
    %v7504 = vlaneseq
    %v7505 = vshrl.u32 %v7504, 7
    %v7506 = vsub.s32 2, %v7505
    %v7507 = vrot.slane %v7494, %v7506
    %v7508 = vlaneseq
    %v7509 = vshrl.u32 %v7508, 7
    %v7510 = vsub.s32 3, %v7509
    %v7511 = vrot.slane %v7494, %v7510
    %v7512 = vlaneseq
    %v7513 = vshrl.u32 %v7512, 7
    %v7514 = vsub.s32 4, %v7513
    %v7515 = vrot.slane %v7494, %v7514
    %v7516 = vlaneseq
    %v7517 = vshrl.u32 %v7516, 7
    %v7518 = vsub.s32 5, %v7517
    %v7519 = vrot.slane %v7494, %v7518
    %v7526 = vmul.f32 %v7490, %v7499
    %v7527 = vmul.f32 %v7489, %v7503
    %v7528 = vmul.f32 %v7488, %v7507
    %v7529 = vmul.f32 %v7487, %v7511
    %v7530 = vmul.f32 %v7486, %v7515
    %v7531 = vmul.f32 %v7491, %v7519
    %v7538 = vrot.slane %v7526, 2
    %v7539 = vrot.slane %v7527, 2
    %v7540 = vrot.slane %v7528, 2
    %v7541 = vrot.slane %v7529, 2
    %v7542 = vrot.slane %v7530, 2
    %v7543 = vrot.slane %v7531, 2
    %7550 = vst [vmem:[#allocation2 + $0x30] sm:$0xc0] %v7538
    %7551 = vst [vmem:[#allocation2 + $0x38] sm:$0xc0] %v7539
    %7552 = vst [vmem:[#allocation2 + $0x40] sm:$0xc0] %v7540
    %7553 = vst [vmem:[#allocation2 + $0x48] sm:$0xc0] %v7541
    %7554 = vst [vmem:[#allocation2 + $0x50] sm:$0xc0] %v7542
    %7555 = vst [vmem:[#allocation2 + $0x58] sm:$0xc0] %v7543
    %7556 = vrot.lane.b32.xlu0 %v6988, 111
    %v7557 = vpop.permute.xlu0 %7556
    %7558 = vrot.lane.b32.xlu0 %v6989, 111
    %v7559 = vpop.permute.xlu0 %7558
    %7560 = vrot.lane.b32.xlu0 %v6990, 111
    %v7561 = vpop.permute.xlu0 %7560
    %7562 = vrot.lane.b32.xlu0 %v6991, 111
    %v7563 = vpop.permute.xlu0 %7562
    %7564 = vrot.lane.b32.xlu0 %v6992, 111
    %v7565 = vpop.permute.xlu0 %7564
    %7566 = vrot.lane.b32.xlu0 %v6993, 111
    %v7567 = vpop.permute.xlu0 %7566
    %v7568 = vsel %vm1907, %v7565, %v7567
    %v7569 = vsel %vm1907, %v7563, %v7565
    %v7570 = vsel %vm1907, %v7561, %v7563
    %v7571 = vsel %vm1907, %v7559, %v7561
    %v7572 = vsel %vm1907, %v7557, %v7559
    %v7573 = vsel %vm1907, %v7567, %v7557
    %v7574 = vld [vmem:[%s1914] ss:$8 sm:$0xf]
    %v7575 = vld [vmem:[%s1914] ss:$8 sm:$0x30]
    %v7576 = vor.u32 %v7574, %v7575
    %v7578 = vlaneseq
    %v7579 = vshrl.u32 %v7578, 7
    %v7580 = vsub.s32 0, %v7579
    %v7581 = vrot.slane %v7576, %v7580
    %v7582 = vlaneseq
    %v7583 = vshrl.u32 %v7582, 7
    %v7584 = vsub.s32 1, %v7583
    %v7585 = vrot.slane %v7576, %v7584
    %v7586 = vlaneseq
    %v7587 = vshrl.u32 %v7586, 7
    %v7588 = vsub.s32 2, %v7587
    %v7589 = vrot.slane %v7576, %v7588
    %v7590 = vlaneseq
    %v7591 = vshrl.u32 %v7590, 7
    %v7592 = vsub.s32 3, %v7591
    %v7593 = vrot.slane %v7576, %v7592
    %v7594 = vlaneseq
    %v7595 = vshrl.u32 %v7594, 7
    %v7596 = vsub.s32 4, %v7595
    %v7597 = vrot.slane %v7576, %v7596
    %v7598 = vlaneseq
    %v7599 = vshrl.u32 %v7598, 7
    %v7600 = vsub.s32 5, %v7599
    %v7601 = vrot.slane %v7576, %v7600
    %v7608 = vmul.f32 %v7572, %v7581
    %v7609 = vmul.f32 %v7571, %v7585
    %v7610 = vmul.f32 %v7570, %v7589
    %v7611 = vmul.f32 %v7569, %v7593
    %v7612 = vmul.f32 %v7568, %v7597
    %v7613 = vmul.f32 %v7573, %v7601
    %7614 = vst [vmem:[#allocation2 + $0x60] sm:$0x3] %v7608
    %7615 = vst [vmem:[#allocation2 + $0x68] sm:$0x3] %v7609
    %7616 = vst [vmem:[#allocation2 + $0x70] sm:$0x3] %v7610
    %7617 = vst [vmem:[#allocation2 + $0x78] sm:$0x3] %v7611
    %7618 = vst [vmem:[#allocation2 + $0x80] sm:$0x3] %v7612
    %7619 = vst [vmem:[#allocation2 + $0x88] sm:$0x3] %v7613
    %7620 = vrot.lane.b32.xlu0 %v6988, 2
    %v7621 = vpop.permute.xlu0 %7620
    %7622 = vrot.lane.b32.xlu0 %v6989, 2
    %v7623 = vpop.permute.xlu0 %7622
    %7624 = vrot.lane.b32.xlu0 %v6990, 2
    %v7625 = vpop.permute.xlu0 %7624
    %7626 = vrot.lane.b32.xlu0 %v6991, 2
    %v7627 = vpop.permute.xlu0 %7626
    %7628 = vrot.lane.b32.xlu0 %v6992, 2
    %v7629 = vpop.permute.xlu0 %7628
    %7630 = vrot.lane.b32.xlu0 %v6993, 2
    %v7631 = vpop.permute.xlu0 %7630
    %v7632 = vsel %vm1331, %v7629, %v7631
    %v7633 = vsel %vm1331, %v7627, %v7629
    %v7634 = vsel %vm1331, %v7625, %v7627
    %v7635 = vsel %vm1331, %v7623, %v7625
    %v7636 = vsel %vm1331, %v7621, %v7623
    %v7637 = vsel %vm1331, %v7631, %v7621
    %v7638 = vld [vmem:[%s1338] ss:$8 sm:$0xf]
    %v7639 = vld [vmem:[%s1338] ss:$8 sm:$0x30]
    %v7640 = vor.u32 %v7638, %v7639
    %v7642 = vlaneseq
    %v7643 = vshrl.u32 %v7642, 7
    %v7644 = vsub.s32 0, %v7643
    %v7645 = vrot.slane %v7640, %v7644
    %v7646 = vlaneseq
    %v7647 = vshrl.u32 %v7646, 7
    %v7648 = vsub.s32 1, %v7647
    %v7649 = vrot.slane %v7640, %v7648
    %v7650 = vlaneseq
    %v7651 = vshrl.u32 %v7650, 7
    %v7652 = vsub.s32 2, %v7651
    %v7653 = vrot.slane %v7640, %v7652
    %v7654 = vlaneseq
    %v7655 = vshrl.u32 %v7654, 7
    %v7656 = vsub.s32 3, %v7655
    %v7657 = vrot.slane %v7640, %v7656
    %v7658 = vlaneseq
    %v7659 = vshrl.u32 %v7658, 7
    %v7660 = vsub.s32 4, %v7659
    %v7661 = vrot.slane %v7640, %v7660
    %v7662 = vlaneseq
    %v7663 = vshrl.u32 %v7662, 7
    %v7664 = vsub.s32 5, %v7663
    %v7665 = vrot.slane %v7640, %v7664
    %v7672 = vmul.f32 %v7637, %v7645
    %v7673 = vmul.f32 %v7636, %v7649
    %v7674 = vmul.f32 %v7635, %v7653
    %v7675 = vmul.f32 %v7634, %v7657
    %v7676 = vmul.f32 %v7633, %v7661
    %v7677 = vmul.f32 %v7632, %v7665
    %v7684 = vrot.slane %v7672, 6
    %v7685 = vrot.slane %v7673, 6
    %v7686 = vrot.slane %v7674, 6
    %v7687 = vrot.slane %v7675, 6
    %v7688 = vrot.slane %v7676, 6
    %v7689 = vrot.slane %v7677, 6
    %7696 = vst [vmem:[#allocation2 + $0x60] sm:$0xc] %v7684
    %7697 = vst [vmem:[#allocation2 + $0x68] sm:$0xc] %v7685
    %7698 = vst [vmem:[#allocation2 + $0x70] sm:$0xc] %v7686
    %7699 = vst [vmem:[#allocation2 + $0x78] sm:$0xc] %v7687
    %7700 = vst [vmem:[#allocation2 + $0x80] sm:$0xc] %v7688
    %7701 = vst [vmem:[#allocation2 + $0x88] sm:$0xc] %v7689
    %7702 = vrot.lane.b32.xlu0 %v6988, 126
    %v7703 = vpop.permute.xlu0 %7702
    %7704 = vrot.lane.b32.xlu0 %v6989, 126
    %v7705 = vpop.permute.xlu0 %7704
    %7706 = vrot.lane.b32.xlu0 %v6990, 126
    %v7707 = vpop.permute.xlu0 %7706
    %7708 = vrot.lane.b32.xlu0 %v6991, 126
    %v7709 = vpop.permute.xlu0 %7708
    %7710 = vrot.lane.b32.xlu0 %v6992, 126
    %v7711 = vpop.permute.xlu0 %7710
    %7712 = vrot.lane.b32.xlu0 %v6993, 126
    %v7713 = vpop.permute.xlu0 %7712
    %v7714 = vsel %vm1589, %v7711, %v7713
    %v7715 = vsel %vm1589, %v7709, %v7711
    %v7716 = vsel %vm1589, %v7707, %v7709
    %v7717 = vsel %vm1589, %v7705, %v7707
    %v7718 = vsel %vm1589, %v7703, %v7705
    %v7719 = vsel %vm1589, %v7713, %v7703
    %v7720 = vld [vmem:[%s1596] ss:$8 sm:$0xf]
    %v7721 = vld [vmem:[%s1596] ss:$8 sm:$0x30]
    %v7722 = vor.u32 %v7720, %v7721
    %v7724 = vlaneseq
    %v7725 = vshrl.u32 %v7724, 7
    %v7726 = vsub.s32 0, %v7725
    %v7727 = vrot.slane %v7722, %v7726
    %v7728 = vlaneseq
    %v7729 = vshrl.u32 %v7728, 7
    %v7730 = vsub.s32 1, %v7729
    %v7731 = vrot.slane %v7722, %v7730
    %v7732 = vlaneseq
    %v7733 = vshrl.u32 %v7732, 7
    %v7734 = vsub.s32 2, %v7733
    %v7735 = vrot.slane %v7722, %v7734
    %v7736 = vlaneseq
    %v7737 = vshrl.u32 %v7736, 7
    %v7738 = vsub.s32 3, %v7737
    %v7739 = vrot.slane %v7722, %v7738
    %v7740 = vlaneseq
    %v7741 = vshrl.u32 %v7740, 7
    %v7742 = vsub.s32 4, %v7741
    %v7743 = vrot.slane %v7722, %v7742
    %v7744 = vlaneseq
    %v7745 = vshrl.u32 %v7744, 7
    %v7746 = vsub.s32 5, %v7745
    %v7747 = vrot.slane %v7722, %v7746
    %v7754 = vmul.f32 %v7718, %v7727
    %v7755 = vmul.f32 %v7717, %v7731
    %v7756 = vmul.f32 %v7716, %v7735
    %v7757 = vmul.f32 %v7715, %v7739
    %v7758 = vmul.f32 %v7714, %v7743
    %v7759 = vmul.f32 %v7719, %v7747
    %v7766 = vrot.slane %v7754, 4
    %v7767 = vrot.slane %v7755, 4
    %v7768 = vrot.slane %v7756, 4
    %v7769 = vrot.slane %v7757, 4
    %v7770 = vrot.slane %v7758, 4
    %v7771 = vrot.slane %v7759, 4
    %7778 = vst [vmem:[#allocation2 + $0x60] sm:$0x30] %v7766
    %7779 = vst [vmem:[#allocation2 + $0x68] sm:$0x30] %v7767
    %7780 = vst [vmem:[#allocation2 + $0x70] sm:$0x30] %v7768
    %7781 = vst [vmem:[#allocation2 + $0x78] sm:$0x30] %v7769
    %7782 = vst [vmem:[#allocation2 + $0x80] sm:$0x30] %v7770
    %7783 = vst [vmem:[#allocation2 + $0x88] sm:$0x30] %v7771
    %v7784 = vld [vmem:[#allocation7 + $0x38] sm:$0xff]
    %v7785 = vld [vmem:[#allocation7 + $0xa0] sm:$0xff]
    %v7786 = vld [vmem:[#allocation2] sm:$0xff]
    %v7787 = vld [vmem:[#allocation2 + $0x8] sm:$0xff]
    %v7788 = vld [vmem:[#allocation2 + $0x10] sm:$0xff]
    %v7789 = vld [vmem:[#allocation2 + $0x18] sm:$0xff]
    %v7790 = vld [vmem:[#allocation2 + $0x20] sm:$0xff]
    %v7791 = vld [vmem:[#allocation2 + $0x28] sm:$0xff]
    %v7792 = vld [vmem:[#allocation2 + $0x30] sm:$0xff]
    %v7793 = vld [vmem:[#allocation2 + $0x38] sm:$0xff]
    %v7794 = vld [vmem:[#allocation2 + $0x40] sm:$0xff]
    %v7795 = vld [vmem:[#allocation2 + $0x48] sm:$0xff]
    %v7796 = vld [vmem:[#allocation2 + $0x50] sm:$0xff]
    %v7797 = vld [vmem:[#allocation2 + $0x58] sm:$0xff]
    %v7798 = vld [vmem:[#allocation2 + $0x60] sm:$0x3f]
    %v7799 = vld [vmem:[#allocation2 + $0x68] sm:$0x3f]
    %v7800 = vld [vmem:[#allocation2 + $0x70] sm:$0x3f]
    %v7801 = vld [vmem:[#allocation2 + $0x78] sm:$0x3f]
    %v7802 = vld [vmem:[#allocation2 + $0x80] sm:$0x3f]
    %v7803 = vld [vmem:[#allocation2 + $0x88] sm:$0x3f]
    %v7804 = vld [vmem:[#allocation8] sm:$0xff]
    %v7805 = vld [vmem:[#allocation8 + $0x8] sm:$0xff]
    %7807 = vset.pattern.permute.xlu0 7
    %7808 = vperm.xlu0 %7807, %v7804
    %v7809 = vpop.permute.xlu0 %7808
    %7812 = vset.pattern.permute.xlu0 7
    %7813 = vperm.xlu0 %7812, %v7805
    %v7814 = vpop.permute.xlu0 %7813
    %v7817 = vsel %vm3572, %v7784, 0
    %v7820 = vsel %vm3572, %v7785, 0
    %v7823 = vsel %vm3579, %v7798, 0
    %v7826 = vsel %vm3579, %v7799, 0
    %v7829 = vsel %vm3579, %v7800, 0
    %v7832 = vsel %vm3579, %v7801, 0
    %v7835 = vsel %vm3579, %v7802, 0
    %v7838 = vsel %vm3579, %v7803, 0
    %7840 = vmatprep.subr.mxu0 %v7787
    %7841 = vmatpush1.msra.mxu0 %v7786
    %7842 = vmatprep.subr.mxu0 %v7793
    %7843 = vmatpush1.msra.mxu0 %v7792
    %7844 = vmatprep.subr.mxu0 %v7826
    %7845 = vmatpush1.msra.mxu0 %v7823
    %7846 = vmatprep.subr.mxu0 0.0
    %7847 = vmatpush1.msra.mxu0 0.0
    %7848 = vmatprep.subr.mxu0 0.0
    %7849 = vmatpush1.msra.mxu0 0.0
    %7850 = vmatprep.subr.mxu0 0.0
    %7851 = vmatpush1.msra.mxu0 0.0
    %7852 = vmatprep.subr.mxu0 0.0
    %7853 = vmatpush1.msra.mxu0 0.0
    %7854 = vmatprep.subr.mxu0 0.0
    %7855 = vmatpush1.msra.mxu0 0.0
    %7856 = vmatprep.subr.mxu0 0.0
    %7857 = vmatpush1.msra.mxu0 0.0
    %7858 = vmatprep.subr.mxu0 0.0
    %7859 = vmatpush1.msra.mxu0 0.0
    %7860 = vmatprep.subr.mxu0 0.0
    %7861 = vmatpush1.msra.mxu0 0.0
    %7862 = vmatprep.subr.mxu0 0.0
    %7863 = vmatpush1.msra.mxu0 0.0
    %7864 = vmatprep.subr.mxu0 0.0
    %7865 = vmatpush1.msra.mxu0 0.0
    %7866 = vmatprep.subr.mxu0 0.0
    %7867 = vmatpush1.msra.mxu0 0.0
    %7868 = vmatprep.subr.mxu0 0.0
    %7869 = vmatpush1.msra.mxu0 0.0
    %7870 = vmatprep.subr.mxu0 0.0
    %7871 = vmatpush1.msra.mxu0 0.0
    %7872 = vmatprep.subr.mxu0 0.0
    %7873 = vmatpush1.msra.mxu0 0.0
    %7874 = vmatprep.subr.mxu0 0.0
    %7875 = vmatpush1.msra.mxu0 0.0
    %7876 = vmatprep.subr.mxu0 0.0
    %7877 = vmatpush1.msra.mxu0 0.0
    %7878 = vmatprep.subr.mxu0 0.0
    %7879 = vmatpush1.msra.mxu0 0.0
    %7880 = vmatprep.subr.mxu0 0.0
    %7881 = vmatpush1.msra.mxu0 0.0
    %7882 = vmatprep.subr.mxu0 0.0
    %7883 = vmatpush1.msra.mxu0 0.0
    %7884 = vmatprep.subr.mxu0 0.0
    %7885 = vmatpush1.msra.mxu0 0.0
    %7886 = vmatprep.subr.mxu0 0.0
    %7887 = vmatpush1.msra.mxu0 0.0
    %7888 = vmatprep.subr.mxu0 0.0
    %7889 = vmatpush1.msra.mxu0 0.0
    %7890 = vmatprep.subr.mxu0 0.0
    %7891 = vmatpush1.msra.mxu0 0.0
    %7892 = vmatprep.subr.mxu0 0.0
    %7893 = vmatpush1.msra.mxu0 0.0
    %7894 = vmatprep.subr.mxu0 0.0
    %7895 = vmatpush1.msra.mxu0 0.0
    %7896 = vmatprep.subr.mxu0 0.0
    %7897 = vmatpush1.msra.mxu0 0.0
    %7898 = vmatprep.subr.mxu0 0.0
    %7899 = vmatpush1.msra.mxu0 0.0
    %7900 = vmatprep.subr.mxu0 0.0
    %7901 = vmatpush1.msra.mxu0 0.0
    %7902 = vmatprep.subr.mxu0 0.0
    %7903 = vmatpush1.msra.mxu0 0.0
    %7904 = vmatprep.mubr.f32.mxu0 0.0
    %7905 = vmatmul.mubr.f32.gmra.mrb[0].mxu0 %v7817
    %v7906 = vpop.f32.mrb[0].mxu0
    %v7907 = vadd.f32 %v7809, %v7906
    %v7908 = vpop.f32.mrb[0].mxu0
    %v7909 = vadd.f32 %v7809, %v7908
    %7910 = vmatprep.mubr.f32.mxu0 0.0
    %7911 = vmatmul.mubr.f32.gmra.mrb[0].mxu0 %v7820
    %v7912 = vpop.f32.mrb[0].mxu0
    %v7913 = vadd.f32 %v7814, %v7912
    %v7914 = vpop.f32.mrb[0].mxu0
    %v7915 = vadd.f32 %v7814, %v7914
    %7916 = vdwg.mxu0
    %7917 = vmatprep.subr.mxu0 %v7789
    %7918 = vmatpush1.msra.mxu0 %v7788
    %7919 = vmatprep.subr.mxu0 %v7795
    %7920 = vmatpush1.msra.mxu0 %v7794
    %7921 = vmatprep.subr.mxu0 %v7832
    %7922 = vmatpush1.msra.mxu0 %v7829
    %7923 = vmatprep.subr.mxu0 0.0
    %7924 = vmatpush1.msra.mxu0 0.0
    %7925 = vmatprep.subr.mxu0 0.0
    %7926 = vmatpush1.msra.mxu0 0.0
    %7927 = vmatprep.subr.mxu0 0.0
    %7928 = vmatpush1.msra.mxu0 0.0
    %7929 = vmatprep.subr.mxu0 0.0
    %7930 = vmatpush1.msra.mxu0 0.0
    %7931 = vmatprep.subr.mxu0 0.0
    %7932 = vmatpush1.msra.mxu0 0.0
    %7933 = vmatprep.subr.mxu0 0.0
    %7934 = vmatpush1.msra.mxu0 0.0
    %7935 = vmatprep.subr.mxu0 0.0
    %7936 = vmatpush1.msra.mxu0 0.0
    %7937 = vmatprep.subr.mxu0 0.0
    %7938 = vmatpush1.msra.mxu0 0.0
    %7939 = vmatprep.subr.mxu0 0.0
    %7940 = vmatpush1.msra.mxu0 0.0
    %7941 = vmatprep.subr.mxu0 0.0
    %7942 = vmatpush1.msra.mxu0 0.0
    %7943 = vmatprep.subr.mxu0 0.0
    %7944 = vmatpush1.msra.mxu0 0.0
    %7945 = vmatprep.subr.mxu0 0.0
    %7946 = vmatpush1.msra.mxu0 0.0
    %7947 = vmatprep.subr.mxu0 0.0
    %7948 = vmatpush1.msra.mxu0 0.0
    %7949 = vmatprep.subr.mxu0 0.0
    %7950 = vmatpush1.msra.mxu0 0.0
    %7951 = vmatprep.subr.mxu0 0.0
    %7952 = vmatpush1.msra.mxu0 0.0
    %7953 = vmatprep.subr.mxu0 0.0
    %7954 = vmatpush1.msra.mxu0 0.0
    %7955 = vmatprep.subr.mxu0 0.0
    %7956 = vmatpush1.msra.mxu0 0.0
    %7957 = vmatprep.subr.mxu0 0.0
    %7958 = vmatpush1.msra.mxu0 0.0
    %7959 = vmatprep.subr.mxu0 0.0
    %7960 = vmatpush1.msra.mxu0 0.0
    %7961 = vmatprep.subr.mxu0 0.0
    %7962 = vmatpush1.msra.mxu0 0.0
    %7963 = vmatprep.subr.mxu0 0.0
    %7964 = vmatpush1.msra.mxu0 0.0
    %7965 = vmatprep.subr.mxu0 0.0
    %7966 = vmatpush1.msra.mxu0 0.0
    %7967 = vmatprep.subr.mxu0 0.0
    %7968 = vmatpush1.msra.mxu0 0.0
    %7969 = vmatprep.subr.mxu0 0.0
    %7970 = vmatpush1.msra.mxu0 0.0
    %7971 = vmatprep.subr.mxu0 0.0
    %7972 = vmatpush1.msra.mxu0 0.0
    %7973 = vmatprep.subr.mxu0 0.0
    %7974 = vmatpush1.msra.mxu0 0.0
    %7975 = vmatprep.subr.mxu0 0.0
    %7976 = vmatpush1.msra.mxu0 0.0
    %7977 = vmatprep.subr.mxu0 0.0
    %7978 = vmatpush1.msra.mxu0 0.0
    %7979 = vmatprep.subr.mxu0 0.0
    %7980 = vmatpush1.msra.mxu0 0.0
    %7981 = vmatprep.mubr.f32.mxu0 0.0
    %7982 = vmatmul.mubr.f32.gmra.mrb[0].mxu0 %v7817
    %v7983 = vpop.f32.mrb[0].mxu0
    %v7984 = vadd.f32 %v7809, %v7983
    %v7985 = vpop.f32.mrb[0].mxu0
    %v7986 = vadd.f32 %v7809, %v7985
    %7987 = vmatprep.mubr.f32.mxu0 0.0
    %7988 = vmatmul.mubr.f32.gmra.mrb[0].mxu0 %v7820
    %v7989 = vpop.f32.mrb[0].mxu0
    %v7990 = vadd.f32 %v7814, %v7989
    %v7991 = vpop.f32.mrb[0].mxu0
    %v7992 = vadd.f32 %v7814, %v7991
    %7993 = vdwg.mxu0
    %7994 = vmatprep.subr.mxu0 %v7791
    %7995 = vmatpush1.msra.mxu0 %v7790
    %7996 = vmatprep.subr.mxu0 %v7797
    %7997 = vmatpush1.msra.mxu0 %v7796
    %7998 = vmatprep.subr.mxu0 %v7838
    %7999 = vmatpush1.msra.mxu0 %v7835
    %8000 = vmatprep.subr.mxu0 0.0
    %8001 = vmatpush1.msra.mxu0 0.0
    %8002 = vmatprep.subr.mxu0 0.0
    %8003 = vmatpush1.msra.mxu0 0.0
    %8004 = vmatprep.subr.mxu0 0.0
    %8005 = vmatpush1.msra.mxu0 0.0
    %8006 = vmatprep.subr.mxu0 0.0
    %8007 = vmatpush1.msra.mxu0 0.0
    %8008 = vmatprep.subr.mxu0 0.0
    %8009 = vmatpush1.msra.mxu0 0.0
    %8010 = vmatprep.subr.mxu0 0.0
    %8011 = vmatpush1.msra.mxu0 0.0
    %8012 = vmatprep.subr.mxu0 0.0
    %8013 = vmatpush1.msra.mxu0 0.0
    %8014 = vmatprep.subr.mxu0 0.0
    %8015 = vmatpush1.msra.mxu0 0.0
    %8016 = vmatprep.subr.mxu0 0.0
    %8017 = vmatpush1.msra.mxu0 0.0
    %8018 = vmatprep.subr.mxu0 0.0
    %8019 = vmatpush1.msra.mxu0 0.0
    %8020 = vmatprep.subr.mxu0 0.0
    %8021 = vmatpush1.msra.mxu0 0.0
    %8022 = vmatprep.subr.mxu0 0.0
    %8023 = vmatpush1.msra.mxu0 0.0
    %8024 = vmatprep.subr.mxu0 0.0
    %8025 = vmatpush1.msra.mxu0 0.0
    %8026 = vmatprep.subr.mxu0 0.0
    %8027 = vmatpush1.msra.mxu0 0.0
    %8028 = vmatprep.subr.mxu0 0.0
    %8029 = vmatpush1.msra.mxu0 0.0
    %8030 = vmatprep.subr.mxu0 0.0
    %8031 = vmatpush1.msra.mxu0 0.0
    %8032 = vmatprep.subr.mxu0 0.0
    %8033 = vmatpush1.msra.mxu0 0.0
    %8034 = vmatprep.subr.mxu0 0.0
    %8035 = vmatpush1.msra.mxu0 0.0
    %8036 = vmatprep.subr.mxu0 0.0
    %8037 = vmatpush1.msra.mxu0 0.0
    %8038 = vmatprep.subr.mxu0 0.0
    %8039 = vmatpush1.msra.mxu0 0.0
    %8040 = vmatprep.subr.mxu0 0.0
    %8041 = vmatpush1.msra.mxu0 0.0
    %8042 = vmatprep.subr.mxu0 0.0
    %8043 = vmatpush1.msra.mxu0 0.0
    %8044 = vmatprep.subr.mxu0 0.0
    %8045 = vmatpush1.msra.mxu0 0.0
    %8046 = vmatprep.subr.mxu0 0.0
    %8047 = vmatpush1.msra.mxu0 0.0
    %8048 = vmatprep.subr.mxu0 0.0
    %8049 = vmatpush1.msra.mxu0 0.0
    %8050 = vmatprep.subr.mxu0 0.0
    %8051 = vmatpush1.msra.mxu0 0.0
    %8052 = vmatprep.subr.mxu0 0.0
    %8053 = vmatpush1.msra.mxu0 0.0
    %8054 = vmatprep.subr.mxu0 0.0
    %8055 = vmatpush1.msra.mxu0 0.0
    %8056 = vmatprep.subr.mxu0 0.0
    %8057 = vmatpush1.msra.mxu0 0.0
    %8058 = vmatprep.mubr.f32.mxu0 0.0
    %8059 = vmatmul.mubr.f32.gmra.mrb[0].mxu0 %v7817
    %v8060 = vpop.f32.mrb[0].mxu0
    %v8061 = vadd.f32 %v7809, %v8060
    %v8062 = vpop.f32.mrb[0].mxu0
    %v8063 = vadd.f32 %v7809, %v8062
    %8064 = vmatprep.mubr.f32.mxu0 0.0
    %8065 = vmatmul.mubr.f32.gmra.mrb[0].mxu0 %v7820
    %v8066 = vpop.f32.mrb[0].mxu0
    %v8067 = vadd.f32 %v7814, %v8066
    %v8068 = vpop.f32.mrb[0].mxu0
    %v8069 = vadd.f32 %v7814, %v8068
    %8070 = vdwg.mxu0
    %vm8071 = vcmp.ge.f32.partialorder %v7907, 0.0
    %vm8072 = vcmp.ge.f32.partialorder %v7909, 0.0
    %vm8073 = vcmp.ge.f32.partialorder %v7984, 0.0
    %vm8074 = vcmp.ge.f32.partialorder %v7986, 0.0
    %vm8075 = vcmp.ge.f32.partialorder %v8061, 0.0
    %vm8076 = vcmp.ge.f32.partialorder %v8063, 0.0
    %v8077 = vmul.f32 %v7907, 0.3
    %v8078 = vmul.f32 %v7909, 0.3
    %v8079 = vmul.f32 %v7984, 0.3
    %v8080 = vmul.f32 %v7986, 0.3
    %v8081 = vmul.f32 %v8061, 0.3
    %v8082 = vmul.f32 %v8063, 0.3
    %v8083 = vsel %vm8071, %v7907, %v8077
    %v8084 = vsel %vm8072, %v7909, %v8078
    %v8085 = vsel %vm8073, %v7984, %v8079
    %v8086 = vsel %vm8074, %v7986, %v8080
    %v8087 = vsel %vm8075, %v8061, %v8081
    %v8088 = vsel %vm8076, %v8063, %v8082
    %vm8089 = vcmp.ge.f32.partialorder %v7913, 0.0
    %vm8090 = vcmp.ge.f32.partialorder %v7915, 0.0
    %vm8091 = vcmp.ge.f32.partialorder %v7990, 0.0
    %vm8092 = vcmp.ge.f32.partialorder %v7992, 0.0
    %vm8093 = vcmp.ge.f32.partialorder %v8067, 0.0
    %vm8094 = vcmp.ge.f32.partialorder %v8069, 0.0
    %v8095 = vmul.f32 %v7913, 0.3
    %v8096 = vmul.f32 %v7915, 0.3
    %v8097 = vmul.f32 %v7990, 0.3
    %v8098 = vmul.f32 %v7992, 0.3
    %v8099 = vmul.f32 %v8067, 0.3
    %v8100 = vmul.f32 %v8069, 0.3
    %v8101 = vsel %vm8089, %v7913, %v8095
    %v8102 = vsel %vm8090, %v7915, %v8096
    %v8103 = vsel %vm8091, %v7990, %v8097
    %v8104 = vsel %vm8092, %v7992, %v8098
    %v8105 = vsel %vm8093, %v8067, %v8099
    %v8106 = vsel %vm8094, %v8069, %v8100
    %8107 = vrot.lane.b32.xlu0 %v8083, 4
    %v8108 = vpop.permute.xlu0 %8107
    %8109 = vrot.lane.b32.xlu0 %v8084, 4
    %v8110 = vpop.permute.xlu0 %8109
    %8111 = vrot.lane.b32.xlu0 %v8085, 4
    %v8112 = vpop.permute.xlu0 %8111
    %8113 = vrot.lane.b32.xlu0 %v8086, 4
    %v8114 = vpop.permute.xlu0 %8113
    %8115 = vrot.lane.b32.xlu0 %v8087, 4
    %v8116 = vpop.permute.xlu0 %8115
    %8117 = vrot.lane.b32.xlu0 %v8088, 4
    %v8118 = vpop.permute.xlu0 %8117
    %v8119 = vsel %vm3877, %v8116, %v8118
    %v8120 = vsel %vm3877, %v8114, %v8116
    %v8121 = vsel %vm3877, %v8112, %v8114
    %v8122 = vsel %vm3877, %v8110, %v8112
    %v8123 = vsel %vm3877, %v8108, %v8110
    %v8124 = vsel %vm3877, %v8118, %v8108
    %v8125 = vld [vmem:[%s3884] ss:$8 sm:$0xf]
    %v8126 = vld [vmem:[%s3884] ss:$8 sm:$0x30]
    %v8127 = vor.u32 %v8125, %v8126
    %v8129 = vlaneseq
    %v8130 = vshrl.u32 %v8129, 7
    %v8131 = vsub.s32 0, %v8130
    %v8132 = vrot.slane %v8127, %v8131
    %v8133 = vlaneseq
    %v8134 = vshrl.u32 %v8133, 7
    %v8135 = vsub.s32 1, %v8134
    %v8136 = vrot.slane %v8127, %v8135
    %v8137 = vlaneseq
    %v8138 = vshrl.u32 %v8137, 7
    %v8139 = vsub.s32 2, %v8138
    %v8140 = vrot.slane %v8127, %v8139
    %v8141 = vlaneseq
    %v8142 = vshrl.u32 %v8141, 7
    %v8143 = vsub.s32 3, %v8142
    %v8144 = vrot.slane %v8127, %v8143
    %v8145 = vlaneseq
    %v8146 = vshrl.u32 %v8145, 7
    %v8147 = vsub.s32 4, %v8146
    %v8148 = vrot.slane %v8127, %v8147
    %v8149 = vlaneseq
    %v8150 = vshrl.u32 %v8149, 7
    %v8151 = vsub.s32 5, %v8150
    %v8152 = vrot.slane %v8127, %v8151
    %v8159 = vmul.f32 %v8124, %v8132
    %v8160 = vmul.f32 %v8123, %v8136
    %v8161 = vmul.f32 %v8122, %v8140
    %v8162 = vmul.f32 %v8121, %v8144
    %v8163 = vmul.f32 %v8120, %v8148
    %v8164 = vmul.f32 %v8119, %v8152
    %8165 = vst [vmem:[#allocation2] sm:$0x7f] %v8159
    %8166 = vst [vmem:[#allocation2 + $0x8] sm:$0x7f] %v8160
    %8167 = vst [vmem:[#allocation2 + $0x10] sm:$0x7f] %v8161
    %8168 = vst [vmem:[#allocation2 + $0x18] sm:$0x7f] %v8162
    %8169 = vst [vmem:[#allocation2 + $0x20] sm:$0x7f] %v8163
    %8170 = vst [vmem:[#allocation2 + $0x28] sm:$0x7f] %v8164
    %8171 = vrot.lane.b32.xlu0 %v8083, 3
    %v8172 = vpop.permute.xlu0 %8171
    %8173 = vrot.lane.b32.xlu0 %v8084, 3
    %v8174 = vpop.permute.xlu0 %8173
    %8175 = vrot.lane.b32.xlu0 %v8085, 3
    %v8176 = vpop.permute.xlu0 %8175
    %8177 = vrot.lane.b32.xlu0 %v8086, 3
    %v8178 = vpop.permute.xlu0 %8177
    %8179 = vrot.lane.b32.xlu0 %v8087, 3
    %v8180 = vpop.permute.xlu0 %8179
    %8181 = vrot.lane.b32.xlu0 %v8088, 3
    %v8182 = vpop.permute.xlu0 %8181
    %v8183 = vsel %vm3943, %v8180, %v8182
    %v8184 = vsel %vm3943, %v8178, %v8180
    %v8185 = vsel %vm3943, %v8176, %v8178
    %v8186 = vsel %vm3943, %v8174, %v8176
    %v8187 = vsel %vm3943, %v8172, %v8174
    %v8188 = vsel %vm3943, %v8182, %v8172
    %v8189 = vld [vmem:[%s3950] ss:$8 sm:$0xf]
    %v8190 = vld [vmem:[%s3950] ss:$8 sm:$0x30]
    %v8191 = vor.u32 %v8189, %v8190
    %v8193 = vlaneseq
    %v8194 = vshrl.u32 %v8193, 7
    %v8195 = vsub.s32 0, %v8194
    %v8196 = vrot.slane %v8191, %v8195
    %v8197 = vlaneseq
    %v8198 = vshrl.u32 %v8197, 7
    %v8199 = vsub.s32 1, %v8198
    %v8200 = vrot.slane %v8191, %v8199
    %v8201 = vlaneseq
    %v8202 = vshrl.u32 %v8201, 7
    %v8203 = vsub.s32 2, %v8202
    %v8204 = vrot.slane %v8191, %v8203
    %v8205 = vlaneseq
    %v8206 = vshrl.u32 %v8205, 7
    %v8207 = vsub.s32 3, %v8206
    %v8208 = vrot.slane %v8191, %v8207
    %v8209 = vlaneseq
    %v8210 = vshrl.u32 %v8209, 7
    %v8211 = vsub.s32 4, %v8210
    %v8212 = vrot.slane %v8191, %v8211
    %v8213 = vlaneseq
    %v8214 = vshrl.u32 %v8213, 7
    %v8215 = vsub.s32 5, %v8214
    %v8216 = vrot.slane %v8191, %v8215
    %v8223 = vmul.f32 %v8188, %v8196
    %v8224 = vmul.f32 %v8187, %v8200
    %v8225 = vmul.f32 %v8186, %v8204
    %v8226 = vmul.f32 %v8185, %v8208
    %v8227 = vmul.f32 %v8184, %v8212
    %v8228 = vmul.f32 %v8183, %v8216
    %v8235 = vrot.slane %v8223, 1
    %v8236 = vrot.slane %v8224, 1
    %v8237 = vrot.slane %v8225, 1
    %v8238 = vrot.slane %v8226, 1
    %v8239 = vrot.slane %v8227, 1
    %v8240 = vrot.slane %v8228, 1
    %8247 = vst [vmem:[#allocation2] sm:$0x80] %v8235
    %8248 = vst [vmem:[#allocation2 + $0x8] sm:$0x80] %v8236
    %8249 = vst [vmem:[#allocation2 + $0x10] sm:$0x80] %v8237
    %8250 = vst [vmem:[#allocation2 + $0x18] sm:$0x80] %v8238
    %8251 = vst [vmem:[#allocation2 + $0x20] sm:$0x80] %v8239
    %8252 = vst [vmem:[#allocation2 + $0x28] sm:$0x80] %v8240
    %8253 = vst [vmem:[#allocation2 + $0x30] sm:$0x3f] %v8235
    %8254 = vst [vmem:[#allocation2 + $0x38] sm:$0x3f] %v8236
    %8255 = vst [vmem:[#allocation2 + $0x40] sm:$0x3f] %v8237
    %8256 = vst [vmem:[#allocation2 + $0x48] sm:$0x3f] %v8238
    %8257 = vst [vmem:[#allocation2 + $0x50] sm:$0x3f] %v8239
    %8258 = vst [vmem:[#allocation2 + $0x58] sm:$0x3f] %v8240
    %8259 = vrot.lane.b32.xlu0 %v8083, 2
    %v8260 = vpop.permute.xlu0 %8259
    %8261 = vrot.lane.b32.xlu0 %v8084, 2
    %v8262 = vpop.permute.xlu0 %8261
    %8263 = vrot.lane.b32.xlu0 %v8085, 2
    %v8264 = vpop.permute.xlu0 %8263
    %8265 = vrot.lane.b32.xlu0 %v8086, 2
    %v8266 = vpop.permute.xlu0 %8265
    %8267 = vrot.lane.b32.xlu0 %v8087, 2
    %v8268 = vpop.permute.xlu0 %8267
    %8269 = vrot.lane.b32.xlu0 %v8088, 2
    %v8270 = vpop.permute.xlu0 %8269
    %v8271 = vsel %vm1331, %v8268, %v8270
    %v8272 = vsel %vm1331, %v8266, %v8268
    %v8273 = vsel %vm1331, %v8264, %v8266
    %v8274 = vsel %vm1331, %v8262, %v8264
    %v8275 = vsel %vm1331, %v8260, %v8262
    %v8276 = vsel %vm1331, %v8270, %v8260
    %v8277 = vld [vmem:[%s1338] ss:$8 sm:$0xf]
    %v8278 = vld [vmem:[%s1338] ss:$8 sm:$0x30]
    %v8279 = vor.u32 %v8277, %v8278
    %v8281 = vlaneseq
    %v8282 = vshrl.u32 %v8281, 7
    %v8283 = vsub.s32 0, %v8282
    %v8284 = vrot.slane %v8279, %v8283
    %v8285 = vlaneseq
    %v8286 = vshrl.u32 %v8285, 7
    %v8287 = vsub.s32 1, %v8286
    %v8288 = vrot.slane %v8279, %v8287
    %v8289 = vlaneseq
    %v8290 = vshrl.u32 %v8289, 7
    %v8291 = vsub.s32 2, %v8290
    %v8292 = vrot.slane %v8279, %v8291
    %v8293 = vlaneseq
    %v8294 = vshrl.u32 %v8293, 7
    %v8295 = vsub.s32 3, %v8294
    %v8296 = vrot.slane %v8279, %v8295
    %v8297 = vlaneseq
    %v8298 = vshrl.u32 %v8297, 7
    %v8299 = vsub.s32 4, %v8298
    %v8300 = vrot.slane %v8279, %v8299
    %v8301 = vlaneseq
    %v8302 = vshrl.u32 %v8301, 7
    %v8303 = vsub.s32 5, %v8302
    %v8304 = vrot.slane %v8279, %v8303
    %v8311 = vmul.f32 %v8276, %v8284
    %v8312 = vmul.f32 %v8275, %v8288
    %v8313 = vmul.f32 %v8274, %v8292
    %v8314 = vmul.f32 %v8273, %v8296
    %v8315 = vmul.f32 %v8272, %v8300
    %v8316 = vmul.f32 %v8271, %v8304
    %v8323 = vrot.slane %v8311, 2
    %v8324 = vrot.slane %v8312, 2
    %v8325 = vrot.slane %v8313, 2
    %v8326 = vrot.slane %v8314, 2
    %v8327 = vrot.slane %v8315, 2
    %v8328 = vrot.slane %v8316, 2
    %8335 = vst [vmem:[#allocation2 + $0x30] sm:$0xc0] %v8323
    %8336 = vst [vmem:[#allocation2 + $0x38] sm:$0xc0] %v8324
    %8337 = vst [vmem:[#allocation2 + $0x40] sm:$0xc0] %v8325
    %8338 = vst [vmem:[#allocation2 + $0x48] sm:$0xc0] %v8326
    %8339 = vst [vmem:[#allocation2 + $0x50] sm:$0xc0] %v8327
    %8340 = vst [vmem:[#allocation2 + $0x58] sm:$0xc0] %v8328
    %8341 = vst [vmem:[#allocation2 + $0x60] sm:$0x1f] %v8323
    %8342 = vst [vmem:[#allocation2 + $0x68] sm:$0x1f] %v8324
    %8343 = vst [vmem:[#allocation2 + $0x70] sm:$0x1f] %v8325
    %8344 = vst [vmem:[#allocation2 + $0x78] sm:$0x1f] %v8326
    %8345 = vst [vmem:[#allocation2 + $0x80] sm:$0x1f] %v8327
    %8346 = vst [vmem:[#allocation2 + $0x88] sm:$0x1f] %v8328
    %8347 = vrot.lane.b32.xlu0 %v8083, 1
    %v8348 = vpop.permute.xlu0 %8347
    %8349 = vrot.lane.b32.xlu0 %v8084, 1
    %v8350 = vpop.permute.xlu0 %8349
    %8351 = vrot.lane.b32.xlu0 %v8085, 1
    %v8352 = vpop.permute.xlu0 %8351
    %8353 = vrot.lane.b32.xlu0 %v8086, 1
    %v8354 = vpop.permute.xlu0 %8353
    %8355 = vrot.lane.b32.xlu0 %v8087, 1
    %v8356 = vpop.permute.xlu0 %8355
    %8357 = vrot.lane.b32.xlu0 %v8088, 1
    %v8358 = vpop.permute.xlu0 %8357
    %v8359 = vsel %vm1415, %v8356, %v8358
    %v8360 = vsel %vm1415, %v8354, %v8356
    %v8361 = vsel %vm1415, %v8352, %v8354
    %v8362 = vsel %vm1415, %v8350, %v8352
    %v8363 = vsel %vm1415, %v8348, %v8350
    %v8364 = vsel %vm1415, %v8358, %v8348
    %v8365 = vld [vmem:[%s1422] ss:$8 sm:$0xf]
    %v8366 = vld [vmem:[%s1422] ss:$8 sm:$0x30]
    %v8367 = vor.u32 %v8365, %v8366
    %v8369 = vlaneseq
    %v8370 = vshrl.u32 %v8369, 7
    %v8371 = vsub.s32 0, %v8370
    %v8372 = vrot.slane %v8367, %v8371
    %v8373 = vlaneseq
    %v8374 = vshrl.u32 %v8373, 7
    %v8375 = vsub.s32 1, %v8374
    %v8376 = vrot.slane %v8367, %v8375
    %v8377 = vlaneseq
    %v8378 = vshrl.u32 %v8377, 7
    %v8379 = vsub.s32 2, %v8378
    %v8380 = vrot.slane %v8367, %v8379
    %v8381 = vlaneseq
    %v8382 = vshrl.u32 %v8381, 7
    %v8383 = vsub.s32 3, %v8382
    %v8384 = vrot.slane %v8367, %v8383
    %v8385 = vlaneseq
    %v8386 = vshrl.u32 %v8385, 7
    %v8387 = vsub.s32 4, %v8386
    %v8388 = vrot.slane %v8367, %v8387
    %v8389 = vlaneseq
    %v8390 = vshrl.u32 %v8389, 7
    %v8391 = vsub.s32 5, %v8390
    %v8392 = vrot.slane %v8367, %v8391
    %v8399 = vmul.f32 %v8364, %v8372
    %v8400 = vmul.f32 %v8363, %v8376
    %v8401 = vmul.f32 %v8362, %v8380
    %v8402 = vmul.f32 %v8361, %v8384
    %v8403 = vmul.f32 %v8360, %v8388
    %v8404 = vmul.f32 %v8359, %v8392
    %v8411 = vrot.slane %v8399, 3
    %v8412 = vrot.slane %v8400, 3
    %v8413 = vrot.slane %v8401, 3
    %v8414 = vrot.slane %v8402, 3
    %v8415 = vrot.slane %v8403, 3
    %v8416 = vrot.slane %v8404, 3
    %8423 = vst [vmem:[#allocation2 + $0x60] sm:$0xe0] %v8411
    %8424 = vst [vmem:[#allocation2 + $0x68] sm:$0xe0] %v8412
    %8425 = vst [vmem:[#allocation2 + $0x70] sm:$0xe0] %v8413
    %8426 = vst [vmem:[#allocation2 + $0x78] sm:$0xe0] %v8414
    %8427 = vst [vmem:[#allocation2 + $0x80] sm:$0xe0] %v8415
    %8428 = vst [vmem:[#allocation2 + $0x88] sm:$0xe0] %v8416
    %8429 = vst [vmem:[#allocation2 + $0x90] sm:$0xf] %v8411
    %8430 = vst [vmem:[#allocation2 + $0x98] sm:$0xf] %v8412
    %8431 = vst [vmem:[#allocation2 + $0xa0] sm:$0xf] %v8413
    %8432 = vst [vmem:[#allocation2 + $0xa8] sm:$0xf] %v8414
    %8433 = vst [vmem:[#allocation2 + $0xb0] sm:$0xf] %v8415
    %8434 = vst [vmem:[#allocation2 + $0xb8] sm:$0xf] %v8416
    %v8441 = vrot.slane %v8083, 4
    %v8442 = vrot.slane %v8084, 4
    %v8443 = vrot.slane %v8085, 4
    %v8444 = vrot.slane %v8086, 4
    %v8445 = vrot.slane %v8087, 4
    %v8446 = vrot.slane %v8088, 4
    %8453 = vst [vmem:[#allocation2 + $0x90] sm:$0xf0] %v8441
    %8454 = vst [vmem:[#allocation2 + $0x98] sm:$0xf0] %v8442
    %8455 = vst [vmem:[#allocation2 + $0xa0] sm:$0xf0] %v8443
    %8456 = vst [vmem:[#allocation2 + $0xa8] sm:$0xf0] %v8444
    %8457 = vst [vmem:[#allocation2 + $0xb0] sm:$0xf0] %v8445
    %8458 = vst [vmem:[#allocation2 + $0xb8] sm:$0xf0] %v8446
    %8459 = vst [vmem:[#allocation2 + $0xc0] sm:$0x7] %v8441
    %8460 = vst [vmem:[#allocation2 + $0xc8] sm:$0x7] %v8442
    %8461 = vst [vmem:[#allocation2 + $0xd0] sm:$0x7] %v8443
    %8462 = vst [vmem:[#allocation2 + $0xd8] sm:$0x7] %v8444
    %8463 = vst [vmem:[#allocation2 + $0xe0] sm:$0x7] %v8445
    %8464 = vst [vmem:[#allocation2 + $0xe8] sm:$0x7] %v8446
    %8465 = vrot.lane.b32.xlu0 %v8083, 127
    %v8466 = vpop.permute.xlu0 %8465
    %8467 = vrot.lane.b32.xlu0 %v8084, 127
    %v8468 = vpop.permute.xlu0 %8467
    %8469 = vrot.lane.b32.xlu0 %v8085, 127
    %v8470 = vpop.permute.xlu0 %8469
    %8471 = vrot.lane.b32.xlu0 %v8086, 127
    %v8472 = vpop.permute.xlu0 %8471
    %8473 = vrot.lane.b32.xlu0 %v8087, 127
    %v8474 = vpop.permute.xlu0 %8473
    %8475 = vrot.lane.b32.xlu0 %v8088, 127
    %v8476 = vpop.permute.xlu0 %8475
    %v8477 = vsel %vm1505, %v8474, %v8476
    %v8478 = vsel %vm1505, %v8472, %v8474
    %v8479 = vsel %vm1505, %v8470, %v8472
    %v8480 = vsel %vm1505, %v8468, %v8470
    %v8481 = vsel %vm1505, %v8466, %v8468
    %v8482 = vsel %vm1505, %v8476, %v8466
    %v8483 = vld [vmem:[%s1512] ss:$8 sm:$0xf]
    %v8484 = vld [vmem:[%s1512] ss:$8 sm:$0x30]
    %v8485 = vor.u32 %v8483, %v8484
    %v8487 = vlaneseq
    %v8488 = vshrl.u32 %v8487, 7
    %v8489 = vsub.s32 0, %v8488
    %v8490 = vrot.slane %v8485, %v8489
    %v8491 = vlaneseq
    %v8492 = vshrl.u32 %v8491, 7
    %v8493 = vsub.s32 1, %v8492
    %v8494 = vrot.slane %v8485, %v8493
    %v8495 = vlaneseq
    %v8496 = vshrl.u32 %v8495, 7
    %v8497 = vsub.s32 2, %v8496
    %v8498 = vrot.slane %v8485, %v8497
    %v8499 = vlaneseq
    %v8500 = vshrl.u32 %v8499, 7
    %v8501 = vsub.s32 3, %v8500
    %v8502 = vrot.slane %v8485, %v8501
    %v8503 = vlaneseq
    %v8504 = vshrl.u32 %v8503, 7
    %v8505 = vsub.s32 4, %v8504
    %v8506 = vrot.slane %v8485, %v8505
    %v8507 = vlaneseq
    %v8508 = vshrl.u32 %v8507, 7
    %v8509 = vsub.s32 5, %v8508
    %v8510 = vrot.slane %v8485, %v8509
    %v8517 = vmul.f32 %v8481, %v8490
    %v8518 = vmul.f32 %v8480, %v8494
    %v8519 = vmul.f32 %v8479, %v8498
    %v8520 = vmul.f32 %v8478, %v8502
    %v8521 = vmul.f32 %v8477, %v8506
    %v8522 = vmul.f32 %v8482, %v8510
    %v8529 = vrot.slane %v8517, 5
    %v8530 = vrot.slane %v8518, 5
    %v8531 = vrot.slane %v8519, 5
    %v8532 = vrot.slane %v8520, 5
    %v8533 = vrot.slane %v8521, 5
    %v8534 = vrot.slane %v8522, 5
    %8541 = vst [vmem:[#allocation2 + $0xc0] sm:$0xf8] %v8529
    %8542 = vst [vmem:[#allocation2 + $0xc8] sm:$0xf8] %v8530
    %8543 = vst [vmem:[#allocation2 + $0xd0] sm:$0xf8] %v8531
    %8544 = vst [vmem:[#allocation2 + $0xd8] sm:$0xf8] %v8532
    %8545 = vst [vmem:[#allocation2 + $0xe0] sm:$0xf8] %v8533
    %8546 = vst [vmem:[#allocation2 + $0xe8] sm:$0xf8] %v8534
    %8547 = vst [vmem:[#allocation2 + $0xf0] sm:$0x3] %v8529
    %8548 = vst [vmem:[#allocation2 + $0xf8] sm:$0x3] %v8530
    %8549 = vst [vmem:[#allocation2 + $0x100] sm:$0x3] %v8531
    %8550 = vst [vmem:[#allocation2 + $0x108] sm:$0x3] %v8532
    %8551 = vst [vmem:[#allocation2 + $0x110] sm:$0x3] %v8533
    %8552 = vst [vmem:[#allocation2 + $0x118] sm:$0x3] %v8534
    %8553 = vrot.lane.b32.xlu0 %v8083, 126
    %v8554 = vpop.permute.xlu0 %8553
    %8555 = vrot.lane.b32.xlu0 %v8084, 126
    %v8556 = vpop.permute.xlu0 %8555
    %8557 = vrot.lane.b32.xlu0 %v8085, 126
    %v8558 = vpop.permute.xlu0 %8557
    %8559 = vrot.lane.b32.xlu0 %v8086, 126
    %v8560 = vpop.permute.xlu0 %8559
    %8561 = vrot.lane.b32.xlu0 %v8087, 126
    %v8562 = vpop.permute.xlu0 %8561
    %8563 = vrot.lane.b32.xlu0 %v8088, 126
    %v8564 = vpop.permute.xlu0 %8563
    %v8565 = vsel %vm1589, %v8562, %v8564
    %v8566 = vsel %vm1589, %v8560, %v8562
    %v8567 = vsel %vm1589, %v8558, %v8560
    %v8568 = vsel %vm1589, %v8556, %v8558
    %v8569 = vsel %vm1589, %v8554, %v8556
    %v8570 = vsel %vm1589, %v8564, %v8554
    %v8571 = vld [vmem:[%s1596] ss:$8 sm:$0xf]
    %v8572 = vld [vmem:[%s1596] ss:$8 sm:$0x30]
    %v8573 = vor.u32 %v8571, %v8572
    %v8575 = vlaneseq
    %v8576 = vshrl.u32 %v8575, 7
    %v8577 = vsub.s32 0, %v8576
    %v8578 = vrot.slane %v8573, %v8577
    %v8579 = vlaneseq
    %v8580 = vshrl.u32 %v8579, 7
    %v8581 = vsub.s32 1, %v8580
    %v8582 = vrot.slane %v8573, %v8581
    %v8583 = vlaneseq
    %v8584 = vshrl.u32 %v8583, 7
    %v8585 = vsub.s32 2, %v8584
    %v8586 = vrot.slane %v8573, %v8585
    %v8587 = vlaneseq
    %v8588 = vshrl.u32 %v8587, 7
    %v8589 = vsub.s32 3, %v8588
    %v8590 = vrot.slane %v8573, %v8589
    %v8591 = vlaneseq
    %v8592 = vshrl.u32 %v8591, 7
    %v8593 = vsub.s32 4, %v8592
    %v8594 = vrot.slane %v8573, %v8593
    %v8595 = vlaneseq
    %v8596 = vshrl.u32 %v8595, 7
    %v8597 = vsub.s32 5, %v8596
    %v8598 = vrot.slane %v8573, %v8597
    %v8605 = vmul.f32 %v8569, %v8578
    %v8606 = vmul.f32 %v8568, %v8582
    %v8607 = vmul.f32 %v8567, %v8586
    %v8608 = vmul.f32 %v8566, %v8590
    %v8609 = vmul.f32 %v8565, %v8594
    %v8610 = vmul.f32 %v8570, %v8598
    %v8617 = vrot.slane %v8605, 6
    %v8618 = vrot.slane %v8606, 6
    %v8619 = vrot.slane %v8607, 6
    %v8620 = vrot.slane %v8608, 6
    %v8621 = vrot.slane %v8609, 6
    %v8622 = vrot.slane %v8610, 6
    %8629 = vst [vmem:[#allocation2 + $0xf0] sm:$0xfc] %v8617
    %8630 = vst [vmem:[#allocation2 + $0xf8] sm:$0xfc] %v8618
    %8631 = vst [vmem:[#allocation2 + $0x100] sm:$0xfc] %v8619
    %8632 = vst [vmem:[#allocation2 + $0x108] sm:$0xfc] %v8620
    %8633 = vst [vmem:[#allocation2 + $0x110] sm:$0xfc] %v8621
    %8634 = vst [vmem:[#allocation2 + $0x118] sm:$0xfc] %v8622
    %8635 = vst [vmem:[#allocation2 + $0x120] sm:$0x1] %v8617
    %8636 = vst [vmem:[#allocation2 + $0x128] sm:$0x1] %v8618
    %8637 = vst [vmem:[#allocation2 + $0x130] sm:$0x1] %v8619
    %8638 = vst [vmem:[#allocation2 + $0x138] sm:$0x1] %v8620
    %8639 = vst [vmem:[#allocation2 + $0x140] sm:$0x1] %v8621
    %8640 = vst [vmem:[#allocation2 + $0x148] sm:$0x1] %v8622
    %8641 = vrot.lane.b32.xlu0 %v8083, 125
    %v8642 = vpop.permute.xlu0 %8641
    %8643 = vrot.lane.b32.xlu0 %v8084, 125
    %v8644 = vpop.permute.xlu0 %8643
    %8645 = vrot.lane.b32.xlu0 %v8085, 125
    %v8646 = vpop.permute.xlu0 %8645
    %8647 = vrot.lane.b32.xlu0 %v8086, 125
    %v8648 = vpop.permute.xlu0 %8647
    %8649 = vrot.lane.b32.xlu0 %v8087, 125
    %v8650 = vpop.permute.xlu0 %8649
    %8651 = vrot.lane.b32.xlu0 %v8088, 125
    %v8652 = vpop.permute.xlu0 %8651
    %v8653 = vsel %vm4415, %v8650, %v8652
    %v8654 = vsel %vm4415, %v8648, %v8650
    %v8655 = vsel %vm4415, %v8646, %v8648
    %v8656 = vsel %vm4415, %v8644, %v8646
    %v8657 = vsel %vm4415, %v8642, %v8644
    %v8658 = vsel %vm4415, %v8652, %v8642
    %v8659 = vld [vmem:[%s4422] ss:$8 sm:$0xf]
    %v8660 = vld [vmem:[%s4422] ss:$8 sm:$0x30]
    %v8661 = vor.u32 %v8659, %v8660
    %v8663 = vlaneseq
    %v8664 = vshrl.u32 %v8663, 7
    %v8665 = vsub.s32 0, %v8664
    %v8666 = vrot.slane %v8661, %v8665
    %v8667 = vlaneseq
    %v8668 = vshrl.u32 %v8667, 7
    %v8669 = vsub.s32 1, %v8668
    %v8670 = vrot.slane %v8661, %v8669
    %v8671 = vlaneseq
    %v8672 = vshrl.u32 %v8671, 7
    %v8673 = vsub.s32 2, %v8672
    %v8674 = vrot.slane %v8661, %v8673
    %v8675 = vlaneseq
    %v8676 = vshrl.u32 %v8675, 7
    %v8677 = vsub.s32 3, %v8676
    %v8678 = vrot.slane %v8661, %v8677
    %v8679 = vlaneseq
    %v8680 = vshrl.u32 %v8679, 7
    %v8681 = vsub.s32 4, %v8680
    %v8682 = vrot.slane %v8661, %v8681
    %v8683 = vlaneseq
    %v8684 = vshrl.u32 %v8683, 7
    %v8685 = vsub.s32 5, %v8684
    %v8686 = vrot.slane %v8661, %v8685
    %v8693 = vmul.f32 %v8657, %v8666
    %v8694 = vmul.f32 %v8656, %v8670
    %v8695 = vmul.f32 %v8655, %v8674
    %v8696 = vmul.f32 %v8654, %v8678
    %v8697 = vmul.f32 %v8653, %v8682
    %v8698 = vmul.f32 %v8658, %v8686
    %v8705 = vrot.slane %v8693, 7
    %v8706 = vrot.slane %v8694, 7
    %v8707 = vrot.slane %v8695, 7
    %v8708 = vrot.slane %v8696, 7
    %v8709 = vrot.slane %v8697, 7
    %v8710 = vrot.slane %v8698, 7
    %8717 = vst [vmem:[#allocation2 + $0x120] sm:$0xfe] %v8705
    %8718 = vst [vmem:[#allocation2 + $0x128] sm:$0xfe] %v8706
    %8719 = vst [vmem:[#allocation2 + $0x130] sm:$0xfe] %v8707
    %8720 = vst [vmem:[#allocation2 + $0x138] sm:$0xfe] %v8708
    %8721 = vst [vmem:[#allocation2 + $0x140] sm:$0xfe] %v8709
    %8722 = vst [vmem:[#allocation2 + $0x148] sm:$0xfe] %v8710
    %8723 = vrot.lane.b32.xlu0 %v8083, 124
    %v8724 = vpop.permute.xlu0 %8723
    %8725 = vrot.lane.b32.xlu0 %v8084, 124
    %v8726 = vpop.permute.xlu0 %8725
    %8727 = vrot.lane.b32.xlu0 %v8085, 124
    %v8728 = vpop.permute.xlu0 %8727
    %8729 = vrot.lane.b32.xlu0 %v8086, 124
    %v8730 = vpop.permute.xlu0 %8729
    %8731 = vrot.lane.b32.xlu0 %v8087, 124
    %v8732 = vpop.permute.xlu0 %8731
    %8733 = vrot.lane.b32.xlu0 %v8088, 124
    %v8734 = vpop.permute.xlu0 %8733
    %v8735 = vsel %vm4499, %v8732, %v8734
    %v8736 = vsel %vm4499, %v8730, %v8732
    %v8737 = vsel %vm4499, %v8728, %v8730
    %v8738 = vsel %vm4499, %v8726, %v8728
    %v8739 = vsel %vm4499, %v8724, %v8726
    %v8740 = vsel %vm4499, %v8734, %v8724
    %v8741 = vld [vmem:[%s4506] ss:$8 sm:$0xf]
    %v8742 = vld [vmem:[%s4506] ss:$8 sm:$0x30]
    %v8743 = vor.u32 %v8741, %v8742
    %v8745 = vlaneseq
    %v8746 = vshrl.u32 %v8745, 7
    %v8747 = vsub.s32 0, %v8746
    %v8748 = vrot.slane %v8743, %v8747
    %v8749 = vlaneseq
    %v8750 = vshrl.u32 %v8749, 7
    %v8751 = vsub.s32 1, %v8750
    %v8752 = vrot.slane %v8743, %v8751
    %v8753 = vlaneseq
    %v8754 = vshrl.u32 %v8753, 7
    %v8755 = vsub.s32 2, %v8754
    %v8756 = vrot.slane %v8743, %v8755
    %v8757 = vlaneseq
    %v8758 = vshrl.u32 %v8757, 7
    %v8759 = vsub.s32 3, %v8758
    %v8760 = vrot.slane %v8743, %v8759
    %v8761 = vlaneseq
    %v8762 = vshrl.u32 %v8761, 7
    %v8763 = vsub.s32 4, %v8762
    %v8764 = vrot.slane %v8743, %v8763
    %v8765 = vlaneseq
    %v8766 = vshrl.u32 %v8765, 7
    %v8767 = vsub.s32 5, %v8766
    %v8768 = vrot.slane %v8743, %v8767
    %v8775 = vmul.f32 %v8739, %v8748
    %v8776 = vmul.f32 %v8738, %v8752
    %v8777 = vmul.f32 %v8737, %v8756
    %v8778 = vmul.f32 %v8736, %v8760
    %v8779 = vmul.f32 %v8735, %v8764
    %v8780 = vmul.f32 %v8740, %v8768
    %8781 = vst [vmem:[#allocation2 + $0x150] sm:$0x7f] %v8775
    %8782 = vst [vmem:[#allocation2 + $0x158] sm:$0x7f] %v8776
    %8783 = vst [vmem:[#allocation2 + $0x160] sm:$0x7f] %v8777
    %8784 = vst [vmem:[#allocation2 + $0x168] sm:$0x7f] %v8778
    %8785 = vst [vmem:[#allocation2 + $0x170] sm:$0x7f] %v8779
    %8786 = vst [vmem:[#allocation2 + $0x178] sm:$0x7f] %v8780
    %v8787 = vld [vmem:[#allocation7 + $0x40] sm:$0x7f]
    %v8788 = vld [vmem:[#allocation2] sm:$0xff]
    %v8789 = vld [vmem:[#allocation2 + $0x8] sm:$0xff]
    %v8790 = vld [vmem:[#allocation2 + $0x10] sm:$0xff]
    %v8791 = vld [vmem:[#allocation2 + $0x18] sm:$0xff]
    %v8792 = vld [vmem:[#allocation2 + $0x20] sm:$0xff]
    %v8793 = vld [vmem:[#allocation2 + $0x28] sm:$0xff]
    %v8794 = vld [vmem:[#allocation2 + $0x30] sm:$0xff]
    %v8795 = vld [vmem:[#allocation2 + $0x38] sm:$0xff]
    %v8796 = vld [vmem:[#allocation2 + $0x40] sm:$0xff]
    %v8797 = vld [vmem:[#allocation2 + $0x48] sm:$0xff]
    %v8798 = vld [vmem:[#allocation2 + $0x50] sm:$0xff]
    %v8799 = vld [vmem:[#allocation2 + $0x58] sm:$0xff]
    %v8800 = vld [vmem:[#allocation2 + $0x60] sm:$0xff]
    %v8801 = vld [vmem:[#allocation2 + $0x68] sm:$0xff]
    %v8802 = vld [vmem:[#allocation2 + $0x70] sm:$0xff]
    %v8803 = vld [vmem:[#allocation2 + $0x78] sm:$0xff]
    %v8804 = vld [vmem:[#allocation2 + $0x80] sm:$0xff]
    %v8805 = vld [vmem:[#allocation2 + $0x88] sm:$0xff]
    %v8806 = vld [vmem:[#allocation2 + $0x90] sm:$0xff]
    %v8807 = vld [vmem:[#allocation2 + $0x98] sm:$0xff]
    %v8808 = vld [vmem:[#allocation2 + $0xa0] sm:$0xff]
    %v8809 = vld [vmem:[#allocation2 + $0xa8] sm:$0xff]
    %v8810 = vld [vmem:[#allocation2 + $0xb0] sm:$0xff]
    %v8811 = vld [vmem:[#allocation2 + $0xb8] sm:$0xff]
    %v8812 = vld [vmem:[#allocation2 + $0xc0] sm:$0xff]
    %v8813 = vld [vmem:[#allocation2 + $0xc8] sm:$0xff]
    %v8814 = vld [vmem:[#allocation2 + $0xd0] sm:$0xff]
    %v8815 = vld [vmem:[#allocation2 + $0xd8] sm:$0xff]
    %v8816 = vld [vmem:[#allocation2 + $0xe0] sm:$0xff]
    %v8817 = vld [vmem:[#allocation2 + $0xe8] sm:$0xff]
    %v8818 = vld [vmem:[#allocation2 + $0xf0] sm:$0xff]
    %v8819 = vld [vmem:[#allocation2 + $0xf8] sm:$0xff]
    %v8820 = vld [vmem:[#allocation2 + $0x100] sm:$0xff]
    %v8821 = vld [vmem:[#allocation2 + $0x108] sm:$0xff]
    %v8822 = vld [vmem:[#allocation2 + $0x110] sm:$0xff]
    %v8823 = vld [vmem:[#allocation2 + $0x118] sm:$0xff]
    %v8824 = vld [vmem:[#allocation2 + $0x120] sm:$0xff]
    %v8825 = vld [vmem:[#allocation2 + $0x128] sm:$0xff]
    %v8826 = vld [vmem:[#allocation2 + $0x130] sm:$0xff]
    %v8827 = vld [vmem:[#allocation2 + $0x138] sm:$0xff]
    %v8828 = vld [vmem:[#allocation2 + $0x140] sm:$0xff]
    %v8829 = vld [vmem:[#allocation2 + $0x148] sm:$0xff]
    %v8830 = vld [vmem:[#allocation2 + $0x150] sm:$0x7f]
    %v8831 = vld [vmem:[#allocation2 + $0x158] sm:$0x7f]
    %v8832 = vld [vmem:[#allocation2 + $0x160] sm:$0x7f]
    %v8833 = vld [vmem:[#allocation2 + $0x168] sm:$0x7f]
    %v8834 = vld [vmem:[#allocation2 + $0x170] sm:$0x7f]
    %v8835 = vld [vmem:[#allocation2 + $0x178] sm:$0x7f]
    %v8836 = vld [vmem:[#allocation8] sm:$0x7f]
    %8838 = vset.pattern.permute.xlu0 8
    %8839 = vperm.xlu0 %8838, %v8836
    %v8840 = vpop.permute.xlu0 %8839
    %v8843 = vsel %vm4608, %v8787, 0
    %v8846 = vsel %vm4612, %v8830, 0
    %v8849 = vsel %vm4612, %v8831, 0
    %v8852 = vsel %vm4612, %v8832, 0
    %v8855 = vsel %vm4612, %v8833, 0
    %v8858 = vsel %vm4612, %v8834, 0
    %v8861 = vsel %vm4612, %v8835, 0
    %8863 = vmatprep.subr.mxu0 %v8789
    %8864 = vmatpush1.msra.mxu0 %v8788
    %8865 = vmatprep.subr.mxu0 %v8795
    %8866 = vmatpush1.msra.mxu0 %v8794
    %8867 = vmatprep.subr.mxu0 %v8801
    %8868 = vmatpush1.msra.mxu0 %v8800
    %8869 = vmatprep.subr.mxu0 %v8807
    %8870 = vmatpush1.msra.mxu0 %v8806
    %8871 = vmatprep.subr.mxu0 %v8813
    %8872 = vmatpush1.msra.mxu0 %v8812
    %8873 = vmatprep.subr.mxu0 %v8819
    %8874 = vmatpush1.msra.mxu0 %v8818
    %8875 = vmatprep.subr.mxu0 %v8825
    %8876 = vmatpush1.msra.mxu0 %v8824
    %8877 = vmatprep.subr.mxu0 %v8849
    %8878 = vmatpush1.msra.mxu0 %v8846
    %8879 = vmatprep.subr.mxu0 0.0
    %8880 = vmatpush1.msra.mxu0 0.0
    %8881 = vmatprep.subr.mxu0 0.0
    %8882 = vmatpush1.msra.mxu0 0.0
    %8883 = vmatprep.subr.mxu0 0.0
    %8884 = vmatpush1.msra.mxu0 0.0
    %8885 = vmatprep.subr.mxu0 0.0
    %8886 = vmatpush1.msra.mxu0 0.0
    %8887 = vmatprep.subr.mxu0 0.0
    %8888 = vmatpush1.msra.mxu0 0.0
    %8889 = vmatprep.subr.mxu0 0.0
    %8890 = vmatpush1.msra.mxu0 0.0
    %8891 = vmatprep.subr.mxu0 0.0
    %8892 = vmatpush1.msra.mxu0 0.0
    %8893 = vmatprep.subr.mxu0 0.0
    %8894 = vmatpush1.msra.mxu0 0.0
    %8895 = vmatprep.subr.mxu0 0.0
    %8896 = vmatpush1.msra.mxu0 0.0
    %8897 = vmatprep.subr.mxu0 0.0
    %8898 = vmatpush1.msra.mxu0 0.0
    %8899 = vmatprep.subr.mxu0 0.0
    %8900 = vmatpush1.msra.mxu0 0.0
    %8901 = vmatprep.subr.mxu0 0.0
    %8902 = vmatpush1.msra.mxu0 0.0
    %8903 = vmatprep.subr.mxu0 0.0
    %8904 = vmatpush1.msra.mxu0 0.0
    %8905 = vmatprep.subr.mxu0 0.0
    %8906 = vmatpush1.msra.mxu0 0.0
    %8907 = vmatprep.subr.mxu0 0.0
    %8908 = vmatpush1.msra.mxu0 0.0
    %8909 = vmatprep.subr.mxu0 0.0
    %8910 = vmatpush1.msra.mxu0 0.0
    %8911 = vmatprep.subr.mxu0 0.0
    %8912 = vmatpush1.msra.mxu0 0.0
    %8913 = vmatprep.subr.mxu0 0.0
    %8914 = vmatpush1.msra.mxu0 0.0
    %8915 = vmatprep.subr.mxu0 0.0
    %8916 = vmatpush1.msra.mxu0 0.0
    %8917 = vmatprep.subr.mxu0 0.0
    %8918 = vmatpush1.msra.mxu0 0.0
    %8919 = vmatprep.subr.mxu0 0.0
    %8920 = vmatpush1.msra.mxu0 0.0
    %8921 = vmatprep.subr.mxu0 0.0
    %8922 = vmatpush1.msra.mxu0 0.0
    %8923 = vmatprep.subr.mxu0 0.0
    %8924 = vmatpush1.msra.mxu0 0.0
    %8925 = vmatprep.subr.mxu0 0.0
    %8926 = vmatpush1.msra.mxu0 0.0
    %8927 = vmatprep.mubr.f32.mxu0 0.0
    %8928 = vmatmul.mubr.f32.gmra.mrb[0].mxu0 %v8843
    %v8929 = vpop.f32.mrb[0].mxu0
    %v8930 = vadd.f32 %v8840, %v8929
    %v8931 = vpop.f32.mrb[0].mxu0
    %v8932 = vadd.f32 %v8840, %v8931
    %8933 = vdwg.mxu0
    %8934 = vmatprep.subr.mxu0 %v8791
    %8935 = vmatpush1.msra.mxu0 %v8790
    %8936 = vmatprep.subr.mxu0 %v8797
    %8937 = vmatpush1.msra.mxu0 %v8796
    %8938 = vmatprep.subr.mxu0 %v8803
    %8939 = vmatpush1.msra.mxu0 %v8802
    %8940 = vmatprep.subr.mxu0 %v8809
    %8941 = vmatpush1.msra.mxu0 %v8808
    %8942 = vmatprep.subr.mxu0 %v8815
    %8943 = vmatpush1.msra.mxu0 %v8814
    %8944 = vmatprep.subr.mxu0 %v8821
    %8945 = vmatpush1.msra.mxu0 %v8820
    %8946 = vmatprep.subr.mxu0 %v8827
    %8947 = vmatpush1.msra.mxu0 %v8826
    %8948 = vmatprep.subr.mxu0 %v8855
    %8949 = vmatpush1.msra.mxu0 %v8852
    %8950 = vmatprep.subr.mxu0 0.0
    %8951 = vmatpush1.msra.mxu0 0.0
    %8952 = vmatprep.subr.mxu0 0.0
    %8953 = vmatpush1.msra.mxu0 0.0
    %8954 = vmatprep.subr.mxu0 0.0
    %8955 = vmatpush1.msra.mxu0 0.0
    %8956 = vmatprep.subr.mxu0 0.0
    %8957 = vmatpush1.msra.mxu0 0.0
    %8958 = vmatprep.subr.mxu0 0.0
    %8959 = vmatpush1.msra.mxu0 0.0
    %8960 = vmatprep.subr.mxu0 0.0
    %8961 = vmatpush1.msra.mxu0 0.0
    %8962 = vmatprep.subr.mxu0 0.0
    %8963 = vmatpush1.msra.mxu0 0.0
    %8964 = vmatprep.subr.mxu0 0.0
    %8965 = vmatpush1.msra.mxu0 0.0
    %8966 = vmatprep.subr.mxu0 0.0
    %8967 = vmatpush1.msra.mxu0 0.0
    %8968 = vmatprep.subr.mxu0 0.0
    %8969 = vmatpush1.msra.mxu0 0.0
    %8970 = vmatprep.subr.mxu0 0.0
    %8971 = vmatpush1.msra.mxu0 0.0
    %8972 = vmatprep.subr.mxu0 0.0
    %8973 = vmatpush1.msra.mxu0 0.0
    %8974 = vmatprep.subr.mxu0 0.0
    %8975 = vmatpush1.msra.mxu0 0.0
    %8976 = vmatprep.subr.mxu0 0.0
    %8977 = vmatpush1.msra.mxu0 0.0
    %8978 = vmatprep.subr.mxu0 0.0
    %8979 = vmatpush1.msra.mxu0 0.0
    %8980 = vmatprep.subr.mxu0 0.0
    %8981 = vmatpush1.msra.mxu0 0.0
    %8982 = vmatprep.subr.mxu0 0.0
    %8983 = vmatpush1.msra.mxu0 0.0
    %8984 = vmatprep.subr.mxu0 0.0
    %8985 = vmatpush1.msra.mxu0 0.0
    %8986 = vmatprep.subr.mxu0 0.0
    %8987 = vmatpush1.msra.mxu0 0.0
    %8988 = vmatprep.subr.mxu0 0.0
    %8989 = vmatpush1.msra.mxu0 0.0
    %8990 = vmatprep.subr.mxu0 0.0
    %8991 = vmatpush1.msra.mxu0 0.0
    %8992 = vmatprep.subr.mxu0 0.0
    %8993 = vmatpush1.msra.mxu0 0.0
    %8994 = vmatprep.subr.mxu0 0.0
    %8995 = vmatpush1.msra.mxu0 0.0
    %8996 = vmatprep.subr.mxu0 0.0
    %8997 = vmatpush1.msra.mxu0 0.0
    %8998 = vmatprep.mubr.f32.mxu0 0.0
    %8999 = vmatmul.mubr.f32.gmra.mrb[0].mxu0 %v8843
    %v9000 = vpop.f32.mrb[0].mxu0
    %v9001 = vadd.f32 %v8840, %v9000
    %v9002 = vpop.f32.mrb[0].mxu0
    %v9003 = vadd.f32 %v8840, %v9002
    %9004 = vdwg.mxu0
    %9005 = vmatprep.subr.mxu0 %v8793
    %9006 = vmatpush1.msra.mxu0 %v8792
    %9007 = vmatprep.subr.mxu0 %v8799
    %9008 = vmatpush1.msra.mxu0 %v8798
    %9009 = vmatprep.subr.mxu0 %v8805
    %9010 = vmatpush1.msra.mxu0 %v8804
    %9011 = vmatprep.subr.mxu0 %v8811
    %9012 = vmatpush1.msra.mxu0 %v8810
    %9013 = vmatprep.subr.mxu0 %v8817
    %9014 = vmatpush1.msra.mxu0 %v8816
    %9015 = vmatprep.subr.mxu0 %v8823
    %9016 = vmatpush1.msra.mxu0 %v8822
    %9017 = vmatprep.subr.mxu0 %v8829
    %9018 = vmatpush1.msra.mxu0 %v8828
    %9019 = vmatprep.subr.mxu0 %v8861
    %9020 = vmatpush1.msra.mxu0 %v8858
    %9021 = vmatprep.subr.mxu0 0.0
    %9022 = vmatpush1.msra.mxu0 0.0
    %9023 = vmatprep.subr.mxu0 0.0
    %9024 = vmatpush1.msra.mxu0 0.0
    %9025 = vmatprep.subr.mxu0 0.0
    %9026 = vmatpush1.msra.mxu0 0.0
    %9027 = vmatprep.subr.mxu0 0.0
    %9028 = vmatpush1.msra.mxu0 0.0
    %9029 = vmatprep.subr.mxu0 0.0
    %9030 = vmatpush1.msra.mxu0 0.0
    %9031 = vmatprep.subr.mxu0 0.0
    %9032 = vmatpush1.msra.mxu0 0.0
    %9033 = vmatprep.subr.mxu0 0.0
    %9034 = vmatpush1.msra.mxu0 0.0
    %9035 = vmatprep.subr.mxu0 0.0
    %9036 = vmatpush1.msra.mxu0 0.0
    %9037 = vmatprep.subr.mxu0 0.0
    %9038 = vmatpush1.msra.mxu0 0.0
    %9039 = vmatprep.subr.mxu0 0.0
    %9040 = vmatpush1.msra.mxu0 0.0
    %9041 = vmatprep.subr.mxu0 0.0
    %9042 = vmatpush1.msra.mxu0 0.0
    %9043 = vmatprep.subr.mxu0 0.0
    %9044 = vmatpush1.msra.mxu0 0.0
    %9045 = vmatprep.subr.mxu0 0.0
    %9046 = vmatpush1.msra.mxu0 0.0
    %9047 = vmatprep.subr.mxu0 0.0
    %9048 = vmatpush1.msra.mxu0 0.0
    %9049 = vmatprep.subr.mxu0 0.0
    %9050 = vmatpush1.msra.mxu0 0.0
    %9051 = vmatprep.subr.mxu0 0.0
    %9052 = vmatpush1.msra.mxu0 0.0
    %9053 = vmatprep.subr.mxu0 0.0
    %9054 = vmatpush1.msra.mxu0 0.0
    %9055 = vmatprep.subr.mxu0 0.0
    %9056 = vmatpush1.msra.mxu0 0.0
    %9057 = vmatprep.subr.mxu0 0.0
    %9058 = vmatpush1.msra.mxu0 0.0
    %9059 = vmatprep.subr.mxu0 0.0
    %9060 = vmatpush1.msra.mxu0 0.0
    %9061 = vmatprep.subr.mxu0 0.0
    %9062 = vmatpush1.msra.mxu0 0.0
    %9063 = vmatprep.subr.mxu0 0.0
    %9064 = vmatpush1.msra.mxu0 0.0
    %9065 = vmatprep.subr.mxu0 0.0
    %9066 = vmatpush1.msra.mxu0 0.0
    %9067 = vmatprep.subr.mxu0 0.0
    %9068 = vmatpush1.msra.mxu0 0.0
    %9069 = vmatprep.mubr.f32.mxu0 0.0
    %9070 = vmatmul.mubr.f32.gmra.mrb[0].mxu0 %v8843
    %v9071 = vpop.f32.mrb[0].mxu0
    %v9072 = vadd.f32 %v8840, %v9071
    %v9073 = vpop.f32.mrb[0].mxu0
    %v9074 = vadd.f32 %v8840, %v9073
    %9075 = vdwg.mxu0
    %vm9076 = vcmp.ge.f32.partialorder %v8930, 0.0
    %vm9077 = vcmp.ge.f32.partialorder %v8932, 0.0
    %vm9078 = vcmp.ge.f32.partialorder %v9001, 0.0
    %vm9079 = vcmp.ge.f32.partialorder %v9003, 0.0
    %vm9080 = vcmp.ge.f32.partialorder %v9072, 0.0
    %vm9081 = vcmp.ge.f32.partialorder %v9074, 0.0
    %v9082 = vmul.f32 %v8930, 0.3
    %v9083 = vmul.f32 %v8932, 0.3
    %v9084 = vmul.f32 %v9001, 0.3
    %v9085 = vmul.f32 %v9003, 0.3
    %v9086 = vmul.f32 %v9072, 0.3
    %v9087 = vmul.f32 %v9074, 0.3
    %v9088 = vsel %vm9076, %v8930, %v9082
    %v9089 = vsel %vm9077, %v8932, %v9083
    %v9090 = vsel %vm9078, %v9001, %v9084
    %v9091 = vsel %vm9079, %v9003, %v9085
    %v9092 = vsel %vm9080, %v9072, %v9086
    %v9093 = vsel %vm9081, %v9074, %v9087
    %9094 = vrot.lane.b32.xlu0 %v9088, 64
    %v9095 = vpop.permute.xlu0 %9094
    %9096 = vrot.lane.b32.xlu0 %v9089, 64
    %v9097 = vpop.permute.xlu0 %9096
    %9098 = vrot.lane.b32.xlu0 %v9090, 64
    %v9099 = vpop.permute.xlu0 %9098
    %9100 = vrot.lane.b32.xlu0 %v9091, 64
    %v9101 = vpop.permute.xlu0 %9100
    %9102 = vrot.lane.b32.xlu0 %v9092, 64
    %v9103 = vpop.permute.xlu0 %9102
    %9104 = vrot.lane.b32.xlu0 %v9093, 64
    %v9105 = vpop.permute.xlu0 %9104
    %v9106 = vsel %vm4874, %v9103, %v9105
    %v9107 = vsel %vm4874, %v9101, %v9103
    %v9108 = vsel %vm4874, %v9099, %v9101
    %v9109 = vsel %vm4874, %v9097, %v9099
    %v9110 = vsel %vm4874, %v9095, %v9097
    %v9111 = vsel %vm4874, %v9105, %v9095
    %v9112 = vld [vmem:[%s4881] ss:$8 sm:$0xf]
    %v9113 = vld [vmem:[%s4881] ss:$8 sm:$0x30]
    %v9114 = vor.u32 %v9112, %v9113
    %v9116 = vlaneseq
    %v9117 = vshrl.u32 %v9116, 7
    %v9118 = vsub.s32 0, %v9117
    %v9119 = vrot.slane %v9114, %v9118
    %v9120 = vlaneseq
    %v9121 = vshrl.u32 %v9120, 7
    %v9122 = vsub.s32 1, %v9121
    %v9123 = vrot.slane %v9114, %v9122
    %v9124 = vlaneseq
    %v9125 = vshrl.u32 %v9124, 7
    %v9126 = vsub.s32 2, %v9125
    %v9127 = vrot.slane %v9114, %v9126
    %v9128 = vlaneseq
    %v9129 = vshrl.u32 %v9128, 7
    %v9130 = vsub.s32 3, %v9129
    %v9131 = vrot.slane %v9114, %v9130
    %v9132 = vlaneseq
    %v9133 = vshrl.u32 %v9132, 7
    %v9134 = vsub.s32 4, %v9133
    %v9135 = vrot.slane %v9114, %v9134
    %v9136 = vlaneseq
    %v9137 = vshrl.u32 %v9136, 7
    %v9138 = vsub.s32 5, %v9137
    %v9139 = vrot.slane %v9114, %v9138
    %v9146 = vmul.f32 %v9111, %v9119
    %v9147 = vmul.f32 %v9110, %v9123
    %v9148 = vmul.f32 %v9109, %v9127
    %v9149 = vmul.f32 %v9108, %v9131
    %v9150 = vmul.f32 %v9107, %v9135
    %v9151 = vmul.f32 %v9106, %v9139
    %9152 = vst [vmem:[#allocation2] sm:$0x7f] %v9146
    %9153 = vst [vmem:[#allocation2 + $0x8] sm:$0x7f] %v9147
    %9154 = vst [vmem:[#allocation2 + $0x10] sm:$0x7f] %v9148
    %9155 = vst [vmem:[#allocation2 + $0x18] sm:$0x7f] %v9149
    %9156 = vst [vmem:[#allocation2 + $0x20] sm:$0x7f] %v9150
    %9157 = vst [vmem:[#allocation2 + $0x28] sm:$0x7f] %v9151
    %9158 = vrot.lane.b32.xlu0 %v9088, 48
    %v9159 = vpop.permute.xlu0 %9158
    %9160 = vrot.lane.b32.xlu0 %v9089, 48
    %v9161 = vpop.permute.xlu0 %9160
    %9162 = vrot.lane.b32.xlu0 %v9090, 48
    %v9163 = vpop.permute.xlu0 %9162
    %9164 = vrot.lane.b32.xlu0 %v9091, 48
    %v9165 = vpop.permute.xlu0 %9164
    %9166 = vrot.lane.b32.xlu0 %v9092, 48
    %v9167 = vpop.permute.xlu0 %9166
    %9168 = vrot.lane.b32.xlu0 %v9093, 48
    %v9169 = vpop.permute.xlu0 %9168
    %v9170 = vsel %vm4940, %v9167, %v9169
    %v9171 = vsel %vm4940, %v9165, %v9167
    %v9172 = vsel %vm4940, %v9163, %v9165
    %v9173 = vsel %vm4940, %v9161, %v9163
    %v9174 = vsel %vm4940, %v9159, %v9161
    %v9175 = vsel %vm4940, %v9169, %v9159
    %v9176 = vld [vmem:[%s4947] ss:$8 sm:$0xf]
    %v9177 = vld [vmem:[%s4947] ss:$8 sm:$0x30]
    %v9178 = vor.u32 %v9176, %v9177
    %v9180 = vlaneseq
    %v9181 = vshrl.u32 %v9180, 7
    %v9182 = vsub.s32 0, %v9181
    %v9183 = vrot.slane %v9178, %v9182
    %v9184 = vlaneseq
    %v9185 = vshrl.u32 %v9184, 7
    %v9186 = vsub.s32 1, %v9185
    %v9187 = vrot.slane %v9178, %v9186
    %v9188 = vlaneseq
    %v9189 = vshrl.u32 %v9188, 7
    %v9190 = vsub.s32 2, %v9189
    %v9191 = vrot.slane %v9178, %v9190
    %v9192 = vlaneseq
    %v9193 = vshrl.u32 %v9192, 7
    %v9194 = vsub.s32 3, %v9193
    %v9195 = vrot.slane %v9178, %v9194
    %v9196 = vlaneseq
    %v9197 = vshrl.u32 %v9196, 7
    %v9198 = vsub.s32 4, %v9197
    %v9199 = vrot.slane %v9178, %v9198
    %v9200 = vlaneseq
    %v9201 = vshrl.u32 %v9200, 7
    %v9202 = vsub.s32 5, %v9201
    %v9203 = vrot.slane %v9178, %v9202
    %v9210 = vmul.f32 %v9175, %v9183
    %v9211 = vmul.f32 %v9174, %v9187
    %v9212 = vmul.f32 %v9173, %v9191
    %v9213 = vmul.f32 %v9172, %v9195
    %v9214 = vmul.f32 %v9171, %v9199
    %v9215 = vmul.f32 %v9170, %v9203
    %v9222 = vrot.slane %v9210, 1
    %v9223 = vrot.slane %v9211, 1
    %v9224 = vrot.slane %v9212, 1
    %v9225 = vrot.slane %v9213, 1
    %v9226 = vrot.slane %v9214, 1
    %v9227 = vrot.slane %v9215, 1
    %9234 = vst [vmem:[#allocation2] sm:$0x80] %v9222
    %9235 = vst [vmem:[#allocation2 + $0x8] sm:$0x80] %v9223
    %9236 = vst [vmem:[#allocation2 + $0x10] sm:$0x80] %v9224
    %9237 = vst [vmem:[#allocation2 + $0x18] sm:$0x80] %v9225
    %9238 = vst [vmem:[#allocation2 + $0x20] sm:$0x80] %v9226
    %9239 = vst [vmem:[#allocation2 + $0x28] sm:$0x80] %v9227
    %9240 = vst [vmem:[#allocation2 + $0x30] sm:$0x3f] %v9222
    %9241 = vst [vmem:[#allocation2 + $0x38] sm:$0x3f] %v9223
    %9242 = vst [vmem:[#allocation2 + $0x40] sm:$0x3f] %v9224
    %9243 = vst [vmem:[#allocation2 + $0x48] sm:$0x3f] %v9225
    %9244 = vst [vmem:[#allocation2 + $0x50] sm:$0x3f] %v9226
    %9245 = vst [vmem:[#allocation2 + $0x58] sm:$0x3f] %v9227
    %9246 = vrot.lane.b32.xlu0 %v9088, 32
    %v9247 = vpop.permute.xlu0 %9246
    %9248 = vrot.lane.b32.xlu0 %v9089, 32
    %v9249 = vpop.permute.xlu0 %9248
    %9250 = vrot.lane.b32.xlu0 %v9090, 32
    %v9251 = vpop.permute.xlu0 %9250
    %9252 = vrot.lane.b32.xlu0 %v9091, 32
    %v9253 = vpop.permute.xlu0 %9252
    %9254 = vrot.lane.b32.xlu0 %v9092, 32
    %v9255 = vpop.permute.xlu0 %9254
    %9256 = vrot.lane.b32.xlu0 %v9093, 32
    %v9257 = vpop.permute.xlu0 %9256
    %v9258 = vsel %vm695, %v9255, %v9257
    %v9259 = vsel %vm695, %v9253, %v9255
    %v9260 = vsel %vm695, %v9251, %v9253
    %v9261 = vsel %vm695, %v9249, %v9251
    %v9262 = vsel %vm695, %v9247, %v9249
    %v9263 = vsel %vm695, %v9257, %v9247
    %v9264 = vld [vmem:[%s702] ss:$8 sm:$0xf]
    %v9265 = vld [vmem:[%s702] ss:$8 sm:$0x30]
    %v9266 = vor.u32 %v9264, %v9265
    %v9268 = vlaneseq
    %v9269 = vshrl.u32 %v9268, 7
    %v9270 = vsub.s32 0, %v9269
    %v9271 = vrot.slane %v9266, %v9270
    %v9272 = vlaneseq
    %v9273 = vshrl.u32 %v9272, 7
    %v9274 = vsub.s32 1, %v9273
    %v9275 = vrot.slane %v9266, %v9274
    %v9276 = vlaneseq
    %v9277 = vshrl.u32 %v9276, 7
    %v9278 = vsub.s32 2, %v9277
    %v9279 = vrot.slane %v9266, %v9278
    %v9280 = vlaneseq
    %v9281 = vshrl.u32 %v9280, 7
    %v9282 = vsub.s32 3, %v9281
    %v9283 = vrot.slane %v9266, %v9282
    %v9284 = vlaneseq
    %v9285 = vshrl.u32 %v9284, 7
    %v9286 = vsub.s32 4, %v9285
    %v9287 = vrot.slane %v9266, %v9286
    %v9288 = vlaneseq
    %v9289 = vshrl.u32 %v9288, 7
    %v9290 = vsub.s32 5, %v9289
    %v9291 = vrot.slane %v9266, %v9290
    %v9298 = vmul.f32 %v9263, %v9271
    %v9299 = vmul.f32 %v9262, %v9275
    %v9300 = vmul.f32 %v9261, %v9279
    %v9301 = vmul.f32 %v9260, %v9283
    %v9302 = vmul.f32 %v9259, %v9287
    %v9303 = vmul.f32 %v9258, %v9291
    %v9310 = vrot.slane %v9298, 2
    %v9311 = vrot.slane %v9299, 2
    %v9312 = vrot.slane %v9300, 2
    %v9313 = vrot.slane %v9301, 2
    %v9314 = vrot.slane %v9302, 2
    %v9315 = vrot.slane %v9303, 2
    %9322 = vst [vmem:[#allocation2 + $0x30] sm:$0xc0] %v9310
    %9323 = vst [vmem:[#allocation2 + $0x38] sm:$0xc0] %v9311
    %9324 = vst [vmem:[#allocation2 + $0x40] sm:$0xc0] %v9312
    %9325 = vst [vmem:[#allocation2 + $0x48] sm:$0xc0] %v9313
    %9326 = vst [vmem:[#allocation2 + $0x50] sm:$0xc0] %v9314
    %9327 = vst [vmem:[#allocation2 + $0x58] sm:$0xc0] %v9315
    %9328 = vst [vmem:[#allocation2 + $0x60] sm:$0x1f] %v9310
    %9329 = vst [vmem:[#allocation2 + $0x68] sm:$0x1f] %v9311
    %9330 = vst [vmem:[#allocation2 + $0x70] sm:$0x1f] %v9312
    %9331 = vst [vmem:[#allocation2 + $0x78] sm:$0x1f] %v9313
    %9332 = vst [vmem:[#allocation2 + $0x80] sm:$0x1f] %v9314
    %9333 = vst [vmem:[#allocation2 + $0x88] sm:$0x1f] %v9315
    %9334 = vrot.lane.b32.xlu0 %v9088, 16
    %v9335 = vpop.permute.xlu0 %9334
    %9336 = vrot.lane.b32.xlu0 %v9089, 16
    %v9337 = vpop.permute.xlu0 %9336
    %9338 = vrot.lane.b32.xlu0 %v9090, 16
    %v9339 = vpop.permute.xlu0 %9338
    %9340 = vrot.lane.b32.xlu0 %v9091, 16
    %v9341 = vpop.permute.xlu0 %9340
    %9342 = vrot.lane.b32.xlu0 %v9092, 16
    %v9343 = vpop.permute.xlu0 %9342
    %9344 = vrot.lane.b32.xlu0 %v9093, 16
    %v9345 = vpop.permute.xlu0 %9344
    %v9346 = vsel %vm1097, %v9343, %v9345
    %v9347 = vsel %vm1097, %v9341, %v9343
    %v9348 = vsel %vm1097, %v9339, %v9341
    %v9349 = vsel %vm1097, %v9337, %v9339
    %v9350 = vsel %vm1097, %v9335, %v9337
    %v9351 = vsel %vm1097, %v9345, %v9335
    %v9352 = vld [vmem:[%s1104] ss:$8 sm:$0xf]
    %v9353 = vld [vmem:[%s1104] ss:$8 sm:$0x30]
    %v9354 = vor.u32 %v9352, %v9353
    %v9356 = vlaneseq
    %v9357 = vshrl.u32 %v9356, 7
    %v9358 = vsub.s32 0, %v9357
    %v9359 = vrot.slane %v9354, %v9358
    %v9360 = vlaneseq
    %v9361 = vshrl.u32 %v9360, 7
    %v9362 = vsub.s32 1, %v9361
    %v9363 = vrot.slane %v9354, %v9362
    %v9364 = vlaneseq
    %v9365 = vshrl.u32 %v9364, 7
    %v9366 = vsub.s32 2, %v9365
    %v9367 = vrot.slane %v9354, %v9366
    %v9368 = vlaneseq
    %v9369 = vshrl.u32 %v9368, 7
    %v9370 = vsub.s32 3, %v9369
    %v9371 = vrot.slane %v9354, %v9370
    %v9372 = vlaneseq
    %v9373 = vshrl.u32 %v9372, 7
    %v9374 = vsub.s32 4, %v9373
    %v9375 = vrot.slane %v9354, %v9374
    %v9376 = vlaneseq
    %v9377 = vshrl.u32 %v9376, 7
    %v9378 = vsub.s32 5, %v9377
    %v9379 = vrot.slane %v9354, %v9378
    %v9386 = vmul.f32 %v9351, %v9359
    %v9387 = vmul.f32 %v9350, %v9363
    %v9388 = vmul.f32 %v9349, %v9367
    %v9389 = vmul.f32 %v9348, %v9371
    %v9390 = vmul.f32 %v9347, %v9375
    %v9391 = vmul.f32 %v9346, %v9379
    %v9398 = vrot.slane %v9386, 3
    %v9399 = vrot.slane %v9387, 3
    %v9400 = vrot.slane %v9388, 3
    %v9401 = vrot.slane %v9389, 3
    %v9402 = vrot.slane %v9390, 3
    %v9403 = vrot.slane %v9391, 3
    %9410 = vst [vmem:[#allocation2 + $0x60] sm:$0xe0] %v9398
    %9411 = vst [vmem:[#allocation2 + $0x68] sm:$0xe0] %v9399
    %9412 = vst [vmem:[#allocation2 + $0x70] sm:$0xe0] %v9400
    %9413 = vst [vmem:[#allocation2 + $0x78] sm:$0xe0] %v9401
    %9414 = vst [vmem:[#allocation2 + $0x80] sm:$0xe0] %v9402
    %9415 = vst [vmem:[#allocation2 + $0x88] sm:$0xe0] %v9403
    %9416 = vst [vmem:[#allocation2 + $0x90] sm:$0xf] %v9398
    %9417 = vst [vmem:[#allocation2 + $0x98] sm:$0xf] %v9399
    %9418 = vst [vmem:[#allocation2 + $0xa0] sm:$0xf] %v9400
    %9419 = vst [vmem:[#allocation2 + $0xa8] sm:$0xf] %v9401
    %9420 = vst [vmem:[#allocation2 + $0xb0] sm:$0xf] %v9402
    %9421 = vst [vmem:[#allocation2 + $0xb8] sm:$0xf] %v9403
    %v9428 = vrot.slane %v9088, 4
    %v9429 = vrot.slane %v9089, 4
    %v9430 = vrot.slane %v9090, 4
    %v9431 = vrot.slane %v9091, 4
    %v9432 = vrot.slane %v9092, 4
    %v9433 = vrot.slane %v9093, 4
    %9440 = vst [vmem:[#allocation2 + $0x90] sm:$0xf0] %v9428
    %9441 = vst [vmem:[#allocation2 + $0x98] sm:$0xf0] %v9429
    %9442 = vst [vmem:[#allocation2 + $0xa0] sm:$0xf0] %v9430
    %9443 = vst [vmem:[#allocation2 + $0xa8] sm:$0xf0] %v9431
    %9444 = vst [vmem:[#allocation2 + $0xb0] sm:$0xf0] %v9432
    %9445 = vst [vmem:[#allocation2 + $0xb8] sm:$0xf0] %v9433
    %9446 = vst [vmem:[#allocation2 + $0xc0] sm:$0x7] %v9428
    %9447 = vst [vmem:[#allocation2 + $0xc8] sm:$0x7] %v9429
    %9448 = vst [vmem:[#allocation2 + $0xd0] sm:$0x7] %v9430
    %9449 = vst [vmem:[#allocation2 + $0xd8] sm:$0x7] %v9431
    %9450 = vst [vmem:[#allocation2 + $0xe0] sm:$0x7] %v9432
    %9451 = vst [vmem:[#allocation2 + $0xe8] sm:$0x7] %v9433
    %9452 = vrot.lane.b32.xlu0 %v9088, 112
    %v9453 = vpop.permute.xlu0 %9452
    %9454 = vrot.lane.b32.xlu0 %v9089, 112
    %v9455 = vpop.permute.xlu0 %9454
    %9456 = vrot.lane.b32.xlu0 %v9090, 112
    %v9457 = vpop.permute.xlu0 %9456
    %9458 = vrot.lane.b32.xlu0 %v9091, 112
    %v9459 = vpop.permute.xlu0 %9458
    %9460 = vrot.lane.b32.xlu0 %v9092, 112
    %v9461 = vpop.permute.xlu0 %9460
    %9462 = vrot.lane.b32.xlu0 %v9093, 112
    %v9463 = vpop.permute.xlu0 %9462
    %v9464 = vsel %vm1823, %v9461, %v9463
    %v9465 = vsel %vm1823, %v9459, %v9461
    %v9466 = vsel %vm1823, %v9457, %v9459
    %v9467 = vsel %vm1823, %v9455, %v9457
    %v9468 = vsel %vm1823, %v9453, %v9455
    %v9469 = vsel %vm1823, %v9463, %v9453
    %v9470 = vld [vmem:[%s1830] ss:$8 sm:$0xf]
    %v9471 = vld [vmem:[%s1830] ss:$8 sm:$0x30]
    %v9472 = vor.u32 %v9470, %v9471
    %v9474 = vlaneseq
    %v9475 = vshrl.u32 %v9474, 7
    %v9476 = vsub.s32 0, %v9475
    %v9477 = vrot.slane %v9472, %v9476
    %v9478 = vlaneseq
    %v9479 = vshrl.u32 %v9478, 7
    %v9480 = vsub.s32 1, %v9479
    %v9481 = vrot.slane %v9472, %v9480
    %v9482 = vlaneseq
    %v9483 = vshrl.u32 %v9482, 7
    %v9484 = vsub.s32 2, %v9483
    %v9485 = vrot.slane %v9472, %v9484
    %v9486 = vlaneseq
    %v9487 = vshrl.u32 %v9486, 7
    %v9488 = vsub.s32 3, %v9487
    %v9489 = vrot.slane %v9472, %v9488
    %v9490 = vlaneseq
    %v9491 = vshrl.u32 %v9490, 7
    %v9492 = vsub.s32 4, %v9491
    %v9493 = vrot.slane %v9472, %v9492
    %v9494 = vlaneseq
    %v9495 = vshrl.u32 %v9494, 7
    %v9496 = vsub.s32 5, %v9495
    %v9497 = vrot.slane %v9472, %v9496
    %v9504 = vmul.f32 %v9468, %v9477
    %v9505 = vmul.f32 %v9467, %v9481
    %v9506 = vmul.f32 %v9466, %v9485
    %v9507 = vmul.f32 %v9465, %v9489
    %v9508 = vmul.f32 %v9464, %v9493
    %v9509 = vmul.f32 %v9469, %v9497
    %v9516 = vrot.slane %v9504, 5
    %v9517 = vrot.slane %v9505, 5
    %v9518 = vrot.slane %v9506, 5
    %v9519 = vrot.slane %v9507, 5
    %v9520 = vrot.slane %v9508, 5
    %v9521 = vrot.slane %v9509, 5
    %9528 = vst [vmem:[#allocation2 + $0xc0] sm:$0xf8] %v9516
    %9529 = vst [vmem:[#allocation2 + $0xc8] sm:$0xf8] %v9517
    %9530 = vst [vmem:[#allocation2 + $0xd0] sm:$0xf8] %v9518
    %9531 = vst [vmem:[#allocation2 + $0xd8] sm:$0xf8] %v9519
    %9532 = vst [vmem:[#allocation2 + $0xe0] sm:$0xf8] %v9520
    %9533 = vst [vmem:[#allocation2 + $0xe8] sm:$0xf8] %v9521
    %9534 = vst [vmem:[#allocation2 + $0xf0] sm:$0x3] %v9516
    %9535 = vst [vmem:[#allocation2 + $0xf8] sm:$0x3] %v9517
    %9536 = vst [vmem:[#allocation2 + $0x100] sm:$0x3] %v9518
    %9537 = vst [vmem:[#allocation2 + $0x108] sm:$0x3] %v9519
    %9538 = vst [vmem:[#allocation2 + $0x110] sm:$0x3] %v9520
    %9539 = vst [vmem:[#allocation2 + $0x118] sm:$0x3] %v9521
    %9540 = vrot.lane.b32.xlu0 %v9088, 96
    %v9541 = vpop.permute.xlu0 %9540
    %9542 = vrot.lane.b32.xlu0 %v9089, 96
    %v9543 = vpop.permute.xlu0 %9542
    %9544 = vrot.lane.b32.xlu0 %v9090, 96
    %v9545 = vpop.permute.xlu0 %9544
    %9546 = vrot.lane.b32.xlu0 %v9091, 96
    %v9547 = vpop.permute.xlu0 %9546
    %9548 = vrot.lane.b32.xlu0 %v9092, 96
    %v9549 = vpop.permute.xlu0 %9548
    %9550 = vrot.lane.b32.xlu0 %v9093, 96
    %v9551 = vpop.permute.xlu0 %9550
    %v9552 = vsel %vm2225, %v9549, %v9551
    %v9553 = vsel %vm2225, %v9547, %v9549
    %v9554 = vsel %vm2225, %v9545, %v9547
    %v9555 = vsel %vm2225, %v9543, %v9545
    %v9556 = vsel %vm2225, %v9541, %v9543
    %v9557 = vsel %vm2225, %v9551, %v9541
    %v9558 = vld [vmem:[%s2232] ss:$8 sm:$0xf]
    %v9559 = vld [vmem:[%s2232] ss:$8 sm:$0x30]
    %v9560 = vor.u32 %v9558, %v9559
    %v9562 = vlaneseq
    %v9563 = vshrl.u32 %v9562, 7
    %v9564 = vsub.s32 0, %v9563
    %v9565 = vrot.slane %v9560, %v9564
    %v9566 = vlaneseq
    %v9567 = vshrl.u32 %v9566, 7
    %v9568 = vsub.s32 1, %v9567
    %v9569 = vrot.slane %v9560, %v9568
    %v9570 = vlaneseq
    %v9571 = vshrl.u32 %v9570, 7
    %v9572 = vsub.s32 2, %v9571
    %v9573 = vrot.slane %v9560, %v9572
    %v9574 = vlaneseq
    %v9575 = vshrl.u32 %v9574, 7
    %v9576 = vsub.s32 3, %v9575
    %v9577 = vrot.slane %v9560, %v9576
    %v9578 = vlaneseq
    %v9579 = vshrl.u32 %v9578, 7
    %v9580 = vsub.s32 4, %v9579
    %v9581 = vrot.slane %v9560, %v9580
    %v9582 = vlaneseq
    %v9583 = vshrl.u32 %v9582, 7
    %v9584 = vsub.s32 5, %v9583
    %v9585 = vrot.slane %v9560, %v9584
    %v9592 = vmul.f32 %v9556, %v9565
    %v9593 = vmul.f32 %v9555, %v9569
    %v9594 = vmul.f32 %v9554, %v9573
    %v9595 = vmul.f32 %v9553, %v9577
    %v9596 = vmul.f32 %v9552, %v9581
    %v9597 = vmul.f32 %v9557, %v9585
    %v9604 = vrot.slane %v9592, 6
    %v9605 = vrot.slane %v9593, 6
    %v9606 = vrot.slane %v9594, 6
    %v9607 = vrot.slane %v9595, 6
    %v9608 = vrot.slane %v9596, 6
    %v9609 = vrot.slane %v9597, 6
    %9616 = vst [vmem:[#allocation2 + $0xf0] sm:$0xfc] %v9604
    %9617 = vst [vmem:[#allocation2 + $0xf8] sm:$0xfc] %v9605
    %9618 = vst [vmem:[#allocation2 + $0x100] sm:$0xfc] %v9606
    %9619 = vst [vmem:[#allocation2 + $0x108] sm:$0xfc] %v9607
    %9620 = vst [vmem:[#allocation2 + $0x110] sm:$0xfc] %v9608
    %9621 = vst [vmem:[#allocation2 + $0x118] sm:$0xfc] %v9609
    %9622 = vst [vmem:[#allocation2 + $0x120] sm:$0x1] %v9604
    %9623 = vst [vmem:[#allocation2 + $0x128] sm:$0x1] %v9605
    %9624 = vst [vmem:[#allocation2 + $0x130] sm:$0x1] %v9606
    %9625 = vst [vmem:[#allocation2 + $0x138] sm:$0x1] %v9607
    %9626 = vst [vmem:[#allocation2 + $0x140] sm:$0x1] %v9608
    %9627 = vst [vmem:[#allocation2 + $0x148] sm:$0x1] %v9609
    %9628 = vrot.lane.b32.xlu0 %v9088, 80
    %v9629 = vpop.permute.xlu0 %9628
    %9630 = vrot.lane.b32.xlu0 %v9089, 80
    %v9631 = vpop.permute.xlu0 %9630
    %9632 = vrot.lane.b32.xlu0 %v9090, 80
    %v9633 = vpop.permute.xlu0 %9632
    %9634 = vrot.lane.b32.xlu0 %v9091, 80
    %v9635 = vpop.permute.xlu0 %9634
    %9636 = vrot.lane.b32.xlu0 %v9092, 80
    %v9637 = vpop.permute.xlu0 %9636
    %9638 = vrot.lane.b32.xlu0 %v9093, 80
    %v9639 = vpop.permute.xlu0 %9638
    %v9640 = vsel %vm5412, %v9637, %v9639
    %v9641 = vsel %vm5412, %v9635, %v9637
    %v9642 = vsel %vm5412, %v9633, %v9635
    %v9643 = vsel %vm5412, %v9631, %v9633
    %v9644 = vsel %vm5412, %v9629, %v9631
    %v9645 = vsel %vm5412, %v9639, %v9629
    %v9646 = vld [vmem:[%s5419] ss:$8 sm:$0xf]
    %v9647 = vld [vmem:[%s5419] ss:$8 sm:$0x30]
    %v9648 = vor.u32 %v9646, %v9647
    %v9650 = vlaneseq
    %v9651 = vshrl.u32 %v9650, 7
    %v9652 = vsub.s32 0, %v9651
    %v9653 = vrot.slane %v9648, %v9652
    %v9654 = vlaneseq
    %v9655 = vshrl.u32 %v9654, 7
    %v9656 = vsub.s32 1, %v9655
    %v9657 = vrot.slane %v9648, %v9656
    %v9658 = vlaneseq
    %v9659 = vshrl.u32 %v9658, 7
    %v9660 = vsub.s32 2, %v9659
    %v9661 = vrot.slane %v9648, %v9660
    %v9662 = vlaneseq
    %v9663 = vshrl.u32 %v9662, 7
    %v9664 = vsub.s32 3, %v9663
    %v9665 = vrot.slane %v9648, %v9664
    %v9666 = vlaneseq
    %v9667 = vshrl.u32 %v9666, 7
    %v9668 = vsub.s32 4, %v9667
    %v9669 = vrot.slane %v9648, %v9668
    %v9670 = vlaneseq
    %v9671 = vshrl.u32 %v9670, 7
    %v9672 = vsub.s32 5, %v9671
    %v9673 = vrot.slane %v9648, %v9672
    %v9680 = vmul.f32 %v9644, %v9653
    %v9681 = vmul.f32 %v9643, %v9657
    %v9682 = vmul.f32 %v9642, %v9661
    %v9683 = vmul.f32 %v9641, %v9665
    %v9684 = vmul.f32 %v9640, %v9669
    %v9685 = vmul.f32 %v9645, %v9673
    %v9692 = vrot.slane %v9680, 7
    %v9693 = vrot.slane %v9681, 7
    %v9694 = vrot.slane %v9682, 7
    %v9695 = vrot.slane %v9683, 7
    %v9696 = vrot.slane %v9684, 7
    %v9697 = vrot.slane %v9685, 7
    %9704 = vst [vmem:[#allocation2 + $0x120] sm:$0xfe] %v9692
    %9705 = vst [vmem:[#allocation2 + $0x128] sm:$0xfe] %v9693
    %9706 = vst [vmem:[#allocation2 + $0x130] sm:$0xfe] %v9694
    %9707 = vst [vmem:[#allocation2 + $0x138] sm:$0xfe] %v9695
    %9708 = vst [vmem:[#allocation2 + $0x140] sm:$0xfe] %v9696
    %9709 = vst [vmem:[#allocation2 + $0x148] sm:$0xfe] %v9697
    %v9710 = vld [vmem:[%s5484] ss:$8 sm:$0xf]
    %v9711 = vld [vmem:[%s5484] ss:$8 sm:$0x30]
    %v9712 = vor.u32 %v9710, %v9711
    %v9714 = vlaneseq
    %v9715 = vshrl.u32 %v9714, 7
    %v9716 = vsub.s32 0, %v9715
    %v9717 = vrot.slane %v9712, %v9716
    %v9718 = vlaneseq
    %v9719 = vshrl.u32 %v9718, 7
    %v9720 = vsub.s32 1, %v9719
    %v9721 = vrot.slane %v9712, %v9720
    %v9722 = vlaneseq
    %v9723 = vshrl.u32 %v9722, 7
    %v9724 = vsub.s32 2, %v9723
    %v9725 = vrot.slane %v9712, %v9724
    %v9726 = vlaneseq
    %v9727 = vshrl.u32 %v9726, 7
    %v9728 = vsub.s32 3, %v9727
    %v9729 = vrot.slane %v9712, %v9728
    %v9730 = vlaneseq
    %v9731 = vshrl.u32 %v9730, 7
    %v9732 = vsub.s32 4, %v9731
    %v9733 = vrot.slane %v9712, %v9732
    %v9734 = vlaneseq
    %v9735 = vshrl.u32 %v9734, 7
    %v9736 = vsub.s32 5, %v9735
    %v9737 = vrot.slane %v9712, %v9736
    %v9744 = vmul.f32 %v9110, %v9717
    %v9745 = vmul.f32 %v9109, %v9721
    %v9746 = vmul.f32 %v9108, %v9725
    %v9747 = vmul.f32 %v9107, %v9729
    %v9748 = vmul.f32 %v9106, %v9733
    %v9749 = vmul.f32 %v9111, %v9737
    %9750 = vst [vmem:[#allocation2 + $0x150] sm:$0x7f] %v9744
    %9751 = vst [vmem:[#allocation2 + $0x158] sm:$0x7f] %v9745
    %9752 = vst [vmem:[#allocation2 + $0x160] sm:$0x7f] %v9746
    %9753 = vst [vmem:[#allocation2 + $0x168] sm:$0x7f] %v9747
    %9754 = vst [vmem:[#allocation2 + $0x170] sm:$0x7f] %v9748
    %9755 = vst [vmem:[#allocation2 + $0x178] sm:$0x7f] %v9749
    %v9756 = vld [vmem:[#allocation7 + $0x48] sm:$0x7f]
    %v9757 = vld [vmem:[#allocation2] sm:$0xff]
    %v9758 = vld [vmem:[#allocation2 + $0x8] sm:$0xff]
    %v9759 = vld [vmem:[#allocation2 + $0x10] sm:$0xff]
    %v9760 = vld [vmem:[#allocation2 + $0x18] sm:$0xff]
    %v9761 = vld [vmem:[#allocation2 + $0x20] sm:$0xff]
    %v9762 = vld [vmem:[#allocation2 + $0x28] sm:$0xff]
    %v9763 = vld [vmem:[#allocation2 + $0x30] sm:$0xff]
    %v9764 = vld [vmem:[#allocation2 + $0x38] sm:$0xff]
    %v9765 = vld [vmem:[#allocation2 + $0x40] sm:$0xff]
    %v9766 = vld [vmem:[#allocation2 + $0x48] sm:$0xff]
    %v9767 = vld [vmem:[#allocation2 + $0x50] sm:$0xff]
    %v9768 = vld [vmem:[#allocation2 + $0x58] sm:$0xff]
    %v9769 = vld [vmem:[#allocation2 + $0x60] sm:$0xff]
    %v9770 = vld [vmem:[#allocation2 + $0x68] sm:$0xff]
    %v9771 = vld [vmem:[#allocation2 + $0x70] sm:$0xff]
    %v9772 = vld [vmem:[#allocation2 + $0x78] sm:$0xff]
    %v9773 = vld [vmem:[#allocation2 + $0x80] sm:$0xff]
    %v9774 = vld [vmem:[#allocation2 + $0x88] sm:$0xff]
    %v9775 = vld [vmem:[#allocation2 + $0x90] sm:$0xff]
    %v9776 = vld [vmem:[#allocation2 + $0x98] sm:$0xff]
    %v9777 = vld [vmem:[#allocation2 + $0xa0] sm:$0xff]
    %v9778 = vld [vmem:[#allocation2 + $0xa8] sm:$0xff]
    %v9779 = vld [vmem:[#allocation2 + $0xb0] sm:$0xff]
    %v9780 = vld [vmem:[#allocation2 + $0xb8] sm:$0xff]
    %v9781 = vld [vmem:[#allocation2 + $0xc0] sm:$0xff]
    %v9782 = vld [vmem:[#allocation2 + $0xc8] sm:$0xff]
    %v9783 = vld [vmem:[#allocation2 + $0xd0] sm:$0xff]
    %v9784 = vld [vmem:[#allocation2 + $0xd8] sm:$0xff]
    %v9785 = vld [vmem:[#allocation2 + $0xe0] sm:$0xff]
    %v9786 = vld [vmem:[#allocation2 + $0xe8] sm:$0xff]
    %v9787 = vld [vmem:[#allocation2 + $0xf0] sm:$0xff]
    %v9788 = vld [vmem:[#allocation2 + $0xf8] sm:$0xff]
    %v9789 = vld [vmem:[#allocation2 + $0x100] sm:$0xff]
    %v9790 = vld [vmem:[#allocation2 + $0x108] sm:$0xff]
    %v9791 = vld [vmem:[#allocation2 + $0x110] sm:$0xff]
    %v9792 = vld [vmem:[#allocation2 + $0x118] sm:$0xff]
    %v9793 = vld [vmem:[#allocation2 + $0x120] sm:$0xff]
    %v9794 = vld [vmem:[#allocation2 + $0x128] sm:$0xff]
    %v9795 = vld [vmem:[#allocation2 + $0x130] sm:$0xff]
    %v9796 = vld [vmem:[#allocation2 + $0x138] sm:$0xff]
    %v9797 = vld [vmem:[#allocation2 + $0x140] sm:$0xff]
    %v9798 = vld [vmem:[#allocation2 + $0x148] sm:$0xff]
    %v9799 = vld [vmem:[#allocation2 + $0x150] sm:$0x7f]
    %v9800 = vld [vmem:[#allocation2 + $0x158] sm:$0x7f]
    %v9801 = vld [vmem:[#allocation2 + $0x160] sm:$0x7f]
    %v9802 = vld [vmem:[#allocation2 + $0x168] sm:$0x7f]
    %v9803 = vld [vmem:[#allocation2 + $0x170] sm:$0x7f]
    %v9804 = vld [vmem:[#allocation2 + $0x178] sm:$0x7f]
    %v9805 = vld [vmem:[#allocation8] sm:$0x7f]
    %9807 = vset.pattern.permute.xlu0 9
    %9808 = vperm.xlu0 %9807, %v9805
    %v9809 = vpop.permute.xlu0 %9808
    %v9812 = vsel %vm4608, %v9756, 0
    %v9815 = vsel %vm4612, %v9799, 0
    %v9818 = vsel %vm4612, %v9800, 0
    %v9821 = vsel %vm4612, %v9801, 0
    %v9824 = vsel %vm4612, %v9802, 0
    %v9827 = vsel %vm4612, %v9803, 0
    %v9830 = vsel %vm4612, %v9804, 0
    %9832 = vmatprep.subr.mxu0 %v9758
    %9833 = vmatpush1.msra.mxu0 %v9757
    %9834 = vmatprep.subr.mxu0 %v9764
    %9835 = vmatpush1.msra.mxu0 %v9763
    %9836 = vmatprep.subr.mxu0 %v9770
    %9837 = vmatpush1.msra.mxu0 %v9769
    %9838 = vmatprep.subr.mxu0 %v9776
    %9839 = vmatpush1.msra.mxu0 %v9775
    %9840 = vmatprep.subr.mxu0 %v9782
    %9841 = vmatpush1.msra.mxu0 %v9781
    %9842 = vmatprep.subr.mxu0 %v9788
    %9843 = vmatpush1.msra.mxu0 %v9787
    %9844 = vmatprep.subr.mxu0 %v9794
    %9845 = vmatpush1.msra.mxu0 %v9793
    %9846 = vmatprep.subr.mxu0 %v9818
    %9847 = vmatpush1.msra.mxu0 %v9815
    %9848 = vmatprep.subr.mxu0 0.0
    %9849 = vmatpush1.msra.mxu0 0.0
    %9850 = vmatprep.subr.mxu0 0.0
    %9851 = vmatpush1.msra.mxu0 0.0
    %9852 = vmatprep.subr.mxu0 0.0
    %9853 = vmatpush1.msra.mxu0 0.0
    %9854 = vmatprep.subr.mxu0 0.0
    %9855 = vmatpush1.msra.mxu0 0.0
    %9856 = vmatprep.subr.mxu0 0.0
    %9857 = vmatpush1.msra.mxu0 0.0
    %9858 = vmatprep.subr.mxu0 0.0
    %9859 = vmatpush1.msra.mxu0 0.0
    %9860 = vmatprep.subr.mxu0 0.0
    %9861 = vmatpush1.msra.mxu0 0.0
    %9862 = vmatprep.subr.mxu0 0.0
    %9863 = vmatpush1.msra.mxu0 0.0
    %9864 = vmatprep.subr.mxu0 0.0
    %9865 = vmatpush1.msra.mxu0 0.0
    %9866 = vmatprep.subr.mxu0 0.0
    %9867 = vmatpush1.msra.mxu0 0.0
    %9868 = vmatprep.subr.mxu0 0.0
    %9869 = vmatpush1.msra.mxu0 0.0
    %9870 = vmatprep.subr.mxu0 0.0
    %9871 = vmatpush1.msra.mxu0 0.0
    %9872 = vmatprep.subr.mxu0 0.0
    %9873 = vmatpush1.msra.mxu0 0.0
    %9874 = vmatprep.subr.mxu0 0.0
    %9875 = vmatpush1.msra.mxu0 0.0
    %9876 = vmatprep.subr.mxu0 0.0
    %9877 = vmatpush1.msra.mxu0 0.0
    %9878 = vmatprep.subr.mxu0 0.0
    %9879 = vmatpush1.msra.mxu0 0.0
    %9880 = vmatprep.subr.mxu0 0.0
    %9881 = vmatpush1.msra.mxu0 0.0
    %9882 = vmatprep.subr.mxu0 0.0
    %9883 = vmatpush1.msra.mxu0 0.0
    %9884 = vmatprep.subr.mxu0 0.0
    %9885 = vmatpush1.msra.mxu0 0.0
    %9886 = vmatprep.subr.mxu0 0.0
    %9887 = vmatpush1.msra.mxu0 0.0
    %9888 = vmatprep.subr.mxu0 0.0
    %9889 = vmatpush1.msra.mxu0 0.0
    %9890 = vmatprep.subr.mxu0 0.0
    %9891 = vmatpush1.msra.mxu0 0.0
    %9892 = vmatprep.subr.mxu0 0.0
    %9893 = vmatpush1.msra.mxu0 0.0
    %9894 = vmatprep.subr.mxu0 0.0
    %9895 = vmatpush1.msra.mxu0 0.0
    %9896 = vmatprep.mubr.f32.mxu0 0.0
    %9897 = vmatmul.mubr.f32.gmra.mrb[0].mxu0 %v9812
    %v9898 = vpop.f32.mrb[0].mxu0
    %v9899 = vadd.f32 %v9809, %v9898
    %v9900 = vpop.f32.mrb[0].mxu0
    %v9901 = vadd.f32 %v9809, %v9900
    %9902 = vdwg.mxu0
    %9903 = vmatprep.subr.mxu0 %v9760
    %9904 = vmatpush1.msra.mxu0 %v9759
    %9905 = vmatprep.subr.mxu0 %v9766
    %9906 = vmatpush1.msra.mxu0 %v9765
    %9907 = vmatprep.subr.mxu0 %v9772
    %9908 = vmatpush1.msra.mxu0 %v9771
    %9909 = vmatprep.subr.mxu0 %v9778
    %9910 = vmatpush1.msra.mxu0 %v9777
    %9911 = vmatprep.subr.mxu0 %v9784
    %9912 = vmatpush1.msra.mxu0 %v9783
    %9913 = vmatprep.subr.mxu0 %v9790
    %9914 = vmatpush1.msra.mxu0 %v9789
    %9915 = vmatprep.subr.mxu0 %v9796
    %9916 = vmatpush1.msra.mxu0 %v9795
    %9917 = vmatprep.subr.mxu0 %v9824
    %9918 = vmatpush1.msra.mxu0 %v9821
    %9919 = vmatprep.subr.mxu0 0.0
    %9920 = vmatpush1.msra.mxu0 0.0
    %9921 = vmatprep.subr.mxu0 0.0
    %9922 = vmatpush1.msra.mxu0 0.0
    %9923 = vmatprep.subr.mxu0 0.0
    %9924 = vmatpush1.msra.mxu0 0.0
    %9925 = vmatprep.subr.mxu0 0.0
    %9926 = vmatpush1.msra.mxu0 0.0
    %9927 = vmatprep.subr.mxu0 0.0
    %9928 = vmatpush1.msra.mxu0 0.0
    %9929 = vmatprep.subr.mxu0 0.0
    %9930 = vmatpush1.msra.mxu0 0.0
    %9931 = vmatprep.subr.mxu0 0.0
    %9932 = vmatpush1.msra.mxu0 0.0
    %9933 = vmatprep.subr.mxu0 0.0
    %9934 = vmatpush1.msra.mxu0 0.0
    %9935 = vmatprep.subr.mxu0 0.0
    %9936 = vmatpush1.msra.mxu0 0.0
    %9937 = vmatprep.subr.mxu0 0.0
    %9938 = vmatpush1.msra.mxu0 0.0
    %9939 = vmatprep.subr.mxu0 0.0
    %9940 = vmatpush1.msra.mxu0 0.0
    %9941 = vmatprep.subr.mxu0 0.0
    %9942 = vmatpush1.msra.mxu0 0.0
    %9943 = vmatprep.subr.mxu0 0.0
    %9944 = vmatpush1.msra.mxu0 0.0
    %9945 = vmatprep.subr.mxu0 0.0
    %9946 = vmatpush1.msra.mxu0 0.0
    %9947 = vmatprep.subr.mxu0 0.0
    %9948 = vmatpush1.msra.mxu0 0.0
    %9949 = vmatprep.subr.mxu0 0.0
    %9950 = vmatpush1.msra.mxu0 0.0
    %9951 = vmatprep.subr.mxu0 0.0
    %9952 = vmatpush1.msra.mxu0 0.0
    %9953 = vmatprep.subr.mxu0 0.0
    %9954 = vmatpush1.msra.mxu0 0.0
    %9955 = vmatprep.subr.mxu0 0.0
    %9956 = vmatpush1.msra.mxu0 0.0
    %9957 = vmatprep.subr.mxu0 0.0
    %9958 = vmatpush1.msra.mxu0 0.0
    %9959 = vmatprep.subr.mxu0 0.0
    %9960 = vmatpush1.msra.mxu0 0.0
    %9961 = vmatprep.subr.mxu0 0.0
    %9962 = vmatpush1.msra.mxu0 0.0
    %9963 = vmatprep.subr.mxu0 0.0
    %9964 = vmatpush1.msra.mxu0 0.0
    %9965 = vmatprep.subr.mxu0 0.0
    %9966 = vmatpush1.msra.mxu0 0.0
    %9967 = vmatprep.mubr.f32.mxu0 0.0
    %9968 = vmatmul.mubr.f32.gmra.mrb[0].mxu0 %v9812
    %v9969 = vpop.f32.mrb[0].mxu0
    %v9970 = vadd.f32 %v9809, %v9969
    %v9971 = vpop.f32.mrb[0].mxu0
    %v9972 = vadd.f32 %v9809, %v9971
    %9973 = vdwg.mxu0
    %9974 = vmatprep.subr.mxu0 %v9762
    %9975 = vmatpush1.msra.mxu0 %v9761
    %9976 = vmatprep.subr.mxu0 %v9768
    %9977 = vmatpush1.msra.mxu0 %v9767
    %9978 = vmatprep.subr.mxu0 %v9774
    %9979 = vmatpush1.msra.mxu0 %v9773
    %9980 = vmatprep.subr.mxu0 %v9780
    %9981 = vmatpush1.msra.mxu0 %v9779
    %9982 = vmatprep.subr.mxu0 %v9786
    %9983 = vmatpush1.msra.mxu0 %v9785
    %9984 = vmatprep.subr.mxu0 %v9792
    %9985 = vmatpush1.msra.mxu0 %v9791
    %9986 = vmatprep.subr.mxu0 %v9798
    %9987 = vmatpush1.msra.mxu0 %v9797
    %9988 = vmatprep.subr.mxu0 %v9830
    %9989 = vmatpush1.msra.mxu0 %v9827
    %9990 = vmatprep.subr.mxu0 0.0
    %9991 = vmatpush1.msra.mxu0 0.0
    %9992 = vmatprep.subr.mxu0 0.0
    %9993 = vmatpush1.msra.mxu0 0.0
    %9994 = vmatprep.subr.mxu0 0.0
    %9995 = vmatpush1.msra.mxu0 0.0
    %9996 = vmatprep.subr.mxu0 0.0
    %9997 = vmatpush1.msra.mxu0 0.0
    %9998 = vmatprep.subr.mxu0 0.0
    %9999 = vmatpush1.msra.mxu0 0.0
    %10000 = vmatprep.subr.mxu0 0.0
    %10001 = vmatpush1.msra.mxu0 0.0
    %10002 = vmatprep.subr.mxu0 0.0
    %10003 = vmatpush1.msra.mxu0 0.0
    %10004 = vmatprep.subr.mxu0 0.0
    %10005 = vmatpush1.msra.mxu0 0.0
    %10006 = vmatprep.subr.mxu0 0.0
    %10007 = vmatpush1.msra.mxu0 0.0
    %10008 = vmatprep.subr.mxu0 0.0
    %10009 = vmatpush1.msra.mxu0 0.0
    %10010 = vmatprep.subr.mxu0 0.0
    %10011 = vmatpush1.msra.mxu0 0.0
    %10012 = vmatprep.subr.mxu0 0.0
    %10013 = vmatpush1.msra.mxu0 0.0
    %10014 = vmatprep.subr.mxu0 0.0
    %10015 = vmatpush1.msra.mxu0 0.0
    %10016 = vmatprep.subr.mxu0 0.0
    %10017 = vmatpush1.msra.mxu0 0.0
    %10018 = vmatprep.subr.mxu0 0.0
    %10019 = vmatpush1.msra.mxu0 0.0
    %10020 = vmatprep.subr.mxu0 0.0
    %10021 = vmatpush1.msra.mxu0 0.0
    %10022 = vmatprep.subr.mxu0 0.0
    %10023 = vmatpush1.msra.mxu0 0.0
    %10024 = vmatprep.subr.mxu0 0.0
    %10025 = vmatpush1.msra.mxu0 0.0
    %10026 = vmatprep.subr.mxu0 0.0
    %10027 = vmatpush1.msra.mxu0 0.0
    %10028 = vmatprep.subr.mxu0 0.0
    %10029 = vmatpush1.msra.mxu0 0.0
    %10030 = vmatprep.subr.mxu0 0.0
    %10031 = vmatpush1.msra.mxu0 0.0
    %10032 = vmatprep.subr.mxu0 0.0
    %10033 = vmatpush1.msra.mxu0 0.0
    %10034 = vmatprep.subr.mxu0 0.0
    %10035 = vmatpush1.msra.mxu0 0.0
    %10036 = vmatprep.subr.mxu0 0.0
    %10037 = vmatpush1.msra.mxu0 0.0
    %10038 = vmatprep.mubr.f32.mxu0 0.0
    %10039 = vmatmul.mubr.f32.gmra.mrb[0].mxu0 %v9812
    %v10040 = vpop.f32.mrb[0].mxu0
    %v10041 = vadd.f32 %v9809, %v10040
    %v10042 = vpop.f32.mrb[0].mxu0
    %v10043 = vadd.f32 %v9809, %v10042
    %10044 = vdwg.mxu0
    %10045 = vrot.lane.b32.xlu0 %v8101, 32
    %v10046 = vpop.permute.xlu0 %10045
    %10047 = vrot.lane.b32.xlu0 %v8102, 32
    %v10048 = vpop.permute.xlu0 %10047
    %10049 = vrot.lane.b32.xlu0 %v8103, 32
    %v10050 = vpop.permute.xlu0 %10049
    %10051 = vrot.lane.b32.xlu0 %v8104, 32
    %v10052 = vpop.permute.xlu0 %10051
    %10053 = vrot.lane.b32.xlu0 %v8105, 32
    %v10054 = vpop.permute.xlu0 %10053
    %10055 = vrot.lane.b32.xlu0 %v8106, 32
    %v10056 = vpop.permute.xlu0 %10055
    %v10057 = vsel %vm695, %v10054, %v10056
    %v10058 = vsel %vm695, %v10052, %v10054
    %v10059 = vsel %vm695, %v10050, %v10052
    %v10060 = vsel %vm695, %v10048, %v10050
    %v10061 = vsel %vm695, %v10046, %v10048
    %v10062 = vsel %vm695, %v10056, %v10046
    %v10063 = vld [vmem:[%s702] ss:$8 sm:$0xf]
    %v10064 = vld [vmem:[%s702] ss:$8 sm:$0x30]
    %v10065 = vor.u32 %v10063, %v10064
    %v10067 = vlaneseq
    %v10068 = vshrl.u32 %v10067, 7
    %v10069 = vsub.s32 0, %v10068
    %v10070 = vrot.slane %v10065, %v10069
    %v10071 = vlaneseq
    %v10072 = vshrl.u32 %v10071, 7
    %v10073 = vsub.s32 1, %v10072
    %v10074 = vrot.slane %v10065, %v10073
    %v10075 = vlaneseq
    %v10076 = vshrl.u32 %v10075, 7
    %v10077 = vsub.s32 2, %v10076
    %v10078 = vrot.slane %v10065, %v10077
    %v10079 = vlaneseq
    %v10080 = vshrl.u32 %v10079, 7
    %v10081 = vsub.s32 3, %v10080
    %v10082 = vrot.slane %v10065, %v10081
    %v10083 = vlaneseq
    %v10084 = vshrl.u32 %v10083, 7
    %v10085 = vsub.s32 4, %v10084
    %v10086 = vrot.slane %v10065, %v10085
    %v10087 = vlaneseq
    %v10088 = vshrl.u32 %v10087, 7
    %v10089 = vsub.s32 5, %v10088
    %v10090 = vrot.slane %v10065, %v10089
    %v10097 = vmul.f32 %v10062, %v10070
    %v10098 = vmul.f32 %v10061, %v10074
    %v10099 = vmul.f32 %v10060, %v10078
    %v10100 = vmul.f32 %v10059, %v10082
    %v10101 = vmul.f32 %v10058, %v10086
    %v10102 = vmul.f32 %v10057, %v10090
    %10103 = vst [vmem:[#allocation2] sm:$0x7f] %v10097
    %10104 = vst [vmem:[#allocation2 + $0x8] sm:$0x7f] %v10098
    %10105 = vst [vmem:[#allocation2 + $0x10] sm:$0x7f] %v10099
    %10106 = vst [vmem:[#allocation2 + $0x18] sm:$0x7f] %v10100
    %10107 = vst [vmem:[#allocation2 + $0x20] sm:$0x7f] %v10101
    %10108 = vst [vmem:[#allocation2 + $0x28] sm:$0x7f] %v10102
    %10109 = vrot.lane.b32.xlu0 %v8101, 16
    %v10110 = vpop.permute.xlu0 %10109
    %10111 = vrot.lane.b32.xlu0 %v8102, 16
    %v10112 = vpop.permute.xlu0 %10111
    %10113 = vrot.lane.b32.xlu0 %v8103, 16
    %v10114 = vpop.permute.xlu0 %10113
    %10115 = vrot.lane.b32.xlu0 %v8104, 16
    %v10116 = vpop.permute.xlu0 %10115
    %10117 = vrot.lane.b32.xlu0 %v8105, 16
    %v10118 = vpop.permute.xlu0 %10117
    %10119 = vrot.lane.b32.xlu0 %v8106, 16
    %v10120 = vpop.permute.xlu0 %10119
    %v10121 = vsel %vm1097, %v10118, %v10120
    %v10122 = vsel %vm1097, %v10116, %v10118
    %v10123 = vsel %vm1097, %v10114, %v10116
    %v10124 = vsel %vm1097, %v10112, %v10114
    %v10125 = vsel %vm1097, %v10110, %v10112
    %v10126 = vsel %vm1097, %v10120, %v10110
    %v10127 = vld [vmem:[%s1104] ss:$8 sm:$0xf]
    %v10128 = vld [vmem:[%s1104] ss:$8 sm:$0x30]
    %v10129 = vor.u32 %v10127, %v10128
    %v10131 = vlaneseq
    %v10132 = vshrl.u32 %v10131, 7
    %v10133 = vsub.s32 0, %v10132
    %v10134 = vrot.slane %v10129, %v10133
    %v10135 = vlaneseq
    %v10136 = vshrl.u32 %v10135, 7
    %v10137 = vsub.s32 1, %v10136
    %v10138 = vrot.slane %v10129, %v10137
    %v10139 = vlaneseq
    %v10140 = vshrl.u32 %v10139, 7
    %v10141 = vsub.s32 2, %v10140
    %v10142 = vrot.slane %v10129, %v10141
    %v10143 = vlaneseq
    %v10144 = vshrl.u32 %v10143, 7
    %v10145 = vsub.s32 3, %v10144
    %v10146 = vrot.slane %v10129, %v10145
    %v10147 = vlaneseq
    %v10148 = vshrl.u32 %v10147, 7
    %v10149 = vsub.s32 4, %v10148
    %v10150 = vrot.slane %v10129, %v10149
    %v10151 = vlaneseq
    %v10152 = vshrl.u32 %v10151, 7
    %v10153 = vsub.s32 5, %v10152
    %v10154 = vrot.slane %v10129, %v10153
    %v10161 = vmul.f32 %v10126, %v10134
    %v10162 = vmul.f32 %v10125, %v10138
    %v10163 = vmul.f32 %v10124, %v10142
    %v10164 = vmul.f32 %v10123, %v10146
    %v10165 = vmul.f32 %v10122, %v10150
    %v10166 = vmul.f32 %v10121, %v10154
    %v10173 = vrot.slane %v10161, 1
    %v10174 = vrot.slane %v10162, 1
    %v10175 = vrot.slane %v10163, 1
    %v10176 = vrot.slane %v10164, 1
    %v10177 = vrot.slane %v10165, 1
    %v10178 = vrot.slane %v10166, 1
    %10185 = vst [vmem:[#allocation2] sm:$0x80] %v10173
    %10186 = vst [vmem:[#allocation2 + $0x8] sm:$0x80] %v10174
    %10187 = vst [vmem:[#allocation2 + $0x10] sm:$0x80] %v10175
    %10188 = vst [vmem:[#allocation2 + $0x18] sm:$0x80] %v10176
    %10189 = vst [vmem:[#allocation2 + $0x20] sm:$0x80] %v10177
    %10190 = vst [vmem:[#allocation2 + $0x28] sm:$0x80] %v10178
    %10191 = vst [vmem:[#allocation2 + $0x30] sm:$0x3f] %v10173
    %10192 = vst [vmem:[#allocation2 + $0x38] sm:$0x3f] %v10174
    %10193 = vst [vmem:[#allocation2 + $0x40] sm:$0x3f] %v10175
    %10194 = vst [vmem:[#allocation2 + $0x48] sm:$0x3f] %v10176
    %10195 = vst [vmem:[#allocation2 + $0x50] sm:$0x3f] %v10177
    %10196 = vst [vmem:[#allocation2 + $0x58] sm:$0x3f] %v10178
    %v10203 = vrot.slane %v8101, 2
    %v10204 = vrot.slane %v8102, 2
    %v10205 = vrot.slane %v8103, 2
    %v10206 = vrot.slane %v8104, 2
    %v10207 = vrot.slane %v8105, 2
    %v10208 = vrot.slane %v8106, 2
    %10215 = vst [vmem:[#allocation2 + $0x30] sm:$0xc0] %v10203
    %10216 = vst [vmem:[#allocation2 + $0x38] sm:$0xc0] %v10204
    %10217 = vst [vmem:[#allocation2 + $0x40] sm:$0xc0] %v10205
    %10218 = vst [vmem:[#allocation2 + $0x48] sm:$0xc0] %v10206
    %10219 = vst [vmem:[#allocation2 + $0x50] sm:$0xc0] %v10207
    %10220 = vst [vmem:[#allocation2 + $0x58] sm:$0xc0] %v10208
    %10221 = vst [vmem:[#allocation2 + $0x60] sm:$0x1f] %v10203
    %10222 = vst [vmem:[#allocation2 + $0x68] sm:$0x1f] %v10204
    %10223 = vst [vmem:[#allocation2 + $0x70] sm:$0x1f] %v10205
    %10224 = vst [vmem:[#allocation2 + $0x78] sm:$0x1f] %v10206
    %10225 = vst [vmem:[#allocation2 + $0x80] sm:$0x1f] %v10207
    %10226 = vst [vmem:[#allocation2 + $0x88] sm:$0x1f] %v10208
    %10227 = vrot.lane.b32.xlu0 %v8101, 112
    %v10228 = vpop.permute.xlu0 %10227
    %10229 = vrot.lane.b32.xlu0 %v8102, 112
    %v10230 = vpop.permute.xlu0 %10229
    %10231 = vrot.lane.b32.xlu0 %v8103, 112
    %v10232 = vpop.permute.xlu0 %10231
    %10233 = vrot.lane.b32.xlu0 %v8104, 112
    %v10234 = vpop.permute.xlu0 %10233
    %10235 = vrot.lane.b32.xlu0 %v8105, 112
    %v10236 = vpop.permute.xlu0 %10235
    %10237 = vrot.lane.b32.xlu0 %v8106, 112
    %v10238 = vpop.permute.xlu0 %10237
    %v10239 = vsel %vm1823, %v10236, %v10238
    %v10240 = vsel %vm1823, %v10234, %v10236
    %v10241 = vsel %vm1823, %v10232, %v10234
    %v10242 = vsel %vm1823, %v10230, %v10232
    %v10243 = vsel %vm1823, %v10228, %v10230
    %v10244 = vsel %vm1823, %v10238, %v10228
    %v10245 = vld [vmem:[%s1830] ss:$8 sm:$0xf]
    %v10246 = vld [vmem:[%s1830] ss:$8 sm:$0x30]
    %v10247 = vor.u32 %v10245, %v10246
    %v10249 = vlaneseq
    %v10250 = vshrl.u32 %v10249, 7
    %v10251 = vsub.s32 0, %v10250
    %v10252 = vrot.slane %v10247, %v10251
    %v10253 = vlaneseq
    %v10254 = vshrl.u32 %v10253, 7
    %v10255 = vsub.s32 1, %v10254
    %v10256 = vrot.slane %v10247, %v10255
    %v10257 = vlaneseq
    %v10258 = vshrl.u32 %v10257, 7
    %v10259 = vsub.s32 2, %v10258
    %v10260 = vrot.slane %v10247, %v10259
    %v10261 = vlaneseq
    %v10262 = vshrl.u32 %v10261, 7
    %v10263 = vsub.s32 3, %v10262
    %v10264 = vrot.slane %v10247, %v10263
    %v10265 = vlaneseq
    %v10266 = vshrl.u32 %v10265, 7
    %v10267 = vsub.s32 4, %v10266
    %v10268 = vrot.slane %v10247, %v10267
    %v10269 = vlaneseq
    %v10270 = vshrl.u32 %v10269, 7
    %v10271 = vsub.s32 5, %v10270
    %v10272 = vrot.slane %v10247, %v10271
    %v10279 = vmul.f32 %v10243, %v10252
    %v10280 = vmul.f32 %v10242, %v10256
    %v10281 = vmul.f32 %v10241, %v10260
    %v10282 = vmul.f32 %v10240, %v10264
    %v10283 = vmul.f32 %v10239, %v10268
    %v10284 = vmul.f32 %v10244, %v10272
    %v10291 = vrot.slane %v10279, 3
    %v10292 = vrot.slane %v10280, 3
    %v10293 = vrot.slane %v10281, 3
    %v10294 = vrot.slane %v10282, 3
    %v10295 = vrot.slane %v10283, 3
    %v10296 = vrot.slane %v10284, 3
    %10303 = vst [vmem:[#allocation2 + $0x60] sm:$0xe0] %v10291
    %10304 = vst [vmem:[#allocation2 + $0x68] sm:$0xe0] %v10292
    %10305 = vst [vmem:[#allocation2 + $0x70] sm:$0xe0] %v10293
    %10306 = vst [vmem:[#allocation2 + $0x78] sm:$0xe0] %v10294
    %10307 = vst [vmem:[#allocation2 + $0x80] sm:$0xe0] %v10295
    %10308 = vst [vmem:[#allocation2 + $0x88] sm:$0xe0] %v10296
    %10309 = vst [vmem:[#allocation2 + $0x90] sm:$0xf] %v10291
    %10310 = vst [vmem:[#allocation2 + $0x98] sm:$0xf] %v10292
    %10311 = vst [vmem:[#allocation2 + $0xa0] sm:$0xf] %v10293
    %10312 = vst [vmem:[#allocation2 + $0xa8] sm:$0xf] %v10294
    %10313 = vst [vmem:[#allocation2 + $0xb0] sm:$0xf] %v10295
    %10314 = vst [vmem:[#allocation2 + $0xb8] sm:$0xf] %v10296
    %10315 = vrot.lane.b32.xlu0 %v8101, 96
    %v10316 = vpop.permute.xlu0 %10315
    %10317 = vrot.lane.b32.xlu0 %v8102, 96
    %v10318 = vpop.permute.xlu0 %10317
    %10319 = vrot.lane.b32.xlu0 %v8103, 96
    %v10320 = vpop.permute.xlu0 %10319
    %10321 = vrot.lane.b32.xlu0 %v8104, 96
    %v10322 = vpop.permute.xlu0 %10321
    %10323 = vrot.lane.b32.xlu0 %v8105, 96
    %v10324 = vpop.permute.xlu0 %10323
    %10325 = vrot.lane.b32.xlu0 %v8106, 96
    %v10326 = vpop.permute.xlu0 %10325
    %v10327 = vsel %vm2225, %v10324, %v10326
    %v10328 = vsel %vm2225, %v10322, %v10324
    %v10329 = vsel %vm2225, %v10320, %v10322
    %v10330 = vsel %vm2225, %v10318, %v10320
    %v10331 = vsel %vm2225, %v10316, %v10318
    %v10332 = vsel %vm2225, %v10326, %v10316
    %v10333 = vld [vmem:[%s2232] ss:$8 sm:$0xf]
    %v10334 = vld [vmem:[%s2232] ss:$8 sm:$0x30]
    %v10335 = vor.u32 %v10333, %v10334
    %v10337 = vlaneseq
    %v10338 = vshrl.u32 %v10337, 7
    %v10339 = vsub.s32 0, %v10338
    %v10340 = vrot.slane %v10335, %v10339
    %v10341 = vlaneseq
    %v10342 = vshrl.u32 %v10341, 7
    %v10343 = vsub.s32 1, %v10342
    %v10344 = vrot.slane %v10335, %v10343
    %v10345 = vlaneseq
    %v10346 = vshrl.u32 %v10345, 7
    %v10347 = vsub.s32 2, %v10346
    %v10348 = vrot.slane %v10335, %v10347
    %v10349 = vlaneseq
    %v10350 = vshrl.u32 %v10349, 7
    %v10351 = vsub.s32 3, %v10350
    %v10352 = vrot.slane %v10335, %v10351
    %v10353 = vlaneseq
    %v10354 = vshrl.u32 %v10353, 7
    %v10355 = vsub.s32 4, %v10354
    %v10356 = vrot.slane %v10335, %v10355
    %v10357 = vlaneseq
    %v10358 = vshrl.u32 %v10357, 7
    %v10359 = vsub.s32 5, %v10358
    %v10360 = vrot.slane %v10335, %v10359
    %v10367 = vmul.f32 %v10331, %v10340
    %v10368 = vmul.f32 %v10330, %v10344
    %v10369 = vmul.f32 %v10329, %v10348
    %v10370 = vmul.f32 %v10328, %v10352
    %v10371 = vmul.f32 %v10327, %v10356
    %v10372 = vmul.f32 %v10332, %v10360
    %v10379 = vrot.slane %v10367, 4
    %v10380 = vrot.slane %v10368, 4
    %v10381 = vrot.slane %v10369, 4
    %v10382 = vrot.slane %v10370, 4
    %v10383 = vrot.slane %v10371, 4
    %v10384 = vrot.slane %v10372, 4
    %10391 = vst [vmem:[#allocation2 + $0x90] sm:$0xf0] %v10379
    %10392 = vst [vmem:[#allocation2 + $0x98] sm:$0xf0] %v10380
    %10393 = vst [vmem:[#allocation2 + $0xa0] sm:$0xf0] %v10381
    %10394 = vst [vmem:[#allocation2 + $0xa8] sm:$0xf0] %v10382
    %10395 = vst [vmem:[#allocation2 + $0xb0] sm:$0xf0] %v10383
    %10396 = vst [vmem:[#allocation2 + $0xb8] sm:$0xf0] %v10384
    %10397 = vst [vmem:[#allocation2 + $0xc0] sm:$0x7] %v10379
    %10398 = vst [vmem:[#allocation2 + $0xc8] sm:$0x7] %v10380
    %10399 = vst [vmem:[#allocation2 + $0xd0] sm:$0x7] %v10381
    %10400 = vst [vmem:[#allocation2 + $0xd8] sm:$0x7] %v10382
    %10401 = vst [vmem:[#allocation2 + $0xe0] sm:$0x7] %v10383
    %10402 = vst [vmem:[#allocation2 + $0xe8] sm:$0x7] %v10384
    %v10403 = vld [vmem:[#allocation7 + $0x50] sm:$0x7f]
    %v10404 = vld [vmem:[#allocation2] sm:$0xff]
    %v10405 = vld [vmem:[#allocation2 + $0x8] sm:$0xff]
    %v10406 = vld [vmem:[#allocation2 + $0x10] sm:$0xff]
    %v10407 = vld [vmem:[#allocation2 + $0x18] sm:$0xff]
    %v10408 = vld [vmem:[#allocation2 + $0x20] sm:$0xff]
    %v10409 = vld [vmem:[#allocation2 + $0x28] sm:$0xff]
    %v10410 = vld [vmem:[#allocation2 + $0x30] sm:$0xff]
    %v10411 = vld [vmem:[#allocation2 + $0x38] sm:$0xff]
    %v10412 = vld [vmem:[#allocation2 + $0x40] sm:$0xff]
    %v10413 = vld [vmem:[#allocation2 + $0x48] sm:$0xff]
    %v10414 = vld [vmem:[#allocation2 + $0x50] sm:$0xff]
    %v10415 = vld [vmem:[#allocation2 + $0x58] sm:$0xff]
    %v10416 = vld [vmem:[#allocation2 + $0x60] sm:$0xff]
    %v10417 = vld [vmem:[#allocation2 + $0x68] sm:$0xff]
    %v10418 = vld [vmem:[#allocation2 + $0x70] sm:$0xff]
    %v10419 = vld [vmem:[#allocation2 + $0x78] sm:$0xff]
    %v10420 = vld [vmem:[#allocation2 + $0x80] sm:$0xff]
    %v10421 = vld [vmem:[#allocation2 + $0x88] sm:$0xff]
    %v10422 = vld [vmem:[#allocation2 + $0x90] sm:$0xff]
    %v10423 = vld [vmem:[#allocation2 + $0x98] sm:$0xff]
    %v10424 = vld [vmem:[#allocation2 + $0xa0] sm:$0xff]
    %v10425 = vld [vmem:[#allocation2 + $0xa8] sm:$0xff]
    %v10426 = vld [vmem:[#allocation2 + $0xb0] sm:$0xff]
    %v10427 = vld [vmem:[#allocation2 + $0xb8] sm:$0xff]
    %v10428 = vld [vmem:[#allocation2 + $0xc0] sm:$0x7]
    %v10429 = vld [vmem:[#allocation2 + $0xc8] sm:$0x7]
    %v10430 = vld [vmem:[#allocation2 + $0xd0] sm:$0x7]
    %v10431 = vld [vmem:[#allocation2 + $0xd8] sm:$0x7]
    %v10432 = vld [vmem:[#allocation2 + $0xe0] sm:$0x7]
    %v10433 = vld [vmem:[#allocation2 + $0xe8] sm:$0x7]
    %v10434 = vld [vmem:[#allocation8] sm:$0x7f]
    %10436 = vset.pattern.permute.xlu0 10
    %10437 = vperm.xlu0 %10436, %v10434
    %v10438 = vpop.permute.xlu0 %10437
    %v10441 = vsel %vm6215, %v10403, 0
    %v10444 = vsel %vm6219, %v10428, 0
    %v10447 = vsel %vm6219, %v10429, 0
    %v10450 = vsel %vm6219, %v10430, 0
    %v10453 = vsel %vm6219, %v10431, 0
    %v10456 = vsel %vm6219, %v10432, 0
    %v10459 = vsel %vm6219, %v10433, 0
    %10461 = vmatprep.subr.mxu0 %v10405
    %10462 = vmatpush1.msra.mxu0 %v10404
    %10463 = vmatprep.subr.mxu0 %v10411
    %10464 = vmatpush1.msra.mxu0 %v10410
    %10465 = vmatprep.subr.mxu0 %v10417
    %10466 = vmatpush1.msra.mxu0 %v10416
    %10467 = vmatprep.subr.mxu0 %v10423
    %10468 = vmatpush1.msra.mxu0 %v10422
    %10469 = vmatprep.subr.mxu0 %v10447
    %10470 = vmatpush1.msra.mxu0 %v10444
    %10471 = vmatprep.subr.mxu0 0.0
    %10472 = vmatpush1.msra.mxu0 0.0
    %10473 = vmatprep.subr.mxu0 0.0
    %10474 = vmatpush1.msra.mxu0 0.0
    %10475 = vmatprep.subr.mxu0 0.0
    %10476 = vmatpush1.msra.mxu0 0.0
    %10477 = vmatprep.subr.mxu0 0.0
    %10478 = vmatpush1.msra.mxu0 0.0
    %10479 = vmatprep.subr.mxu0 0.0
    %10480 = vmatpush1.msra.mxu0 0.0
    %10481 = vmatprep.subr.mxu0 0.0
    %10482 = vmatpush1.msra.mxu0 0.0
    %10483 = vmatprep.subr.mxu0 0.0
    %10484 = vmatpush1.msra.mxu0 0.0
    %10485 = vmatprep.subr.mxu0 0.0
    %10486 = vmatpush1.msra.mxu0 0.0
    %10487 = vmatprep.subr.mxu0 0.0
    %10488 = vmatpush1.msra.mxu0 0.0
    %10489 = vmatprep.subr.mxu0 0.0
    %10490 = vmatpush1.msra.mxu0 0.0
    %10491 = vmatprep.subr.mxu0 0.0
    %10492 = vmatpush1.msra.mxu0 0.0
    %10493 = vmatprep.subr.mxu0 0.0
    %10494 = vmatpush1.msra.mxu0 0.0
    %10495 = vmatprep.subr.mxu0 0.0
    %10496 = vmatpush1.msra.mxu0 0.0
    %10497 = vmatprep.subr.mxu0 0.0
    %10498 = vmatpush1.msra.mxu0 0.0
    %10499 = vmatprep.subr.mxu0 0.0
    %10500 = vmatpush1.msra.mxu0 0.0
    %10501 = vmatprep.subr.mxu0 0.0
    %10502 = vmatpush1.msra.mxu0 0.0
    %10503 = vmatprep.subr.mxu0 0.0
    %10504 = vmatpush1.msra.mxu0 0.0
    %10505 = vmatprep.subr.mxu0 0.0
    %10506 = vmatpush1.msra.mxu0 0.0
    %10507 = vmatprep.subr.mxu0 0.0
    %10508 = vmatpush1.msra.mxu0 0.0
    %10509 = vmatprep.subr.mxu0 0.0
    %10510 = vmatpush1.msra.mxu0 0.0
    %10511 = vmatprep.subr.mxu0 0.0
    %10512 = vmatpush1.msra.mxu0 0.0
    %10513 = vmatprep.subr.mxu0 0.0
    %10514 = vmatpush1.msra.mxu0 0.0
    %10515 = vmatprep.subr.mxu0 0.0
    %10516 = vmatpush1.msra.mxu0 0.0
    %10517 = vmatprep.subr.mxu0 0.0
    %10518 = vmatpush1.msra.mxu0 0.0
    %10519 = vmatprep.subr.mxu0 0.0
    %10520 = vmatpush1.msra.mxu0 0.0
    %10521 = vmatprep.subr.mxu0 0.0
    %10522 = vmatpush1.msra.mxu0 0.0
    %10523 = vmatprep.subr.mxu0 0.0
    %10524 = vmatpush1.msra.mxu0 0.0
    %10525 = vmatprep.mubr.f32.mxu0 0.0
    %10526 = vmatmul.mubr.f32.gmra.mrb[0].mxu0 %v10441
    %v10527 = vpop.f32.mrb[0].mxu0
    %v10528 = vadd.f32 %v10438, %v10527
    %v10529 = vpop.f32.mrb[0].mxu0
    %v10530 = vadd.f32 %v10438, %v10529
    %10531 = vdwg.mxu0
    %10532 = vmatprep.subr.mxu0 %v10407
    %10533 = vmatpush1.msra.mxu0 %v10406
    %10534 = vmatprep.subr.mxu0 %v10413
    %10535 = vmatpush1.msra.mxu0 %v10412
    %10536 = vmatprep.subr.mxu0 %v10419
    %10537 = vmatpush1.msra.mxu0 %v10418
    %10538 = vmatprep.subr.mxu0 %v10425
    %10539 = vmatpush1.msra.mxu0 %v10424
    %10540 = vmatprep.subr.mxu0 %v10453
    %10541 = vmatpush1.msra.mxu0 %v10450
    %10542 = vmatprep.subr.mxu0 0.0
    %10543 = vmatpush1.msra.mxu0 0.0
    %10544 = vmatprep.subr.mxu0 0.0
    %10545 = vmatpush1.msra.mxu0 0.0
    %10546 = vmatprep.subr.mxu0 0.0
    %10547 = vmatpush1.msra.mxu0 0.0
    %10548 = vmatprep.subr.mxu0 0.0
    %10549 = vmatpush1.msra.mxu0 0.0
    %10550 = vmatprep.subr.mxu0 0.0
    %10551 = vmatpush1.msra.mxu0 0.0
    %10552 = vmatprep.subr.mxu0 0.0
    %10553 = vmatpush1.msra.mxu0 0.0
    %10554 = vmatprep.subr.mxu0 0.0
    %10555 = vmatpush1.msra.mxu0 0.0
    %10556 = vmatprep.subr.mxu0 0.0
    %10557 = vmatpush1.msra.mxu0 0.0
    %10558 = vmatprep.subr.mxu0 0.0
    %10559 = vmatpush1.msra.mxu0 0.0
    %10560 = vmatprep.subr.mxu0 0.0
    %10561 = vmatpush1.msra.mxu0 0.0
    %10562 = vmatprep.subr.mxu0 0.0
    %10563 = vmatpush1.msra.mxu0 0.0
    %10564 = vmatprep.subr.mxu0 0.0
    %10565 = vmatpush1.msra.mxu0 0.0
    %10566 = vmatprep.subr.mxu0 0.0
    %10567 = vmatpush1.msra.mxu0 0.0
    %10568 = vmatprep.subr.mxu0 0.0
    %10569 = vmatpush1.msra.mxu0 0.0
    %10570 = vmatprep.subr.mxu0 0.0
    %10571 = vmatpush1.msra.mxu0 0.0
    %10572 = vmatprep.subr.mxu0 0.0
    %10573 = vmatpush1.msra.mxu0 0.0
    %10574 = vmatprep.subr.mxu0 0.0
    %10575 = vmatpush1.msra.mxu0 0.0
    %10576 = vmatprep.subr.mxu0 0.0
    %10577 = vmatpush1.msra.mxu0 0.0
    %10578 = vmatprep.subr.mxu0 0.0
    %10579 = vmatpush1.msra.mxu0 0.0
    %10580 = vmatprep.subr.mxu0 0.0
    %10581 = vmatpush1.msra.mxu0 0.0
    %10582 = vmatprep.subr.mxu0 0.0
    %10583 = vmatpush1.msra.mxu0 0.0
    %10584 = vmatprep.subr.mxu0 0.0
    %10585 = vmatpush1.msra.mxu0 0.0
    %10586 = vmatprep.subr.mxu0 0.0
    %10587 = vmatpush1.msra.mxu0 0.0
    %10588 = vmatprep.subr.mxu0 0.0
    %10589 = vmatpush1.msra.mxu0 0.0
    %10590 = vmatprep.subr.mxu0 0.0
    %10591 = vmatpush1.msra.mxu0 0.0
    %10592 = vmatprep.subr.mxu0 0.0
    %10593 = vmatpush1.msra.mxu0 0.0
    %10594 = vmatprep.subr.mxu0 0.0
    %10595 = vmatpush1.msra.mxu0 0.0
    %10596 = vmatprep.mubr.f32.mxu0 0.0
    %10597 = vmatmul.mubr.f32.gmra.mrb[0].mxu0 %v10441
    %v10598 = vpop.f32.mrb[0].mxu0
    %v10599 = vadd.f32 %v10438, %v10598
    %v10600 = vpop.f32.mrb[0].mxu0
    %v10601 = vadd.f32 %v10438, %v10600
    %10602 = vdwg.mxu0
    %10603 = vmatprep.subr.mxu0 %v10409
    %10604 = vmatpush1.msra.mxu0 %v10408
    %10605 = vmatprep.subr.mxu0 %v10415
    %10606 = vmatpush1.msra.mxu0 %v10414
    %10607 = vmatprep.subr.mxu0 %v10421
    %10608 = vmatpush1.msra.mxu0 %v10420
    %10609 = vmatprep.subr.mxu0 %v10427
    %10610 = vmatpush1.msra.mxu0 %v10426
    %10611 = vmatprep.subr.mxu0 %v10459
    %10612 = vmatpush1.msra.mxu0 %v10456
    %10613 = vmatprep.subr.mxu0 0.0
    %10614 = vmatpush1.msra.mxu0 0.0
    %10615 = vmatprep.subr.mxu0 0.0
    %10616 = vmatpush1.msra.mxu0 0.0
    %10617 = vmatprep.subr.mxu0 0.0
    %10618 = vmatpush1.msra.mxu0 0.0
    %10619 = vmatprep.subr.mxu0 0.0
    %10620 = vmatpush1.msra.mxu0 0.0
    %10621 = vmatprep.subr.mxu0 0.0
    %10622 = vmatpush1.msra.mxu0 0.0
    %10623 = vmatprep.subr.mxu0 0.0
    %10624 = vmatpush1.msra.mxu0 0.0
    %10625 = vmatprep.subr.mxu0 0.0
    %10626 = vmatpush1.msra.mxu0 0.0
    %10627 = vmatprep.subr.mxu0 0.0
    %10628 = vmatpush1.msra.mxu0 0.0
    %10629 = vmatprep.subr.mxu0 0.0
    %10630 = vmatpush1.msra.mxu0 0.0
    %10631 = vmatprep.subr.mxu0 0.0
    %10632 = vmatpush1.msra.mxu0 0.0
    %10633 = vmatprep.subr.mxu0 0.0
    %10634 = vmatpush1.msra.mxu0 0.0
    %10635 = vmatprep.subr.mxu0 0.0
    %10636 = vmatpush1.msra.mxu0 0.0
    %10637 = vmatprep.subr.mxu0 0.0
    %10638 = vmatpush1.msra.mxu0 0.0
    %10639 = vmatprep.subr.mxu0 0.0
    %10640 = vmatpush1.msra.mxu0 0.0
    %10641 = vmatprep.subr.mxu0 0.0
    %10642 = vmatpush1.msra.mxu0 0.0
    %10643 = vmatprep.subr.mxu0 0.0
    %10644 = vmatpush1.msra.mxu0 0.0
    %10645 = vmatprep.subr.mxu0 0.0
    %10646 = vmatpush1.msra.mxu0 0.0
    %10647 = vmatprep.subr.mxu0 0.0
    %10648 = vmatpush1.msra.mxu0 0.0
    %10649 = vmatprep.subr.mxu0 0.0
    %10650 = vmatpush1.msra.mxu0 0.0
    %10651 = vmatprep.subr.mxu0 0.0
    %10652 = vmatpush1.msra.mxu0 0.0
    %10653 = vmatprep.subr.mxu0 0.0
    %10654 = vmatpush1.msra.mxu0 0.0
    %10655 = vmatprep.subr.mxu0 0.0
    %10656 = vmatpush1.msra.mxu0 0.0
    %10657 = vmatprep.subr.mxu0 0.0
    %10658 = vmatpush1.msra.mxu0 0.0
    %10659 = vmatprep.subr.mxu0 0.0
    %10660 = vmatpush1.msra.mxu0 0.0
    %10661 = vmatprep.subr.mxu0 0.0
    %10662 = vmatpush1.msra.mxu0 0.0
    %10663 = vmatprep.subr.mxu0 0.0
    %10664 = vmatpush1.msra.mxu0 0.0
    %10665 = vmatprep.subr.mxu0 0.0
    %10666 = vmatpush1.msra.mxu0 0.0
    %10667 = vmatprep.mubr.f32.mxu0 0.0
    %10668 = vmatmul.mubr.f32.gmra.mrb[0].mxu0 %v10441
    %v10669 = vpop.f32.mrb[0].mxu0
    %v10670 = vadd.f32 %v10438, %v10669
    %v10671 = vpop.f32.mrb[0].mxu0
    %v10672 = vadd.f32 %v10438, %v10671
    %10673 = vdwg.mxu0
    %vm10674 = vcmp.ge.f32.partialorder %v9899, 0.0
    %vm10675 = vcmp.ge.f32.partialorder %v9901, 0.0
    %vm10676 = vcmp.ge.f32.partialorder %v9970, 0.0
    %vm10677 = vcmp.ge.f32.partialorder %v9972, 0.0
    %vm10678 = vcmp.ge.f32.partialorder %v10041, 0.0
    %vm10679 = vcmp.ge.f32.partialorder %v10043, 0.0
    %v10680 = vmul.f32 %v9899, 0.3
    %v10681 = vmul.f32 %v9901, 0.3
    %v10682 = vmul.f32 %v9970, 0.3
    %v10683 = vmul.f32 %v9972, 0.3
    %v10684 = vmul.f32 %v10041, 0.3
    %v10685 = vmul.f32 %v10043, 0.3
    %v10686 = vsel %vm10674, %v9899, %v10680
    %v10687 = vsel %vm10675, %v9901, %v10681
    %v10688 = vsel %vm10676, %v9970, %v10682
    %v10689 = vsel %vm10677, %v9972, %v10683
    %v10690 = vsel %vm10678, %v10041, %v10684
    %v10691 = vsel %vm10679, %v10043, %v10685
    %vm10692 = vcmp.ge.f32.partialorder %v10528, 0.0
    %vm10693 = vcmp.ge.f32.partialorder %v10530, 0.0
    %vm10694 = vcmp.ge.f32.partialorder %v10599, 0.0
    %vm10695 = vcmp.ge.f32.partialorder %v10601, 0.0
    %vm10696 = vcmp.ge.f32.partialorder %v10670, 0.0
    %vm10697 = vcmp.ge.f32.partialorder %v10672, 0.0
    %v10698 = vmul.f32 %v10528, 0.3
    %v10699 = vmul.f32 %v10530, 0.3
    %v10700 = vmul.f32 %v10599, 0.3
    %v10701 = vmul.f32 %v10601, 0.3
    %v10702 = vmul.f32 %v10670, 0.3
    %v10703 = vmul.f32 %v10672, 0.3
    %v10704 = vsel %vm10692, %v10528, %v10698
    %v10705 = vsel %vm10693, %v10530, %v10699
    %v10706 = vsel %vm10694, %v10599, %v10700
    %v10707 = vsel %vm10695, %v10601, %v10701
    %v10708 = vsel %vm10696, %v10670, %v10702
    %v10709 = vsel %vm10697, %v10672, %v10703
    %v10710 = vld [vmem:[#allocation7 + $0x58] sm:$0x3]
    %v10711 = vld [vmem:[#allocation7 + $0x60] sm:$0x3]
    %v10713 = vsel %vm6489, %v10711, 0
    %v10716 = vsel %vm4612, %v10704, 0
    %v10719 = vsel %vm4612, %v10705, 0
    %v10722 = vsel %vm4612, %v10706, 0
    %v10725 = vsel %vm4612, %v10707, 0
    %v10728 = vsel %vm4612, %v10708, 0
    %v10731 = vsel %vm4612, %v10709, 0
    %10733 = vmatprep.subr.mxu0 %v10719
    %10734 = vmatpush1.msra.mxu0 %v10716
    %10735 = vmatprep.subr.mxu0 0.0
    %10736 = vmatpush1.msra.mxu0 0.0
    %10737 = vmatprep.subr.mxu0 0.0
    %10738 = vmatpush1.msra.mxu0 0.0
    %10739 = vmatprep.subr.mxu0 0.0
    %10740 = vmatpush1.msra.mxu0 0.0
    %10741 = vmatprep.subr.mxu0 0.0
    %10742 = vmatpush1.msra.mxu0 0.0
    %10743 = vmatprep.subr.mxu0 0.0
    %10744 = vmatpush1.msra.mxu0 0.0
    %10745 = vmatprep.subr.mxu0 0.0
    %10746 = vmatpush1.msra.mxu0 0.0
    %10747 = vmatprep.subr.mxu0 0.0
    %10748 = vmatpush1.msra.mxu0 0.0
    %10749 = vmatprep.subr.mxu0 0.0
    %10750 = vmatpush1.msra.mxu0 0.0
    %10751 = vmatprep.subr.mxu0 0.0
    %10752 = vmatpush1.msra.mxu0 0.0
    %10753 = vmatprep.subr.mxu0 0.0
    %10754 = vmatpush1.msra.mxu0 0.0
    %10755 = vmatprep.subr.mxu0 0.0
    %10756 = vmatpush1.msra.mxu0 0.0
    %10757 = vmatprep.subr.mxu0 0.0
    %10758 = vmatpush1.msra.mxu0 0.0
    %10759 = vmatprep.subr.mxu0 0.0
    %10760 = vmatpush1.msra.mxu0 0.0
    %10761 = vmatprep.subr.mxu0 0.0
    %10762 = vmatpush1.msra.mxu0 0.0
    %10763 = vmatprep.subr.mxu0 0.0
    %10764 = vmatpush1.msra.mxu0 0.0
    %10765 = vmatprep.subr.mxu0 0.0
    %10766 = vmatpush1.msra.mxu0 0.0
    %10767 = vmatprep.subr.mxu0 0.0
    %10768 = vmatpush1.msra.mxu0 0.0
    %10769 = vmatprep.subr.mxu0 0.0
    %10770 = vmatpush1.msra.mxu0 0.0
    %10771 = vmatprep.subr.mxu0 0.0
    %10772 = vmatpush1.msra.mxu0 0.0
    %10773 = vmatprep.subr.mxu0 0.0
    %10774 = vmatpush1.msra.mxu0 0.0
    %10775 = vmatprep.subr.mxu0 0.0
    %10776 = vmatpush1.msra.mxu0 0.0
    %10777 = vmatprep.subr.mxu0 0.0
    %10778 = vmatpush1.msra.mxu0 0.0
    %10779 = vmatprep.subr.mxu0 0.0
    %10780 = vmatpush1.msra.mxu0 0.0
    %10781 = vmatprep.subr.mxu0 0.0
    %10782 = vmatpush1.msra.mxu0 0.0
    %10783 = vmatprep.subr.mxu0 0.0
    %10784 = vmatpush1.msra.mxu0 0.0
    %10785 = vmatprep.subr.mxu0 0.0
    %10786 = vmatpush1.msra.mxu0 0.0
    %10787 = vmatprep.subr.mxu0 0.0
    %10788 = vmatpush1.msra.mxu0 0.0
    %10789 = vmatprep.subr.mxu0 0.0
    %10790 = vmatpush1.msra.mxu0 0.0
    %10791 = vmatprep.subr.mxu0 0.0
    %10792 = vmatpush1.msra.mxu0 0.0
    %10793 = vmatprep.subr.mxu0 0.0
    %10794 = vmatpush1.msra.mxu0 0.0
    %10795 = vmatprep.subr.mxu0 0.0
    %10796 = vmatpush1.msra.mxu0 0.0
    %10797 = vmatprep.mubr.f32.mxu0 0.0
    %10798 = vmatmul.mubr.f32.gmra.mrb[0].mxu0 %v10713
    %v10799 = vpop.f32.mrb[0].mxu0
    %v10800 = vadd.f32 0.0, %v10799
    %v10801 = vpop.f32.mrb[0].mxu0
    %v10802 = vadd.f32 0.0, %v10801
    %10803 = vdwg.mxu0
    %10804 = vmatprep.subr.mxu0 %v10725
    %10805 = vmatpush1.msra.mxu0 %v10722
    %10806 = vmatprep.subr.mxu0 0.0
    %10807 = vmatpush1.msra.mxu0 0.0
    %10808 = vmatprep.subr.mxu0 0.0
    %10809 = vmatpush1.msra.mxu0 0.0
    %10810 = vmatprep.subr.mxu0 0.0
    %10811 = vmatpush1.msra.mxu0 0.0
    %10812 = vmatprep.subr.mxu0 0.0
    %10813 = vmatpush1.msra.mxu0 0.0
    %10814 = vmatprep.subr.mxu0 0.0
    %10815 = vmatpush1.msra.mxu0 0.0
    %10816 = vmatprep.subr.mxu0 0.0
    %10817 = vmatpush1.msra.mxu0 0.0
    %10818 = vmatprep.subr.mxu0 0.0
    %10819 = vmatpush1.msra.mxu0 0.0
    %10820 = vmatprep.subr.mxu0 0.0
    %10821 = vmatpush1.msra.mxu0 0.0
    %10822 = vmatprep.subr.mxu0 0.0
    %10823 = vmatpush1.msra.mxu0 0.0
    %10824 = vmatprep.subr.mxu0 0.0
    %10825 = vmatpush1.msra.mxu0 0.0
    %10826 = vmatprep.subr.mxu0 0.0
    %10827 = vmatpush1.msra.mxu0 0.0
    %10828 = vmatprep.subr.mxu0 0.0
    %10829 = vmatpush1.msra.mxu0 0.0
    %10830 = vmatprep.subr.mxu0 0.0
    %10831 = vmatpush1.msra.mxu0 0.0
    %10832 = vmatprep.subr.mxu0 0.0
    %10833 = vmatpush1.msra.mxu0 0.0
    %10834 = vmatprep.subr.mxu0 0.0
    %10835 = vmatpush1.msra.mxu0 0.0
    %10836 = vmatprep.subr.mxu0 0.0
    %10837 = vmatpush1.msra.mxu0 0.0
    %10838 = vmatprep.subr.mxu0 0.0
    %10839 = vmatpush1.msra.mxu0 0.0
    %10840 = vmatprep.subr.mxu0 0.0
    %10841 = vmatpush1.msra.mxu0 0.0
    %10842 = vmatprep.subr.mxu0 0.0
    %10843 = vmatpush1.msra.mxu0 0.0
    %10844 = vmatprep.subr.mxu0 0.0
    %10845 = vmatpush1.msra.mxu0 0.0
    %10846 = vmatprep.subr.mxu0 0.0
    %10847 = vmatpush1.msra.mxu0 0.0
    %10848 = vmatprep.subr.mxu0 0.0
    %10849 = vmatpush1.msra.mxu0 0.0
    %10850 = vmatprep.subr.mxu0 0.0
    %10851 = vmatpush1.msra.mxu0 0.0
    %10852 = vmatprep.subr.mxu0 0.0
    %10853 = vmatpush1.msra.mxu0 0.0
    %10854 = vmatprep.subr.mxu0 0.0
    %10855 = vmatpush1.msra.mxu0 0.0
    %10856 = vmatprep.subr.mxu0 0.0
    %10857 = vmatpush1.msra.mxu0 0.0
    %10858 = vmatprep.subr.mxu0 0.0
    %10859 = vmatpush1.msra.mxu0 0.0
    %10860 = vmatprep.subr.mxu0 0.0
    %10861 = vmatpush1.msra.mxu0 0.0
    %10862 = vmatprep.subr.mxu0 0.0
    %10863 = vmatpush1.msra.mxu0 0.0
    %10864 = vmatprep.subr.mxu0 0.0
    %10865 = vmatpush1.msra.mxu0 0.0
    %10866 = vmatprep.subr.mxu0 0.0
    %10867 = vmatpush1.msra.mxu0 0.0
    %10868 = vmatprep.mubr.f32.mxu0 0.0
    %10869 = vmatmul.mubr.f32.gmra.mrb[0].mxu0 %v10713
    %v10870 = vpop.f32.mrb[0].mxu0
    %v10871 = vadd.f32 0.0, %v10870
    %v10872 = vpop.f32.mrb[0].mxu0
    %v10873 = vadd.f32 0.0, %v10872
    %10874 = vdwg.mxu0
    %10875 = vmatprep.subr.mxu0 %v10731
    %10876 = vmatpush1.msra.mxu0 %v10728
    %10877 = vmatprep.subr.mxu0 0.0
    %10878 = vmatpush1.msra.mxu0 0.0
    %10879 = vmatprep.subr.mxu0 0.0
    %10880 = vmatpush1.msra.mxu0 0.0
    %10881 = vmatprep.subr.mxu0 0.0
    %10882 = vmatpush1.msra.mxu0 0.0
    %10883 = vmatprep.subr.mxu0 0.0
    %10884 = vmatpush1.msra.mxu0 0.0
    %10885 = vmatprep.subr.mxu0 0.0
    %10886 = vmatpush1.msra.mxu0 0.0
    %10887 = vmatprep.subr.mxu0 0.0
    %10888 = vmatpush1.msra.mxu0 0.0
    %10889 = vmatprep.subr.mxu0 0.0
    %10890 = vmatpush1.msra.mxu0 0.0
    %10891 = vmatprep.subr.mxu0 0.0
    %10892 = vmatpush1.msra.mxu0 0.0
    %10893 = vmatprep.subr.mxu0 0.0
    %10894 = vmatpush1.msra.mxu0 0.0
    %10895 = vmatprep.subr.mxu0 0.0
    %10896 = vmatpush1.msra.mxu0 0.0
    %10897 = vmatprep.subr.mxu0 0.0
    %10898 = vmatpush1.msra.mxu0 0.0
    %10899 = vmatprep.subr.mxu0 0.0
    %10900 = vmatpush1.msra.mxu0 0.0
    %10901 = vmatprep.subr.mxu0 0.0
    %10902 = vmatpush1.msra.mxu0 0.0
    %10903 = vmatprep.subr.mxu0 0.0
    %10904 = vmatpush1.msra.mxu0 0.0
    %10905 = vmatprep.subr.mxu0 0.0
    %10906 = vmatpush1.msra.mxu0 0.0
    %10907 = vmatprep.subr.mxu0 0.0
    %10908 = vmatpush1.msra.mxu0 0.0
    %10909 = vmatprep.subr.mxu0 0.0
    %10910 = vmatpush1.msra.mxu0 0.0
    %10911 = vmatprep.subr.mxu0 0.0
    %10912 = vmatpush1.msra.mxu0 0.0
    %10913 = vmatprep.subr.mxu0 0.0
    %10914 = vmatpush1.msra.mxu0 0.0
    %10915 = vmatprep.subr.mxu0 0.0
    %10916 = vmatpush1.msra.mxu0 0.0
    %10917 = vmatprep.subr.mxu0 0.0
    %10918 = vmatpush1.msra.mxu0 0.0
    %10919 = vmatprep.subr.mxu0 0.0
    %10920 = vmatpush1.msra.mxu0 0.0
    %10921 = vmatprep.subr.mxu0 0.0
    %10922 = vmatpush1.msra.mxu0 0.0
    %10923 = vmatprep.subr.mxu0 0.0
    %10924 = vmatpush1.msra.mxu0 0.0
    %10925 = vmatprep.subr.mxu0 0.0
    %10926 = vmatpush1.msra.mxu0 0.0
    %10927 = vmatprep.subr.mxu0 0.0
    %10928 = vmatpush1.msra.mxu0 0.0
    %10929 = vmatprep.subr.mxu0 0.0
    %10930 = vmatpush1.msra.mxu0 0.0
    %10931 = vmatprep.subr.mxu0 0.0
    %10932 = vmatpush1.msra.mxu0 0.0
    %10933 = vmatprep.subr.mxu0 0.0
    %10934 = vmatpush1.msra.mxu0 0.0
    %10935 = vmatprep.subr.mxu0 0.0
    %10936 = vmatpush1.msra.mxu0 0.0
    %10937 = vmatprep.subr.mxu0 0.0
    %10938 = vmatpush1.msra.mxu0 0.0
    %10939 = vmatprep.mubr.f32.mxu0 0.0
    %10940 = vmatmul.mubr.f32.gmra.mrb[0].mxu0 %v10713
    %v10941 = vpop.f32.mrb[0].mxu0
    %v10942 = vadd.f32 0.0, %v10941
    %v10943 = vpop.f32.mrb[0].mxu0
    %v10944 = vadd.f32 0.0, %v10943
    %10945 = vdwg.mxu0
    %v10947 = vsel %vm6489, %v10710, 0
    %v10950 = vsel %vm4612, %v10686, 0
    %v10953 = vsel %vm4612, %v10687, 0
    %v10956 = vsel %vm4612, %v10688, 0
    %v10959 = vsel %vm4612, %v10689, 0
    %v10962 = vsel %vm4612, %v10690, 0
    %v10965 = vsel %vm4612, %v10691, 0
    %10967 = vmatprep.subr.mxu0 %v10953
    %10968 = vmatpush1.msra.mxu0 %v10950
    %10969 = vmatprep.subr.mxu0 0.0
    %10970 = vmatpush1.msra.mxu0 0.0
    %10971 = vmatprep.subr.mxu0 0.0
    %10972 = vmatpush1.msra.mxu0 0.0
    %10973 = vmatprep.subr.mxu0 0.0
    %10974 = vmatpush1.msra.mxu0 0.0
    %10975 = vmatprep.subr.mxu0 0.0
    %10976 = vmatpush1.msra.mxu0 0.0
    %10977 = vmatprep.subr.mxu0 0.0
    %10978 = vmatpush1.msra.mxu0 0.0
    %10979 = vmatprep.subr.mxu0 0.0
    %10980 = vmatpush1.msra.mxu0 0.0
    %10981 = vmatprep.subr.mxu0 0.0
    %10982 = vmatpush1.msra.mxu0 0.0
    %10983 = vmatprep.subr.mxu0 0.0
    %10984 = vmatpush1.msra.mxu0 0.0
    %10985 = vmatprep.subr.mxu0 0.0
    %10986 = vmatpush1.msra.mxu0 0.0
    %10987 = vmatprep.subr.mxu0 0.0
    %10988 = vmatpush1.msra.mxu0 0.0
    %10989 = vmatprep.subr.mxu0 0.0
    %10990 = vmatpush1.msra.mxu0 0.0
    %10991 = vmatprep.subr.mxu0 0.0
    %10992 = vmatpush1.msra.mxu0 0.0
    %10993 = vmatprep.subr.mxu0 0.0
    %10994 = vmatpush1.msra.mxu0 0.0
    %10995 = vmatprep.subr.mxu0 0.0
    %10996 = vmatpush1.msra.mxu0 0.0
    %10997 = vmatprep.subr.mxu0 0.0
    %10998 = vmatpush1.msra.mxu0 0.0
    %10999 = vmatprep.subr.mxu0 0.0
    %11000 = vmatpush1.msra.mxu0 0.0
    %11001 = vmatprep.subr.mxu0 0.0
    %11002 = vmatpush1.msra.mxu0 0.0
    %11003 = vmatprep.subr.mxu0 0.0
    %11004 = vmatpush1.msra.mxu0 0.0
    %11005 = vmatprep.subr.mxu0 0.0
    %11006 = vmatpush1.msra.mxu0 0.0
    %11007 = vmatprep.subr.mxu0 0.0
    %11008 = vmatpush1.msra.mxu0 0.0
    %11009 = vmatprep.subr.mxu0 0.0
    %11010 = vmatpush1.msra.mxu0 0.0
    %11011 = vmatprep.subr.mxu0 0.0
    %11012 = vmatpush1.msra.mxu0 0.0
    %11013 = vmatprep.subr.mxu0 0.0
    %11014 = vmatpush1.msra.mxu0 0.0
    %11015 = vmatprep.subr.mxu0 0.0
    %11016 = vmatpush1.msra.mxu0 0.0
    %11017 = vmatprep.subr.mxu0 0.0
    %11018 = vmatpush1.msra.mxu0 0.0
    %11019 = vmatprep.subr.mxu0 0.0
    %11020 = vmatpush1.msra.mxu0 0.0
    %11021 = vmatprep.subr.mxu0 0.0
    %11022 = vmatpush1.msra.mxu0 0.0
    %11023 = vmatprep.subr.mxu0 0.0
    %11024 = vmatpush1.msra.mxu0 0.0
    %11025 = vmatprep.subr.mxu0 0.0
    %11026 = vmatpush1.msra.mxu0 0.0
    %11027 = vmatprep.subr.mxu0 0.0
    %11028 = vmatpush1.msra.mxu0 0.0
    %11029 = vmatprep.subr.mxu0 0.0
    %11030 = vmatpush1.msra.mxu0 0.0
    %11031 = vmatprep.mubr.f32.mxu0 0.0
    %11032 = vmatmul.mubr.f32.gmra.mrb[0].mxu0 %v10947
    %v11033 = vpop.f32.mrb[0].mxu0
    %v11034 = vadd.f32 %v10800, %v11033
    %v11035 = vpop.f32.mrb[0].mxu0
    %v11036 = vadd.f32 %v10802, %v11035
    %11037 = vdwg.mxu0
    %11038 = vmatprep.subr.mxu0 %v10959
    %11039 = vmatpush1.msra.mxu0 %v10956
    %11040 = vmatprep.subr.mxu0 0.0
    %11041 = vmatpush1.msra.mxu0 0.0
    %11042 = vmatprep.subr.mxu0 0.0
    %11043 = vmatpush1.msra.mxu0 0.0
    %11044 = vmatprep.subr.mxu0 0.0
    %11045 = vmatpush1.msra.mxu0 0.0
    %11046 = vmatprep.subr.mxu0 0.0
    %11047 = vmatpush1.msra.mxu0 0.0
    %11048 = vmatprep.subr.mxu0 0.0
    %11049 = vmatpush1.msra.mxu0 0.0
    %11050 = vmatprep.subr.mxu0 0.0
    %11051 = vmatpush1.msra.mxu0 0.0
    %11052 = vmatprep.subr.mxu0 0.0
    %11053 = vmatpush1.msra.mxu0 0.0
    %11054 = vmatprep.subr.mxu0 0.0
    %11055 = vmatpush1.msra.mxu0 0.0
    %11056 = vmatprep.subr.mxu0 0.0
    %11057 = vmatpush1.msra.mxu0 0.0
    %11058 = vmatprep.subr.mxu0 0.0
    %11059 = vmatpush1.msra.mxu0 0.0
    %11060 = vmatprep.subr.mxu0 0.0
    %11061 = vmatpush1.msra.mxu0 0.0
    %11062 = vmatprep.subr.mxu0 0.0
    %11063 = vmatpush1.msra.mxu0 0.0
    %11064 = vmatprep.subr.mxu0 0.0
    %11065 = vmatpush1.msra.mxu0 0.0
    %11066 = vmatprep.subr.mxu0 0.0
    %11067 = vmatpush1.msra.mxu0 0.0
    %11068 = vmatprep.subr.mxu0 0.0
    %11069 = vmatpush1.msra.mxu0 0.0
    %11070 = vmatprep.subr.mxu0 0.0
    %11071 = vmatpush1.msra.mxu0 0.0
    %11072 = vmatprep.subr.mxu0 0.0
    %11073 = vmatpush1.msra.mxu0 0.0
    %11074 = vmatprep.subr.mxu0 0.0
    %11075 = vmatpush1.msra.mxu0 0.0
    %11076 = vmatprep.subr.mxu0 0.0
    %11077 = vmatpush1.msra.mxu0 0.0
    %11078 = vmatprep.subr.mxu0 0.0
    %11079 = vmatpush1.msra.mxu0 0.0
    %11080 = vmatprep.subr.mxu0 0.0
    %11081 = vmatpush1.msra.mxu0 0.0
    %11082 = vmatprep.subr.mxu0 0.0
    %11083 = vmatpush1.msra.mxu0 0.0
    %11084 = vmatprep.subr.mxu0 0.0
    %11085 = vmatpush1.msra.mxu0 0.0
    %11086 = vmatprep.subr.mxu0 0.0
    %11087 = vmatpush1.msra.mxu0 0.0
    %11088 = vmatprep.subr.mxu0 0.0
    %11089 = vmatpush1.msra.mxu0 0.0
    %11090 = vmatprep.subr.mxu0 0.0
    %11091 = vmatpush1.msra.mxu0 0.0
    %11092 = vmatprep.subr.mxu0 0.0
    %11093 = vmatpush1.msra.mxu0 0.0
    %11094 = vmatprep.subr.mxu0 0.0
    %11095 = vmatpush1.msra.mxu0 0.0
    %11096 = vmatprep.subr.mxu0 0.0
    %11097 = vmatpush1.msra.mxu0 0.0
    %11098 = vmatprep.subr.mxu0 0.0
    %11099 = vmatpush1.msra.mxu0 0.0
    %11100 = vmatprep.subr.mxu0 0.0
    %11101 = vmatpush1.msra.mxu0 0.0
    %11102 = vmatprep.mubr.f32.mxu0 0.0
    %11103 = vmatmul.mubr.f32.gmra.mrb[0].mxu0 %v10947
    %v11104 = vpop.f32.mrb[0].mxu0
    %v11105 = vadd.f32 %v10871, %v11104
    %v11106 = vpop.f32.mrb[0].mxu0
    %v11107 = vadd.f32 %v10873, %v11106
    %11108 = vdwg.mxu0
    %11109 = vmatprep.subr.mxu0 %v10965
    %11110 = vmatpush1.msra.mxu0 %v10962
    %11111 = vmatprep.subr.mxu0 0.0
    %11112 = vmatpush1.msra.mxu0 0.0
    %11113 = vmatprep.subr.mxu0 0.0
    %11114 = vmatpush1.msra.mxu0 0.0
    %11115 = vmatprep.subr.mxu0 0.0
    %11116 = vmatpush1.msra.mxu0 0.0
    %11117 = vmatprep.subr.mxu0 0.0
    %11118 = vmatpush1.msra.mxu0 0.0
    %11119 = vmatprep.subr.mxu0 0.0
    %11120 = vmatpush1.msra.mxu0 0.0
    %11121 = vmatprep.subr.mxu0 0.0
    %11122 = vmatpush1.msra.mxu0 0.0
    %11123 = vmatprep.subr.mxu0 0.0
    %11124 = vmatpush1.msra.mxu0 0.0
    %11125 = vmatprep.subr.mxu0 0.0
    %11126 = vmatpush1.msra.mxu0 0.0
    %11127 = vmatprep.subr.mxu0 0.0
    %11128 = vmatpush1.msra.mxu0 0.0
    %11129 = vmatprep.subr.mxu0 0.0
    %11130 = vmatpush1.msra.mxu0 0.0
    %11131 = vmatprep.subr.mxu0 0.0
    %11132 = vmatpush1.msra.mxu0 0.0
    %11133 = vmatprep.subr.mxu0 0.0
    %11134 = vmatpush1.msra.mxu0 0.0
    %11135 = vmatprep.subr.mxu0 0.0
    %11136 = vmatpush1.msra.mxu0 0.0
    %11137 = vmatprep.subr.mxu0 0.0
    %11138 = vmatpush1.msra.mxu0 0.0
    %11139 = vmatprep.subr.mxu0 0.0
    %11140 = vmatpush1.msra.mxu0 0.0
    %11141 = vmatprep.subr.mxu0 0.0
    %11142 = vmatpush1.msra.mxu0 0.0
    %11143 = vmatprep.subr.mxu0 0.0
    %11144 = vmatpush1.msra.mxu0 0.0
    %11145 = vmatprep.subr.mxu0 0.0
    %11146 = vmatpush1.msra.mxu0 0.0
    %11147 = vmatprep.subr.mxu0 0.0
    %11148 = vmatpush1.msra.mxu0 0.0
    %11149 = vmatprep.subr.mxu0 0.0
    %11150 = vmatpush1.msra.mxu0 0.0
    %11151 = vmatprep.subr.mxu0 0.0
    %11152 = vmatpush1.msra.mxu0 0.0
    %11153 = vmatprep.subr.mxu0 0.0
    %11154 = vmatpush1.msra.mxu0 0.0
    %11155 = vmatprep.subr.mxu0 0.0
    %11156 = vmatpush1.msra.mxu0 0.0
    %11157 = vmatprep.subr.mxu0 0.0
    %11158 = vmatpush1.msra.mxu0 0.0
    %11159 = vmatprep.subr.mxu0 0.0
    %11160 = vmatpush1.msra.mxu0 0.0
    %11161 = vmatprep.subr.mxu0 0.0
    %11162 = vmatpush1.msra.mxu0 0.0
    %11163 = vmatprep.subr.mxu0 0.0
    %11164 = vmatpush1.msra.mxu0 0.0
    %11165 = vmatprep.subr.mxu0 0.0
    %11166 = vmatpush1.msra.mxu0 0.0
    %11167 = vmatprep.subr.mxu0 0.0
    %11168 = vmatpush1.msra.mxu0 0.0
    %11169 = vmatprep.subr.mxu0 0.0
    %11170 = vmatpush1.msra.mxu0 0.0
    %11171 = vmatprep.subr.mxu0 0.0
    %11172 = vmatpush1.msra.mxu0 0.0
    %11173 = vmatprep.mubr.f32.mxu0 0.0
    %11174 = vmatmul.mubr.f32.gmra.mrb[0].mxu0 %v10947
    %v11175 = vpop.f32.mrb[0].mxu0
    %v11176 = vadd.f32 %v10942, %v11175
    %v11177 = vpop.f32.mrb[0].mxu0
    %v11178 = vadd.f32 %v10944, %v11177
    %11179 = vdwg.mxu0
    %v11180 = vld [vmem:[#allocation8] sm:$0x3]
    %11182 = vset.pattern.permute.xlu0 11
    %11183 = vperm.xlu0 %11182, %v11180
    %v11184 = vpop.permute.xlu0 %11183
    %v11186 = vadd.f32 %v11034, %v11184
    %v11187 = vadd.f32 %v11036, %v11184
    %v11188 = vadd.f32 %v11105, %v11184
    %v11189 = vadd.f32 %v11107, %v11184
    %v11190 = vadd.f32 %v11176, %v11184
    %v11191 = vadd.f32 %v11178, %v11184
    %v11192 = vadd.f32 %v11186, %v6988
    %v11193 = vadd.f32 %v11187, %v6989
    %v11194 = vadd.f32 %v11188, %v6990
    %v11195 = vadd.f32 %v11189, %v6991
    %v11196 = vadd.f32 %v11190, %v6992
    %v11197 = vadd.f32 %v11191, %v6993
    %vm11198 = vcmp.ge.f32.partialorder %v11192, 0.0
    %vm11199 = vcmp.ge.f32.partialorder %v11193, 0.0
    %vm11200 = vcmp.ge.f32.partialorder %v11194, 0.0
    %vm11201 = vcmp.ge.f32.partialorder %v11195, 0.0
    %vm11202 = vcmp.ge.f32.partialorder %v11196, 0.0
    %vm11203 = vcmp.ge.f32.partialorder %v11197, 0.0
    %v11204 = vmul.f32 %v11192, 0.3
    %v11205 = vmul.f32 %v11193, 0.3
    %v11206 = vmul.f32 %v11194, 0.3
    %v11207 = vmul.f32 %v11195, 0.3
    %v11208 = vmul.f32 %v11196, 0.3
    %v11209 = vmul.f32 %v11197, 0.3
    %v11210 = vsel %vm11198, %v11192, %v11204
    %v11211 = vsel %vm11199, %v11193, %v11205
    %v11212 = vsel %vm11200, %v11194, %v11206
    %v11213 = vsel %vm11201, %v11195, %v11207
    %v11214 = vsel %vm11202, %v11196, %v11208
    %v11215 = vsel %vm11203, %v11197, %v11209
    %v11216 = vxor.u32 %v11210, 2147483648
    %v11217 = vxor.u32 %v11211, 2147483648
    %v11218 = vxor.u32 %v11212, 2147483648
    %v11219 = vxor.u32 %v11213, 2147483648
    %v11220 = vxor.u32 %v11214, 2147483648
    %v11221 = vxor.u32 %v11215, 2147483648
    %v11222 = vmul.f32 %v11216, 1.442695
    %v11223 = vpow.pop %v11222
    %v11224 = vmul.f32 %v11217, 1.442695
    %v11225 = vpow.pop %v11224
    %v11226 = vmul.f32 %v11218, 1.442695
    %v11227 = vpow.pop %v11226
    %v11228 = vmul.f32 %v11219, 1.442695
    %v11229 = vpow.pop %v11228
    %v11230 = vmul.f32 %v11220, 1.442695
    %v11231 = vpow.pop %v11230
    %v11232 = vmul.f32 %v11221, 1.442695
    %v11233 = vpow.pop %v11232
    %v11234 = vadd.f32 %v11223, 1.0
    %v11235 = vadd.f32 %v11225, 1.0
    %v11236 = vadd.f32 %v11227, 1.0
    %v11237 = vadd.f32 %v11229, 1.0
    %v11238 = vadd.f32 %v11231, 1.0
    %v11239 = vadd.f32 %v11233, 1.0
    %v11240 = vrcp.pop %v11234
    %v11241 = vmul.f32 1.0, %v11240
    %v11242 = vrcp.pop %v11235
    %v11243 = vmul.f32 1.0, %v11242
    %v11244 = vrcp.pop %v11236
    %v11245 = vmul.f32 1.0, %v11244
    %v11246 = vrcp.pop %v11237
    %v11247 = vmul.f32 1.0, %v11246
    %v11248 = vrcp.pop %v11238
    %v11249 = vmul.f32 1.0, %v11248
    %v11250 = vrcp.pop %v11239
    %v11251 = vmul.f32 1.0, %v11250
    %v11258 = vcombine.low %v11241, %v11243
    %v11259 = vcombine.low %v11245, %v11247
    %v11261 = vunpack.c.l.s4 1983009808
    %v11262 = vunpack.c.0.s8 %v11261
    %v11263 = vlaneseq
    %v11264 = vshrl.u32 %v11263, 7
    %v11265 = vsub.s32 %v11262, %v11264
    %v11266 = vrot.slane %v11258, %v11265
    %v11268 = vunpack.c.l.s4 1983009808
    %v11269 = vunpack.c.0.s8 %v11268
    %v11270 = vlaneseq
    %v11271 = vshrl.u32 %v11270, 7
    %v11272 = vsub.s32 %v11269, %v11271
    %v11273 = vrot.slane %v11259, %v11272
    %v11274 = vcombine.low %v11266, %v11273
    %v11275 = vcombine.low %v11249, %v11251
    %v11277 = vunpack.c.l.s4 1983009808
    %v11278 = vunpack.c.0.s8 %v11277
    %v11279 = vlaneseq
    %v11280 = vshrl.u32 %v11279, 7
    %v11281 = vsub.s32 %v11278, %v11280
    %v11282 = vrot.slane %v11275, %v11281
    %11285 = vst [vmem:[%s6] sm:$0xff] %v11274
    %11286 = vst [vmem:[%s6 + $0x8] sm:$0xf] %v11282
    // Predicated region
    $region42: #{decoder_forward.1} parent=1 // pred_check
      _
    $region43: #{decoder_forward.1} parent=1 // pred_check_branch
      %11288 = sbr.rel (0) target = $region45
    $region44: #{decoder_forward.1} parent=1 // pred_region
      _
    $region45: #{decoder_forward.1} parent=1 // pred_fallthru
      _
    // Predicated region
    $region46: #{decoder_forward.1} parent=1 // pred_check
      _
    $region47: #{decoder_forward.1} parent=1 // pred_check_branch
      %11290 = sbr.rel (0) target = $region49
    $region48: #{decoder_forward.1} parent=1 // pred_region
      _
    $region49: #{decoder_forward.1} parent=1 // pred_fallthru
      _
    %11291 = vsyncpa [#allocation4], 1
    %11292 = vsyncpa [#allocation6], 1
    %11293 = vsyncpa [#allocation9], 1

</llo_original>
